<compile_context>
chip_gen: v7x
topology: tpu7x:2x2x1
jax: 0.10.0
libtpu: 0.0.40
codegen_flags: <defaults>
</compile_context>

<pallas_src>
import functools

import jax
import jax.numpy as jnp
from jax import lax
from jax.experimental import pallas as pl
from jax.experimental.pallas import tpu as pltpu

EXPANSION = 4
BN_EPS = 1e-5
LANE = 128
MAX_TILE_M = 1024
VMEM_LIMIT = 48 * 1024 * 1024  # headroom under v7x's 64 MiB physical VMEM


def _round_up(x, m):
    return (x + m - 1) // m * m


def _pick_tile(m, max_tile=MAX_TILE_M):
    """Largest row tile that divides m exactly (multiple of 8), capped."""
    if m <= max_tile:
        return m
    for t in range(max_tile, 7, -8):
        if m % t == 0:
            return t
    return m  # very non-composite m: fall back to a single block


def _pad2d(w, rows, cols):
    return jnp.pad(w, ((0, rows - w.shape[0]), (0, cols - w.shape[1])))


def _cparams(sem):
    return pltpu.CompilerParams(dimension_semantics=sem,
                                vmem_limit_bytes=VMEM_LIMIT)


# ----------------------------------------------------------------------------
# Kernel 1: [optional fused BN+ReLU of input] + matmul (MXU, bf16) + BN stats
# ----------------------------------------------------------------------------
def _mm_stats_kernel(pre_norm):
    def kernel(*refs):
        if pre_norm:
            x_ref, psc_ref, psh_ref, w_ref, y_ref, st_ref = refs
        else:
            x_ref, w_ref, y_ref, st_ref = refs

        @pl.when(pl.program_id(0) == 0)
        def _():
            st_ref[...] = jnp.zeros_like(st_ref)

        x = x_ref[...]
        if pre_norm:
            x = jnp.maximum(x * psc_ref[...] + psh_ref[...], 0.0)
        y = jnp.dot(x.astype(jnp.bfloat16), w_ref[...],
                    preferred_element_type=jnp.float32)
        y_ref[...] = y
        st_ref[0:1, :] += jnp.sum(y, axis=0, keepdims=True)
        st_ref[1:2, :] += jnp.sum(y * y, axis=0, keepdims=True)

    return kernel


def matmul_stats(x, w_bf16, pre_scale=None, pre_shift=None):
    """y = [relu(x*pre_scale+pre_shift)] @ w, plus per-channel (sum, sumsq).

    x: (M, Cin) f32, w_bf16: (Cin, Cout) bf16; Cin/Cout multiples of 128.
    Tiled over M; BN statistics accumulate across tiles (grid is 'arbitrary').
    """
    m, cin = x.shape
    cout = w_bf16.shape[1]
    tm = _pick_tile(m)
    pre = pre_scale is not None

    in_specs = [pl.BlockSpec((tm, cin), lambda i: (i, 0))]
    args = [x]
    if pre:
        in_specs += [pl.BlockSpec((1, cin), lambda i: (0, 0)),
                     pl.BlockSpec((1, cin), lambda i: (0, 0))]
        args += [pre_scale, pre_shift]
    in_specs.append(pl.BlockSpec((cin, cout), lambda i: (0, 0)))
    args.append(w_bf16)

    y, stats = pl.pallas_call(
        _mm_stats_kernel(pre),
        grid=(m // tm,),
        in_specs=in_specs,
        out_specs=(pl.BlockSpec((tm, cout), lambda i: (i, 0)),
                   pl.BlockSpec((8, cout), lambda i: (0, 0))),
        out_shape=(jax.ShapeDtypeStruct((m, cout), jnp.float32),
                   jax.ShapeDtypeStruct((8, cout), jnp.float32)),
        compiler_params=_cparams(("arbitrary",)),
    )(*args)
    return y, stats


# ----------------------------------------------------------------------------
# Kernel 2: 3x3 conv (stride 1) as 9 shifted matmuls on a zero-padded VMEM
#           slab, with stage-1 BN+ReLU fused in, plus BN stats of the output.
# ----------------------------------------------------------------------------
def _conv3x3_stats_kernel(h, w, cin, cout):
    def kernel(x_ref, psc_ref, psh_ref, w_ref, y_ref, st_ref, xp_ref):
        @pl.when(pl.program_id(0) == 0)
        def _():
            xp_ref[...] = jnp.zeros_like(xp_ref)   # halo rows/cols stay zero
            st_ref[...] = jnp.zeros_like(st_ref)

        # previous-stage BatchNorm + ReLU fused here; write padded interior.
        a = x_ref[0]                                             # (h, w, cin)
        a = jnp.maximum(a * psc_ref[...].reshape(1, 1, cin)
                        + psh_ref[...].reshape(1, 1, cin), 0.0)
        xp_ref[1:h + 1, 1:w + 1, :] = a

        # 3x3 conv = 9 shifted (h*w, cin) @ (cin, cout) matmuls (no im2col).
        acc = jnp.zeros((h * w, cout), jnp.float32)
        for ky in range(3):
            for kx in range(3):
                win = xp_ref[ky:ky + h, kx:kx + w, :]            # (h, w, cin)
                mat = win.reshape(h * w, cin).astype(jnp.bfloat16)
                acc = acc + jnp.dot(mat, w_ref[ky, kx],
                                    preferred_element_type=jnp.float32)
        y_ref[0] = acc
        st_ref[0:1, :] += jnp.sum(acc, axis=0, keepdims=True)
        st_ref[1:2, :] += jnp.sum(acc * acc, axis=0, keepdims=True)

    return kernel


def conv3x3_stats(x_img, w_bf16, pre_scale, pre_shift):
    """x_img: (n, h, w, cin) raw (pre-BN) stage-1 output; w_bf16: (3,3,cin,cout).
    Returns raw conv2 output flattened to (n*h*w, cout) and its (sum, sumsq)."""
    n, h, w, cin = x_img.shape
    cout = w_bf16.shape[-1]
    y, stats = pl.pallas_call(
        _conv3x3_stats_kernel(h, w, cin, cout),
        grid=(n,),
        in_specs=[pl.BlockSpec((1, h, w, cin), lambda b: (b, 0, 0, 0)),
                  pl.BlockSpec((1, cin), lambda b: (0, 0)),
                  pl.BlockSpec((1, cin), lambda b: (0, 0)),
                  pl.BlockSpec((3, 3, cin, cout), lambda b: (0, 0, 0, 0))],
        out_specs=(pl.BlockSpec((1, h * w, cout), lambda b: (b, 0, 0)),
                   pl.BlockSpec((8, cout), lambda b: (0, 0))),
        out_shape=(jax.ShapeDtypeStruct((n, h * w, cout), jnp.float32),
                   jax.ShapeDtypeStruct((8, cout), jnp.float32)),
        scratch_shapes=[pltpu.VMEM((h + 2, w + 2, cin), jnp.float32)],
        compiler_params=_cparams(("arbitrary",)),
    )(x_img, pre_scale, pre_shift, w_bf16)
    return y.reshape(n * h * w, cout), stats


# ----------------------------------------------------------------------------
# Kernel 3: apply folded BN (+ optional residual, optionally BN'd) (+ ReLU)
# ----------------------------------------------------------------------------
def _bn_apply_kernel(residual_mode, relu):
    def kernel(*refs):
        y_ref, sc_ref, sh_ref = refs[0:3]
        o_ref = refs[-1]
        out = y_ref[...] * sc_ref[...] + sh_ref[...]
        if residual_mode == "plain":
            out = out + refs[3][...]
        elif residual_mode == "bn":
            r_ref, rsc_ref, rsh_ref = refs[3:6]
            out = out + (r_ref[...] * rsc_ref[...] + rsh_ref[...])
        if relu:
            out = jnp.maximum(out, 0.0)
        o_ref[...] = out.astype(o_ref.dtype)

    return kernel


def bn_apply(y, scale, shift, *, relu, residual=None,
             res_scale=None, res_shift=None):
    m, c = y.shape
    tm = _pick_tile(m)
    row = lambda i: (i, 0)
    vec = lambda i: (0, 0)
    in_specs = [pl.BlockSpec((tm, c), row),
                pl.BlockSpec((1, c), vec), pl.BlockSpec((1, c), vec)]
    args = [y, scale, shift]
    if residual is None:
        mode = "none"
    elif res_scale is None:
        mode = "plain"
        in_specs.append(pl.BlockSpec((tm, c), row))
        args.append(residual)
    else:
        mode = "bn"
        in_specs += [pl.BlockSpec((tm, c), row),
                     pl.BlockSpec((1, c), vec), pl.BlockSpec((1, c), vec)]
        args += [residual, res_scale, res_shift]
    return pl.pallas_call(
        _bn_apply_kernel(mode, relu),
        grid=(m // tm,),
        in_specs=in_specs,
        out_specs=pl.BlockSpec((tm, c), row),
        out_shape=jax.ShapeDtypeStruct((m, c), jnp.float32),
        compiler_params=_cparams(("parallel",)),
    )(*args)


def bn_fold(stats, gamma, beta, count):
    """Fold (sum, sumsq) batch statistics + affine params into (scale, shift)."""
    mean = stats[0] / count
    var = jnp.maximum(stats[1] / count - mean * mean, 0.0)
    scale = gamma * lax.rsqrt(var + BN_EPS)
    shift = beta - mean * scale
    return scale.reshape(1, -1), shift.reshape(1, -1)


# ----------------------------------------------------------------------------
# Bottleneck forward (wrapper: layout, channel padding, kernel orchestration)
# ----------------------------------------------------------------------------
def bottleneck_forward(x_nchw, params, stride):
    n, cin, h, w = x_nchw.shape
    planes = params["w1"].shape[0]
    cout = EXPANSION * planes

    cin_p = _round_up(cin, LANE)
    pln_p = _round_up(planes, LANE)
    co_p = _round_up(cout, LANE)

    # NCHW -> NHWC, channels padded to lane-dense multiples of 128
    x = jnp.transpose(x_nchw, (0, 2, 3, 1)).astype(jnp.float32)
    x = jnp.pad(x, ((0, 0), (0, 0), (0, 0), (0, cin_p - cin)))
    m1 = n * h * w
    x_flat = x.reshape(m1, cin_p)

    # padded bf16 weights / padded BN affine params
    w1 = _pad2d(params["w1"].reshape(planes, cin).T, cin_p, pln_p).astype(jnp.bfloat16)
    w3 = _pad2d(params["w3"].reshape(cout, planes).T, pln_p, co_p).astype(jnp.bfloat16)
    w2 = jnp.transpose(params["w2"], (2, 3, 1, 0))                 # (3,3,in,out)
    w2 = jnp.pad(w2, ((0, 0), (0, 0), (0, pln_p - planes), (0, pln_p - planes)))
    g1 = jnp.pad(params["g1"], (0, pln_p - planes), constant_values=1.0)
    b1 = jnp.pad(params["b1"], (0, pln_p - planes))
    g2 = jnp.pad(params["g2"], (0, pln_p - planes), constant_values=1.0)
    b2 = jnp.pad(params["b2"], (0, pln_p - planes))
    g3 = jnp.pad(params["g3"], (0, co_p - cout), constant_values=1.0)
    b3 = jnp.pad(params["b3"], (0, co_p - cout))

    ho = (h - 1) // stride + 1
    wo = (w - 1) // stride + 1
    m2 = n * ho * wo

    # ---- stage 1: 1x1 conv (matmul) + BN statistics -------------------------
    y1, st1 = matmul_stats(x_flat, w1)
    sc1, sh1 = bn_fold(st1, g1, b1, m1)

    # ---- stage 2: 3x3 conv + BN statistics (stage-1 BN/ReLU fused in) -------
    if stride == 1:
        y2, st2 = conv3x3_stats(y1.reshape(n, h, w, pln_p),
                                w2.astype(jnp.bfloat16), sc1, sh1)
    else:
        # TODO(synk): strided 3x3 path falls back to a wrapper-side im2col
        # (materializes the 9 taps in HBM); an in-kernel strided-window
        # variant would remove that traffic.
        out1 = bn_apply(y1, sc1, sh1, relu=True).reshape(n, h, w, pln_p)
        xp = jnp.pad(out1, ((0, 0), (1, 1), (1, 1), (0, 0)))
        taps = [xp[:, ky: ky + stride * (ho - 1) + 1: stride,
                    kx: kx + stride * (wo - 1) + 1: stride, :]
                for ky in range(3) for kx in range(3)]
        patches = jnp.concatenate(taps, axis=-1).reshape(m2, 9 * pln_p)
        w2f = w2.reshape(9 * pln_p, pln_p).astype(jnp.bfloat16)
        y2, st2 = matmul_stats(patches, w2f)
    sc2, sh2 = bn_fold(st2, g2, b2, m2)

    # ---- stage 3: 1x1 conv (stage-2 BN/ReLU fused in) + BN statistics -------
    y3, st3 = matmul_stats(y2, w3, sc2, sh2)
    sc3, sh3 = bn_fold(st3, g3, b3, m2)

    # ---- shortcut + final fused BN3 + residual + ReLU ------------------------
    if stride != 1 or cin != cout:
        ws = _pad2d(params["ws"].reshape(cout, cin).T, cin_p, co_p).astype(jnp.bfloat16)
        gs = jnp.pad(params["gs"], (0, co_p - cout), constant_values=1.0)
        bs = jnp.pad(params["bs"], (0, co_p - cout))
        xs = x[:, ::stride, ::stride, :].reshape(m2, cin_p)
        ysc, sts = matmul_stats(xs, ws)
        scs, shs = bn_fold(sts, gs, bs, m2)
        out = bn_apply(y3, sc3, sh3, relu=True,
                       residual=ysc, res_scale=scs, res_shift=shs)
    else:
        out = bn_apply(y3, sc3, sh3, relu=True, residual=x_flat)

    out = out.reshape(n, ho, wo, co_p)[:, :, :, :cout]
    return jnp.transpose(out, (0, 3, 1, 2))                       # back to NCHW


# ----------------------------------------------------------------------------
# Deterministic parameter init (matches nn.Module shapes / BN defaults)
# ----------------------------------------------------------------------------
def init_params(key, in_planes, planes, stride):
    cout = EXPANSION * planes
    k1, k2, k3, k4 = jax.random.split(key, 4)
    p = {
        "w1": 0.1 * jax.random.normal(k1, (planes, in_planes, 1, 1), jnp.float32),
        "g1": jnp.ones((planes,), jnp.float32),
        "b1": jnp.zeros((planes,), jnp.float32),
        "w2": 0.1 * jax.random.normal(k2, (planes, planes, 3, 3), jnp.float32),
        "g2": jnp.ones((planes,), jnp.float32),
        "b2": jnp.zeros((planes,), jnp.float32),
        "w3": 0.1 * jax.random.normal(k3, (cout, planes, 1, 1), jnp.float32),
        "g3": jnp.ones((cout,), jnp.float32),
        "b3": jnp.zeros((cout,), jnp.float32),
    }
    if stride != 1 or in_planes != cout:
        p["ws"] = 0.1 * jax.random.normal(k4, (cout, in_planes, 1, 1), jnp.float32)
        p["gs"] = jnp.ones((cout,), jnp.float32)
        p["bs"] = jnp.zeros((cout,), jnp.float32)
    return p


# ----------------------------------------------------------------------------
# Pure-JAX f32 reference (for correctness check)
# ----------------------------------------------------------------------------
def ref_forward(x, p, stride):
    def conv(x, w, s=1, pad=0):
        return lax.conv_general_dilated(
            x, w, (s, s), [(pad, pad), (pad, pad)],
            dimension_numbers=("NCHW", "OIHW", "NCHW"))

    def bn(y, g, b):
        mean = y.mean(axis=(0, 2, 3), keepdims=True)
        var = ((y - mean) ** 2).mean(axis=(0, 2, 3), keepdims=True)
        yhat = (y - mean) * lax.rsqrt(var + BN_EPS)
        return yhat * g.reshape(1, -1, 1, 1) + b.reshape(1, -1, 1, 1)

    out = jax.nn.relu(bn(conv(x, p["w1"]), p["g1"], p["b1"]))
    out = jax.nn.relu(bn(conv(out, p["w2"], s=stride, pad=1), p["g2"], p["b2"]))
    out = bn(conv(out, p["w3"]), p["g3"], p["b3"])
    if "ws" in p:
        sc = bn(conv(x, p["ws"], s=stride), p["gs"], p["bs"])
    else:
        sc = x
    return jax.nn.relu(out + sc)


# ----------------------------------------------------------------------------
if __name__ == "__main__":
    # TODO(synk): BatchNorm running-statistic (running_mean/var, momentum)
    # buffer updates are stateful nn.Module buffers and are not modelled; they
    # do not affect the forward output.
    key = jax.random.PRNGKey(0)
    kx, kp = jax.random.split(key)

    in_planes, planes, stride = 4, 4, 1          # shortcut conv active (4 != 16)
    x = jax.random.normal(kx, (2, in_planes, 16, 16), jnp.float32)
    params = init_params(kp, in_planes, planes, stride)

    fwd = jax.jit(functools.partial(bottleneck_forward, stride=stride))
    out = jax.block_until_ready(fwd(x, params))

    ref = ref_forward(x, params, stride)
    assert out.shape == ref.shape == (2, EXPANSION * planes, 16, 16)
    # bf16 MXU inputs across three chained conv+BN stages on O(1) normalized
    # activations give per-element deviations up to a few 1e-2 vs. the f32
    # reference; structural bugs would show up as O(1) errors.
    diff = jnp.abs(out - ref)
    max_err = float(jnp.max(diff))
    mean_err = float(jnp.mean(diff))
    assert max_err < 2e-1 and mean_err < 2e-2, (
        f"error too large: max={max_err}, mean={mean_err}")

    print("KERNEL_OK")
</pallas_src>

<mosaic_0001>
module attributes {stable_mosaic.version = 11 : i64} {
  func.func @kernel(%arg0: i32, %arg1: memref<512x128xf32, #tpu.memory_space<vmem>>, %arg2: memref<128x128xbf16, #tpu.memory_space<vmem>>, %arg3: memref<512x128xf32, #tpu.memory_space<vmem>>, %arg4: memref<8x128xf32, #tpu.memory_space<vmem>>) attributes {dimension_semantics = [#tpu.dimension_semantics<arbitrary>], iteration_bounds = array<i64: 1>, scalar_prefetch = 0 : i64, scratch_operands = 0 : i64, tpu.core_type = #tpu.core_type<tc>, window_params = [{transform_indices = @transform_0, window_bounds = array<i64: 512, 128>}, {pipeline_mode = #tpu.pipeline_mode<synchronous>, transform_indices = @transform_1, window_bounds = array<i64: 128, 128>}, {transform_indices = @transform_2, window_bounds = array<i64: 512, 128>}, {pipeline_mode = #tpu.pipeline_mode<synchronous>, transform_indices = @transform_3, window_bounds = array<i64: 8, 128>}]} {
    %c0_i32 = arith.constant 0 : i32
    %0 = arith.cmpi eq, %arg0, %c0_i32 : i32
    %1 = arith.extui %0 : i1 to i32
    %c0_i32_0 = arith.constant 0 : i32
    %2 = arith.cmpi ne, %1, %c0_i32_0 : i32
    scf.if %2 {
      %cst_15 = arith.constant 0.000000e+00 : f32
      %19 = vector.broadcast %cst_15 : f32 to vector<8x128xf32>
      %c0_16 = arith.constant 0 : index
      %c0_17 = arith.constant 0 : index
      %20 = vector.load %arg4[%c0_16, %c0_17] : memref<8x128xf32, #tpu.memory_space<vmem>>, vector<8x128xf32>
      tpu.vector_store %arg4[%c0_16, %c0_17], %19 {strides = array<i32>} : memref<8x128xf32, #tpu.memory_space<vmem>>, vector<8x128xf32>,
    } else {
    }
    %c0 = arith.constant 0 : index
    %c0_1 = arith.constant 0 : index
    %3 = vector.load %arg1[%c0, %c0_1] : memref<512x128xf32, #tpu.memory_space<vmem>>, vector<512x128xf32>
    %4 = arith.truncf %3 : vector<512x128xf32> to vector<512x128xbf16>
    %c0_2 = arith.constant 0 : index
    %c0_3 = arith.constant 0 : index
    %5 = vector.load %arg2[%c0_2, %c0_3] : memref<128x128xbf16, #tpu.memory_space<vmem>>, vector<128x128xbf16>
    %cst = arith.constant dense<0.000000e+00> : vector<512x128xf32>
    %6 = tpu.matmul %4, %5, %cst {dimension_numbers = #tpu.dot_dimension_numbers<[1], [0], [0], [1], [0, 0, 1, 1], [], []>} : vector<512x128xbf16>, vector<128x128xbf16>, vector<512x128xf32> -> vector<512x128xf32>
    %c0_4 = arith.constant 0 : index
    %c0_5 = arith.constant 0 : index
    %7 = vector.load %arg3[%c0_4, %c0_5] : memref<512x128xf32, #tpu.memory_space<vmem>>, vector<512x128xf32>
    tpu.vector_store %arg3[%c0_4, %c0_5], %6 {strides = array<i32>} : memref<512x128xf32, #tpu.memory_space<vmem>>, vector<512x128xf32>,
    %c0_6 = arith.constant 0 : index
    %c0_7 = arith.constant 0 : index
    %8 = vector.load %arg4[%c0_6, %c0_7] : memref<8x128xf32, #tpu.memory_space<vmem>>, vector<1x128xf32>
    %cst_8 = arith.constant dense<0.000000e+00> : vector<128xf32>
    %9 = vector.multi_reduction <add>, %6, %cst_8 [0] : vector<512x128xf32> to vector<128xf32>
    %10 = vector.shape_cast %9 : vector<128xf32> to vector<1x128xf32>
    %11 = arith.addf %8, %10 : vector<1x128xf32>
    %c0_9 = arith.constant 0 : index
    %c0_10 = arith.constant 0 : index
    %12 = vector.load %arg4[%c0_9, %c0_10] : memref<8x128xf32, #tpu.memory_space<vmem>>, vector<1x128xf32>
    tpu.vector_store %arg4[%c0_9, %c0_10], %11 {strides = array<i32>} : memref<8x128xf32, #tpu.memory_space<vmem>>, vector<1x128xf32>,
    %c1 = arith.constant 1 : index
    %c0_11 = arith.constant 0 : index
    %13 = vector.load %arg4[%c1, %c0_11] : memref<8x128xf32, #tpu.memory_space<vmem>>, vector<1x128xf32>
    %14 = arith.mulf %6, %6 : vector<512x128xf32>
    %cst_12 = arith.constant dense<0.000000e+00> : vector<128xf32>
    %15 = vector.multi_reduction <add>, %14, %cst_12 [0] : vector<512x128xf32> to vector<128xf32>
    %16 = vector.shape_cast %15 : vector<128xf32> to vector<1x128xf32>
    %17 = arith.addf %13, %16 : vector<1x128xf32>
    %c1_13 = arith.constant 1 : index
    %c0_14 = arith.constant 0 : index
    %18 = vector.load %arg4[%c1_13, %c0_14] : memref<8x128xf32, #tpu.memory_space<vmem>>, vector<1x128xf32>
    tpu.vector_store %arg4[%c1_13, %c0_14], %17 {strides = array<i32>} : memref<8x128xf32, #tpu.memory_space<vmem>>, vector<1x128xf32>,
    return
  }
  func.func @transform_0(%arg0: i32) -> (i32, i32) {
    %c0_i32 = arith.constant 0 : i32
    %c0_i32_0 = arith.constant 0 : i32
    return %arg0, %c0_i32 : i32, i32
  }
  func.func @transform_1(%arg0: i32) -> (i32, i32) {
    %c0_i32 = arith.constant 0 : i32
    %c0_i32_0 = arith.constant 0 : i32
    %c0_i32_1 = arith.constant 0 : i32
    return %c0_i32, %c0_i32_0 : i32, i32
  }
  func.func @transform_2(%arg0: i32) -> (i32, i32) {
    %c0_i32 = arith.constant 0 : i32
    %c0_i32_0 = arith.constant 0 : i32
    return %arg0, %c0_i32 : i32, i32
  }
  func.func @transform_3(%arg0: i32) -> (i32, i32) {
    %c0_i32 = arith.constant 0 : i32
    %c0_i32_0 = arith.constant 0 : i32
    %c0_i32_1 = arith.constant 0 : i32
    return %c0_i32, %c0_i32_0 : i32, i32
  }
}

module attributes {stable_mosaic.version = 11 : i64} {
  func.func @kernel(%arg0: i32, %arg1: memref<1x16x16x128xf32, #tpu.memory_space<vmem>>, %arg2: memref<1x128xf32, #tpu.memory_space<vmem>>, %arg3: memref<1x128xf32, #tpu.memory_space<vmem>>, %arg4: memref<3x3x128x128xbf16, #tpu.memory_space<vmem>>, %arg5: memref<1x256x128xf32, #tpu.memory_space<vmem>>, %arg6: memref<8x128xf32, #tpu.memory_space<vmem>>, %arg7: memref<18x18x128xf32, #tpu.memory_space<vmem>>) attributes {dimension_semantics = [#tpu.dimension_semantics<arbitrary>], iteration_bounds = array<i64: 2>, scalar_prefetch = 0 : i64, scratch_operands = 1 : i64, tpu.core_type = #tpu.core_type<tc>, window_params = [{transform_indices = @transform_0, window_bounds = array<i64: 1, 16, 16, 128>}, {pipeline_mode = #tpu.pipeline_mode<synchronous>, transform_indices = @transform_1, window_bounds = array<i64: 1, 128>}, {pipeline_mode = #tpu.pipeline_mode<synchronous>, transform_indices = @transform_2, window_bounds = array<i64: 1, 128>}, {pipeline_mode = #tpu.pipeline_mode<synchronous>, transform_indices = @transform_3, window_bounds = array<i64: 3, 3, 128, 128>}, {transform_indices = @transform_4, window_bounds = array<i64: 1, 256, 128>}, {pipeline_mode = #tpu.pipeline_mode<synchronous>, transform_indices = @transform_5, window_bounds = array<i64: 8, 128>}]} {
    %c0_i32 = arith.constant 0 : i32
    %0 = arith.cmpi eq, %arg0, %c0_i32 : i32
    %1 = arith.extui %0 : i1 to i32
    %c0_i32_0 = arith.constant 0 : i32
    %2 = arith.cmpi ne, %1, %c0_i32_0 : i32
    scf.if %2 {
      %cst_95 = arith.constant 0.000000e+00 : f32
      %94 = vector.broadcast %cst_95 : f32 to vector<18x18x128xf32>
      %c0_96 = arith.constant 0 : index
      %c0_97 = arith.constant 0 : index
      %c0_98 = arith.constant 0 : index
      %95 = vector.load %arg7[%c0_96, %c0_97, %c0_98] : memref<18x18x128xf32, #tpu.memory_space<vmem>>, vector<18x18x128xf32>
      tpu.vector_store %arg7[%c0_96, %c0_97, %c0_98], %94 {strides = array<i32>} : memref<18x18x128xf32, #tpu.memory_space<vmem>>, vector<18x18x128xf32>,
      %cst_99 = arith.constant 0.000000e+00 : f32
      %96 = vector.broadcast %cst_99 : f32 to vector<8x128xf32>
      %c0_100 = arith.constant 0 : index
      %c0_101 = arith.constant 0 : index
      %97 = vector.load %arg6[%c0_100, %c0_101] : memref<8x128xf32, #tpu.memory_space<vmem>>, vector<8x128xf32>
      tpu.vector_store %arg6[%c0_100, %c0_101], %96 {strides = array<i32>} : memref<8x128xf32, #tpu.memory_space<vmem>>, vector<8x128xf32>,
    } else {
    }
    %c0 = arith.constant 0 : index
    %c0_1 = arith.constant 0 : index
    %c0_2 = arith.constant 0 : index
    %c0_3 = arith.constant 0 : index
    %3 = vector.load %arg1[%c0, %c0_1, %c0_2, %c0_3] : memref<1x16x16x128xf32, #tpu.memory_space<vmem>>, vector<1x16x16x128xf32>
    %4 = vector.shape_cast %3 : vector<1x16x16x128xf32> to vector<16x16x128xf32>
    %c0_4 = arith.constant 0 : index
    %c0_5 = arith.constant 0 : index
    %5 = vector.load %arg2[%c0_4, %c0_5] : memref<1x128xf32, #tpu.memory_space<vmem>>, vector<1x128xf32>
    %6 = vector.shape_cast %5 : vector<1x128xf32> to vector<1x1x128xf32>
    %7 = vector.broadcast %6 : vector<1x1x128xf32> to vector<16x16x128xf32>
    %8 = arith.mulf %4, %7 : vector<16x16x128xf32>
    %c0_6 = arith.constant 0 : index
    %c0_7 = arith.constant 0 : index
    %9 = vector.load %arg3[%c0_6, %c0_7] : memref<1x128xf32, #tpu.memory_space<vmem>>, vector<1x128xf32>
    %10 = vector.shape_cast %9 : vector<1x128xf32> to vector<1x1x128xf32>
    %11 = vector.broadcast %10 : vector<1x1x128xf32> to vector<16x16x128xf32>
    %12 = arith.addf %8, %11 : vector<16x16x128xf32>
    %cst = arith.constant 0.000000e+00 : f32
    %13 = vector.broadcast %cst : f32 to vector<16x16x128xf32>
    %14 = arith.maximumf %12, %13 : vector<16x16x128xf32>
    %c1 = arith.constant 1 : index
    %c1_8 = arith.constant 1 : index
    %c0_9 = arith.constant 0 : index
    %15 = vector.load %arg7[%c1, %c1_8, %c0_9] : memref<18x18x128xf32, #tpu.memory_space<vmem>>, vector<16x16x128xf32>
    tpu.vector_store %arg7[%c1, %c1_8, %c0_9], %14 {strides = array<i32>} : memref<18x18x128xf32, #tpu.memory_space<vmem>>, vector<16x16x128xf32>,
    %cst_10 = arith.constant 0.000000e+00 : f32
    %16 = vector.broadcast %cst_10 : f32 to vector<256x128xf32>
    %c0_11 = arith.constant 0 : index
    %c0_12 = arith.constant 0 : index
    %c0_13 = arith.constant 0 : index
    %17 = vector.load %arg7[%c0_11, %c0_12, %c0_13] : memref<18x18x128xf32, #tpu.memory_space<vmem>>, vector<16x16x128xf32>
    %18 = vector.shape_cast %17 : vector<16x16x128xf32> to vector<256x128xf32>
    %19 = arith.truncf %18 : vector<256x128xf32> to vector<256x128xbf16>
    %c0_14 = arith.constant 0 : index
    %c0_15 = arith.constant 0 : index
    %c0_16 = arith.constant 0 : index
    %c0_17 = arith.constant 0 : index
    %20 = vector.load %arg4[%c0_14, %c0_15, %c0_16, %c0_17] : memref<3x3x128x128xbf16, #tpu.memory_space<vmem>>, vector<1x1x128x128xbf16>
    %21 = vector.shape_cast %20 : vector<1x1x128x128xbf16> to vector<128x128xbf16>
    %cst_18 = arith.constant dense<0.000000e+00> : vector<256x128xf32>
    %22 = tpu.matmul %19, %21, %cst_18 {dimension_numbers = #tpu.dot_dimension_numbers<[1], [0], [0], [1], [0, 0, 1, 1], [], []>} : vector<256x128xbf16>, vector<128x128xbf16>, vector<256x128xf32> -> vector<256x128xf32>
    %23 = arith.addf %16, %22 : vector<256x128xf32>
    %c0_19 = arith.constant 0 : index
    %c1_20 = arith.constant 1 : index
    %c0_21 = arith.constant 0 : index
    %24 = vector.load %arg7[%c0_19, %c1_20, %c0_21] : memref<18x18x128xf32, #tpu.memory_space<vmem>>, vector<16x16x128xf32>
    %25 = vector.shape_cast %24 : vector<16x16x128xf32> to vector<256x128xf32>
    %26 = arith.truncf %25 : vector<256x128xf32> to vector<256x128xbf16>
    %c0_22 = arith.constant 0 : index
    %c1_23 = arith.constant 1 : index
    %c0_24 = arith.constant 0 : index
    %c0_25 = arith.constant 0 : index
    %27 = vector.load %arg4[%c0_22, %c1_23, %c0_24, %c0_25] : memref<3x3x128x128xbf16, #tpu.memory_space<vmem>>, vector<1x1x128x128xbf16>
    %28 = vector.shape_cast %27 : vector<1x1x128x128xbf16> to vector<128x128xbf16>
    %cst_26 = arith.constant dense<0.000000e+00> : vector<256x128xf32>
    %29 = tpu.matmul %26, %28, %cst_26 {dimension_numbers = #tpu.dot_dimension_numbers<[1], [0], [0], [1], [0, 0, 1, 1], [], []>} : vector<256x128xbf16>, vector<128x128xbf16>, vector<256x128xf32> -> vector<256x128xf32>
    %30 = arith.addf %23, %29 : vector<256x128xf32>
    %c0_27 = arith.constant 0 : index
    %c2 = arith.constant 2 : index
    %c0_28 = arith.constant 0 : index
    %31 = vector.load %arg7[%c0_27, %c2, %c0_28] : memref<18x18x128xf32, #tpu.memory_space<vmem>>, vector<16x16x128xf32>
    %32 = vector.shape_cast %31 : vector<16x16x128xf32> to vector<256x128xf32>
    %33 = arith.truncf %32 : vector<256x128xf32> to vector<256x128xbf16>
    %c0_29 = arith.constant 0 : index
    %c2_30 = arith.constant 2 : index
    %c0_31 = arith.constant 0 : index
    %c0_32 = arith.constant 0 : index
    %34 = vector.load %arg4[%c0_29, %c2_30, %c0_31, %c0_32] : memref<3x3x128x128xbf16, #tpu.memory_space<vmem>>, vector<1x1x128x128xbf16>
    %35 = vector.shape_cast %34 : vector<1x1x128x128xbf16> to vector<128x128xbf16>
    %cst_33 = arith.constant dense<0.000000e+00> : vector<256x128xf32>
    %36 = tpu.matmul %33, %35, %cst_33 {dimension_numbers = #tpu.dot_dimension_numbers<[1], [0], [0], [1], [0, 0, 1, 1], [], []>} : vector<256x128xbf16>, vector<128x128xbf16>, vector<256x128xf32> -> vector<256x128xf32>
    %37 = arith.addf %30, %36 : vector<256x128xf32>
    %c1_34 = arith.constant 1 : index
    %c0_35 = arith.constant 0 : index
    %c0_36 = arith.constant 0 : index
    %38 = vector.load %arg7[%c1_34, %c0_35, %c0_36] : memref<18x18x128xf32, #tpu.memory_space<vmem>>, vector<16x16x128xf32>
    %39 = vector.shape_cast %38 : vector<16x16x128xf32> to vector<256x128xf32>
    %40 = arith.truncf %39 : vector<256x128xf32> to vector<256x128xbf16>
    %c1_37 = arith.constant 1 : index
    %c0_38 = arith.constant 0 : index
    %c0_39 = arith.constant 0 : index
    %c0_40 = arith.constant 0 : index
    %41 = vector.load %arg4[%c1_37, %c0_38, %c0_39, %c0_40] : memref<3x3x128x128xbf16, #tpu.memory_space<vmem>>, vector<1x1x128x128xbf16>
    %42 = vector.shape_cast %41 : vector<1x1x128x128xbf16> to vector<128x128xbf16>
    %cst_41 = arith.constant dense<0.000000e+00> : vector<256x128xf32>
    %43 = tpu.matmul %40, %42, %cst_41 {dimension_numbers = #tpu.dot_dimension_numbers<[1], [0], [0], [1], [0, 0, 1, 1], [], []>} : vector<256x128xbf16>, vector<128x128xbf16>, vector<256x128xf32> -> vector<256x128xf32>
    %44 = arith.addf %37, %43 : vector<256x128xf32>
    %c1_42 = arith.constant 1 : index
    %c1_43 = arith.constant 1 : index
    %c0_44 = arith.constant 0 : index
    %45 = vector.load %arg7[%c1_42, %c1_43, %c0_44] : memref<18x18x128xf32, #tpu.memory_space<vmem>>, vector<16x16x128xf32>
    %46 = vector.shape_cast %45 : vector<16x16x128xf32> to vector<256x128xf32>
    %47 = arith.truncf %46 : vector<256x128xf32> to vector<256x128xbf16>
    %c1_45 = arith.constant 1 : index
    %c1_46 = arith.constant 1 : index
    %c0_47 = arith.constant 0 : index
    %c0_48 = arith.constant 0 : index
    %48 = vector.load %arg4[%c1_45, %c1_46, %c0_47, %c0_48] : memref<3x3x128x128xbf16, #tpu.memory_space<vmem>>, vector<1x1x128x128xbf16>
    %49 = vector.shape_cast %48 : vector<1x1x128x128xbf16> to vector<128x128xbf16>
    %cst_49 = arith.constant dense<0.000000e+00> : vector<256x128xf32>
    %50 = tpu.matmul %47, %49, %cst_49 {dimension_numbers = #tpu.dot_dimension_numbers<[1], [0], [0], [1], [0, 0, 1, 1], [], []>} : vector<256x128xbf16>, vector<128x128xbf16>, vector<256x128xf32> -> vector<256x128xf32>
    %51 = arith.addf %44, %50 : vector<256x128xf32>
    %c1_50 = arith.constant 1 : index
    %c2_51 = arith.constant 2 : index
    %c0_52 = arith.constant 0 : index
    %52 = vector.load %arg7[%c1_50, %c2_51, %c0_52] : memref<18x18x128xf32, #tpu.memory_space<vmem>>, vector<16x16x128xf32>
    %53 = vector.shape_cast %52 : vector<16x16x128xf32> to vector<256x128xf32>
    %54 = arith.truncf %53 : vector<256x128xf32> to vector<256x128xbf16>
    %c1_53 = arith.constant 1 : index
    %c2_54 = arith.constant 2 : index
    %c0_55 = arith.constant 0 : index
    %c0_56 = arith.constant 0 : index
    %55 = vector.load %arg4[%c1_53, %c2_54, %c0_55, %c0_56] : memref<3x3x128x128xbf16, #tpu.memory_space<vmem>>, vector<1x1x128x128xbf16>
    %56 = vector.shape_cast %55 : vector<1x1x128x128xbf16> to vector<128x128xbf16>
    %cst_57 = arith.constant dense<0.000000e+00> : vector<256x128xf32>
    %57 = tpu.matmul %54, %56, %cst_57 {dimension_numbers = #tpu.dot_dimension_numbers<[1], [0], [0], [1], [0, 0, 1, 1], [], []>} : vector<256x128xbf16>, vector<128x128xbf16>, vector<256x128xf32> -> vector<256x128xf32>
    %58 = arith.addf %51, %57 : vector<256x128xf32>
    %c2_58 = arith.constant 2 : index
    %c0_59 = arith.constant 0 : index
    %c0_60 = arith.constant 0 : index
    %59 = vector.load %arg7[%c2_58, %c0_59, %c0_60] : memref<18x18x128xf32, #tpu.memory_space<vmem>>, vector<16x16x128xf32>
    %60 = vector.shape_cast %59 : vector<16x16x128xf32> to vector<256x128xf32>
    %61 = arith.truncf %60 : vector<256x128xf32> to vector<256x128xbf16>
    %c2_61 = arith.constant 2 : index
    %c0_62 = arith.constant 0 : index
    %c0_63 = arith.constant 0 : index
    %c0_64 = arith.constant 0 : index
    %62 = vector.load %arg4[%c2_61, %c0_62, %c0_63, %c0_64] : memref<3x3x128x128xbf16, #tpu.memory_space<vmem>>, vector<1x1x128x128xbf16>
    %63 = vector.shape_cast %62 : vector<1x1x128x128xbf16> to vector<128x128xbf16>
    %cst_65 = arith.constant dense<0.000000e+00> : vector<256x128xf32>
    %64 = tpu.matmul %61, %63, %cst_65 {dimension_numbers = #tpu.dot_dimension_numbers<[1], [0], [0], [1], [0, 0, 1, 1], [], []>} : vector<256x128xbf16>, vector<128x128xbf16>, vector<256x128xf32> -> vector<256x128xf32>
    %65 = arith.addf %58, %64 : vector<256x128xf32>
    %c2_66 = arith.constant 2 : index
    %c1_67 = arith.constant 1 : index
    %c0_68 = arith.constant 0 : index
    %66 = vector.load %arg7[%c2_66, %c1_67, %c0_68] : memref<18x18x128xf32, #tpu.memory_space<vmem>>, vector<16x16x128xf32>
    %67 = vector.shape_cast %66 : vector<16x16x128xf32> to vector<256x128xf32>
    %68 = arith.truncf %67 : vector<256x128xf32> to vector<256x128xbf16>
    %c2_69 = arith.constant 2 : index
    %c1_70 = arith.constant 1 : index
    %c0_71 = arith.constant 0 : index
    %c0_72 = arith.constant 0 : index
    %69 = vector.load %arg4[%c2_69, %c1_70, %c0_71, %c0_72] : memref<3x3x128x128xbf16, #tpu.memory_space<vmem>>, vector<1x1x128x128xbf16>
    %70 = vector.shape_cast %69 : vector<1x1x128x128xbf16> to vector<128x128xbf16>
    %cst_73 = arith.constant dense<0.000000e+00> : vector<256x128xf32>
    %71 = tpu.matmul %68, %70, %cst_73 {dimension_numbers = #tpu.dot_dimension_numbers<[1], [0], [0], [1], [0, 0, 1, 1], [], []>} : vector<256x128xbf16>, vector<128x128xbf16>, vector<256x128xf32> -> vector<256x128xf32>
    %72 = arith.addf %65, %71 : vector<256x128xf32>
    %c2_74 = arith.constant 2 : index
    %c2_75 = arith.constant 2 : index
    %c0_76 = arith.constant 0 : index
    %73 = vector.load %arg7[%c2_74, %c2_75, %c0_76] : memref<18x18x128xf32, #tpu.memory_space<vmem>>, vector<16x16x128xf32>
    %74 = vector.shape_cast %73 : vector<16x16x128xf32> to vector<256x128xf32>
    %75 = arith.truncf %74 : vector<256x128xf32> to vector<256x128xbf16>
    %c2_77 = arith.constant 2 : index
    %c2_78 = arith.constant 2 : index
    %c0_79 = arith.constant 0 : index
    %c0_80 = arith.constant 0 : index
    %76 = vector.load %arg4[%c2_77, %c2_78, %c0_79, %c0_80] : memref<3x3x128x128xbf16, #tpu.memory_space<vmem>>, vector<1x1x128x128xbf16>
    %77 = vector.shape_cast %76 : vector<1x1x128x128xbf16> to vector<128x128xbf16>
    %cst_81 = arith.constant dense<0.000000e+00> : vector<256x128xf32>
    %78 = tpu.matmul %75, %77, %cst_81 {dimension_numbers = #tpu.dot_dimension_numbers<[1], [0], [0], [1], [0, 0, 1, 1], [], []>} : vector<256x128xbf16>, vector<128x128xbf16>, vector<256x128xf32> -> vector<256x128xf32>
    %79 = arith.addf %72, %78 : vector<256x128xf32>
    %c0_82 = arith.constant 0 : index
    %c0_83 = arith.constant 0 : index
    %c0_84 = arith.constant 0 : index
    %80 = vector.load %arg5[%c0_82, %c0_83, %c0_84] : memref<1x256x128xf32, #tpu.memory_space<vmem>>, vector<1x256x128xf32>
    %81 = vector.shape_cast %80 : vector<1x256x128xf32> to vector<256x128xf32>
    %82 = vector.shape_cast %79 : vector<256x128xf32> to vector<1x256x128xf32>
    tpu.vector_store %arg5[%c0_82, %c0_83, %c0_84], %82 {strides = array<i32>} : memref<1x256x128xf32, #tpu.memory_space<vmem>>, vector<1x256x128xf32>,
    %c0_85 = arith.constant 0 : index
    %c0_86 = arith.constant 0 : index
    %83 = vector.load %arg6[%c0_85, %c0_86] : memref<8x128xf32, #tpu.memory_space<vmem>>, vector<1x128xf32>
    %cst_87 = arith.constant dense<0.000000e+00> : vector<128xf32>
    %84 = vector.multi_reduction <add>, %79, %cst_87 [0] : vector<256x128xf32> to vector<128xf32>
    %85 = vector.shape_cast %84 : vector<128xf32> to vector<1x128xf32>
    %86 = arith.addf %83, %85 : vector<1x128xf32>
    %c0_88 = arith.constant 0 : index
    %c0_89 = arith.constant 0 : index
    %87 = vector.load %arg6[%c0_88, %c0_89] : memref<8x128xf32, #tpu.memory_space<vmem>>, vector<1x128xf32>
    tpu.vector_store %arg6[%c0_88, %c0_89], %86 {strides = array<i32>} : memref<8x128xf32, #tpu.memory_space<vmem>>, vector<1x128xf32>,
    %c1_90 = arith.constant 1 : index
    %c0_91 = arith.constant 0 : index
    %88 = vector.load %arg6[%c1_90, %c0_91] : memref<8x128xf32, #tpu.memory_space<vmem>>, vector<1x128xf32>
    %89 = arith.mulf %79, %79 : vector<256x128xf32>
    %cst_92 = arith.constant dense<0.000000e+00> : vector<128xf32>
    %90 = vector.multi_reduction <add>, %89, %cst_92 [0] : vector<256x128xf32> to vector<128xf32>
    %91 = vector.shape_cast %90 : vector<128xf32> to vector<1x128xf32>
    %92 = arith.addf %88, %91 : vector<1x128xf32>
    %c1_93 = arith.constant 1 : index
    %c0_94 = arith.constant 0 : index
    %93 = vector.load %arg6[%c1_93, %c0_94] : memref<8x128xf32, #tpu.memory_space<vmem>>, vector<1x128xf32>
    tpu.vector_store %arg6[%c1_93, %c0_94], %92 {strides = array<i32>} : memref<8x128xf32, #tpu.memory_space<vmem>>, vector<1x128xf32>,
    return
  }
  func.func @transform_0(%arg0: i32) -> (i32, i32, i32, i32) {
    %c0_i32 = arith.constant 0 : i32
    %c0_i32_0 = arith.constant 0 : i32
    %c0_i32_1 = arith.constant 0 : i32
    %c0_i32_2 = arith.constant 0 : i32
    return %arg0, %c0_i32, %c0_i32_0, %c0_i32_1 : i32, i32, i32, i32
  }
  func.func @transform_1(%arg0: i32) -> (i32, i32) {
    %c0_i32 = arith.constant 0 : i32
    %c0_i32_0 = arith.constant 0 : i32
    %c0_i32_1 = arith.constant 0 : i32
    return %c0_i32, %c0_i32_0 : i32, i32
  }
  func.func @transform_2(%arg0: i32) -> (i32, i32) {
    %c0_i32 = arith.constant 0 : i32
    %c0_i32_0 = arith.constant 0 : i32
    %c0_i32_1 = arith.constant 0 : i32
    return %c0_i32, %c0_i32_0 : i32, i32
  }
  func.func @transform_3(%arg0: i32) -> (i32, i32, i32, i32) {
    %c0_i32 = arith.constant 0 : i32
    %c0_i32_0 = arith.constant 0 : i32
    %c0_i32_1 = arith.constant 0 : i32
    %c0_i32_2 = arith.constant 0 : i32
    %c0_i32_3 = arith.constant 0 : i32
    return %c0_i32, %c0_i32_0, %c0_i32_1, %c0_i32_2 : i32, i32, i32, i32
  }
  func.func @transform_4(%arg0: i32) -> (i32, i32, i32) {
    %c0_i32 = arith.constant 0 : i32
    %c0_i32_0 = arith.constant 0 : i32
    %c0_i32_1 = arith.constant 0 : i32
    return %arg0, %c0_i32, %c0_i32_0 : i32, i32, i32
  }
  func.func @transform_5(%arg0: i32) -> (i32, i32) {
    %c0_i32 = arith.constant 0 : i32
    %c0_i32_0 = arith.constant 0 : i32
    %c0_i32_1 = arith.constant 0 : i32
    return %c0_i32, %c0_i32_0 : i32, i32
  }
}

module attributes {stable_mosaic.version = 11 : i64} {
  func.func @kernel(%arg0: i32, %arg1: memref<512x128xf32, #tpu.memory_space<vmem>>, %arg2: memref<1x128xf32, #tpu.memory_space<vmem>>, %arg3: memref<1x128xf32, #tpu.memory_space<vmem>>, %arg4: memref<128x128xbf16, #tpu.memory_space<vmem>>, %arg5: memref<512x128xf32, #tpu.memory_space<vmem>>, %arg6: memref<8x128xf32, #tpu.memory_space<vmem>>) attributes {dimension_semantics = [#tpu.dimension_semantics<arbitrary>], iteration_bounds = array<i64: 1>, scalar_prefetch = 0 : i64, scratch_operands = 0 : i64, tpu.core_type = #tpu.core_type<tc>, window_params = [{transform_indices = @transform_0, window_bounds = array<i64: 512, 128>}, {pipeline_mode = #tpu.pipeline_mode<synchronous>, transform_indices = @transform_1, window_bounds = array<i64: 1, 128>}, {pipeline_mode = #tpu.pipeline_mode<synchronous>, transform_indices = @transform_2, window_bounds = array<i64: 1, 128>}, {pipeline_mode = #tpu.pipeline_mode<synchronous>, transform_indices = @transform_3, window_bounds = array<i64: 128, 128>}, {transform_indices = @transform_4, window_bounds = array<i64: 512, 128>}, {pipeline_mode = #tpu.pipeline_mode<synchronous>, transform_indices = @transform_5, window_bounds = array<i64: 8, 128>}]} {
    %c0_i32 = arith.constant 0 : i32
    %0 = arith.cmpi eq, %arg0, %c0_i32 : i32
    %1 = arith.extui %0 : i1 to i32
    %c0_i32_0 = arith.constant 0 : i32
    %2 = arith.cmpi ne, %1, %c0_i32_0 : i32
    scf.if %2 {
      %cst_20 = arith.constant 0.000000e+00 : f32
      %27 = vector.broadcast %cst_20 : f32 to vector<8x128xf32>
      %c0_21 = arith.constant 0 : index
      %c0_22 = arith.constant 0 : index
      %28 = vector.load %arg6[%c0_21, %c0_22] : memref<8x128xf32, #tpu.memory_space<vmem>>, vector<8x128xf32>
      tpu.vector_store %arg6[%c0_21, %c0_22], %27 {strides = array<i32>} : memref<8x128xf32, #tpu.memory_space<vmem>>, vector<8x128xf32>,
    } else {
    }
    %c0 = arith.constant 0 : index
    %c0_1 = arith.constant 0 : index
    %3 = vector.load %arg1[%c0, %c0_1] : memref<512x128xf32, #tpu.memory_space<vmem>>, vector<512x128xf32>
    %c0_2 = arith.constant 0 : index
    %c0_3 = arith.constant 0 : index
    %4 = vector.load %arg2[%c0_2, %c0_3] : memref<1x128xf32, #tpu.memory_space<vmem>>, vector<1x128xf32>
    %5 = vector.broadcast %4 : vector<1x128xf32> to vector<512x128xf32>
    %6 = arith.mulf %3, %5 : vector<512x128xf32>
    %c0_4 = arith.constant 0 : index
    %c0_5 = arith.constant 0 : index
    %7 = vector.load %arg3[%c0_4, %c0_5] : memref<1x128xf32, #tpu.memory_space<vmem>>, vector<1x128xf32>
    %8 = vector.broadcast %7 : vector<1x128xf32> to vector<512x128xf32>
    %9 = arith.addf %6, %8 : vector<512x128xf32>
    %cst = arith.constant 0.000000e+00 : f32
    %10 = vector.broadcast %cst : f32 to vector<512x128xf32>
    %11 = arith.maximumf %9, %10 : vector<512x128xf32>
    %12 = arith.truncf %11 : vector<512x128xf32> to vector<512x128xbf16>
    %c0_6 = arith.constant 0 : index
    %c0_7 = arith.constant 0 : index
    %13 = vector.load %arg4[%c0_6, %c0_7] : memref<128x128xbf16, #tpu.memory_space<vmem>>, vector<128x128xbf16>
    %cst_8 = arith.constant dense<0.000000e+00> : vector<512x128xf32>
    %14 = tpu.matmul %12, %13, %cst_8 {dimension_numbers = #tpu.dot_dimension_numbers<[1], [0], [0], [1], [0, 0, 1, 1], [], []>} : vector<512x128xbf16>, vector<128x128xbf16>, vector<512x128xf32> -> vector<512x128xf32>
    %c0_9 = arith.constant 0 : index
    %c0_10 = arith.constant 0 : index
    %15 = vector.load %arg5[%c0_9, %c0_10] : memref<512x128xf32, #tpu.memory_space<vmem>>, vector<512x128xf32>
    tpu.vector_store %arg5[%c0_9, %c0_10], %14 {strides = array<i32>} : memref<512x128xf32, #tpu.memory_space<vmem>>, vector<512x128xf32>,
    %c0_11 = arith.constant 0 : index
    %c0_12 = arith.constant 0 : index
    %16 = vector.load %arg6[%c0_11, %c0_12] : memref<8x128xf32, #tpu.memory_space<vmem>>, vector<1x128xf32>
    %cst_13 = arith.constant dense<0.000000e+00> : vector<128xf32>
    %17 = vector.multi_reduction <add>, %14, %cst_13 [0] : vector<512x128xf32> to vector<128xf32>
    %18 = vector.shape_cast %17 : vector<128xf32> to vector<1x128xf32>
    %19 = arith.addf %16, %18 : vector<1x128xf32>
    %c0_14 = arith.constant 0 : index
    %c0_15 = arith.constant 0 : index
    %20 = vector.load %arg6[%c0_14, %c0_15] : memref<8x128xf32, #tpu.memory_space<vmem>>, vector<1x128xf32>
    tpu.vector_store %arg6[%c0_14, %c0_15], %19 {strides = array<i32>} : memref<8x128xf32, #tpu.memory_space<vmem>>, vector<1x128xf32>,
    %c1 = arith.constant 1 : index
    %c0_16 = arith.constant 0 : index
    %21 = vector.load %arg6[%c1, %c0_16] : memref<8x128xf32, #tpu.memory_space<vmem>>, vector<1x128xf32>
    %22 = arith.mulf %14, %14 : vector<512x128xf32>
    %cst_17 = arith.constant dense<0.000000e+00> : vector<128xf32>
    %23 = vector.multi_reduction <add>, %22, %cst_17 [0] : vector<512x128xf32> to vector<128xf32>
    %24 = vector.shape_cast %23 : vector<128xf32> to vector<1x128xf32>
    %25 = arith.addf %21, %24 : vector<1x128xf32>
    %c1_18 = arith.constant 1 : index
    %c0_19 = arith.constant 0 : index
    %26 = vector.load %arg6[%c1_18, %c0_19] : memref<8x128xf32, #tpu.memory_space<vmem>>, vector<1x128xf32>
    tpu.vector_store %arg6[%c1_18, %c0_19], %25 {strides = array<i32>} : memref<8x128xf32, #tpu.memory_space<vmem>>, vector<1x128xf32>,
    return
  }
  func.func @transform_0(%arg0: i32) -> (i32, i32) {
    %c0_i32 = arith.constant 0 : i32
    %c0_i32_0 = arith.constant 0 : i32
    return %arg0, %c0_i32 : i32, i32
  }
  func.func @transform_1(%arg0: i32) -> (i32, i32) {
    %c0_i32 = arith.constant 0 : i32
    %c0_i32_0 = arith.constant 0 : i32
    %c0_i32_1 = arith.constant 0 : i32
    return %c0_i32, %c0_i32_0 : i32, i32
  }
  func.func @transform_2(%arg0: i32) -> (i32, i32) {
    %c0_i32 = arith.constant 0 : i32
    %c0_i32_0 = arith.constant 0 : i32
    %c0_i32_1 = arith.constant 0 : i32
    return %c0_i32, %c0_i32_0 : i32, i32
  }
  func.func @transform_3(%arg0: i32) -> (i32, i32) {
    %c0_i32 = arith.constant 0 : i32
    %c0_i32_0 = arith.constant 0 : i32
    %c0_i32_1 = arith.constant 0 : i32
    return %c0_i32, %c0_i32_0 : i32, i32
  }
  func.func @transform_4(%arg0: i32) -> (i32, i32) {
    %c0_i32 = arith.constant 0 : i32
    %c0_i32_0 = arith.constant 0 : i32
    return %arg0, %c0_i32 : i32, i32
  }
  func.func @transform_5(%arg0: i32) -> (i32, i32) {
    %c0_i32 = arith.constant 0 : i32
    %c0_i32_0 = arith.constant 0 : i32
    %c0_i32_1 = arith.constant 0 : i32
    return %c0_i32, %c0_i32_0 : i32, i32
  }
}

module attributes {stable_mosaic.version = 11 : i64} {
  func.func @kernel(%arg0: i32, %arg1: memref<512x128xf32, #tpu.memory_space<vmem>>, %arg2: memref<1x128xf32, #tpu.memory_space<vmem>>, %arg3: memref<1x128xf32, #tpu.memory_space<vmem>>, %arg4: memref<512x128xf32, #tpu.memory_space<vmem>>, %arg5: memref<1x128xf32, #tpu.memory_space<vmem>>, %arg6: memref<1x128xf32, #tpu.memory_space<vmem>>, %arg7: memref<512x128xf32, #tpu.memory_space<vmem>>) attributes {dimension_semantics = [#tpu.dimension_semantics<parallel>], iteration_bounds = array<i64: 1>, scalar_prefetch = 0 : i64, scratch_operands = 0 : i64, tpu.core_type = #tpu.core_type<tc>, window_params = [{transform_indices = @transform_0, window_bounds = array<i64: 512, 128>}, {pipeline_mode = #tpu.pipeline_mode<synchronous>, transform_indices = @transform_1, window_bounds = array<i64: 1, 128>}, {pipeline_mode = #tpu.pipeline_mode<synchronous>, transform_indices = @transform_2, window_bounds = array<i64: 1, 128>}, {transform_indices = @transform_3, window_bounds = array<i64: 512, 128>}, {pipeline_mode = #tpu.pipeline_mode<synchronous>, transform_indices = @transform_4, window_bounds = array<i64: 1, 128>}, {pipeline_mode = #tpu.pipeline_mode<synchronous>, transform_indices = @transform_5, window_bounds = array<i64: 1, 128>}, {transform_indices = @transform_6, window_bounds = array<i64: 512, 128>}]} {
    %c0 = arith.constant 0 : index
    %c0_0 = arith.constant 0 : index
    %0 = vector.load %arg1[%c0, %c0_0] : memref<512x128xf32, #tpu.memory_space<vmem>>, vector<512x128xf32>
    %c0_1 = arith.constant 0 : index
    %c0_2 = arith.constant 0 : index
    %1 = vector.load %arg2[%c0_1, %c0_2] : memref<1x128xf32, #tpu.memory_space<vmem>>, vector<1x128xf32>
    %2 = vector.broadcast %1 : vector<1x128xf32> to vector<512x128xf32>
    %3 = arith.mulf %0, %2 : vector<512x128xf32>
    %c0_3 = arith.constant 0 : index
    %c0_4 = arith.constant 0 : index
    %4 = vector.load %arg3[%c0_3, %c0_4] : memref<1x128xf32, #tpu.memory_space<vmem>>, vector<1x128xf32>
    %5 = vector.broadcast %4 : vector<1x128xf32> to vector<512x128xf32>
    %6 = arith.addf %3, %5 : vector<512x128xf32>
    %c0_5 = arith.constant 0 : index
    %c0_6 = arith.constant 0 : index
    %7 = vector.load %arg4[%c0_5, %c0_6] : memref<512x128xf32, #tpu.memory_space<vmem>>, vector<512x128xf32>
    %c0_7 = arith.constant 0 : index
    %c0_8 = arith.constant 0 : index
    %8 = vector.load %arg5[%c0_7, %c0_8] : memref<1x128xf32, #tpu.memory_space<vmem>>, vector<1x128xf32>
    %9 = vector.broadcast %8 : vector<1x128xf32> to vector<512x128xf32>
    %10 = arith.mulf %7, %9 : vector<512x128xf32>
    %c0_9 = arith.constant 0 : index
    %c0_10 = arith.constant 0 : index
    %11 = vector.load %arg6[%c0_9, %c0_10] : memref<1x128xf32, #tpu.memory_space<vmem>>, vector<1x128xf32>
    %12 = vector.broadcast %11 : vector<1x128xf32> to vector<512x128xf32>
    %13 = arith.addf %10, %12 : vector<512x128xf32>
    %14 = arith.addf %6, %13 : vector<512x128xf32>
    %cst = arith.constant 0.000000e+00 : f32
    %15 = vector.broadcast %cst : f32 to vector<512x128xf32>
    %16 = arith.maximumf %14, %15 : vector<512x128xf32>
    %c0_11 = arith.constant 0 : index
    %c0_12 = arith.constant 0 : index
    %17 = vector.load %arg7[%c0_11, %c0_12] : memref<512x128xf32, #tpu.memory_space<vmem>>, vector<512x128xf32>
    tpu.vector_store %arg7[%c0_11, %c0_12], %16 {strides = array<i32>} : memref<512x128xf32, #tpu.memory_space<vmem>>, vector<512x128xf32>,
    return
  }
  func.func @transform_0(%arg0: i32) -> (i32, i32) {
    %c0_i32 = arith.constant 0 : i32
    %c0_i32_0 = arith.constant 0 : i32
    return %arg0, %c0_i32 : i32, i32
  }
  func.func @transform_1(%arg0: i32) -> (i32, i32) {
    %c0_i32 = arith.constant 0 : i32
    %c0_i32_0 = arith.constant 0 : i32
    %c0_i32_1 = arith.constant 0 : i32
    return %c0_i32, %c0_i32_0 : i32, i32
  }
  func.func @transform_2(%arg0: i32) -> (i32, i32) {
    %c0_i32 = arith.constant 0 : i32
    %c0_i32_0 = arith.constant 0 : i32
    %c0_i32_1 = arith.constant 0 : i32
    return %c0_i32, %c0_i32_0 : i32, i32
  }
  func.func @transform_3(%arg0: i32) -> (i32, i32) {
    %c0_i32 = arith.constant 0 : i32
    %c0_i32_0 = arith.constant 0 : i32
    return %arg0, %c0_i32 : i32, i32
  }
  func.func @transform_4(%arg0: i32) -> (i32, i32) {
    %c0_i32 = arith.constant 0 : i32
    %c0_i32_0 = arith.constant 0 : i32
    %c0_i32_1 = arith.constant 0 : i32
    return %c0_i32, %c0_i32_0 : i32, i32
  }
  func.func @transform_5(%arg0: i32) -> (i32, i32) {
    %c0_i32 = arith.constant 0 : i32
    %c0_i32_0 = arith.constant 0 : i32
    %c0_i32_1 = arith.constant 0 : i32
    return %c0_i32, %c0_i32_0 : i32, i32
  }
  func.func @transform_6(%arg0: i32) -> (i32, i32) {
    %c0_i32 = arith.constant 0 : i32
    %c0_i32_0 = arith.constant 0 : i32
    return %arg0, %c0_i32 : i32, i32
  }
}

</mosaic_0001>

<llo_original>
// kernel: bottleneck_forward.5
$region0: #{bottleneck_forward.5}
  #allocation0 [shape = 'u32[]', space=smem, size = 0x4, offset = 0x4, fixed_abs, tag = 'smem constant byte address 0x4 - core index']
  #allocation1 [shape = 'u32[144,128]{1,0:T(1,128)}', space=vmem, size = 0x12000, scoped, tag = 'internal scratch']
  %s0 = inlined_call_operand.vmem [shape: f32[512,128], index: 0, kind: input, shape index: {}]
  %s1 = inlined_call_operand.vmem [shape: bf16[128,128], index: 1, kind: input, shape index: {}]
  %s2 = inlined_call_operand.vmem [shape: f32[512,128], index: 2, kind: output, shape index: {0}]
  %s3 = inlined_call_operand.vmem [shape: f32[8,128], index: 3, kind: output, shape index: {1}]
  %4 = xla_tuple %s2, %s3
  %s5 = sld [smem:[#allocation0]]
  $region30: #{bottleneck_forward.5} parent=0
    _
  %s7 = ssub.s32 1, %s5
  %s8 = scalar_select 0, %s7, %s5
  // Predicated region
  $region2: #{bottleneck_forward.5} parent=0 // pred_check
    _
  $region3: #{bottleneck_forward.5} parent=0 // pred_check_branch
    %10 = sbr.rel (0) target = $region5
  $region4: #{bottleneck_forward.5} parent=0 // pred_region
    _
  $region5: #{bottleneck_forward.5} parent=0 // pred_fallthru
    _
  // Predicated region
  $region6: #{bottleneck_forward.5} parent=0 // pred_check
    _
  $region7: #{bottleneck_forward.5} parent=0 // pred_check_branch
    %12 = sbr.rel (0) target = $region9
  $region8: #{bottleneck_forward.5} parent=0 // pred_region
    _
  $region9: #{bottleneck_forward.5} parent=0 // pred_fallthru
    _
  %p14 = scmp.eq.s32.totalorder 0, 0
  // Predicated region
  $region10: #{bottleneck_forward.5} parent=0 // pred_check
    %p15 = pneg %p14
  $region11: #{bottleneck_forward.5} parent=0 // pred_check_branch
    %17 = sbr.rel (%p15) target = $region13
  $region12: #{bottleneck_forward.5} parent=0 // pred_region
    %18 = vst [vmem:[%s3] sm:$0xff] 0.0
  $region13: #{bottleneck_forward.5} parent=0 // pred_fallthru
    _
  %v19 = vld [vmem:[%s0] sm:$0xff]
  %v20 = vld [vmem:[%s0 + $0x8] sm:$0xff]
  %v21 = vld [vmem:[%s0 + $0x10] sm:$0xff]
  %v22 = vld [vmem:[%s0 + $0x18] sm:$0xff]
  %v23 = vld [vmem:[%s0 + $0x20] sm:$0xff]
  %v24 = vld [vmem:[%s0 + $0x28] sm:$0xff]
  %v25 = vld [vmem:[%s0 + $0x30] sm:$0xff]
  %v26 = vld [vmem:[%s0 + $0x38] sm:$0xff]
  %v27 = vld [vmem:[%s0 + $0x40] sm:$0xff]
  %v28 = vld [vmem:[%s0 + $0x48] sm:$0xff]
  %v29 = vld [vmem:[%s0 + $0x50] sm:$0xff]
  %v30 = vld [vmem:[%s0 + $0x58] sm:$0xff]
  %v31 = vld [vmem:[%s0 + $0x60] sm:$0xff]
  %v32 = vld [vmem:[%s0 + $0x68] sm:$0xff]
  %v33 = vld [vmem:[%s0 + $0x70] sm:$0xff]
  %v34 = vld [vmem:[%s0 + $0x78] sm:$0xff]
  %v35 = vld [vmem:[%s0 + $0x80] sm:$0xff]
  %v36 = vld [vmem:[%s0 + $0x88] sm:$0xff]
  %v37 = vld [vmem:[%s0 + $0x90] sm:$0xff]
  %v38 = vld [vmem:[%s0 + $0x98] sm:$0xff]
  %v39 = vld [vmem:[%s0 + $0xa0] sm:$0xff]
  %v40 = vld [vmem:[%s0 + $0xa8] sm:$0xff]
  %v41 = vld [vmem:[%s0 + $0xb0] sm:$0xff]
  %v42 = vld [vmem:[%s0 + $0xb8] sm:$0xff]
  %v43 = vld [vmem:[%s0 + $0xc0] sm:$0xff]
  %v44 = vld [vmem:[%s0 + $0xc8] sm:$0xff]
  %v45 = vld [vmem:[%s0 + $0xd0] sm:$0xff]
  %v46 = vld [vmem:[%s0 + $0xd8] sm:$0xff]
  %v47 = vld [vmem:[%s0 + $0xe0] sm:$0xff]
  %v48 = vld [vmem:[%s0 + $0xe8] sm:$0xff]
  %v49 = vld [vmem:[%s0 + $0xf0] sm:$0xff]
  %v50 = vld [vmem:[%s0 + $0xf8] sm:$0xff]
  %v51 = vld [vmem:[%s0 + $0x100] sm:$0xff]
  %v52 = vld [vmem:[%s0 + $0x108] sm:$0xff]
  %v53 = vld [vmem:[%s0 + $0x110] sm:$0xff]
  %v54 = vld [vmem:[%s0 + $0x118] sm:$0xff]
  %v55 = vld [vmem:[%s0 + $0x120] sm:$0xff]
  %v56 = vld [vmem:[%s0 + $0x128] sm:$0xff]
  %v57 = vld [vmem:[%s0 + $0x130] sm:$0xff]
  %v58 = vld [vmem:[%s0 + $0x138] sm:$0xff]
  %v59 = vld [vmem:[%s0 + $0x140] sm:$0xff]
  %v60 = vld [vmem:[%s0 + $0x148] sm:$0xff]
  %v61 = vld [vmem:[%s0 + $0x150] sm:$0xff]
  %v62 = vld [vmem:[%s0 + $0x158] sm:$0xff]
  %v63 = vld [vmem:[%s0 + $0x160] sm:$0xff]
  %v64 = vld [vmem:[%s0 + $0x168] sm:$0xff]
  %v65 = vld [vmem:[%s0 + $0x170] sm:$0xff]
  %v66 = vld [vmem:[%s0 + $0x178] sm:$0xff]
  %v67 = vld [vmem:[%s0 + $0x180] sm:$0xff]
  %v68 = vld [vmem:[%s0 + $0x188] sm:$0xff]
  %v69 = vld [vmem:[%s0 + $0x190] sm:$0xff]
  %v70 = vld [vmem:[%s0 + $0x198] sm:$0xff]
  %v71 = vld [vmem:[%s0 + $0x1a0] sm:$0xff]
  %v72 = vld [vmem:[%s0 + $0x1a8] sm:$0xff]
  %v73 = vld [vmem:[%s0 + $0x1b0] sm:$0xff]
  %v74 = vld [vmem:[%s0 + $0x1b8] sm:$0xff]
  %v75 = vld [vmem:[%s0 + $0x1c0] sm:$0xff]
  %v76 = vld [vmem:[%s0 + $0x1c8] sm:$0xff]
  %v77 = vld [vmem:[%s0 + $0x1d0] sm:$0xff]
  %v78 = vld [vmem:[%s0 + $0x1d8] sm:$0xff]
  %v79 = vld [vmem:[%s0 + $0x1e0] sm:$0xff]
  %v80 = vld [vmem:[%s0 + $0x1e8] sm:$0xff]
  %v81 = vld [vmem:[%s0 + $0x1f0] sm:$0xff]
  %v82 = vld [vmem:[%s0 + $0x1f8] sm:$0xff]
  %v83 = vpack.c.bf16 %v20, %v19
  %v84 = vpack.c.bf16 %v22, %v21
  %v85 = vpack.c.bf16 %v24, %v23
  %v86 = vpack.c.bf16 %v26, %v25
  %v87 = vpack.c.bf16 %v28, %v27
  %v88 = vpack.c.bf16 %v30, %v29
  %v89 = vpack.c.bf16 %v32, %v31
  %v90 = vpack.c.bf16 %v34, %v33
  %v91 = vpack.c.bf16 %v36, %v35
  %v92 = vpack.c.bf16 %v38, %v37
  %v93 = vpack.c.bf16 %v40, %v39
  %v94 = vpack.c.bf16 %v42, %v41
  %v95 = vpack.c.bf16 %v44, %v43
  %v96 = vpack.c.bf16 %v46, %v45
  %v97 = vpack.c.bf16 %v48, %v47
  %v98 = vpack.c.bf16 %v50, %v49
  %v99 = vpack.c.bf16 %v52, %v51
  %v100 = vpack.c.bf16 %v54, %v53
  %v101 = vpack.c.bf16 %v56, %v55
  %v102 = vpack.c.bf16 %v58, %v57
  %v103 = vpack.c.bf16 %v60, %v59
  %v104 = vpack.c.bf16 %v62, %v61
  %v105 = vpack.c.bf16 %v64, %v63
  %v106 = vpack.c.bf16 %v66, %v65
  %v107 = vpack.c.bf16 %v68, %v67
  %v108 = vpack.c.bf16 %v70, %v69
  %v109 = vpack.c.bf16 %v72, %v71
  %v110 = vpack.c.bf16 %v74, %v73
  %v111 = vpack.c.bf16 %v76, %v75
  %v112 = vpack.c.bf16 %v78, %v77
  %v113 = vpack.c.bf16 %v80, %v79
  %v114 = vpack.c.bf16 %v82, %v81
  %v115 = vld [vmem:[%s1] sm:$0xf]
  %v116 = vld [vmem:[%s1 + $0x4] sm:$0xf]
  %v117 = vld [vmem:[%s1 + $0x8] sm:$0xf]
  %v118 = vld [vmem:[%s1 + $0xc] sm:$0xf]
  %v119 = vld [vmem:[%s1 + $0x10] sm:$0xf]
  %v120 = vld [vmem:[%s1 + $0x14] sm:$0xf]
  %v121 = vld [vmem:[%s1 + $0x18] sm:$0xf]
  %v122 = vld [vmem:[%s1 + $0x1c] sm:$0xf]
  %v123 = vld [vmem:[%s1 + $0x20] sm:$0xf]
  %v124 = vld [vmem:[%s1 + $0x24] sm:$0xf]
  %v125 = vld [vmem:[%s1 + $0x28] sm:$0xf]
  %v126 = vld [vmem:[%s1 + $0x2c] sm:$0xf]
  %v127 = vld [vmem:[%s1 + $0x30] sm:$0xf]
  %v128 = vld [vmem:[%s1 + $0x34] sm:$0xf]
  %v129 = vld [vmem:[%s1 + $0x38] sm:$0xf]
  %v130 = vld [vmem:[%s1 + $0x3c] sm:$0xf]
  %v147 = vunpack.c.l.b16 %v115
  %v148 = vunpack.c.l.b16 %v116
  %v149 = vunpack.c.l.b16 %v117
  %v150 = vunpack.c.l.b16 %v118
  %v151 = vunpack.c.l.b16 %v119
  %v152 = vunpack.c.l.b16 %v120
  %v153 = vunpack.c.l.b16 %v121
  %v154 = vunpack.c.l.b16 %v122
  %v155 = vunpack.c.l.b16 %v123
  %v156 = vunpack.c.l.b16 %v124
  %v157 = vunpack.c.l.b16 %v125
  %v158 = vunpack.c.l.b16 %v126
  %v159 = vunpack.c.l.b16 %v127
  %v160 = vunpack.c.l.b16 %v128
  %v161 = vunpack.c.l.b16 %v129
  %v162 = vunpack.c.l.b16 %v130
  %v163 = vpack.c.b16 %v148, %v147
  %v164 = vpack.c.b16 %v150, %v149
  %v165 = vpack.c.b16 %v152, %v151
  %v166 = vpack.c.b16 %v154, %v153
  %v167 = vpack.c.b16 %v156, %v155
  %v168 = vpack.c.b16 %v158, %v157
  %v169 = vpack.c.b16 %v160, %v159
  %v170 = vpack.c.b16 %v162, %v161
  %179 = vmatprep.subr.bf16.mxu0 0
  %180 = vmatpush1.bf16.msra.mxu0 %v163
  %181 = vmatprep.subr.bf16.mxu0 0
  %182 = vmatpush1.bf16.msra.mxu0 %v164
  %183 = vmatprep.subr.bf16.mxu0 0
  %184 = vmatpush1.bf16.msra.mxu0 %v165
  %185 = vmatprep.subr.bf16.mxu0 0
  %186 = vmatpush1.bf16.msra.mxu0 %v166
  %187 = vmatprep.subr.bf16.mxu0 0
  %188 = vmatpush1.bf16.msra.mxu0 %v167
  %189 = vmatprep.subr.bf16.mxu0 0
  %190 = vmatpush1.bf16.msra.mxu0 %v168
  %191 = vmatprep.subr.bf16.mxu0 0
  %192 = vmatpush1.bf16.msra.mxu0 %v169
  %193 = vmatprep.subr.bf16.mxu0 0
  %194 = vmatpush1.bf16.msra.mxu0 %v170
  %195 = vmatprep.subr.bf16.mxu0 0
  %196 = vmatpush1.bf16.msra.mxu0 0
  %197 = vmatprep.subr.bf16.mxu0 0
  %198 = vmatpush1.bf16.msra.mxu0 0
  %199 = vmatprep.subr.bf16.mxu0 0
  %200 = vmatpush1.bf16.msra.mxu0 0
  %201 = vmatprep.subr.bf16.mxu0 0
  %202 = vmatpush1.bf16.msra.mxu0 0
  %203 = vmatprep.subr.bf16.mxu0 0
  %204 = vmatpush1.bf16.msra.mxu0 0
  %205 = vmatprep.subr.bf16.mxu0 0
  %206 = vmatpush1.bf16.msra.mxu0 0
  %207 = vmatprep.subr.bf16.mxu0 0
  %208 = vmatpush1.bf16.msra.mxu0 0
  %209 = vmatprep.subr.bf16.mxu0 0
  %210 = vmatpush1.bf16.msra.mxu0 0
  %211 = vmatprep.mubr.bf16.mxu0 0
  %212 = vmatmul.mubr.bf16.gmra.mrb[0].mxu0 %v83
  %v213 = vpop.f32.mrb[0].mxu0
  %v214 = vadd.f32 0.0, %v213
  %v215 = vpop.f32.mrb[0].mxu0
  %v216 = vpop.f32.mrb[0].mxu0
  %v217 = vadd.f32 0.0, %v216
  %v218 = vpop.f32.mrb[0].mxu0
  %219 = vmatprep.mubr.bf16.mxu0 0
  %220 = vmatmul.mubr.bf16.gmra.mrb[0].mxu0 %v84
  %v221 = vpop.f32.mrb[0].mxu0
  %v222 = vadd.f32 0.0, %v221
  %v223 = vpop.f32.mrb[0].mxu0
  %v224 = vpop.f32.mrb[0].mxu0
  %v225 = vadd.f32 0.0, %v224
  %v226 = vpop.f32.mrb[0].mxu0
  %227 = vmatprep.mubr.bf16.mxu0 0
  %228 = vmatmul.mubr.bf16.gmra.mrb[0].mxu0 %v85
  %v229 = vpop.f32.mrb[0].mxu0
  %v230 = vadd.f32 0.0, %v229
  %v231 = vpop.f32.mrb[0].mxu0
  %v232 = vpop.f32.mrb[0].mxu0
  %v233 = vadd.f32 0.0, %v232
  %v234 = vpop.f32.mrb[0].mxu0
  %235 = vmatprep.mubr.bf16.mxu0 0
  %236 = vmatmul.mubr.bf16.gmra.mrb[0].mxu0 %v86
  %v237 = vpop.f32.mrb[0].mxu0
  %v238 = vadd.f32 0.0, %v237
  %v239 = vpop.f32.mrb[0].mxu0
  %v240 = vpop.f32.mrb[0].mxu0
  %v241 = vadd.f32 0.0, %v240
  %v242 = vpop.f32.mrb[0].mxu0
  %243 = vmatprep.mubr.bf16.mxu0 0
  %244 = vmatmul.mubr.bf16.gmra.mrb[0].mxu0 %v87
  %v245 = vpop.f32.mrb[0].mxu0
  %v246 = vadd.f32 0.0, %v245
  %v247 = vpop.f32.mrb[0].mxu0
  %v248 = vpop.f32.mrb[0].mxu0
  %v249 = vadd.f32 0.0, %v248
  %v250 = vpop.f32.mrb[0].mxu0
  %251 = vmatprep.mubr.bf16.mxu0 0
  %252 = vmatmul.mubr.bf16.gmra.mrb[0].mxu0 %v88
  %v253 = vpop.f32.mrb[0].mxu0
  %v254 = vadd.f32 0.0, %v253
  %v255 = vpop.f32.mrb[0].mxu0
  %v256 = vpop.f32.mrb[0].mxu0
  %v257 = vadd.f32 0.0, %v256
  %v258 = vpop.f32.mrb[0].mxu0
  %259 = vmatprep.mubr.bf16.mxu0 0
  %260 = vmatmul.mubr.bf16.gmra.mrb[0].mxu0 %v89
  %v261 = vpop.f32.mrb[0].mxu0
  %v262 = vadd.f32 0.0, %v261
  %v263 = vpop.f32.mrb[0].mxu0
  %v264 = vpop.f32.mrb[0].mxu0
  %v265 = vadd.f32 0.0, %v264
  %v266 = vpop.f32.mrb[0].mxu0
  %267 = vmatprep.mubr.bf16.mxu0 0
  %268 = vmatmul.mubr.bf16.gmra.mrb[0].mxu0 %v90
  %v269 = vpop.f32.mrb[0].mxu0
  %v270 = vadd.f32 0.0, %v269
  %v271 = vpop.f32.mrb[0].mxu0
  %v272 = vpop.f32.mrb[0].mxu0
  %v273 = vadd.f32 0.0, %v272
  %v274 = vpop.f32.mrb[0].mxu0
  %275 = vmatprep.mubr.bf16.mxu0 0
  %276 = vmatmul.mubr.bf16.gmra.mrb[0].mxu0 %v91
  %v277 = vpop.f32.mrb[0].mxu0
  %v278 = vadd.f32 0.0, %v277
  %v279 = vpop.f32.mrb[0].mxu0
  %v280 = vpop.f32.mrb[0].mxu0
  %v281 = vadd.f32 0.0, %v280
  %v282 = vpop.f32.mrb[0].mxu0
  %283 = vmatprep.mubr.bf16.mxu0 0
  %284 = vmatmul.mubr.bf16.gmra.mrb[0].mxu0 %v92
  %v285 = vpop.f32.mrb[0].mxu0
  %v286 = vadd.f32 0.0, %v285
  %v287 = vpop.f32.mrb[0].mxu0
  %v288 = vpop.f32.mrb[0].mxu0
  %v289 = vadd.f32 0.0, %v288
  %v290 = vpop.f32.mrb[0].mxu0
  %291 = vmatprep.mubr.bf16.mxu0 0
  %292 = vmatmul.mubr.bf16.gmra.mrb[0].mxu0 %v93
  %v293 = vpop.f32.mrb[0].mxu0
  %v294 = vadd.f32 0.0, %v293
  %v295 = vpop.f32.mrb[0].mxu0
  %v296 = vpop.f32.mrb[0].mxu0
  %v297 = vadd.f32 0.0, %v296
  %v298 = vpop.f32.mrb[0].mxu0
  %299 = vmatprep.mubr.bf16.mxu0 0
  %300 = vmatmul.mubr.bf16.gmra.mrb[0].mxu0 %v94
  %v301 = vpop.f32.mrb[0].mxu0
  %v302 = vadd.f32 0.0, %v301
  %v303 = vpop.f32.mrb[0].mxu0
  %v304 = vpop.f32.mrb[0].mxu0
  %v305 = vadd.f32 0.0, %v304
  %v306 = vpop.f32.mrb[0].mxu0
  %307 = vmatprep.mubr.bf16.mxu0 0
  %308 = vmatmul.mubr.bf16.gmra.mrb[0].mxu0 %v95
  %v309 = vpop.f32.mrb[0].mxu0
  %v310 = vadd.f32 0.0, %v309
  %v311 = vpop.f32.mrb[0].mxu0
  %v312 = vpop.f32.mrb[0].mxu0
  %v313 = vadd.f32 0.0, %v312
  %v314 = vpop.f32.mrb[0].mxu0
  %315 = vmatprep.mubr.bf16.mxu0 0
  %316 = vmatmul.mubr.bf16.gmra.mrb[0].mxu0 %v96
  %v317 = vpop.f32.mrb[0].mxu0
  %v318 = vadd.f32 0.0, %v317
  %v319 = vpop.f32.mrb[0].mxu0
  %v320 = vpop.f32.mrb[0].mxu0
  %v321 = vadd.f32 0.0, %v320
  %v322 = vpop.f32.mrb[0].mxu0
  %323 = vmatprep.mubr.bf16.mxu0 0
  %324 = vmatmul.mubr.bf16.gmra.mrb[0].mxu0 %v97
  %v325 = vpop.f32.mrb[0].mxu0
  %v326 = vadd.f32 0.0, %v325
  %v327 = vpop.f32.mrb[0].mxu0
  %v328 = vpop.f32.mrb[0].mxu0
  %v329 = vadd.f32 0.0, %v328
  %v330 = vpop.f32.mrb[0].mxu0
  %331 = vmatprep.mubr.bf16.mxu0 0
  %332 = vmatmul.mubr.bf16.gmra.mrb[0].mxu0 %v98
  %v333 = vpop.f32.mrb[0].mxu0
  %v334 = vadd.f32 0.0, %v333
  %v335 = vpop.f32.mrb[0].mxu0
  %v336 = vpop.f32.mrb[0].mxu0
  %v337 = vadd.f32 0.0, %v336
  %v338 = vpop.f32.mrb[0].mxu0
  %339 = vmatprep.mubr.bf16.mxu0 0
  %340 = vmatmul.mubr.bf16.gmra.mrb[0].mxu0 %v99
  %v341 = vpop.f32.mrb[0].mxu0
  %v342 = vadd.f32 0.0, %v341
  %v343 = vpop.f32.mrb[0].mxu0
  %v344 = vpop.f32.mrb[0].mxu0
  %v345 = vadd.f32 0.0, %v344
  %v346 = vpop.f32.mrb[0].mxu0
  %347 = vmatprep.mubr.bf16.mxu0 0
  %348 = vmatmul.mubr.bf16.gmra.mrb[0].mxu0 %v100
  %v349 = vpop.f32.mrb[0].mxu0
  %v350 = vadd.f32 0.0, %v349
  %v351 = vpop.f32.mrb[0].mxu0
  %v352 = vpop.f32.mrb[0].mxu0
  %v353 = vadd.f32 0.0, %v352
  %v354 = vpop.f32.mrb[0].mxu0
  %355 = vmatprep.mubr.bf16.mxu0 0
  %356 = vmatmul.mubr.bf16.gmra.mrb[0].mxu0 %v101
  %v357 = vpop.f32.mrb[0].mxu0
  %v358 = vadd.f32 0.0, %v357
  %v359 = vpop.f32.mrb[0].mxu0
  %v360 = vpop.f32.mrb[0].mxu0
  %v361 = vadd.f32 0.0, %v360
  %v362 = vpop.f32.mrb[0].mxu0
  %363 = vmatprep.mubr.bf16.mxu0 0
  %364 = vmatmul.mubr.bf16.gmra.mrb[0].mxu0 %v102
  %v365 = vpop.f32.mrb[0].mxu0
  %v366 = vadd.f32 0.0, %v365
  %v367 = vpop.f32.mrb[0].mxu0
  %v368 = vpop.f32.mrb[0].mxu0
  %v369 = vadd.f32 0.0, %v368
  %v370 = vpop.f32.mrb[0].mxu0
  %371 = vmatprep.mubr.bf16.mxu0 0
  %372 = vmatmul.mubr.bf16.gmra.mrb[0].mxu0 %v103
  %v373 = vpop.f32.mrb[0].mxu0
  %v374 = vadd.f32 0.0, %v373
  %v375 = vpop.f32.mrb[0].mxu0
  %v376 = vpop.f32.mrb[0].mxu0
  %v377 = vadd.f32 0.0, %v376
  %v378 = vpop.f32.mrb[0].mxu0
  %379 = vmatprep.mubr.bf16.mxu0 0
  %380 = vmatmul.mubr.bf16.gmra.mrb[0].mxu0 %v104
  %v381 = vpop.f32.mrb[0].mxu0
  %v382 = vadd.f32 0.0, %v381
  %v383 = vpop.f32.mrb[0].mxu0
  %v384 = vpop.f32.mrb[0].mxu0
  %v385 = vadd.f32 0.0, %v384
  %v386 = vpop.f32.mrb[0].mxu0
  %387 = vmatprep.mubr.bf16.mxu0 0
  %388 = vmatmul.mubr.bf16.gmra.mrb[0].mxu0 %v105
  %v389 = vpop.f32.mrb[0].mxu0
  %v390 = vadd.f32 0.0, %v389
  %v391 = vpop.f32.mrb[0].mxu0
  %v392 = vpop.f32.mrb[0].mxu0
  %v393 = vadd.f32 0.0, %v392
  %v394 = vpop.f32.mrb[0].mxu0
  %395 = vmatprep.mubr.bf16.mxu0 0
  %396 = vmatmul.mubr.bf16.gmra.mrb[0].mxu0 %v106
  %v397 = vpop.f32.mrb[0].mxu0
  %v398 = vadd.f32 0.0, %v397
  %v399 = vpop.f32.mrb[0].mxu0
  %v400 = vpop.f32.mrb[0].mxu0
  %v401 = vadd.f32 0.0, %v400
  %v402 = vpop.f32.mrb[0].mxu0
  %403 = vmatprep.mubr.bf16.mxu0 0
  %404 = vmatmul.mubr.bf16.gmra.mrb[0].mxu0 %v107
  %v405 = vpop.f32.mrb[0].mxu0
  %v406 = vadd.f32 0.0, %v405
  %v407 = vpop.f32.mrb[0].mxu0
  %v408 = vpop.f32.mrb[0].mxu0
  %v409 = vadd.f32 0.0, %v408
  %v410 = vpop.f32.mrb[0].mxu0
  %411 = vmatprep.mubr.bf16.mxu0 0
  %412 = vmatmul.mubr.bf16.gmra.mrb[0].mxu0 %v108
  %v413 = vpop.f32.mrb[0].mxu0
  %v414 = vadd.f32 0.0, %v413
  %v415 = vpop.f32.mrb[0].mxu0
  %v416 = vpop.f32.mrb[0].mxu0
  %v417 = vadd.f32 0.0, %v416
  %v418 = vpop.f32.mrb[0].mxu0
  %419 = vmatprep.mubr.bf16.mxu0 0
  %420 = vmatmul.mubr.bf16.gmra.mrb[0].mxu0 %v109
  %v421 = vpop.f32.mrb[0].mxu0
  %v422 = vadd.f32 0.0, %v421
  %v423 = vpop.f32.mrb[0].mxu0
  %v424 = vpop.f32.mrb[0].mxu0
  %v425 = vadd.f32 0.0, %v424
  %v426 = vpop.f32.mrb[0].mxu0
  %427 = vmatprep.mubr.bf16.mxu0 0
  %428 = vmatmul.mubr.bf16.gmra.mrb[0].mxu0 %v110
  %v429 = vpop.f32.mrb[0].mxu0
  %v430 = vadd.f32 0.0, %v429
  %v431 = vpop.f32.mrb[0].mxu0
  %v432 = vpop.f32.mrb[0].mxu0
  %v433 = vadd.f32 0.0, %v432
  %v434 = vpop.f32.mrb[0].mxu0
  %435 = vmatprep.mubr.bf16.mxu0 0
  %436 = vmatmul.mubr.bf16.gmra.mrb[0].mxu0 %v111
  %v437 = vpop.f32.mrb[0].mxu0
  %v438 = vadd.f32 0.0, %v437
  %v439 = vpop.f32.mrb[0].mxu0
  %v440 = vpop.f32.mrb[0].mxu0
  %v441 = vadd.f32 0.0, %v440
  %v442 = vpop.f32.mrb[0].mxu0
  %443 = vmatprep.mubr.bf16.mxu0 0
  %444 = vmatmul.mubr.bf16.gmra.mrb[0].mxu0 %v112
  %v445 = vpop.f32.mrb[0].mxu0
  %v446 = vadd.f32 0.0, %v445
  %v447 = vpop.f32.mrb[0].mxu0
  %v448 = vpop.f32.mrb[0].mxu0
  %v449 = vadd.f32 0.0, %v448
  %v450 = vpop.f32.mrb[0].mxu0
  %451 = vmatprep.mubr.bf16.mxu0 0
  %452 = vmatmul.mubr.bf16.gmra.mrb[0].mxu0 %v113
  %v453 = vpop.f32.mrb[0].mxu0
  %v454 = vadd.f32 0.0, %v453
  %v455 = vpop.f32.mrb[0].mxu0
  %v456 = vpop.f32.mrb[0].mxu0
  %v457 = vadd.f32 0.0, %v456
  %v458 = vpop.f32.mrb[0].mxu0
  %459 = vmatprep.mubr.bf16.mxu0 0
  %460 = vmatmul.mubr.bf16.gmra.mrb[0].mxu0 %v114
  %v461 = vpop.f32.mrb[0].mxu0
  %v462 = vadd.f32 0.0, %v461
  %v463 = vpop.f32.mrb[0].mxu0
  %v464 = vpop.f32.mrb[0].mxu0
  %v465 = vadd.f32 0.0, %v464
  %v466 = vpop.f32.mrb[0].mxu0
  %467 = vdwg.mxu0
  %468 = vst [vmem:[%s2] sm:$0xff] %v214
  %469 = vst [vmem:[%s2 + $0x8] sm:$0xff] %v217
  %470 = vst [vmem:[%s2 + $0x10] sm:$0xff] %v222
  %471 = vst [vmem:[%s2 + $0x18] sm:$0xff] %v225
  %472 = vst [vmem:[%s2 + $0x20] sm:$0xff] %v230
  %473 = vst [vmem:[%s2 + $0x28] sm:$0xff] %v233
  %474 = vst [vmem:[%s2 + $0x30] sm:$0xff] %v238
  %475 = vst [vmem:[%s2 + $0x38] sm:$0xff] %v241
  %476 = vst [vmem:[%s2 + $0x40] sm:$0xff] %v246
  %477 = vst [vmem:[%s2 + $0x48] sm:$0xff] %v249
  %478 = vst [vmem:[%s2 + $0x50] sm:$0xff] %v254
  %479 = vst [vmem:[%s2 + $0x58] sm:$0xff] %v257
  %480 = vst [vmem:[%s2 + $0x60] sm:$0xff] %v262
  %481 = vst [vmem:[%s2 + $0x68] sm:$0xff] %v265
  %482 = vst [vmem:[%s2 + $0x70] sm:$0xff] %v270
  %483 = vst [vmem:[%s2 + $0x78] sm:$0xff] %v273
  %484 = vst [vmem:[%s2 + $0x80] sm:$0xff] %v278
  %485 = vst [vmem:[%s2 + $0x88] sm:$0xff] %v281
  %486 = vst [vmem:[%s2 + $0x90] sm:$0xff] %v286
  %487 = vst [vmem:[%s2 + $0x98] sm:$0xff] %v289
  %488 = vst [vmem:[%s2 + $0xa0] sm:$0xff] %v294
  %489 = vst [vmem:[%s2 + $0xa8] sm:$0xff] %v297
  %490 = vst [vmem:[%s2 + $0xb0] sm:$0xff] %v302
  %491 = vst [vmem:[%s2 + $0xb8] sm:$0xff] %v305
  %492 = vst [vmem:[%s2 + $0xc0] sm:$0xff] %v310
  %493 = vst [vmem:[%s2 + $0xc8] sm:$0xff] %v313
  %494 = vst [vmem:[%s2 + $0xd0] sm:$0xff] %v318
  %495 = vst [vmem:[%s2 + $0xd8] sm:$0xff] %v321
  %496 = vst [vmem:[%s2 + $0xe0] sm:$0xff] %v326
  %497 = vst [vmem:[%s2 + $0xe8] sm:$0xff] %v329
  %498 = vst [vmem:[%s2 + $0xf0] sm:$0xff] %v334
  %499 = vst [vmem:[%s2 + $0xf8] sm:$0xff] %v337
  %500 = vst [vmem:[%s2 + $0x100] sm:$0xff] %v342
  %501 = vst [vmem:[%s2 + $0x108] sm:$0xff] %v345
  %502 = vst [vmem:[%s2 + $0x110] sm:$0xff] %v350
  %503 = vst [vmem:[%s2 + $0x118] sm:$0xff] %v353
  %504 = vst [vmem:[%s2 + $0x120] sm:$0xff] %v358
  %505 = vst [vmem:[%s2 + $0x128] sm:$0xff] %v361
  %506 = vst [vmem:[%s2 + $0x130] sm:$0xff] %v366
  %507 = vst [vmem:[%s2 + $0x138] sm:$0xff] %v369
  %508 = vst [vmem:[%s2 + $0x140] sm:$0xff] %v374
  %509 = vst [vmem:[%s2 + $0x148] sm:$0xff] %v377
  %510 = vst [vmem:[%s2 + $0x150] sm:$0xff] %v382
  %511 = vst [vmem:[%s2 + $0x158] sm:$0xff] %v385
  %512 = vst [vmem:[%s2 + $0x160] sm:$0xff] %v390
  %513 = vst [vmem:[%s2 + $0x168] sm:$0xff] %v393
  %514 = vst [vmem:[%s2 + $0x170] sm:$0xff] %v398
  %515 = vst [vmem:[%s2 + $0x178] sm:$0xff] %v401
  %516 = vst [vmem:[%s2 + $0x180] sm:$0xff] %v406
  %517 = vst [vmem:[%s2 + $0x188] sm:$0xff] %v409
  %518 = vst [vmem:[%s2 + $0x190] sm:$0xff] %v414
  %519 = vst [vmem:[%s2 + $0x198] sm:$0xff] %v417
  %520 = vst [vmem:[%s2 + $0x1a0] sm:$0xff] %v422
  %521 = vst [vmem:[%s2 + $0x1a8] sm:$0xff] %v425
  %522 = vst [vmem:[%s2 + $0x1b0] sm:$0xff] %v430
  %523 = vst [vmem:[%s2 + $0x1b8] sm:$0xff] %v433
  %524 = vst [vmem:[%s2 + $0x1c0] sm:$0xff] %v438
  %525 = vst [vmem:[%s2 + $0x1c8] sm:$0xff] %v441
  %526 = vst [vmem:[%s2 + $0x1d0] sm:$0xff] %v446
  %527 = vst [vmem:[%s2 + $0x1d8] sm:$0xff] %v449
  %528 = vst [vmem:[%s2 + $0x1e0] sm:$0xff] %v454
  %529 = vst [vmem:[%s2 + $0x1e8] sm:$0xff] %v457
  %530 = vst [vmem:[%s2 + $0x1f0] sm:$0xff] %v462
  %531 = vst [vmem:[%s2 + $0x1f8] sm:$0xff] %v465
  %v532 = vld [vmem:[%s3] sm:$0x1]
  %v533 = vadd.f32 %v214, %v217
  %v534 = vadd.f32 %v533, %v222
  %v535 = vadd.f32 %v534, %v225
  %v536 = vadd.f32 %v535, %v230
  %v537 = vadd.f32 %v536, %v233
  %v538 = vadd.f32 %v537, %v238
  %v539 = vadd.f32 %v538, %v241
  %v540 = vadd.f32 %v539, %v246
  %v541 = vadd.f32 %v540, %v249
  %v542 = vadd.f32 %v541, %v254
  %v543 = vadd.f32 %v542, %v257
  %v544 = vadd.f32 %v543, %v262
  %v545 = vadd.f32 %v544, %v265
  %v546 = vadd.f32 %v545, %v270
  %v547 = vadd.f32 %v546, %v273
  %v548 = vadd.f32 %v547, %v278
  %v549 = vadd.f32 %v548, %v281
  %v550 = vadd.f32 %v549, %v286
  %v551 = vadd.f32 %v550, %v289
  %v552 = vadd.f32 %v551, %v294
  %v553 = vadd.f32 %v552, %v297
  %v554 = vadd.f32 %v553, %v302
  %v555 = vadd.f32 %v554, %v305
  %v556 = vadd.f32 %v555, %v310
  %v557 = vadd.f32 %v556, %v313
  %v558 = vadd.f32 %v557, %v318
  %v559 = vadd.f32 %v558, %v321
  %v560 = vadd.f32 %v559, %v326
  %v561 = vadd.f32 %v560, %v329
  %v562 = vadd.f32 %v561, %v334
  %v563 = vadd.f32 %v562, %v337
  %v564 = vadd.f32 %v563, %v342
  %v565 = vadd.f32 %v564, %v345
  %v566 = vadd.f32 %v565, %v350
  %v567 = vadd.f32 %v566, %v353
  %v568 = vadd.f32 %v567, %v358
  %v569 = vadd.f32 %v568, %v361
  %v570 = vadd.f32 %v569, %v366
  %v571 = vadd.f32 %v570, %v369
  %v572 = vadd.f32 %v571, %v374
  %v573 = vadd.f32 %v572, %v377
  %v574 = vadd.f32 %v573, %v382
  %v575 = vadd.f32 %v574, %v385
  %v576 = vadd.f32 %v575, %v390
  %v577 = vadd.f32 %v576, %v393
  %v578 = vadd.f32 %v577, %v398
  %v579 = vadd.f32 %v578, %v401
  %v580 = vadd.f32 %v579, %v406
  %v581 = vadd.f32 %v580, %v409
  %v582 = vadd.f32 %v581, %v414
  %v583 = vadd.f32 %v582, %v417
  %v584 = vadd.f32 %v583, %v422
  %v585 = vadd.f32 %v584, %v425
  %v586 = vadd.f32 %v585, %v430
  %v587 = vadd.f32 %v586, %v433
  %v588 = vadd.f32 %v587, %v438
  %v589 = vadd.f32 %v588, %v441
  %v590 = vadd.f32 %v589, %v446
  %v591 = vadd.f32 %v590, %v449
  %v592 = vadd.f32 %v591, %v454
  %v593 = vadd.f32 %v592, %v457
  %v594 = vadd.f32 %v593, %v462
  %v595 = vadd.f32 %v594, %v465
  %v596 = vrot.slane %v595, 4
  %v597 = vadd.f32 %v595, %v596
  %v598 = vrot.slane %v597, 2
  %v599 = vadd.f32 %v597, %v598
  %v600 = vrot.slane %v599, 1
  %v601 = vadd.f32 %v599, %v600
  %v602 = vadd.f32 %v532, %v601
  %603 = vst [vmem:[%s3] sm:$0x1] %v602
  %v604 = vld [vmem:[%s3 + $0x1] sm:$0x1]
  %v605 = vmul.f32 %v214, %v214
  %v606 = vmul.f32 %v217, %v217
  %v607 = vmul.f32 %v222, %v222
  %v608 = vmul.f32 %v225, %v225
  %v609 = vmul.f32 %v230, %v230
  %v610 = vmul.f32 %v233, %v233
  %v611 = vmul.f32 %v238, %v238
  %v612 = vmul.f32 %v241, %v241
  %v613 = vmul.f32 %v246, %v246
  %v614 = vmul.f32 %v249, %v249
  %v615 = vmul.f32 %v254, %v254
  %v616 = vmul.f32 %v257, %v257
  %v617 = vmul.f32 %v262, %v262
  %v618 = vmul.f32 %v265, %v265
  %v619 = vmul.f32 %v270, %v270
  %v620 = vmul.f32 %v273, %v273
  %v621 = vmul.f32 %v278, %v278
  %v622 = vmul.f32 %v281, %v281
  %v623 = vmul.f32 %v286, %v286
  %v624 = vmul.f32 %v289, %v289
  %v625 = vmul.f32 %v294, %v294
  %v626 = vmul.f32 %v297, %v297
  %v627 = vmul.f32 %v302, %v302
  %v628 = vmul.f32 %v305, %v305
  %v629 = vmul.f32 %v310, %v310
  %v630 = vmul.f32 %v313, %v313
  %v631 = vmul.f32 %v318, %v318
  %v632 = vmul.f32 %v321, %v321
  %v633 = vmul.f32 %v326, %v326
  %v634 = vmul.f32 %v329, %v329
  %v635 = vmul.f32 %v334, %v334
  %v636 = vmul.f32 %v337, %v337
  %v637 = vmul.f32 %v342, %v342
  %v638 = vmul.f32 %v345, %v345
  %v639 = vmul.f32 %v350, %v350
  %v640 = vmul.f32 %v353, %v353
  %v641 = vmul.f32 %v358, %v358
  %v642 = vmul.f32 %v361, %v361
  %v643 = vmul.f32 %v366, %v366
  %v644 = vmul.f32 %v369, %v369
  %v645 = vmul.f32 %v374, %v374
  %v646 = vmul.f32 %v377, %v377
  %v647 = vmul.f32 %v382, %v382
  %v648 = vmul.f32 %v385, %v385
  %v649 = vmul.f32 %v390, %v390
  %v650 = vmul.f32 %v393, %v393
  %v651 = vmul.f32 %v398, %v398
  %v652 = vmul.f32 %v401, %v401
  %v653 = vmul.f32 %v406, %v406
  %v654 = vmul.f32 %v409, %v409
  %v655 = vmul.f32 %v414, %v414
  %v656 = vmul.f32 %v417, %v417
  %v657 = vmul.f32 %v422, %v422
  %v658 = vmul.f32 %v425, %v425
  %v659 = vmul.f32 %v430, %v430
  %v660 = vmul.f32 %v433, %v433
  %v661 = vmul.f32 %v438, %v438
  %v662 = vmul.f32 %v441, %v441
  %v663 = vmul.f32 %v446, %v446
  %v664 = vmul.f32 %v449, %v449
  %v665 = vmul.f32 %v454, %v454
  %v666 = vmul.f32 %v457, %v457
  %v667 = vmul.f32 %v462, %v462
  %v668 = vmul.f32 %v465, %v465
  %v669 = vadd.f32 %v605, %v606
  %v670 = vadd.f32 %v669, %v607
  %v671 = vadd.f32 %v670, %v608
  %v672 = vadd.f32 %v671, %v609
  %v673 = vadd.f32 %v672, %v610
  %v674 = vadd.f32 %v673, %v611
  %v675 = vadd.f32 %v674, %v612
  %v676 = vadd.f32 %v675, %v613
  %v677 = vadd.f32 %v676, %v614
  %v678 = vadd.f32 %v677, %v615
  %v679 = vadd.f32 %v678, %v616
  %v680 = vadd.f32 %v679, %v617
  %v681 = vadd.f32 %v680, %v618
  %v682 = vadd.f32 %v681, %v619
  %v683 = vadd.f32 %v682, %v620
  %v684 = vadd.f32 %v683, %v621
  %v685 = vadd.f32 %v684, %v622
  %v686 = vadd.f32 %v685, %v623
  %v687 = vadd.f32 %v686, %v624
  %v688 = vadd.f32 %v687, %v625
  %v689 = vadd.f32 %v688, %v626
  %v690 = vadd.f32 %v689, %v627
  %v691 = vadd.f32 %v690, %v628
  %v692 = vadd.f32 %v691, %v629
  %v693 = vadd.f32 %v692, %v630
  %v694 = vadd.f32 %v693, %v631
  %v695 = vadd.f32 %v694, %v632
  %v696 = vadd.f32 %v695, %v633
  %v697 = vadd.f32 %v696, %v634
  %v698 = vadd.f32 %v697, %v635
  %v699 = vadd.f32 %v698, %v636
  %v700 = vadd.f32 %v699, %v637
  %v701 = vadd.f32 %v700, %v638
  %v702 = vadd.f32 %v701, %v639
  %v703 = vadd.f32 %v702, %v640
  %v704 = vadd.f32 %v703, %v641
  %v705 = vadd.f32 %v704, %v642
  %v706 = vadd.f32 %v705, %v643
  %v707 = vadd.f32 %v706, %v644
  %v708 = vadd.f32 %v707, %v645
  %v709 = vadd.f32 %v708, %v646
  %v710 = vadd.f32 %v709, %v647
  %v711 = vadd.f32 %v710, %v648
  %v712 = vadd.f32 %v711, %v649
  %v713 = vadd.f32 %v712, %v650
  %v714 = vadd.f32 %v713, %v651
  %v715 = vadd.f32 %v714, %v652
  %v716 = vadd.f32 %v715, %v653
  %v717 = vadd.f32 %v716, %v654
  %v718 = vadd.f32 %v717, %v655
  %v719 = vadd.f32 %v718, %v656
  %v720 = vadd.f32 %v719, %v657
  %v721 = vadd.f32 %v720, %v658
  %v722 = vadd.f32 %v721, %v659
  %v723 = vadd.f32 %v722, %v660
  %v724 = vadd.f32 %v723, %v661
  %v725 = vadd.f32 %v724, %v662
  %v726 = vadd.f32 %v725, %v663
  %v727 = vadd.f32 %v726, %v664
  %v728 = vadd.f32 %v727, %v665
  %v729 = vadd.f32 %v728, %v666
  %v730 = vadd.f32 %v729, %v667
  %v731 = vadd.f32 %v730, %v668
  %v732 = vrot.slane %v731, 4
  %v733 = vadd.f32 %v731, %v732
  %v734 = vrot.slane %v733, 2
  %v735 = vadd.f32 %v733, %v734
  %v736 = vrot.slane %v735, 1
  %v737 = vadd.f32 %v735, %v736
  %v738 = vadd.f32 %v604, %v737
  %739 = vst [vmem:[%s3 + $0x1] sm:$0x1] %v738
  // Predicated region
  $region14: #{bottleneck_forward.5} parent=0 // pred_check
    _
  $region15: #{bottleneck_forward.5} parent=0 // pred_check_branch
    %741 = sbr.rel (0) target = $region17
  $region16: #{bottleneck_forward.5} parent=0 // pred_region
    _
  $region17: #{bottleneck_forward.5} parent=0 // pred_fallthru
    _
  // Predicated region
  $region18: #{bottleneck_forward.5} parent=0 // pred_check
    _
  $region19: #{bottleneck_forward.5} parent=0 // pred_check_branch
    %743 = sbr.rel (0) target = $region21
  $region20: #{bottleneck_forward.5} parent=0 // pred_region
    _
  $region21: #{bottleneck_forward.5} parent=0 // pred_fallthru
    _
  // Predicated region
  $region22: #{bottleneck_forward.5} parent=0 // pred_check
    _
  $region23: #{bottleneck_forward.5} parent=0 // pred_check_branch
    %745 = sbr.rel (0) target = $region25
  $region24: #{bottleneck_forward.5} parent=0 // pred_region
    _
  $region25: #{bottleneck_forward.5} parent=0 // pred_fallthru
    _
  // Predicated region
  $region26: #{bottleneck_forward.5} parent=0 // pred_check
    _
  $region27: #{bottleneck_forward.5} parent=0 // pred_check_branch
    %747 = sbr.rel (0) target = $region29
  $region28: #{bottleneck_forward.5} parent=0 // pred_region
    _
  $region29: #{bottleneck_forward.5} parent=0 // pred_fallthru
    _

// kernel: bottleneck_forward.9
$region0: #{bottleneck_forward.9}
  #allocation0 [shape = 'u32[]', space=smem, size = 0x4, offset = 0x4, fixed_abs, tag = 'smem constant byte address 0x4 - core index']
  #allocation1 [shape = 'u32[144,128]{1,0:T(1,128)}', space=vmem, size = 0x12000, scoped, tag = 'internal scratch']
  %s0 = inlined_call_operand.vmem [shape: f32[512,128], index: 0, kind: input, shape index: {}]
  %s1 = inlined_call_operand.vmem [shape: f32[1,128], index: 1, kind: input, shape index: {}]
  %s2 = inlined_call_operand.vmem [shape: f32[1,128], index: 2, kind: input, shape index: {}]
  %s3 = inlined_call_operand.vmem [shape: f32[512,128], index: 3, kind: input, shape index: {}]
  %s4 = inlined_call_operand.vmem [shape: f32[1,128], index: 4, kind: input, shape index: {}]
  %s5 = inlined_call_operand.vmem [shape: f32[1,128], index: 5, kind: input, shape index: {}]
  %s6 = inlined_call_operand.vmem [shape: f32[512,128], index: 6, kind: output, shape index: {}]
  %s7 = sld [smem:[#allocation0]]
  $region34: #{bottleneck_forward.9} parent=0
    _
  %s9 = ssub.s32 1, %s7
  %s10 = scalar_select 0, %s9, %s7
  // Predicated region
  $region2: #{bottleneck_forward.9} parent=0 // pred_check
    _
  $region3: #{bottleneck_forward.9} parent=0 // pred_check_branch
    %12 = sbr.rel (0) target = $region5
  $region4: #{bottleneck_forward.9} parent=0 // pred_region
    _
  $region5: #{bottleneck_forward.9} parent=0 // pred_fallthru
    _
  // Predicated region
  $region6: #{bottleneck_forward.9} parent=0 // pred_check
    _
  $region7: #{bottleneck_forward.9} parent=0 // pred_check_branch
    %14 = sbr.rel (0) target = $region9
  $region8: #{bottleneck_forward.9} parent=0 // pred_region
    _
  $region9: #{bottleneck_forward.9} parent=0 // pred_fallthru
    _
  // Predicated region
  $region10: #{bottleneck_forward.9} parent=0 // pred_check
    _
  $region11: #{bottleneck_forward.9} parent=0 // pred_check_branch
    %16 = sbr.rel (0) target = $region13
  $region12: #{bottleneck_forward.9} parent=0 // pred_region
    _
  $region13: #{bottleneck_forward.9} parent=0 // pred_fallthru
    _
  // Predicated region
  $region14: #{bottleneck_forward.9} parent=0 // pred_check
    _
  $region15: #{bottleneck_forward.9} parent=0 // pred_check_branch
    %18 = sbr.rel (0) target = $region17
  $region16: #{bottleneck_forward.9} parent=0 // pred_region
    _
  $region17: #{bottleneck_forward.9} parent=0 // pred_fallthru
    _
  // Predicated region
  $region18: #{bottleneck_forward.9} parent=0 // pred_check
    _
  $region19: #{bottleneck_forward.9} parent=0 // pred_check_branch
    %20 = sbr.rel (0) target = $region21
  $region20: #{bottleneck_forward.9} parent=0 // pred_region
    _
  $region21: #{bottleneck_forward.9} parent=0 // pred_fallthru
    _
  // Predicated region
  $region22: #{bottleneck_forward.9} parent=0 // pred_check
    _
  $region23: #{bottleneck_forward.9} parent=0 // pred_check_branch
    %22 = sbr.rel (0) target = $region25
  $region24: #{bottleneck_forward.9} parent=0 // pred_region
    _
  $region25: #{bottleneck_forward.9} parent=0 // pred_fallthru
    _
  %v23 = vld [vmem:[%s0] sm:$0xff]
  %v24 = vld [vmem:[%s0 + $0x8] sm:$0xff]
  %v25 = vld [vmem:[%s0 + $0x10] sm:$0xff]
  %v26 = vld [vmem:[%s0 + $0x18] sm:$0xff]
  %v27 = vld [vmem:[%s0 + $0x20] sm:$0xff]
  %v28 = vld [vmem:[%s0 + $0x28] sm:$0xff]
  %v29 = vld [vmem:[%s0 + $0x30] sm:$0xff]
  %v30 = vld [vmem:[%s0 + $0x38] sm:$0xff]
  %v31 = vld [vmem:[%s0 + $0x40] sm:$0xff]
  %v32 = vld [vmem:[%s0 + $0x48] sm:$0xff]
  %v33 = vld [vmem:[%s0 + $0x50] sm:$0xff]
  %v34 = vld [vmem:[%s0 + $0x58] sm:$0xff]
  %v35 = vld [vmem:[%s0 + $0x60] sm:$0xff]
  %v36 = vld [vmem:[%s0 + $0x68] sm:$0xff]
  %v37 = vld [vmem:[%s0 + $0x70] sm:$0xff]
  %v38 = vld [vmem:[%s0 + $0x78] sm:$0xff]
  %v39 = vld [vmem:[%s0 + $0x80] sm:$0xff]
  %v40 = vld [vmem:[%s0 + $0x88] sm:$0xff]
  %v41 = vld [vmem:[%s0 + $0x90] sm:$0xff]
  %v42 = vld [vmem:[%s0 + $0x98] sm:$0xff]
  %v43 = vld [vmem:[%s0 + $0xa0] sm:$0xff]
  %v44 = vld [vmem:[%s0 + $0xa8] sm:$0xff]
  %v45 = vld [vmem:[%s0 + $0xb0] sm:$0xff]
  %v46 = vld [vmem:[%s0 + $0xb8] sm:$0xff]
  %v47 = vld [vmem:[%s0 + $0xc0] sm:$0xff]
  %v48 = vld [vmem:[%s0 + $0xc8] sm:$0xff]
  %v49 = vld [vmem:[%s0 + $0xd0] sm:$0xff]
  %v50 = vld [vmem:[%s0 + $0xd8] sm:$0xff]
  %v51 = vld [vmem:[%s0 + $0xe0] sm:$0xff]
  %v52 = vld [vmem:[%s0 + $0xe8] sm:$0xff]
  %v53 = vld [vmem:[%s0 + $0xf0] sm:$0xff]
  %v54 = vld [vmem:[%s0 + $0xf8] sm:$0xff]
  %v55 = vld [vmem:[%s0 + $0x100] sm:$0xff]
  %v56 = vld [vmem:[%s0 + $0x108] sm:$0xff]
  %v57 = vld [vmem:[%s0 + $0x110] sm:$0xff]
  %v58 = vld [vmem:[%s0 + $0x118] sm:$0xff]
  %v59 = vld [vmem:[%s0 + $0x120] sm:$0xff]
  %v60 = vld [vmem:[%s0 + $0x128] sm:$0xff]
  %v61 = vld [vmem:[%s0 + $0x130] sm:$0xff]
  %v62 = vld [vmem:[%s0 + $0x138] sm:$0xff]
  %v63 = vld [vmem:[%s0 + $0x140] sm:$0xff]
  %v64 = vld [vmem:[%s0 + $0x148] sm:$0xff]
  %v65 = vld [vmem:[%s0 + $0x150] sm:$0xff]
  %v66 = vld [vmem:[%s0 + $0x158] sm:$0xff]
  %v67 = vld [vmem:[%s0 + $0x160] sm:$0xff]
  %v68 = vld [vmem:[%s0 + $0x168] sm:$0xff]
  %v69 = vld [vmem:[%s0 + $0x170] sm:$0xff]
  %v70 = vld [vmem:[%s0 + $0x178] sm:$0xff]
  %v71 = vld [vmem:[%s0 + $0x180] sm:$0xff]
  %v72 = vld [vmem:[%s0 + $0x188] sm:$0xff]
  %v73 = vld [vmem:[%s0 + $0x190] sm:$0xff]
  %v74 = vld [vmem:[%s0 + $0x198] sm:$0xff]
  %v75 = vld [vmem:[%s0 + $0x1a0] sm:$0xff]
  %v76 = vld [vmem:[%s0 + $0x1a8] sm:$0xff]
  %v77 = vld [vmem:[%s0 + $0x1b0] sm:$0xff]
  %v78 = vld [vmem:[%s0 + $0x1b8] sm:$0xff]
  %v79 = vld [vmem:[%s0 + $0x1c0] sm:$0xff]
  %v80 = vld [vmem:[%s0 + $0x1c8] sm:$0xff]
  %v81 = vld [vmem:[%s0 + $0x1d0] sm:$0xff]
  %v82 = vld [vmem:[%s0 + $0x1d8] sm:$0xff]
  %v83 = vld [vmem:[%s0 + $0x1e0] sm:$0xff]
  %v84 = vld [vmem:[%s0 + $0x1e8] sm:$0xff]
  %v85 = vld [vmem:[%s0 + $0x1f0] sm:$0xff]
  %v86 = vld [vmem:[%s0 + $0x1f8] sm:$0xff]
  %v87 = vld [vmem:[%s1] sm:$0x1]
  %v89 = vlaneseq
  %v90 = vshrl.u32 %v89, 7
  %v91 = vsub.s32 0, %v90
  %v92 = vrot.slane %v87, %v91
  %v94 = vmul.f32 %v23, %v92
  %v95 = vmul.f32 %v24, %v92
  %v96 = vmul.f32 %v25, %v92
  %v97 = vmul.f32 %v26, %v92
  %v98 = vmul.f32 %v27, %v92
  %v99 = vmul.f32 %v28, %v92
  %v100 = vmul.f32 %v29, %v92
  %v101 = vmul.f32 %v30, %v92
  %v102 = vmul.f32 %v31, %v92
  %v103 = vmul.f32 %v32, %v92
  %v104 = vmul.f32 %v33, %v92
  %v105 = vmul.f32 %v34, %v92
  %v106 = vmul.f32 %v35, %v92
  %v107 = vmul.f32 %v36, %v92
  %v108 = vmul.f32 %v37, %v92
  %v109 = vmul.f32 %v38, %v92
  %v110 = vmul.f32 %v39, %v92
  %v111 = vmul.f32 %v40, %v92
  %v112 = vmul.f32 %v41, %v92
  %v113 = vmul.f32 %v42, %v92
  %v114 = vmul.f32 %v43, %v92
  %v115 = vmul.f32 %v44, %v92
  %v116 = vmul.f32 %v45, %v92
  %v117 = vmul.f32 %v46, %v92
  %v118 = vmul.f32 %v47, %v92
  %v119 = vmul.f32 %v48, %v92
  %v120 = vmul.f32 %v49, %v92
  %v121 = vmul.f32 %v50, %v92
  %v122 = vmul.f32 %v51, %v92
  %v123 = vmul.f32 %v52, %v92
  %v124 = vmul.f32 %v53, %v92
  %v125 = vmul.f32 %v54, %v92
  %v126 = vmul.f32 %v55, %v92
  %v127 = vmul.f32 %v56, %v92
  %v128 = vmul.f32 %v57, %v92
  %v129 = vmul.f32 %v58, %v92
  %v130 = vmul.f32 %v59, %v92
  %v131 = vmul.f32 %v60, %v92
  %v132 = vmul.f32 %v61, %v92
  %v133 = vmul.f32 %v62, %v92
  %v134 = vmul.f32 %v63, %v92
  %v135 = vmul.f32 %v64, %v92
  %v136 = vmul.f32 %v65, %v92
  %v137 = vmul.f32 %v66, %v92
  %v138 = vmul.f32 %v67, %v92
  %v139 = vmul.f32 %v68, %v92
  %v140 = vmul.f32 %v69, %v92
  %v141 = vmul.f32 %v70, %v92
  %v142 = vmul.f32 %v71, %v92
  %v143 = vmul.f32 %v72, %v92
  %v144 = vmul.f32 %v73, %v92
  %v145 = vmul.f32 %v74, %v92
  %v146 = vmul.f32 %v75, %v92
  %v147 = vmul.f32 %v76, %v92
  %v148 = vmul.f32 %v77, %v92
  %v149 = vmul.f32 %v78, %v92
  %v150 = vmul.f32 %v79, %v92
  %v151 = vmul.f32 %v80, %v92
  %v152 = vmul.f32 %v81, %v92
  %v153 = vmul.f32 %v82, %v92
  %v154 = vmul.f32 %v83, %v92
  %v155 = vmul.f32 %v84, %v92
  %v156 = vmul.f32 %v85, %v92
  %v157 = vmul.f32 %v86, %v92
  %v158 = vld [vmem:[%s2] sm:$0x1]
  %v160 = vlaneseq
  %v161 = vshrl.u32 %v160, 7
  %v162 = vsub.s32 0, %v161
  %v163 = vrot.slane %v158, %v162
  %v165 = vadd.f32 %v94, %v163
  %v166 = vadd.f32 %v95, %v163
  %v167 = vadd.f32 %v96, %v163
  %v168 = vadd.f32 %v97, %v163
  %v169 = vadd.f32 %v98, %v163
  %v170 = vadd.f32 %v99, %v163
  %v171 = vadd.f32 %v100, %v163
  %v172 = vadd.f32 %v101, %v163
  %v173 = vadd.f32 %v102, %v163
  %v174 = vadd.f32 %v103, %v163
  %v175 = vadd.f32 %v104, %v163
  %v176 = vadd.f32 %v105, %v163
  %v177 = vadd.f32 %v106, %v163
  %v178 = vadd.f32 %v107, %v163
  %v179 = vadd.f32 %v108, %v163
  %v180 = vadd.f32 %v109, %v163
  %v181 = vadd.f32 %v110, %v163
  %v182 = vadd.f32 %v111, %v163
  %v183 = vadd.f32 %v112, %v163
  %v184 = vadd.f32 %v113, %v163
  %v185 = vadd.f32 %v114, %v163
  %v186 = vadd.f32 %v115, %v163
  %v187 = vadd.f32 %v116, %v163
  %v188 = vadd.f32 %v117, %v163
  %v189 = vadd.f32 %v118, %v163
  %v190 = vadd.f32 %v119, %v163
  %v191 = vadd.f32 %v120, %v163
  %v192 = vadd.f32 %v121, %v163
  %v193 = vadd.f32 %v122, %v163
  %v194 = vadd.f32 %v123, %v163
  %v195 = vadd.f32 %v124, %v163
  %v196 = vadd.f32 %v125, %v163
  %v197 = vadd.f32 %v126, %v163
  %v198 = vadd.f32 %v127, %v163
  %v199 = vadd.f32 %v128, %v163
  %v200 = vadd.f32 %v129, %v163
  %v201 = vadd.f32 %v130, %v163
  %v202 = vadd.f32 %v131, %v163
  %v203 = vadd.f32 %v132, %v163
  %v204 = vadd.f32 %v133, %v163
  %v205 = vadd.f32 %v134, %v163
  %v206 = vadd.f32 %v135, %v163
  %v207 = vadd.f32 %v136, %v163
  %v208 = vadd.f32 %v137, %v163
  %v209 = vadd.f32 %v138, %v163
  %v210 = vadd.f32 %v139, %v163
  %v211 = vadd.f32 %v140, %v163
  %v212 = vadd.f32 %v141, %v163
  %v213 = vadd.f32 %v142, %v163
  %v214 = vadd.f32 %v143, %v163
  %v215 = vadd.f32 %v144, %v163
  %v216 = vadd.f32 %v145, %v163
  %v217 = vadd.f32 %v146, %v163
  %v218 = vadd.f32 %v147, %v163
  %v219 = vadd.f32 %v148, %v163
  %v220 = vadd.f32 %v149, %v163
  %v221 = vadd.f32 %v150, %v163
  %v222 = vadd.f32 %v151, %v163
  %v223 = vadd.f32 %v152, %v163
  %v224 = vadd.f32 %v153, %v163
  %v225 = vadd.f32 %v154, %v163
  %v226 = vadd.f32 %v155, %v163
  %v227 = vadd.f32 %v156, %v163
  %v228 = vadd.f32 %v157, %v163
  %v229 = vld [vmem:[%s3] sm:$0xff]
  %v230 = vld [vmem:[%s3 + $0x8] sm:$0xff]
  %v231 = vld [vmem:[%s3 + $0x10] sm:$0xff]
  %v232 = vld [vmem:[%s3 + $0x18] sm:$0xff]
  %v233 = vld [vmem:[%s3 + $0x20] sm:$0xff]
  %v234 = vld [vmem:[%s3 + $0x28] sm:$0xff]
  %v235 = vld [vmem:[%s3 + $0x30] sm:$0xff]
  %v236 = vld [vmem:[%s3 + $0x38] sm:$0xff]
  %v237 = vld [vmem:[%s3 + $0x40] sm:$0xff]
  %v238 = vld [vmem:[%s3 + $0x48] sm:$0xff]
  %v239 = vld [vmem:[%s3 + $0x50] sm:$0xff]
  %v240 = vld [vmem:[%s3 + $0x58] sm:$0xff]
  %v241 = vld [vmem:[%s3 + $0x60] sm:$0xff]
  %v242 = vld [vmem:[%s3 + $0x68] sm:$0xff]
  %v243 = vld [vmem:[%s3 + $0x70] sm:$0xff]
  %v244 = vld [vmem:[%s3 + $0x78] sm:$0xff]
  %v245 = vld [vmem:[%s3 + $0x80] sm:$0xff]
  %v246 = vld [vmem:[%s3 + $0x88] sm:$0xff]
  %v247 = vld [vmem:[%s3 + $0x90] sm:$0xff]
  %v248 = vld [vmem:[%s3 + $0x98] sm:$0xff]
  %v249 = vld [vmem:[%s3 + $0xa0] sm:$0xff]
  %v250 = vld [vmem:[%s3 + $0xa8] sm:$0xff]
  %v251 = vld [vmem:[%s3 + $0xb0] sm:$0xff]
  %v252 = vld [vmem:[%s3 + $0xb8] sm:$0xff]
  %v253 = vld [vmem:[%s3 + $0xc0] sm:$0xff]
  %v254 = vld [vmem:[%s3 + $0xc8] sm:$0xff]
  %v255 = vld [vmem:[%s3 + $0xd0] sm:$0xff]
  %v256 = vld [vmem:[%s3 + $0xd8] sm:$0xff]
  %v257 = vld [vmem:[%s3 + $0xe0] sm:$0xff]
  %v258 = vld [vmem:[%s3 + $0xe8] sm:$0xff]
  %v259 = vld [vmem:[%s3 + $0xf0] sm:$0xff]
  %v260 = vld [vmem:[%s3 + $0xf8] sm:$0xff]
  %v261 = vld [vmem:[%s3 + $0x100] sm:$0xff]
  %v262 = vld [vmem:[%s3 + $0x108] sm:$0xff]
  %v263 = vld [vmem:[%s3 + $0x110] sm:$0xff]
  %v264 = vld [vmem:[%s3 + $0x118] sm:$0xff]
  %v265 = vld [vmem:[%s3 + $0x120] sm:$0xff]
  %v266 = vld [vmem:[%s3 + $0x128] sm:$0xff]
  %v267 = vld [vmem:[%s3 + $0x130] sm:$0xff]
  %v268 = vld [vmem:[%s3 + $0x138] sm:$0xff]
  %v269 = vld [vmem:[%s3 + $0x140] sm:$0xff]
  %v270 = vld [vmem:[%s3 + $0x148] sm:$0xff]
  %v271 = vld [vmem:[%s3 + $0x150] sm:$0xff]
  %v272 = vld [vmem:[%s3 + $0x158] sm:$0xff]
  %v273 = vld [vmem:[%s3 + $0x160] sm:$0xff]
  %v274 = vld [vmem:[%s3 + $0x168] sm:$0xff]
  %v275 = vld [vmem:[%s3 + $0x170] sm:$0xff]
  %v276 = vld [vmem:[%s3 + $0x178] sm:$0xff]
  %v277 = vld [vmem:[%s3 + $0x180] sm:$0xff]
  %v278 = vld [vmem:[%s3 + $0x188] sm:$0xff]
  %v279 = vld [vmem:[%s3 + $0x190] sm:$0xff]
  %v280 = vld [vmem:[%s3 + $0x198] sm:$0xff]
  %v281 = vld [vmem:[%s3 + $0x1a0] sm:$0xff]
  %v282 = vld [vmem:[%s3 + $0x1a8] sm:$0xff]
  %v283 = vld [vmem:[%s3 + $0x1b0] sm:$0xff]
  %v284 = vld [vmem:[%s3 + $0x1b8] sm:$0xff]
  %v285 = vld [vmem:[%s3 + $0x1c0] sm:$0xff]
  %v286 = vld [vmem:[%s3 + $0x1c8] sm:$0xff]
  %v287 = vld [vmem:[%s3 + $0x1d0] sm:$0xff]
  %v288 = vld [vmem:[%s3 + $0x1d8] sm:$0xff]
  %v289 = vld [vmem:[%s3 + $0x1e0] sm:$0xff]
  %v290 = vld [vmem:[%s3 + $0x1e8] sm:$0xff]
  %v291 = vld [vmem:[%s3 + $0x1f0] sm:$0xff]
  %v292 = vld [vmem:[%s3 + $0x1f8] sm:$0xff]
  %v293 = vld [vmem:[%s4] sm:$0x1]
  %v295 = vlaneseq
  %v296 = vshrl.u32 %v295, 7
  %v297 = vsub.s32 0, %v296
  %v298 = vrot.slane %v293, %v297
  %v300 = vmul.f32 %v229, %v298
  %v301 = vmul.f32 %v230, %v298
  %v302 = vmul.f32 %v231, %v298
  %v303 = vmul.f32 %v232, %v298
  %v304 = vmul.f32 %v233, %v298
  %v305 = vmul.f32 %v234, %v298
  %v306 = vmul.f32 %v235, %v298
  %v307 = vmul.f32 %v236, %v298
  %v308 = vmul.f32 %v237, %v298
  %v309 = vmul.f32 %v238, %v298
  %v310 = vmul.f32 %v239, %v298
  %v311 = vmul.f32 %v240, %v298
  %v312 = vmul.f32 %v241, %v298
  %v313 = vmul.f32 %v242, %v298
  %v314 = vmul.f32 %v243, %v298
  %v315 = vmul.f32 %v244, %v298
  %v316 = vmul.f32 %v245, %v298
  %v317 = vmul.f32 %v246, %v298
  %v318 = vmul.f32 %v247, %v298
  %v319 = vmul.f32 %v248, %v298
  %v320 = vmul.f32 %v249, %v298
  %v321 = vmul.f32 %v250, %v298
  %v322 = vmul.f32 %v251, %v298
  %v323 = vmul.f32 %v252, %v298
  %v324 = vmul.f32 %v253, %v298
  %v325 = vmul.f32 %v254, %v298
  %v326 = vmul.f32 %v255, %v298
  %v327 = vmul.f32 %v256, %v298
  %v328 = vmul.f32 %v257, %v298
  %v329 = vmul.f32 %v258, %v298
  %v330 = vmul.f32 %v259, %v298
  %v331 = vmul.f32 %v260, %v298
  %v332 = vmul.f32 %v261, %v298
  %v333 = vmul.f32 %v262, %v298
  %v334 = vmul.f32 %v263, %v298
  %v335 = vmul.f32 %v264, %v298
  %v336 = vmul.f32 %v265, %v298
  %v337 = vmul.f32 %v266, %v298
  %v338 = vmul.f32 %v267, %v298
  %v339 = vmul.f32 %v268, %v298
  %v340 = vmul.f32 %v269, %v298
  %v341 = vmul.f32 %v270, %v298
  %v342 = vmul.f32 %v271, %v298
  %v343 = vmul.f32 %v272, %v298
  %v344 = vmul.f32 %v273, %v298
  %v345 = vmul.f32 %v274, %v298
  %v346 = vmul.f32 %v275, %v298
  %v347 = vmul.f32 %v276, %v298
  %v348 = vmul.f32 %v277, %v298
  %v349 = vmul.f32 %v278, %v298
  %v350 = vmul.f32 %v279, %v298
  %v351 = vmul.f32 %v280, %v298
  %v352 = vmul.f32 %v281, %v298
  %v353 = vmul.f32 %v282, %v298
  %v354 = vmul.f32 %v283, %v298
  %v355 = vmul.f32 %v284, %v298
  %v356 = vmul.f32 %v285, %v298
  %v357 = vmul.f32 %v286, %v298
  %v358 = vmul.f32 %v287, %v298
  %v359 = vmul.f32 %v288, %v298
  %v360 = vmul.f32 %v289, %v298
  %v361 = vmul.f32 %v290, %v298
  %v362 = vmul.f32 %v291, %v298
  %v363 = vmul.f32 %v292, %v298
  %v364 = vld [vmem:[%s5] sm:$0x1]
  %v366 = vlaneseq
  %v367 = vshrl.u32 %v366, 7
  %v368 = vsub.s32 0, %v367
  %v369 = vrot.slane %v364, %v368
  %v371 = vadd.f32 %v300, %v369
  %v372 = vadd.f32 %v301, %v369
  %v373 = vadd.f32 %v302, %v369
  %v374 = vadd.f32 %v303, %v369
  %v375 = vadd.f32 %v304, %v369
  %v376 = vadd.f32 %v305, %v369
  %v377 = vadd.f32 %v306, %v369
  %v378 = vadd.f32 %v307, %v369
  %v379 = vadd.f32 %v308, %v369
  %v380 = vadd.f32 %v309, %v369
  %v381 = vadd.f32 %v310, %v369
  %v382 = vadd.f32 %v311, %v369
  %v383 = vadd.f32 %v312, %v369
  %v384 = vadd.f32 %v313, %v369
  %v385 = vadd.f32 %v314, %v369
  %v386 = vadd.f32 %v315, %v369
  %v387 = vadd.f32 %v316, %v369
  %v388 = vadd.f32 %v317, %v369
  %v389 = vadd.f32 %v318, %v369
  %v390 = vadd.f32 %v319, %v369
  %v391 = vadd.f32 %v320, %v369
  %v392 = vadd.f32 %v321, %v369
  %v393 = vadd.f32 %v322, %v369
  %v394 = vadd.f32 %v323, %v369
  %v395 = vadd.f32 %v324, %v369
  %v396 = vadd.f32 %v325, %v369
  %v397 = vadd.f32 %v326, %v369
  %v398 = vadd.f32 %v327, %v369
  %v399 = vadd.f32 %v328, %v369
  %v400 = vadd.f32 %v329, %v369
  %v401 = vadd.f32 %v330, %v369
  %v402 = vadd.f32 %v331, %v369
  %v403 = vadd.f32 %v332, %v369
  %v404 = vadd.f32 %v333, %v369
  %v405 = vadd.f32 %v334, %v369
  %v406 = vadd.f32 %v335, %v369
  %v407 = vadd.f32 %v336, %v369
  %v408 = vadd.f32 %v337, %v369
  %v409 = vadd.f32 %v338, %v369
  %v410 = vadd.f32 %v339, %v369
  %v411 = vadd.f32 %v340, %v369
  %v412 = vadd.f32 %v341, %v369
  %v413 = vadd.f32 %v342, %v369
  %v414 = vadd.f32 %v343, %v369
  %v415 = vadd.f32 %v344, %v369
  %v416 = vadd.f32 %v345, %v369
  %v417 = vadd.f32 %v346, %v369
  %v418 = vadd.f32 %v347, %v369
  %v419 = vadd.f32 %v348, %v369
  %v420 = vadd.f32 %v349, %v369
  %v421 = vadd.f32 %v350, %v369
  %v422 = vadd.f32 %v351, %v369
  %v423 = vadd.f32 %v352, %v369
  %v424 = vadd.f32 %v353, %v369
  %v425 = vadd.f32 %v354, %v369
  %v426 = vadd.f32 %v355, %v369
  %v427 = vadd.f32 %v356, %v369
  %v428 = vadd.f32 %v357, %v369
  %v429 = vadd.f32 %v358, %v369
  %v430 = vadd.f32 %v359, %v369
  %v431 = vadd.f32 %v360, %v369
  %v432 = vadd.f32 %v361, %v369
  %v433 = vadd.f32 %v362, %v369
  %v434 = vadd.f32 %v363, %v369
  %v435 = vadd.f32 %v165, %v371
  %v436 = vadd.f32 %v166, %v372
  %v437 = vadd.f32 %v167, %v373
  %v438 = vadd.f32 %v168, %v374
  %v439 = vadd.f32 %v169, %v375
  %v440 = vadd.f32 %v170, %v376
  %v441 = vadd.f32 %v171, %v377
  %v442 = vadd.f32 %v172, %v378
  %v443 = vadd.f32 %v173, %v379
  %v444 = vadd.f32 %v174, %v380
  %v445 = vadd.f32 %v175, %v381
  %v446 = vadd.f32 %v176, %v382
  %v447 = vadd.f32 %v177, %v383
  %v448 = vadd.f32 %v178, %v384
  %v449 = vadd.f32 %v179, %v385
  %v450 = vadd.f32 %v180, %v386
  %v451 = vadd.f32 %v181, %v387
  %v452 = vadd.f32 %v182, %v388
  %v453 = vadd.f32 %v183, %v389
  %v454 = vadd.f32 %v184, %v390
  %v455 = vadd.f32 %v185, %v391
  %v456 = vadd.f32 %v186, %v392
  %v457 = vadd.f32 %v187, %v393
  %v458 = vadd.f32 %v188, %v394
  %v459 = vadd.f32 %v189, %v395
  %v460 = vadd.f32 %v190, %v396
  %v461 = vadd.f32 %v191, %v397
  %v462 = vadd.f32 %v192, %v398
  %v463 = vadd.f32 %v193, %v399
  %v464 = vadd.f32 %v194, %v400
  %v465 = vadd.f32 %v195, %v401
  %v466 = vadd.f32 %v196, %v402
  %v467 = vadd.f32 %v197, %v403
  %v468 = vadd.f32 %v198, %v404
  %v469 = vadd.f32 %v199, %v405
  %v470 = vadd.f32 %v200, %v406
  %v471 = vadd.f32 %v201, %v407
  %v472 = vadd.f32 %v202, %v408
  %v473 = vadd.f32 %v203, %v409
  %v474 = vadd.f32 %v204, %v410
  %v475 = vadd.f32 %v205, %v411
  %v476 = vadd.f32 %v206, %v412
  %v477 = vadd.f32 %v207, %v413
  %v478 = vadd.f32 %v208, %v414
  %v479 = vadd.f32 %v209, %v415
  %v480 = vadd.f32 %v210, %v416
  %v481 = vadd.f32 %v211, %v417
  %v482 = vadd.f32 %v212, %v418
  %v483 = vadd.f32 %v213, %v419
  %v484 = vadd.f32 %v214, %v420
  %v485 = vadd.f32 %v215, %v421
  %v486 = vadd.f32 %v216, %v422
  %v487 = vadd.f32 %v217, %v423
  %v488 = vadd.f32 %v218, %v424
  %v489 = vadd.f32 %v219, %v425
  %v490 = vadd.f32 %v220, %v426
  %v491 = vadd.f32 %v221, %v427
  %v492 = vadd.f32 %v222, %v428
  %v493 = vadd.f32 %v223, %v429
  %v494 = vadd.f32 %v224, %v430
  %v495 = vadd.f32 %v225, %v431
  %v496 = vadd.f32 %v226, %v432
  %v497 = vadd.f32 %v227, %v433
  %v498 = vadd.f32 %v228, %v434
  %v499 = vmax.f32 %v435, 0.0
  %v500 = vmax.f32 %v436, 0.0
  %v501 = vmax.f32 %v437, 0.0
  %v502 = vmax.f32 %v438, 0.0
  %v503 = vmax.f32 %v439, 0.0
  %v504 = vmax.f32 %v440, 0.0
  %v505 = vmax.f32 %v441, 0.0
  %v506 = vmax.f32 %v442, 0.0
  %v507 = vmax.f32 %v443, 0.0
  %v508 = vmax.f32 %v444, 0.0
  %v509 = vmax.f32 %v445, 0.0
  %v510 = vmax.f32 %v446, 0.0
  %v511 = vmax.f32 %v447, 0.0
  %v512 = vmax.f32 %v448, 0.0
  %v513 = vmax.f32 %v449, 0.0
  %v514 = vmax.f32 %v450, 0.0
  %v515 = vmax.f32 %v451, 0.0
  %v516 = vmax.f32 %v452, 0.0
  %v517 = vmax.f32 %v453, 0.0
  %v518 = vmax.f32 %v454, 0.0
  %v519 = vmax.f32 %v455, 0.0
  %v520 = vmax.f32 %v456, 0.0
  %v521 = vmax.f32 %v457, 0.0
  %v522 = vmax.f32 %v458, 0.0
  %v523 = vmax.f32 %v459, 0.0
  %v524 = vmax.f32 %v460, 0.0
  %v525 = vmax.f32 %v461, 0.0
  %v526 = vmax.f32 %v462, 0.0
  %v527 = vmax.f32 %v463, 0.0
  %v528 = vmax.f32 %v464, 0.0
  %v529 = vmax.f32 %v465, 0.0
  %v530 = vmax.f32 %v466, 0.0
  %v531 = vmax.f32 %v467, 0.0
  %v532 = vmax.f32 %v468, 0.0
  %v533 = vmax.f32 %v469, 0.0
  %v534 = vmax.f32 %v470, 0.0
  %v535 = vmax.f32 %v471, 0.0
  %v536 = vmax.f32 %v472, 0.0
  %v537 = vmax.f32 %v473, 0.0
  %v538 = vmax.f32 %v474, 0.0
  %v539 = vmax.f32 %v475, 0.0
  %v540 = vmax.f32 %v476, 0.0
  %v541 = vmax.f32 %v477, 0.0
  %v542 = vmax.f32 %v478, 0.0
  %v543 = vmax.f32 %v479, 0.0
  %v544 = vmax.f32 %v480, 0.0
  %v545 = vmax.f32 %v481, 0.0
  %v546 = vmax.f32 %v482, 0.0
  %v547 = vmax.f32 %v483, 0.0
  %v548 = vmax.f32 %v484, 0.0
  %v549 = vmax.f32 %v485, 0.0
  %v550 = vmax.f32 %v486, 0.0
  %v551 = vmax.f32 %v487, 0.0
  %v552 = vmax.f32 %v488, 0.0
  %v553 = vmax.f32 %v489, 0.0
  %v554 = vmax.f32 %v490, 0.0
  %v555 = vmax.f32 %v491, 0.0
  %v556 = vmax.f32 %v492, 0.0
  %v557 = vmax.f32 %v493, 0.0
  %v558 = vmax.f32 %v494, 0.0
  %v559 = vmax.f32 %v495, 0.0
  %v560 = vmax.f32 %v496, 0.0
  %v561 = vmax.f32 %v497, 0.0
  %v562 = vmax.f32 %v498, 0.0
  %563 = vst [vmem:[%s6] sm:$0xff] %v499
  %564 = vst [vmem:[%s6 + $0x8] sm:$0xff] %v500
  %565 = vst [vmem:[%s6 + $0x10] sm:$0xff] %v501
  %566 = vst [vmem:[%s6 + $0x18] sm:$0xff] %v502
  %567 = vst [vmem:[%s6 + $0x20] sm:$0xff] %v503
  %568 = vst [vmem:[%s6 + $0x28] sm:$0xff] %v504
  %569 = vst [vmem:[%s6 + $0x30] sm:$0xff] %v505
  %570 = vst [vmem:[%s6 + $0x38] sm:$0xff] %v506
  %571 = vst [vmem:[%s6 + $0x40] sm:$0xff] %v507
  %572 = vst [vmem:[%s6 + $0x48] sm:$0xff] %v508
  %573 = vst [vmem:[%s6 + $0x50] sm:$0xff] %v509
  %574 = vst [vmem:[%s6 + $0x58] sm:$0xff] %v510
  %575 = vst [vmem:[%s6 + $0x60] sm:$0xff] %v511
  %576 = vst [vmem:[%s6 + $0x68] sm:$0xff] %v512
  %577 = vst [vmem:[%s6 + $0x70] sm:$0xff] %v513
  %578 = vst [vmem:[%s6 + $0x78] sm:$0xff] %v514
  %579 = vst [vmem:[%s6 + $0x80] sm:$0xff] %v515
  %580 = vst [vmem:[%s6 + $0x88] sm:$0xff] %v516
  %581 = vst [vmem:[%s6 + $0x90] sm:$0xff] %v517
  %582 = vst [vmem:[%s6 + $0x98] sm:$0xff] %v518
  %583 = vst [vmem:[%s6 + $0xa0] sm:$0xff] %v519
  %584 = vst [vmem:[%s6 + $0xa8] sm:$0xff] %v520
  %585 = vst [vmem:[%s6 + $0xb0] sm:$0xff] %v521
  %586 = vst [vmem:[%s6 + $0xb8] sm:$0xff] %v522
  %587 = vst [vmem:[%s6 + $0xc0] sm:$0xff] %v523
  %588 = vst [vmem:[%s6 + $0xc8] sm:$0xff] %v524
  %589 = vst [vmem:[%s6 + $0xd0] sm:$0xff] %v525
  %590 = vst [vmem:[%s6 + $0xd8] sm:$0xff] %v526
  %591 = vst [vmem:[%s6 + $0xe0] sm:$0xff] %v527
  %592 = vst [vmem:[%s6 + $0xe8] sm:$0xff] %v528
  %593 = vst [vmem:[%s6 + $0xf0] sm:$0xff] %v529
  %594 = vst [vmem:[%s6 + $0xf8] sm:$0xff] %v530
  %595 = vst [vmem:[%s6 + $0x100] sm:$0xff] %v531
  %596 = vst [vmem:[%s6 + $0x108] sm:$0xff] %v532
  %597 = vst [vmem:[%s6 + $0x110] sm:$0xff] %v533
  %598 = vst [vmem:[%s6 + $0x118] sm:$0xff] %v534
  %599 = vst [vmem:[%s6 + $0x120] sm:$0xff] %v535
  %600 = vst [vmem:[%s6 + $0x128] sm:$0xff] %v536
  %601 = vst [vmem:[%s6 + $0x130] sm:$0xff] %v537
  %602 = vst [vmem:[%s6 + $0x138] sm:$0xff] %v538
  %603 = vst [vmem:[%s6 + $0x140] sm:$0xff] %v539
  %604 = vst [vmem:[%s6 + $0x148] sm:$0xff] %v540
  %605 = vst [vmem:[%s6 + $0x150] sm:$0xff] %v541
  %606 = vst [vmem:[%s6 + $0x158] sm:$0xff] %v542
  %607 = vst [vmem:[%s6 + $0x160] sm:$0xff] %v543
  %608 = vst [vmem:[%s6 + $0x168] sm:$0xff] %v544
  %609 = vst [vmem:[%s6 + $0x170] sm:$0xff] %v545
  %610 = vst [vmem:[%s6 + $0x178] sm:$0xff] %v546
  %611 = vst [vmem:[%s6 + $0x180] sm:$0xff] %v547
  %612 = vst [vmem:[%s6 + $0x188] sm:$0xff] %v548
  %613 = vst [vmem:[%s6 + $0x190] sm:$0xff] %v549
  %614 = vst [vmem:[%s6 + $0x198] sm:$0xff] %v550
  %615 = vst [vmem:[%s6 + $0x1a0] sm:$0xff] %v551
  %616 = vst [vmem:[%s6 + $0x1a8] sm:$0xff] %v552
  %617 = vst [vmem:[%s6 + $0x1b0] sm:$0xff] %v553
  %618 = vst [vmem:[%s6 + $0x1b8] sm:$0xff] %v554
  %619 = vst [vmem:[%s6 + $0x1c0] sm:$0xff] %v555
  %620 = vst [vmem:[%s6 + $0x1c8] sm:$0xff] %v556
  %621 = vst [vmem:[%s6 + $0x1d0] sm:$0xff] %v557
  %622 = vst [vmem:[%s6 + $0x1d8] sm:$0xff] %v558
  %623 = vst [vmem:[%s6 + $0x1e0] sm:$0xff] %v559
  %624 = vst [vmem:[%s6 + $0x1e8] sm:$0xff] %v560
  %625 = vst [vmem:[%s6 + $0x1f0] sm:$0xff] %v561
  %626 = vst [vmem:[%s6 + $0x1f8] sm:$0xff] %v562
  // Predicated region
  $region26: #{bottleneck_forward.9} parent=0 // pred_check
    _
  $region27: #{bottleneck_forward.9} parent=0 // pred_check_branch
    %628 = sbr.rel (0) target = $region29
  $region28: #{bottleneck_forward.9} parent=0 // pred_region
    _
  $region29: #{bottleneck_forward.9} parent=0 // pred_fallthru
    _
  // Predicated region
  $region30: #{bottleneck_forward.9} parent=0 // pred_check
    _
  $region31: #{bottleneck_forward.9} parent=0 // pred_check_branch
    %630 = sbr.rel (0) target = $region33
  $region32: #{bottleneck_forward.9} parent=0 // pred_region
    _
  $region33: #{bottleneck_forward.9} parent=0 // pred_fallthru
    _

// kernel: bottleneck_forward.7
$region0: #{bottleneck_forward.7}
  #allocation0 [shape = 'u32[]', space=smem, size = 0x4, offset = 0x4, fixed_abs, tag = 'smem constant byte address 0x4 - core index']
  #allocation1 [shape = 'u32[144,128]{1,0:T(1,128)}', space=vmem, size = 0x12000, scoped, tag = 'internal scratch']
  %s0 = inlined_call_operand.vmem [shape: f32[512,128], index: 0, kind: input, shape index: {}]
  %s1 = inlined_call_operand.vmem [shape: f32[1,128], index: 1, kind: input, shape index: {}]
  %s2 = inlined_call_operand.vmem [shape: f32[1,128], index: 2, kind: input, shape index: {}]
  %s3 = inlined_call_operand.vmem [shape: bf16[128,128], index: 3, kind: input, shape index: {}]
  %s4 = inlined_call_operand.vmem [shape: f32[512,128], index: 4, kind: output, shape index: {0}]
  %s5 = inlined_call_operand.vmem [shape: f32[8,128], index: 5, kind: output, shape index: {1}]
  %6 = xla_tuple %s4, %s5
  %s7 = sld [smem:[#allocation0]]
  $region38: #{bottleneck_forward.7} parent=0
    _
  %s9 = ssub.s32 1, %s7
  %s10 = scalar_select 0, %s9, %s7
  // Predicated region
  $region2: #{bottleneck_forward.7} parent=0 // pred_check
    _
  $region3: #{bottleneck_forward.7} parent=0 // pred_check_branch
    %12 = sbr.rel (0) target = $region5
  $region4: #{bottleneck_forward.7} parent=0 // pred_region
    _
  $region5: #{bottleneck_forward.7} parent=0 // pred_fallthru
    _
  // Predicated region
  $region6: #{bottleneck_forward.7} parent=0 // pred_check
    _
  $region7: #{bottleneck_forward.7} parent=0 // pred_check_branch
    %14 = sbr.rel (0) target = $region9
  $region8: #{bottleneck_forward.7} parent=0 // pred_region
    _
  $region9: #{bottleneck_forward.7} parent=0 // pred_fallthru
    _
  // Predicated region
  $region10: #{bottleneck_forward.7} parent=0 // pred_check
    _
  $region11: #{bottleneck_forward.7} parent=0 // pred_check_branch
    %16 = sbr.rel (0) target = $region13
  $region12: #{bottleneck_forward.7} parent=0 // pred_region
    _
  $region13: #{bottleneck_forward.7} parent=0 // pred_fallthru
    _
  // Predicated region
  $region14: #{bottleneck_forward.7} parent=0 // pred_check
    _
  $region15: #{bottleneck_forward.7} parent=0 // pred_check_branch
    %18 = sbr.rel (0) target = $region17
  $region16: #{bottleneck_forward.7} parent=0 // pred_region
    _
  $region17: #{bottleneck_forward.7} parent=0 // pred_fallthru
    _
  %p20 = scmp.eq.s32.totalorder 0, 0
  // Predicated region
  $region18: #{bottleneck_forward.7} parent=0 // pred_check
    %p21 = pneg %p20
  $region19: #{bottleneck_forward.7} parent=0 // pred_check_branch
    %23 = sbr.rel (%p21) target = $region21
  $region20: #{bottleneck_forward.7} parent=0 // pred_region
    %24 = vst [vmem:[%s5] sm:$0xff] 0.0
  $region21: #{bottleneck_forward.7} parent=0 // pred_fallthru
    _
  %v25 = vld [vmem:[%s0] sm:$0xff]
  %v26 = vld [vmem:[%s0 + $0x8] sm:$0xff]
  %v27 = vld [vmem:[%s0 + $0x10] sm:$0xff]
  %v28 = vld [vmem:[%s0 + $0x18] sm:$0xff]
  %v29 = vld [vmem:[%s0 + $0x20] sm:$0xff]
  %v30 = vld [vmem:[%s0 + $0x28] sm:$0xff]
  %v31 = vld [vmem:[%s0 + $0x30] sm:$0xff]
  %v32 = vld [vmem:[%s0 + $0x38] sm:$0xff]
  %v33 = vld [vmem:[%s0 + $0x40] sm:$0xff]
  %v34 = vld [vmem:[%s0 + $0x48] sm:$0xff]
  %v35 = vld [vmem:[%s0 + $0x50] sm:$0xff]
  %v36 = vld [vmem:[%s0 + $0x58] sm:$0xff]
  %v37 = vld [vmem:[%s0 + $0x60] sm:$0xff]
  %v38 = vld [vmem:[%s0 + $0x68] sm:$0xff]
  %v39 = vld [vmem:[%s0 + $0x70] sm:$0xff]
  %v40 = vld [vmem:[%s0 + $0x78] sm:$0xff]
  %v41 = vld [vmem:[%s0 + $0x80] sm:$0xff]
  %v42 = vld [vmem:[%s0 + $0x88] sm:$0xff]
  %v43 = vld [vmem:[%s0 + $0x90] sm:$0xff]
  %v44 = vld [vmem:[%s0 + $0x98] sm:$0xff]
  %v45 = vld [vmem:[%s0 + $0xa0] sm:$0xff]
  %v46 = vld [vmem:[%s0 + $0xa8] sm:$0xff]
  %v47 = vld [vmem:[%s0 + $0xb0] sm:$0xff]
  %v48 = vld [vmem:[%s0 + $0xb8] sm:$0xff]
  %v49 = vld [vmem:[%s0 + $0xc0] sm:$0xff]
  %v50 = vld [vmem:[%s0 + $0xc8] sm:$0xff]
  %v51 = vld [vmem:[%s0 + $0xd0] sm:$0xff]
  %v52 = vld [vmem:[%s0 + $0xd8] sm:$0xff]
  %v53 = vld [vmem:[%s0 + $0xe0] sm:$0xff]
  %v54 = vld [vmem:[%s0 + $0xe8] sm:$0xff]
  %v55 = vld [vmem:[%s0 + $0xf0] sm:$0xff]
  %v56 = vld [vmem:[%s0 + $0xf8] sm:$0xff]
  %v57 = vld [vmem:[%s0 + $0x100] sm:$0xff]
  %v58 = vld [vmem:[%s0 + $0x108] sm:$0xff]
  %v59 = vld [vmem:[%s0 + $0x110] sm:$0xff]
  %v60 = vld [vmem:[%s0 + $0x118] sm:$0xff]
  %v61 = vld [vmem:[%s0 + $0x120] sm:$0xff]
  %v62 = vld [vmem:[%s0 + $0x128] sm:$0xff]
  %v63 = vld [vmem:[%s0 + $0x130] sm:$0xff]
  %v64 = vld [vmem:[%s0 + $0x138] sm:$0xff]
  %v65 = vld [vmem:[%s0 + $0x140] sm:$0xff]
  %v66 = vld [vmem:[%s0 + $0x148] sm:$0xff]
  %v67 = vld [vmem:[%s0 + $0x150] sm:$0xff]
  %v68 = vld [vmem:[%s0 + $0x158] sm:$0xff]
  %v69 = vld [vmem:[%s0 + $0x160] sm:$0xff]
  %v70 = vld [vmem:[%s0 + $0x168] sm:$0xff]
  %v71 = vld [vmem:[%s0 + $0x170] sm:$0xff]
  %v72 = vld [vmem:[%s0 + $0x178] sm:$0xff]
  %v73 = vld [vmem:[%s0 + $0x180] sm:$0xff]
  %v74 = vld [vmem:[%s0 + $0x188] sm:$0xff]
  %v75 = vld [vmem:[%s0 + $0x190] sm:$0xff]
  %v76 = vld [vmem:[%s0 + $0x198] sm:$0xff]
  %v77 = vld [vmem:[%s0 + $0x1a0] sm:$0xff]
  %v78 = vld [vmem:[%s0 + $0x1a8] sm:$0xff]
  %v79 = vld [vmem:[%s0 + $0x1b0] sm:$0xff]
  %v80 = vld [vmem:[%s0 + $0x1b8] sm:$0xff]
  %v81 = vld [vmem:[%s0 + $0x1c0] sm:$0xff]
  %v82 = vld [vmem:[%s0 + $0x1c8] sm:$0xff]
  %v83 = vld [vmem:[%s0 + $0x1d0] sm:$0xff]
  %v84 = vld [vmem:[%s0 + $0x1d8] sm:$0xff]
  %v85 = vld [vmem:[%s0 + $0x1e0] sm:$0xff]
  %v86 = vld [vmem:[%s0 + $0x1e8] sm:$0xff]
  %v87 = vld [vmem:[%s0 + $0x1f0] sm:$0xff]
  %v88 = vld [vmem:[%s0 + $0x1f8] sm:$0xff]
  %v89 = vld [vmem:[%s1] sm:$0x1]
  %v91 = vlaneseq
  %v92 = vshrl.u32 %v91, 7
  %v93 = vsub.s32 0, %v92
  %v94 = vrot.slane %v89, %v93
  %v96 = vmul.f32 %v25, %v94
  %v97 = vmul.f32 %v26, %v94
  %v98 = vmul.f32 %v27, %v94
  %v99 = vmul.f32 %v28, %v94
  %v100 = vmul.f32 %v29, %v94
  %v101 = vmul.f32 %v30, %v94
  %v102 = vmul.f32 %v31, %v94
  %v103 = vmul.f32 %v32, %v94
  %v104 = vmul.f32 %v33, %v94
  %v105 = vmul.f32 %v34, %v94
  %v106 = vmul.f32 %v35, %v94
  %v107 = vmul.f32 %v36, %v94
  %v108 = vmul.f32 %v37, %v94
  %v109 = vmul.f32 %v38, %v94
  %v110 = vmul.f32 %v39, %v94
  %v111 = vmul.f32 %v40, %v94
  %v112 = vmul.f32 %v41, %v94
  %v113 = vmul.f32 %v42, %v94
  %v114 = vmul.f32 %v43, %v94
  %v115 = vmul.f32 %v44, %v94
  %v116 = vmul.f32 %v45, %v94
  %v117 = vmul.f32 %v46, %v94
  %v118 = vmul.f32 %v47, %v94
  %v119 = vmul.f32 %v48, %v94
  %v120 = vmul.f32 %v49, %v94
  %v121 = vmul.f32 %v50, %v94
  %v122 = vmul.f32 %v51, %v94
  %v123 = vmul.f32 %v52, %v94
  %v124 = vmul.f32 %v53, %v94
  %v125 = vmul.f32 %v54, %v94
  %v126 = vmul.f32 %v55, %v94
  %v127 = vmul.f32 %v56, %v94
  %v128 = vmul.f32 %v57, %v94
  %v129 = vmul.f32 %v58, %v94
  %v130 = vmul.f32 %v59, %v94
  %v131 = vmul.f32 %v60, %v94
  %v132 = vmul.f32 %v61, %v94
  %v133 = vmul.f32 %v62, %v94
  %v134 = vmul.f32 %v63, %v94
  %v135 = vmul.f32 %v64, %v94
  %v136 = vmul.f32 %v65, %v94
  %v137 = vmul.f32 %v66, %v94
  %v138 = vmul.f32 %v67, %v94
  %v139 = vmul.f32 %v68, %v94
  %v140 = vmul.f32 %v69, %v94
  %v141 = vmul.f32 %v70, %v94
  %v142 = vmul.f32 %v71, %v94
  %v143 = vmul.f32 %v72, %v94
  %v144 = vmul.f32 %v73, %v94
  %v145 = vmul.f32 %v74, %v94
  %v146 = vmul.f32 %v75, %v94
  %v147 = vmul.f32 %v76, %v94
  %v148 = vmul.f32 %v77, %v94
  %v149 = vmul.f32 %v78, %v94
  %v150 = vmul.f32 %v79, %v94
  %v151 = vmul.f32 %v80, %v94
  %v152 = vmul.f32 %v81, %v94
  %v153 = vmul.f32 %v82, %v94
  %v154 = vmul.f32 %v83, %v94
  %v155 = vmul.f32 %v84, %v94
  %v156 = vmul.f32 %v85, %v94
  %v157 = vmul.f32 %v86, %v94
  %v158 = vmul.f32 %v87, %v94
  %v159 = vmul.f32 %v88, %v94
  %v160 = vld [vmem:[%s2] sm:$0x1]
  %v162 = vlaneseq
  %v163 = vshrl.u32 %v162, 7
  %v164 = vsub.s32 0, %v163
  %v165 = vrot.slane %v160, %v164
  %v167 = vadd.f32 %v96, %v165
  %v168 = vadd.f32 %v97, %v165
  %v169 = vadd.f32 %v98, %v165
  %v170 = vadd.f32 %v99, %v165
  %v171 = vadd.f32 %v100, %v165
  %v172 = vadd.f32 %v101, %v165
  %v173 = vadd.f32 %v102, %v165
  %v174 = vadd.f32 %v103, %v165
  %v175 = vadd.f32 %v104, %v165
  %v176 = vadd.f32 %v105, %v165
  %v177 = vadd.f32 %v106, %v165
  %v178 = vadd.f32 %v107, %v165
  %v179 = vadd.f32 %v108, %v165
  %v180 = vadd.f32 %v109, %v165
  %v181 = vadd.f32 %v110, %v165
  %v182 = vadd.f32 %v111, %v165
  %v183 = vadd.f32 %v112, %v165
  %v184 = vadd.f32 %v113, %v165
  %v185 = vadd.f32 %v114, %v165
  %v186 = vadd.f32 %v115, %v165
  %v187 = vadd.f32 %v116, %v165
  %v188 = vadd.f32 %v117, %v165
  %v189 = vadd.f32 %v118, %v165
  %v190 = vadd.f32 %v119, %v165
  %v191 = vadd.f32 %v120, %v165
  %v192 = vadd.f32 %v121, %v165
  %v193 = vadd.f32 %v122, %v165
  %v194 = vadd.f32 %v123, %v165
  %v195 = vadd.f32 %v124, %v165
  %v196 = vadd.f32 %v125, %v165
  %v197 = vadd.f32 %v126, %v165
  %v198 = vadd.f32 %v127, %v165
  %v199 = vadd.f32 %v128, %v165
  %v200 = vadd.f32 %v129, %v165
  %v201 = vadd.f32 %v130, %v165
  %v202 = vadd.f32 %v131, %v165
  %v203 = vadd.f32 %v132, %v165
  %v204 = vadd.f32 %v133, %v165
  %v205 = vadd.f32 %v134, %v165
  %v206 = vadd.f32 %v135, %v165
  %v207 = vadd.f32 %v136, %v165
  %v208 = vadd.f32 %v137, %v165
  %v209 = vadd.f32 %v138, %v165
  %v210 = vadd.f32 %v139, %v165
  %v211 = vadd.f32 %v140, %v165
  %v212 = vadd.f32 %v141, %v165
  %v213 = vadd.f32 %v142, %v165
  %v214 = vadd.f32 %v143, %v165
  %v215 = vadd.f32 %v144, %v165
  %v216 = vadd.f32 %v145, %v165
  %v217 = vadd.f32 %v146, %v165
  %v218 = vadd.f32 %v147, %v165
  %v219 = vadd.f32 %v148, %v165
  %v220 = vadd.f32 %v149, %v165
  %v221 = vadd.f32 %v150, %v165
  %v222 = vadd.f32 %v151, %v165
  %v223 = vadd.f32 %v152, %v165
  %v224 = vadd.f32 %v153, %v165
  %v225 = vadd.f32 %v154, %v165
  %v226 = vadd.f32 %v155, %v165
  %v227 = vadd.f32 %v156, %v165
  %v228 = vadd.f32 %v157, %v165
  %v229 = vadd.f32 %v158, %v165
  %v230 = vadd.f32 %v159, %v165
  %v231 = vmax.f32 %v167, 0.0
  %v232 = vmax.f32 %v168, 0.0
  %v233 = vmax.f32 %v169, 0.0
  %v234 = vmax.f32 %v170, 0.0
  %v235 = vmax.f32 %v171, 0.0
  %v236 = vmax.f32 %v172, 0.0
  %v237 = vmax.f32 %v173, 0.0
  %v238 = vmax.f32 %v174, 0.0
  %v239 = vmax.f32 %v175, 0.0
  %v240 = vmax.f32 %v176, 0.0
  %v241 = vmax.f32 %v177, 0.0
  %v242 = vmax.f32 %v178, 0.0
  %v243 = vmax.f32 %v179, 0.0
  %v244 = vmax.f32 %v180, 0.0
  %v245 = vmax.f32 %v181, 0.0
  %v246 = vmax.f32 %v182, 0.0
  %v247 = vmax.f32 %v183, 0.0
  %v248 = vmax.f32 %v184, 0.0
  %v249 = vmax.f32 %v185, 0.0
  %v250 = vmax.f32 %v186, 0.0
  %v251 = vmax.f32 %v187, 0.0
  %v252 = vmax.f32 %v188, 0.0
  %v253 = vmax.f32 %v189, 0.0
  %v254 = vmax.f32 %v190, 0.0
  %v255 = vmax.f32 %v191, 0.0
  %v256 = vmax.f32 %v192, 0.0
  %v257 = vmax.f32 %v193, 0.0
  %v258 = vmax.f32 %v194, 0.0
  %v259 = vmax.f32 %v195, 0.0
  %v260 = vmax.f32 %v196, 0.0
  %v261 = vmax.f32 %v197, 0.0
  %v262 = vmax.f32 %v198, 0.0
  %v263 = vmax.f32 %v199, 0.0
  %v264 = vmax.f32 %v200, 0.0
  %v265 = vmax.f32 %v201, 0.0
  %v266 = vmax.f32 %v202, 0.0
  %v267 = vmax.f32 %v203, 0.0
  %v268 = vmax.f32 %v204, 0.0
  %v269 = vmax.f32 %v205, 0.0
  %v270 = vmax.f32 %v206, 0.0
  %v271 = vmax.f32 %v207, 0.0
  %v272 = vmax.f32 %v208, 0.0
  %v273 = vmax.f32 %v209, 0.0
  %v274 = vmax.f32 %v210, 0.0
  %v275 = vmax.f32 %v211, 0.0
  %v276 = vmax.f32 %v212, 0.0
  %v277 = vmax.f32 %v213, 0.0
  %v278 = vmax.f32 %v214, 0.0
  %v279 = vmax.f32 %v215, 0.0
  %v280 = vmax.f32 %v216, 0.0
  %v281 = vmax.f32 %v217, 0.0
  %v282 = vmax.f32 %v218, 0.0
  %v283 = vmax.f32 %v219, 0.0
  %v284 = vmax.f32 %v220, 0.0
  %v285 = vmax.f32 %v221, 0.0
  %v286 = vmax.f32 %v222, 0.0
  %v287 = vmax.f32 %v223, 0.0
  %v288 = vmax.f32 %v224, 0.0
  %v289 = vmax.f32 %v225, 0.0
  %v290 = vmax.f32 %v226, 0.0
  %v291 = vmax.f32 %v227, 0.0
  %v292 = vmax.f32 %v228, 0.0
  %v293 = vmax.f32 %v229, 0.0
  %v294 = vmax.f32 %v230, 0.0
  %v295 = vpack.c.bf16 %v232, %v231
  %v296 = vpack.c.bf16 %v234, %v233
  %v297 = vpack.c.bf16 %v236, %v235
  %v298 = vpack.c.bf16 %v238, %v237
  %v299 = vpack.c.bf16 %v240, %v239
  %v300 = vpack.c.bf16 %v242, %v241
  %v301 = vpack.c.bf16 %v244, %v243
  %v302 = vpack.c.bf16 %v246, %v245
  %v303 = vpack.c.bf16 %v248, %v247
  %v304 = vpack.c.bf16 %v250, %v249
  %v305 = vpack.c.bf16 %v252, %v251
  %v306 = vpack.c.bf16 %v254, %v253
  %v307 = vpack.c.bf16 %v256, %v255
  %v308 = vpack.c.bf16 %v258, %v257
  %v309 = vpack.c.bf16 %v260, %v259
  %v310 = vpack.c.bf16 %v262, %v261
  %v311 = vpack.c.bf16 %v264, %v263
  %v312 = vpack.c.bf16 %v266, %v265
  %v313 = vpack.c.bf16 %v268, %v267
  %v314 = vpack.c.bf16 %v270, %v269
  %v315 = vpack.c.bf16 %v272, %v271
  %v316 = vpack.c.bf16 %v274, %v273
  %v317 = vpack.c.bf16 %v276, %v275
  %v318 = vpack.c.bf16 %v278, %v277
  %v319 = vpack.c.bf16 %v280, %v279
  %v320 = vpack.c.bf16 %v282, %v281
  %v321 = vpack.c.bf16 %v284, %v283
  %v322 = vpack.c.bf16 %v286, %v285
  %v323 = vpack.c.bf16 %v288, %v287
  %v324 = vpack.c.bf16 %v290, %v289
  %v325 = vpack.c.bf16 %v292, %v291
  %v326 = vpack.c.bf16 %v294, %v293
  %v327 = vld [vmem:[%s3] sm:$0xf]
  %v328 = vld [vmem:[%s3 + $0x4] sm:$0xf]
  %v329 = vld [vmem:[%s3 + $0x8] sm:$0xf]
  %v330 = vld [vmem:[%s3 + $0xc] sm:$0xf]
  %v331 = vld [vmem:[%s3 + $0x10] sm:$0xf]
  %v332 = vld [vmem:[%s3 + $0x14] sm:$0xf]
  %v333 = vld [vmem:[%s3 + $0x18] sm:$0xf]
  %v334 = vld [vmem:[%s3 + $0x1c] sm:$0xf]
  %v335 = vld [vmem:[%s3 + $0x20] sm:$0xf]
  %v336 = vld [vmem:[%s3 + $0x24] sm:$0xf]
  %v337 = vld [vmem:[%s3 + $0x28] sm:$0xf]
  %v338 = vld [vmem:[%s3 + $0x2c] sm:$0xf]
  %v339 = vld [vmem:[%s3 + $0x30] sm:$0xf]
  %v340 = vld [vmem:[%s3 + $0x34] sm:$0xf]
  %v341 = vld [vmem:[%s3 + $0x38] sm:$0xf]
  %v342 = vld [vmem:[%s3 + $0x3c] sm:$0xf]
  %v359 = vunpack.c.l.b16 %v327
  %v360 = vunpack.c.l.b16 %v328
  %v361 = vunpack.c.l.b16 %v329
  %v362 = vunpack.c.l.b16 %v330
  %v363 = vunpack.c.l.b16 %v331
  %v364 = vunpack.c.l.b16 %v332
  %v365 = vunpack.c.l.b16 %v333
  %v366 = vunpack.c.l.b16 %v334
  %v367 = vunpack.c.l.b16 %v335
  %v368 = vunpack.c.l.b16 %v336
  %v369 = vunpack.c.l.b16 %v337
  %v370 = vunpack.c.l.b16 %v338
  %v371 = vunpack.c.l.b16 %v339
  %v372 = vunpack.c.l.b16 %v340
  %v373 = vunpack.c.l.b16 %v341
  %v374 = vunpack.c.l.b16 %v342
  %v375 = vpack.c.b16 %v360, %v359
  %v376 = vpack.c.b16 %v362, %v361
  %v377 = vpack.c.b16 %v364, %v363
  %v378 = vpack.c.b16 %v366, %v365
  %v379 = vpack.c.b16 %v368, %v367
  %v380 = vpack.c.b16 %v370, %v369
  %v381 = vpack.c.b16 %v372, %v371
  %v382 = vpack.c.b16 %v374, %v373
  %391 = vmatprep.subr.bf16.mxu0 0
  %392 = vmatpush1.bf16.msra.mxu0 %v375
  %393 = vmatprep.subr.bf16.mxu0 0
  %394 = vmatpush1.bf16.msra.mxu0 %v376
  %395 = vmatprep.subr.bf16.mxu0 0
  %396 = vmatpush1.bf16.msra.mxu0 %v377
  %397 = vmatprep.subr.bf16.mxu0 0
  %398 = vmatpush1.bf16.msra.mxu0 %v378
  %399 = vmatprep.subr.bf16.mxu0 0
  %400 = vmatpush1.bf16.msra.mxu0 %v379
  %401 = vmatprep.subr.bf16.mxu0 0
  %402 = vmatpush1.bf16.msra.mxu0 %v380
  %403 = vmatprep.subr.bf16.mxu0 0
  %404 = vmatpush1.bf16.msra.mxu0 %v381
  %405 = vmatprep.subr.bf16.mxu0 0
  %406 = vmatpush1.bf16.msra.mxu0 %v382
  %407 = vmatprep.subr.bf16.mxu0 0
  %408 = vmatpush1.bf16.msra.mxu0 0
  %409 = vmatprep.subr.bf16.mxu0 0
  %410 = vmatpush1.bf16.msra.mxu0 0
  %411 = vmatprep.subr.bf16.mxu0 0
  %412 = vmatpush1.bf16.msra.mxu0 0
  %413 = vmatprep.subr.bf16.mxu0 0
  %414 = vmatpush1.bf16.msra.mxu0 0
  %415 = vmatprep.subr.bf16.mxu0 0
  %416 = vmatpush1.bf16.msra.mxu0 0
  %417 = vmatprep.subr.bf16.mxu0 0
  %418 = vmatpush1.bf16.msra.mxu0 0
  %419 = vmatprep.subr.bf16.mxu0 0
  %420 = vmatpush1.bf16.msra.mxu0 0
  %421 = vmatprep.subr.bf16.mxu0 0
  %422 = vmatpush1.bf16.msra.mxu0 0
  %423 = vmatprep.mubr.bf16.mxu0 0
  %424 = vmatmul.mubr.bf16.gmra.mrb[0].mxu0 %v295
  %v425 = vpop.f32.mrb[0].mxu0
  %v426 = vadd.f32 0.0, %v425
  %v427 = vpop.f32.mrb[0].mxu0
  %v428 = vpop.f32.mrb[0].mxu0
  %v429 = vadd.f32 0.0, %v428
  %v430 = vpop.f32.mrb[0].mxu0
  %431 = vmatprep.mubr.bf16.mxu0 0
  %432 = vmatmul.mubr.bf16.gmra.mrb[0].mxu0 %v296
  %v433 = vpop.f32.mrb[0].mxu0
  %v434 = vadd.f32 0.0, %v433
  %v435 = vpop.f32.mrb[0].mxu0
  %v436 = vpop.f32.mrb[0].mxu0
  %v437 = vadd.f32 0.0, %v436
  %v438 = vpop.f32.mrb[0].mxu0
  %439 = vmatprep.mubr.bf16.mxu0 0
  %440 = vmatmul.mubr.bf16.gmra.mrb[0].mxu0 %v297
  %v441 = vpop.f32.mrb[0].mxu0
  %v442 = vadd.f32 0.0, %v441
  %v443 = vpop.f32.mrb[0].mxu0
  %v444 = vpop.f32.mrb[0].mxu0
  %v445 = vadd.f32 0.0, %v444
  %v446 = vpop.f32.mrb[0].mxu0
  %447 = vmatprep.mubr.bf16.mxu0 0
  %448 = vmatmul.mubr.bf16.gmra.mrb[0].mxu0 %v298
  %v449 = vpop.f32.mrb[0].mxu0
  %v450 = vadd.f32 0.0, %v449
  %v451 = vpop.f32.mrb[0].mxu0
  %v452 = vpop.f32.mrb[0].mxu0
  %v453 = vadd.f32 0.0, %v452
  %v454 = vpop.f32.mrb[0].mxu0
  %455 = vmatprep.mubr.bf16.mxu0 0
  %456 = vmatmul.mubr.bf16.gmra.mrb[0].mxu0 %v299
  %v457 = vpop.f32.mrb[0].mxu0
  %v458 = vadd.f32 0.0, %v457
  %v459 = vpop.f32.mrb[0].mxu0
  %v460 = vpop.f32.mrb[0].mxu0
  %v461 = vadd.f32 0.0, %v460
  %v462 = vpop.f32.mrb[0].mxu0
  %463 = vmatprep.mubr.bf16.mxu0 0
  %464 = vmatmul.mubr.bf16.gmra.mrb[0].mxu0 %v300
  %v465 = vpop.f32.mrb[0].mxu0
  %v466 = vadd.f32 0.0, %v465
  %v467 = vpop.f32.mrb[0].mxu0
  %v468 = vpop.f32.mrb[0].mxu0
  %v469 = vadd.f32 0.0, %v468
  %v470 = vpop.f32.mrb[0].mxu0
  %471 = vmatprep.mubr.bf16.mxu0 0
  %472 = vmatmul.mubr.bf16.gmra.mrb[0].mxu0 %v301
  %v473 = vpop.f32.mrb[0].mxu0
  %v474 = vadd.f32 0.0, %v473
  %v475 = vpop.f32.mrb[0].mxu0
  %v476 = vpop.f32.mrb[0].mxu0
  %v477 = vadd.f32 0.0, %v476
  %v478 = vpop.f32.mrb[0].mxu0
  %479 = vmatprep.mubr.bf16.mxu0 0
  %480 = vmatmul.mubr.bf16.gmra.mrb[0].mxu0 %v302
  %v481 = vpop.f32.mrb[0].mxu0
  %v482 = vadd.f32 0.0, %v481
  %v483 = vpop.f32.mrb[0].mxu0
  %v484 = vpop.f32.mrb[0].mxu0
  %v485 = vadd.f32 0.0, %v484
  %v486 = vpop.f32.mrb[0].mxu0
  %487 = vmatprep.mubr.bf16.mxu0 0
  %488 = vmatmul.mubr.bf16.gmra.mrb[0].mxu0 %v303
  %v489 = vpop.f32.mrb[0].mxu0
  %v490 = vadd.f32 0.0, %v489
  %v491 = vpop.f32.mrb[0].mxu0
  %v492 = vpop.f32.mrb[0].mxu0
  %v493 = vadd.f32 0.0, %v492
  %v494 = vpop.f32.mrb[0].mxu0
  %495 = vmatprep.mubr.bf16.mxu0 0
  %496 = vmatmul.mubr.bf16.gmra.mrb[0].mxu0 %v304
  %v497 = vpop.f32.mrb[0].mxu0
  %v498 = vadd.f32 0.0, %v497
  %v499 = vpop.f32.mrb[0].mxu0
  %v500 = vpop.f32.mrb[0].mxu0
  %v501 = vadd.f32 0.0, %v500
  %v502 = vpop.f32.mrb[0].mxu0
  %503 = vmatprep.mubr.bf16.mxu0 0
  %504 = vmatmul.mubr.bf16.gmra.mrb[0].mxu0 %v305
  %v505 = vpop.f32.mrb[0].mxu0
  %v506 = vadd.f32 0.0, %v505
  %v507 = vpop.f32.mrb[0].mxu0
  %v508 = vpop.f32.mrb[0].mxu0
  %v509 = vadd.f32 0.0, %v508
  %v510 = vpop.f32.mrb[0].mxu0
  %511 = vmatprep.mubr.bf16.mxu0 0
  %512 = vmatmul.mubr.bf16.gmra.mrb[0].mxu0 %v306
  %v513 = vpop.f32.mrb[0].mxu0
  %v514 = vadd.f32 0.0, %v513
  %v515 = vpop.f32.mrb[0].mxu0
  %v516 = vpop.f32.mrb[0].mxu0
  %v517 = vadd.f32 0.0, %v516
  %v518 = vpop.f32.mrb[0].mxu0
  %519 = vmatprep.mubr.bf16.mxu0 0
  %520 = vmatmul.mubr.bf16.gmra.mrb[0].mxu0 %v307
  %v521 = vpop.f32.mrb[0].mxu0
  %v522 = vadd.f32 0.0, %v521
  %v523 = vpop.f32.mrb[0].mxu0
  %v524 = vpop.f32.mrb[0].mxu0
  %v525 = vadd.f32 0.0, %v524
  %v526 = vpop.f32.mrb[0].mxu0
  %527 = vmatprep.mubr.bf16.mxu0 0
  %528 = vmatmul.mubr.bf16.gmra.mrb[0].mxu0 %v308
  %v529 = vpop.f32.mrb[0].mxu0
  %v530 = vadd.f32 0.0, %v529
  %v531 = vpop.f32.mrb[0].mxu0
  %v532 = vpop.f32.mrb[0].mxu0
  %v533 = vadd.f32 0.0, %v532
  %v534 = vpop.f32.mrb[0].mxu0
  %535 = vmatprep.mubr.bf16.mxu0 0
  %536 = vmatmul.mubr.bf16.gmra.mrb[0].mxu0 %v309
  %v537 = vpop.f32.mrb[0].mxu0
  %v538 = vadd.f32 0.0, %v537
  %v539 = vpop.f32.mrb[0].mxu0
  %v540 = vpop.f32.mrb[0].mxu0
  %v541 = vadd.f32 0.0, %v540
  %v542 = vpop.f32.mrb[0].mxu0
  %543 = vmatprep.mubr.bf16.mxu0 0
  %544 = vmatmul.mubr.bf16.gmra.mrb[0].mxu0 %v310
  %v545 = vpop.f32.mrb[0].mxu0
  %v546 = vadd.f32 0.0, %v545
  %v547 = vpop.f32.mrb[0].mxu0
  %v548 = vpop.f32.mrb[0].mxu0
  %v549 = vadd.f32 0.0, %v548
  %v550 = vpop.f32.mrb[0].mxu0
  %551 = vmatprep.mubr.bf16.mxu0 0
  %552 = vmatmul.mubr.bf16.gmra.mrb[0].mxu0 %v311
  %v553 = vpop.f32.mrb[0].mxu0
  %v554 = vadd.f32 0.0, %v553
  %v555 = vpop.f32.mrb[0].mxu0
  %v556 = vpop.f32.mrb[0].mxu0
  %v557 = vadd.f32 0.0, %v556
  %v558 = vpop.f32.mrb[0].mxu0
  %559 = vmatprep.mubr.bf16.mxu0 0
  %560 = vmatmul.mubr.bf16.gmra.mrb[0].mxu0 %v312
  %v561 = vpop.f32.mrb[0].mxu0
  %v562 = vadd.f32 0.0, %v561
  %v563 = vpop.f32.mrb[0].mxu0
  %v564 = vpop.f32.mrb[0].mxu0
  %v565 = vadd.f32 0.0, %v564
  %v566 = vpop.f32.mrb[0].mxu0
  %567 = vmatprep.mubr.bf16.mxu0 0
  %568 = vmatmul.mubr.bf16.gmra.mrb[0].mxu0 %v313
  %v569 = vpop.f32.mrb[0].mxu0
  %v570 = vadd.f32 0.0, %v569
  %v571 = vpop.f32.mrb[0].mxu0
  %v572 = vpop.f32.mrb[0].mxu0
  %v573 = vadd.f32 0.0, %v572
  %v574 = vpop.f32.mrb[0].mxu0
  %575 = vmatprep.mubr.bf16.mxu0 0
  %576 = vmatmul.mubr.bf16.gmra.mrb[0].mxu0 %v314
  %v577 = vpop.f32.mrb[0].mxu0
  %v578 = vadd.f32 0.0, %v577
  %v579 = vpop.f32.mrb[0].mxu0
  %v580 = vpop.f32.mrb[0].mxu0
  %v581 = vadd.f32 0.0, %v580
  %v582 = vpop.f32.mrb[0].mxu0
  %583 = vmatprep.mubr.bf16.mxu0 0
  %584 = vmatmul.mubr.bf16.gmra.mrb[0].mxu0 %v315
  %v585 = vpop.f32.mrb[0].mxu0
  %v586 = vadd.f32 0.0, %v585
  %v587 = vpop.f32.mrb[0].mxu0
  %v588 = vpop.f32.mrb[0].mxu0
  %v589 = vadd.f32 0.0, %v588
  %v590 = vpop.f32.mrb[0].mxu0
  %591 = vmatprep.mubr.bf16.mxu0 0
  %592 = vmatmul.mubr.bf16.gmra.mrb[0].mxu0 %v316
  %v593 = vpop.f32.mrb[0].mxu0
  %v594 = vadd.f32 0.0, %v593
  %v595 = vpop.f32.mrb[0].mxu0
  %v596 = vpop.f32.mrb[0].mxu0
  %v597 = vadd.f32 0.0, %v596
  %v598 = vpop.f32.mrb[0].mxu0
  %599 = vmatprep.mubr.bf16.mxu0 0
  %600 = vmatmul.mubr.bf16.gmra.mrb[0].mxu0 %v317
  %v601 = vpop.f32.mrb[0].mxu0
  %v602 = vadd.f32 0.0, %v601
  %v603 = vpop.f32.mrb[0].mxu0
  %v604 = vpop.f32.mrb[0].mxu0
  %v605 = vadd.f32 0.0, %v604
  %v606 = vpop.f32.mrb[0].mxu0
  %607 = vmatprep.mubr.bf16.mxu0 0
  %608 = vmatmul.mubr.bf16.gmra.mrb[0].mxu0 %v318
  %v609 = vpop.f32.mrb[0].mxu0
  %v610 = vadd.f32 0.0, %v609
  %v611 = vpop.f32.mrb[0].mxu0
  %v612 = vpop.f32.mrb[0].mxu0
  %v613 = vadd.f32 0.0, %v612
  %v614 = vpop.f32.mrb[0].mxu0
  %615 = vmatprep.mubr.bf16.mxu0 0
  %616 = vmatmul.mubr.bf16.gmra.mrb[0].mxu0 %v319
  %v617 = vpop.f32.mrb[0].mxu0
  %v618 = vadd.f32 0.0, %v617
  %v619 = vpop.f32.mrb[0].mxu0
  %v620 = vpop.f32.mrb[0].mxu0
  %v621 = vadd.f32 0.0, %v620
  %v622 = vpop.f32.mrb[0].mxu0
  %623 = vmatprep.mubr.bf16.mxu0 0
  %624 = vmatmul.mubr.bf16.gmra.mrb[0].mxu0 %v320
  %v625 = vpop.f32.mrb[0].mxu0
  %v626 = vadd.f32 0.0, %v625
  %v627 = vpop.f32.mrb[0].mxu0
  %v628 = vpop.f32.mrb[0].mxu0
  %v629 = vadd.f32 0.0, %v628
  %v630 = vpop.f32.mrb[0].mxu0
  %631 = vmatprep.mubr.bf16.mxu0 0
  %632 = vmatmul.mubr.bf16.gmra.mrb[0].mxu0 %v321
  %v633 = vpop.f32.mrb[0].mxu0
  %v634 = vadd.f32 0.0, %v633
  %v635 = vpop.f32.mrb[0].mxu0
  %v636 = vpop.f32.mrb[0].mxu0
  %v637 = vadd.f32 0.0, %v636
  %v638 = vpop.f32.mrb[0].mxu0
  %639 = vmatprep.mubr.bf16.mxu0 0
  %640 = vmatmul.mubr.bf16.gmra.mrb[0].mxu0 %v322
  %v641 = vpop.f32.mrb[0].mxu0
  %v642 = vadd.f32 0.0, %v641
  %v643 = vpop.f32.mrb[0].mxu0
  %v644 = vpop.f32.mrb[0].mxu0
  %v645 = vadd.f32 0.0, %v644
  %v646 = vpop.f32.mrb[0].mxu0
  %647 = vmatprep.mubr.bf16.mxu0 0
  %648 = vmatmul.mubr.bf16.gmra.mrb[0].mxu0 %v323
  %v649 = vpop.f32.mrb[0].mxu0
  %v650 = vadd.f32 0.0, %v649
  %v651 = vpop.f32.mrb[0].mxu0
  %v652 = vpop.f32.mrb[0].mxu0
  %v653 = vadd.f32 0.0, %v652
  %v654 = vpop.f32.mrb[0].mxu0
  %655 = vmatprep.mubr.bf16.mxu0 0
  %656 = vmatmul.mubr.bf16.gmra.mrb[0].mxu0 %v324
  %v657 = vpop.f32.mrb[0].mxu0
  %v658 = vadd.f32 0.0, %v657
  %v659 = vpop.f32.mrb[0].mxu0
  %v660 = vpop.f32.mrb[0].mxu0
  %v661 = vadd.f32 0.0, %v660
  %v662 = vpop.f32.mrb[0].mxu0
  %663 = vmatprep.mubr.bf16.mxu0 0
  %664 = vmatmul.mubr.bf16.gmra.mrb[0].mxu0 %v325
  %v665 = vpop.f32.mrb[0].mxu0
  %v666 = vadd.f32 0.0, %v665
  %v667 = vpop.f32.mrb[0].mxu0
  %v668 = vpop.f32.mrb[0].mxu0
  %v669 = vadd.f32 0.0, %v668
  %v670 = vpop.f32.mrb[0].mxu0
  %671 = vmatprep.mubr.bf16.mxu0 0
  %672 = vmatmul.mubr.bf16.gmra.mrb[0].mxu0 %v326
  %v673 = vpop.f32.mrb[0].mxu0
  %v674 = vadd.f32 0.0, %v673
  %v675 = vpop.f32.mrb[0].mxu0
  %v676 = vpop.f32.mrb[0].mxu0
  %v677 = vadd.f32 0.0, %v676
  %v678 = vpop.f32.mrb[0].mxu0
  %679 = vdwg.mxu0
  %680 = vst [vmem:[%s4] sm:$0xff] %v426
  %681 = vst [vmem:[%s4 + $0x8] sm:$0xff] %v429
  %682 = vst [vmem:[%s4 + $0x10] sm:$0xff] %v434
  %683 = vst [vmem:[%s4 + $0x18] sm:$0xff] %v437
  %684 = vst [vmem:[%s4 + $0x20] sm:$0xff] %v442
  %685 = vst [vmem:[%s4 + $0x28] sm:$0xff] %v445
  %686 = vst [vmem:[%s4 + $0x30] sm:$0xff] %v450
  %687 = vst [vmem:[%s4 + $0x38] sm:$0xff] %v453
  %688 = vst [vmem:[%s4 + $0x40] sm:$0xff] %v458
  %689 = vst [vmem:[%s4 + $0x48] sm:$0xff] %v461
  %690 = vst [vmem:[%s4 + $0x50] sm:$0xff] %v466
  %691 = vst [vmem:[%s4 + $0x58] sm:$0xff] %v469
  %692 = vst [vmem:[%s4 + $0x60] sm:$0xff] %v474
  %693 = vst [vmem:[%s4 + $0x68] sm:$0xff] %v477
  %694 = vst [vmem:[%s4 + $0x70] sm:$0xff] %v482
  %695 = vst [vmem:[%s4 + $0x78] sm:$0xff] %v485
  %696 = vst [vmem:[%s4 + $0x80] sm:$0xff] %v490
  %697 = vst [vmem:[%s4 + $0x88] sm:$0xff] %v493
  %698 = vst [vmem:[%s4 + $0x90] sm:$0xff] %v498
  %699 = vst [vmem:[%s4 + $0x98] sm:$0xff] %v501
  %700 = vst [vmem:[%s4 + $0xa0] sm:$0xff] %v506
  %701 = vst [vmem:[%s4 + $0xa8] sm:$0xff] %v509
  %702 = vst [vmem:[%s4 + $0xb0] sm:$0xff] %v514
  %703 = vst [vmem:[%s4 + $0xb8] sm:$0xff] %v517
  %704 = vst [vmem:[%s4 + $0xc0] sm:$0xff] %v522
  %705 = vst [vmem:[%s4 + $0xc8] sm:$0xff] %v525
  %706 = vst [vmem:[%s4 + $0xd0] sm:$0xff] %v530
  %707 = vst [vmem:[%s4 + $0xd8] sm:$0xff] %v533
  %708 = vst [vmem:[%s4 + $0xe0] sm:$0xff] %v538
  %709 = vst [vmem:[%s4 + $0xe8] sm:$0xff] %v541
  %710 = vst [vmem:[%s4 + $0xf0] sm:$0xff] %v546
  %711 = vst [vmem:[%s4 + $0xf8] sm:$0xff] %v549
  %712 = vst [vmem:[%s4 + $0x100] sm:$0xff] %v554
  %713 = vst [vmem:[%s4 + $0x108] sm:$0xff] %v557
  %714 = vst [vmem:[%s4 + $0x110] sm:$0xff] %v562
  %715 = vst [vmem:[%s4 + $0x118] sm:$0xff] %v565
  %716 = vst [vmem:[%s4 + $0x120] sm:$0xff] %v570
  %717 = vst [vmem:[%s4 + $0x128] sm:$0xff] %v573
  %718 = vst [vmem:[%s4 + $0x130] sm:$0xff] %v578
  %719 = vst [vmem:[%s4 + $0x138] sm:$0xff] %v581
  %720 = vst [vmem:[%s4 + $0x140] sm:$0xff] %v586
  %721 = vst [vmem:[%s4 + $0x148] sm:$0xff] %v589
  %722 = vst [vmem:[%s4 + $0x150] sm:$0xff] %v594
  %723 = vst [vmem:[%s4 + $0x158] sm:$0xff] %v597
  %724 = vst [vmem:[%s4 + $0x160] sm:$0xff] %v602
  %725 = vst [vmem:[%s4 + $0x168] sm:$0xff] %v605
  %726 = vst [vmem:[%s4 + $0x170] sm:$0xff] %v610
  %727 = vst [vmem:[%s4 + $0x178] sm:$0xff] %v613
  %728 = vst [vmem:[%s4 + $0x180] sm:$0xff] %v618
  %729 = vst [vmem:[%s4 + $0x188] sm:$0xff] %v621
  %730 = vst [vmem:[%s4 + $0x190] sm:$0xff] %v626
  %731 = vst [vmem:[%s4 + $0x198] sm:$0xff] %v629
  %732 = vst [vmem:[%s4 + $0x1a0] sm:$0xff] %v634
  %733 = vst [vmem:[%s4 + $0x1a8] sm:$0xff] %v637
  %734 = vst [vmem:[%s4 + $0x1b0] sm:$0xff] %v642
  %735 = vst [vmem:[%s4 + $0x1b8] sm:$0xff] %v645
  %736 = vst [vmem:[%s4 + $0x1c0] sm:$0xff] %v650
  %737 = vst [vmem:[%s4 + $0x1c8] sm:$0xff] %v653
  %738 = vst [vmem:[%s4 + $0x1d0] sm:$0xff] %v658
  %739 = vst [vmem:[%s4 + $0x1d8] sm:$0xff] %v661
  %740 = vst [vmem:[%s4 + $0x1e0] sm:$0xff] %v666
  %741 = vst [vmem:[%s4 + $0x1e8] sm:$0xff] %v669
  %742 = vst [vmem:[%s4 + $0x1f0] sm:$0xff] %v674
  %743 = vst [vmem:[%s4 + $0x1f8] sm:$0xff] %v677
  %v744 = vld [vmem:[%s5] sm:$0x1]
  %v745 = vadd.f32 %v426, %v429
  %v746 = vadd.f32 %v745, %v434
  %v747 = vadd.f32 %v746, %v437
  %v748 = vadd.f32 %v747, %v442
  %v749 = vadd.f32 %v748, %v445
  %v750 = vadd.f32 %v749, %v450
  %v751 = vadd.f32 %v750, %v453
  %v752 = vadd.f32 %v751, %v458
  %v753 = vadd.f32 %v752, %v461
  %v754 = vadd.f32 %v753, %v466
  %v755 = vadd.f32 %v754, %v469
  %v756 = vadd.f32 %v755, %v474
  %v757 = vadd.f32 %v756, %v477
  %v758 = vadd.f32 %v757, %v482
  %v759 = vadd.f32 %v758, %v485
  %v760 = vadd.f32 %v759, %v490
  %v761 = vadd.f32 %v760, %v493
  %v762 = vadd.f32 %v761, %v498
  %v763 = vadd.f32 %v762, %v501
  %v764 = vadd.f32 %v763, %v506
  %v765 = vadd.f32 %v764, %v509
  %v766 = vadd.f32 %v765, %v514
  %v767 = vadd.f32 %v766, %v517
  %v768 = vadd.f32 %v767, %v522
  %v769 = vadd.f32 %v768, %v525
  %v770 = vadd.f32 %v769, %v530
  %v771 = vadd.f32 %v770, %v533
  %v772 = vadd.f32 %v771, %v538
  %v773 = vadd.f32 %v772, %v541
  %v774 = vadd.f32 %v773, %v546
  %v775 = vadd.f32 %v774, %v549
  %v776 = vadd.f32 %v775, %v554
  %v777 = vadd.f32 %v776, %v557
  %v778 = vadd.f32 %v777, %v562
  %v779 = vadd.f32 %v778, %v565
  %v780 = vadd.f32 %v779, %v570
  %v781 = vadd.f32 %v780, %v573
  %v782 = vadd.f32 %v781, %v578
  %v783 = vadd.f32 %v782, %v581
  %v784 = vadd.f32 %v783, %v586
  %v785 = vadd.f32 %v784, %v589
  %v786 = vadd.f32 %v785, %v594
  %v787 = vadd.f32 %v786, %v597
  %v788 = vadd.f32 %v787, %v602
  %v789 = vadd.f32 %v788, %v605
  %v790 = vadd.f32 %v789, %v610
  %v791 = vadd.f32 %v790, %v613
  %v792 = vadd.f32 %v791, %v618
  %v793 = vadd.f32 %v792, %v621
  %v794 = vadd.f32 %v793, %v626
  %v795 = vadd.f32 %v794, %v629
  %v796 = vadd.f32 %v795, %v634
  %v797 = vadd.f32 %v796, %v637
  %v798 = vadd.f32 %v797, %v642
  %v799 = vadd.f32 %v798, %v645
  %v800 = vadd.f32 %v799, %v650
  %v801 = vadd.f32 %v800, %v653
  %v802 = vadd.f32 %v801, %v658
  %v803 = vadd.f32 %v802, %v661
  %v804 = vadd.f32 %v803, %v666
  %v805 = vadd.f32 %v804, %v669
  %v806 = vadd.f32 %v805, %v674
  %v807 = vadd.f32 %v806, %v677
  %v808 = vrot.slane %v807, 4
  %v809 = vadd.f32 %v807, %v808
  %v810 = vrot.slane %v809, 2
  %v811 = vadd.f32 %v809, %v810
  %v812 = vrot.slane %v811, 1
  %v813 = vadd.f32 %v811, %v812
  %v814 = vadd.f32 %v744, %v813
  %815 = vst [vmem:[%s5] sm:$0x1] %v814
  %v816 = vld [vmem:[%s5 + $0x1] sm:$0x1]
  %v817 = vmul.f32 %v426, %v426
  %v818 = vmul.f32 %v429, %v429
  %v819 = vmul.f32 %v434, %v434
  %v820 = vmul.f32 %v437, %v437
  %v821 = vmul.f32 %v442, %v442
  %v822 = vmul.f32 %v445, %v445
  %v823 = vmul.f32 %v450, %v450
  %v824 = vmul.f32 %v453, %v453
  %v825 = vmul.f32 %v458, %v458
  %v826 = vmul.f32 %v461, %v461
  %v827 = vmul.f32 %v466, %v466
  %v828 = vmul.f32 %v469, %v469
  %v829 = vmul.f32 %v474, %v474
  %v830 = vmul.f32 %v477, %v477
  %v831 = vmul.f32 %v482, %v482
  %v832 = vmul.f32 %v485, %v485
  %v833 = vmul.f32 %v490, %v490
  %v834 = vmul.f32 %v493, %v493
  %v835 = vmul.f32 %v498, %v498
  %v836 = vmul.f32 %v501, %v501
  %v837 = vmul.f32 %v506, %v506
  %v838 = vmul.f32 %v509, %v509
  %v839 = vmul.f32 %v514, %v514
  %v840 = vmul.f32 %v517, %v517
  %v841 = vmul.f32 %v522, %v522
  %v842 = vmul.f32 %v525, %v525
  %v843 = vmul.f32 %v530, %v530
  %v844 = vmul.f32 %v533, %v533
  %v845 = vmul.f32 %v538, %v538
  %v846 = vmul.f32 %v541, %v541
  %v847 = vmul.f32 %v546, %v546
  %v848 = vmul.f32 %v549, %v549
  %v849 = vmul.f32 %v554, %v554
  %v850 = vmul.f32 %v557, %v557
  %v851 = vmul.f32 %v562, %v562
  %v852 = vmul.f32 %v565, %v565
  %v853 = vmul.f32 %v570, %v570
  %v854 = vmul.f32 %v573, %v573
  %v855 = vmul.f32 %v578, %v578
  %v856 = vmul.f32 %v581, %v581
  %v857 = vmul.f32 %v586, %v586
  %v858 = vmul.f32 %v589, %v589
  %v859 = vmul.f32 %v594, %v594
  %v860 = vmul.f32 %v597, %v597
  %v861 = vmul.f32 %v602, %v602
  %v862 = vmul.f32 %v605, %v605
  %v863 = vmul.f32 %v610, %v610
  %v864 = vmul.f32 %v613, %v613
  %v865 = vmul.f32 %v618, %v618
  %v866 = vmul.f32 %v621, %v621
  %v867 = vmul.f32 %v626, %v626
  %v868 = vmul.f32 %v629, %v629
  %v869 = vmul.f32 %v634, %v634
  %v870 = vmul.f32 %v637, %v637
  %v871 = vmul.f32 %v642, %v642
  %v872 = vmul.f32 %v645, %v645
  %v873 = vmul.f32 %v650, %v650
  %v874 = vmul.f32 %v653, %v653
  %v875 = vmul.f32 %v658, %v658
  %v876 = vmul.f32 %v661, %v661
  %v877 = vmul.f32 %v666, %v666
  %v878 = vmul.f32 %v669, %v669
  %v879 = vmul.f32 %v674, %v674
  %v880 = vmul.f32 %v677, %v677
  %v881 = vadd.f32 %v817, %v818
  %v882 = vadd.f32 %v881, %v819
  %v883 = vadd.f32 %v882, %v820
  %v884 = vadd.f32 %v883, %v821
  %v885 = vadd.f32 %v884, %v822
  %v886 = vadd.f32 %v885, %v823
  %v887 = vadd.f32 %v886, %v824
  %v888 = vadd.f32 %v887, %v825
  %v889 = vadd.f32 %v888, %v826
  %v890 = vadd.f32 %v889, %v827
  %v891 = vadd.f32 %v890, %v828
  %v892 = vadd.f32 %v891, %v829
  %v893 = vadd.f32 %v892, %v830
  %v894 = vadd.f32 %v893, %v831
  %v895 = vadd.f32 %v894, %v832
  %v896 = vadd.f32 %v895, %v833
  %v897 = vadd.f32 %v896, %v834
  %v898 = vadd.f32 %v897, %v835
  %v899 = vadd.f32 %v898, %v836
  %v900 = vadd.f32 %v899, %v837
  %v901 = vadd.f32 %v900, %v838
  %v902 = vadd.f32 %v901, %v839
  %v903 = vadd.f32 %v902, %v840
  %v904 = vadd.f32 %v903, %v841
  %v905 = vadd.f32 %v904, %v842
  %v906 = vadd.f32 %v905, %v843
  %v907 = vadd.f32 %v906, %v844
  %v908 = vadd.f32 %v907, %v845
  %v909 = vadd.f32 %v908, %v846
  %v910 = vadd.f32 %v909, %v847
  %v911 = vadd.f32 %v910, %v848
  %v912 = vadd.f32 %v911, %v849
  %v913 = vadd.f32 %v912, %v850
  %v914 = vadd.f32 %v913, %v851
  %v915 = vadd.f32 %v914, %v852
  %v916 = vadd.f32 %v915, %v853
  %v917 = vadd.f32 %v916, %v854
  %v918 = vadd.f32 %v917, %v855
  %v919 = vadd.f32 %v918, %v856
  %v920 = vadd.f32 %v919, %v857
  %v921 = vadd.f32 %v920, %v858
  %v922 = vadd.f32 %v921, %v859
  %v923 = vadd.f32 %v922, %v860
  %v924 = vadd.f32 %v923, %v861
  %v925 = vadd.f32 %v924, %v862
  %v926 = vadd.f32 %v925, %v863
  %v927 = vadd.f32 %v926, %v864
  %v928 = vadd.f32 %v927, %v865
  %v929 = vadd.f32 %v928, %v866
  %v930 = vadd.f32 %v929, %v867
  %v931 = vadd.f32 %v930, %v868
  %v932 = vadd.f32 %v931, %v869
  %v933 = vadd.f32 %v932, %v870
  %v934 = vadd.f32 %v933, %v871
  %v935 = vadd.f32 %v934, %v872
  %v936 = vadd.f32 %v935, %v873
  %v937 = vadd.f32 %v936, %v874
  %v938 = vadd.f32 %v937, %v875
  %v939 = vadd.f32 %v938, %v876
  %v940 = vadd.f32 %v939, %v877
  %v941 = vadd.f32 %v940, %v878
  %v942 = vadd.f32 %v941, %v879
  %v943 = vadd.f32 %v942, %v880
  %v944 = vrot.slane %v943, 4
  %v945 = vadd.f32 %v943, %v944
  %v946 = vrot.slane %v945, 2
  %v947 = vadd.f32 %v945, %v946
  %v948 = vrot.slane %v947, 1
  %v949 = vadd.f32 %v947, %v948
  %v950 = vadd.f32 %v816, %v949
  %951 = vst [vmem:[%s5 + $0x1] sm:$0x1] %v950
  // Predicated region
  $region22: #{bottleneck_forward.7} parent=0 // pred_check
    _
  $region23: #{bottleneck_forward.7} parent=0 // pred_check_branch
    %953 = sbr.rel (0) target = $region25
  $region24: #{bottleneck_forward.7} parent=0 // pred_region
    _
  $region25: #{bottleneck_forward.7} parent=0 // pred_fallthru
    _
  // Predicated region
  $region26: #{bottleneck_forward.7} parent=0 // pred_check
    _
  $region27: #{bottleneck_forward.7} parent=0 // pred_check_branch
    %955 = sbr.rel (0) target = $region29
  $region28: #{bottleneck_forward.7} parent=0 // pred_region
    _
  $region29: #{bottleneck_forward.7} parent=0 // pred_fallthru
    _
  // Predicated region
  $region30: #{bottleneck_forward.7} parent=0 // pred_check
    _
  $region31: #{bottleneck_forward.7} parent=0 // pred_check_branch
    %957 = sbr.rel (0) target = $region33
  $region32: #{bottleneck_forward.7} parent=0 // pred_region
    _
  $region33: #{bottleneck_forward.7} parent=0 // pred_fallthru
    _
  // Predicated region
  $region34: #{bottleneck_forward.7} parent=0 // pred_check
    _
  $region35: #{bottleneck_forward.7} parent=0 // pred_check_branch
    %959 = sbr.rel (0) target = $region37
  $region36: #{bottleneck_forward.7} parent=0 // pred_region
    _
  $region37: #{bottleneck_forward.7} parent=0 // pred_fallthru
    _

// kernel: bottleneck_forward.6
$region0: #{bottleneck_forward.6}
  #allocation0 [shape = 'u32[]', space=smem, size = 0x4, offset = 0x4, fixed_abs, tag = 'smem constant byte address 0x4 - core index']
  #allocation1 [shape = 'u32[144,128]{1,0:T(1,128)}', space=vmem, size = 0x12000, scoped, tag = 'internal scratch']
  #allocation2 [shape = 'f32[18,18,128]{2,1,0:T(8,128)}', space=vmem, size = 0x36000, scoped, tag = 'scratch operand']
  %s0 = inlined_call_operand.vmem [shape: f32[2,16,16,128], index: 0, kind: input, shape index: {}]
  %s1 = inlined_call_operand.vmem [shape: f32[1,128], index: 1, kind: input, shape index: {}]
  %s2 = inlined_call_operand.vmem [shape: f32[1,128], index: 2, kind: input, shape index: {}]
  %s3 = inlined_call_operand.vmem [shape: bf16[3,3,128,128], index: 3, kind: input, shape index: {}]
  %s4 = inlined_call_operand.vmem [shape: f32[2,256,128], index: 4, kind: output, shape index: {0}]
  %s5 = inlined_call_operand.vmem [shape: f32[8,128], index: 5, kind: output, shape index: {1}]
  %6 = xla_tuple %s4, %s5
  %s7 = sld [smem:[#allocation0]]
  $region61: #{bottleneck_forward.6} parent=0
    _
  %s9 = ssub.s32 1, %s7
  %s10 = scalar_select 0, %s9, %s7
  loop: start=0, step=1, limit=4
  $region2: #{bottleneck_forward.6} parent=0 // loop_pre_header
    _
  $region3: #{bottleneck_forward.6} parent=0 // loop_header
    %s12 = sphi 0, %s16
    %p13 = scmp.ge.s32.totalorder %s12, 4
    %s22 = sphi 0, %s24
    %s25 = sphi 0, %s22
    %s26 = sphi 0, %s25
    %s42 = sphi 0, %s26
    %s46 = sphi 0, %s46
    %s48 = sphi 0, %s46
    %s49 = sphi 0, %s48
    %s63 = sphi 0, %s49
    %s67 = sphi 0, %s67
    %s69 = sphi 0, %s67
    %s70 = sphi 0, %s69
    %s84 = sphi 0, %s70
    %s88 = sphi 0, %s88
    %s90 = sphi 0, %s88
    %s91 = sphi 0, %s90
    %s105 = sphi 0, %s91
    %s111 = sphi 0, %s113
    %s114 = sphi 0, %s111
    %s115 = sphi 0, %s114
    %s131 = sphi 0, %s115
    %s135 = sphi 0, %s135
    %s137 = sphi 0, %s135
    %s138 = sphi 0, %s137
    %s152 = sphi 0, %s138
  $region4: #{bottleneck_forward.6} parent=0 // loop_header_branch
    %15 = sbr.rel (%p13) target = $region8
  $region5: #{bottleneck_forward.6} parent=0 // loop_body
    %s17 = ssub.s32 %s12, 1
    %s18 = ssub.s32 %s12, 2
    %s19 = sadd.s32 %s12, 1
    %s20 = ssub.s32 %s12, %s19
    %p21 = scmp.eq.s32.totalorder %s20, 0
    %s23 = sadd.s32 %s22, 1
    %s24 = scalar_select %p21, %s22, %s23
    %p27 = pneg %p21
    %p28 = scmp.eq.s32.totalorder %s12, 1
    %p29 = por %p27, %p28
    %p30 = scmp.ne.s32.totalorder %s22, %s25
    %p31 = scmp.eq.s32.totalorder %s12, 0
    %p32 = por %p30, %p31
    %p33 = scmp.ne.s32.totalorder %s22, %s25
    %p34 = scmp.eq.s32.totalorder %s17, 1
    %p35 = por %p33, %p34
    %p36 = scmp.ne.s32.totalorder %s25, %s26
    %p37 = scmp.eq.s32.totalorder %s17, 0
    %p38 = por %p36, %p37
    %p39 = scmp.ne.s32.totalorder %s25, %s26
    %p40 = scmp.eq.s32.totalorder %s18, 1
    %p41 = por %p39, %p40
    %p43 = scmp.ne.s32.totalorder %s26, %s42
    %p44 = scmp.eq.s32.totalorder %s18, 0
    %p45 = por %p43, %p44
    %s47 = sadd.s32 %s46, 1
    %p50 = scmp.eq.s32.totalorder %s12, 1
    %p51 = scmp.ne.s32.totalorder %s46, %s48
    %p52 = scmp.eq.s32.totalorder %s12, 0
    %p53 = por %p51, %p52
    %p54 = scmp.ne.s32.totalorder %s46, %s48
    %p55 = scmp.eq.s32.totalorder %s17, 1
    %p56 = por %p54, %p55
    %p57 = scmp.ne.s32.totalorder %s48, %s49
    %p58 = scmp.eq.s32.totalorder %s17, 0
    %p59 = por %p57, %p58
    %p60 = scmp.ne.s32.totalorder %s48, %s49
    %p61 = scmp.eq.s32.totalorder %s18, 1
    %p62 = por %p60, %p61
    %p64 = scmp.ne.s32.totalorder %s49, %s63
    %p65 = scmp.eq.s32.totalorder %s18, 0
    %p66 = por %p64, %p65
    %s68 = sadd.s32 %s67, 1
    %p71 = scmp.eq.s32.totalorder %s12, 1
    %p72 = scmp.ne.s32.totalorder %s67, %s69
    %p73 = scmp.eq.s32.totalorder %s12, 0
    %p74 = por %p72, %p73
    %p75 = scmp.ne.s32.totalorder %s67, %s69
    %p76 = scmp.eq.s32.totalorder %s17, 1
    %p77 = por %p75, %p76
    %p78 = scmp.ne.s32.totalorder %s69, %s70
    %p79 = scmp.eq.s32.totalorder %s17, 0
    %p80 = por %p78, %p79
    %p81 = scmp.ne.s32.totalorder %s69, %s70
    %p82 = scmp.eq.s32.totalorder %s18, 1
    %p83 = por %p81, %p82
    %p85 = scmp.ne.s32.totalorder %s70, %s84
    %p86 = scmp.eq.s32.totalorder %s18, 0
    %p87 = por %p85, %p86
    %s89 = sadd.s32 %s88, 1
    %p92 = scmp.eq.s32.totalorder %s12, 1
    %p93 = scmp.ne.s32.totalorder %s88, %s90
    %p94 = scmp.eq.s32.totalorder %s12, 0
    %p95 = por %p93, %p94
    %p96 = scmp.ne.s32.totalorder %s88, %s90
    %p97 = scmp.eq.s32.totalorder %s17, 1
    %p98 = por %p96, %p97
    %p99 = scmp.ne.s32.totalorder %s90, %s91
    %p100 = scmp.eq.s32.totalorder %s17, 0
    %p101 = por %p99, %p100
    %p102 = scmp.ne.s32.totalorder %s90, %s91
    %p103 = scmp.eq.s32.totalorder %s18, 1
    %p104 = por %p102, %p103
    %p106 = scmp.ne.s32.totalorder %s91, %s105
    %p107 = scmp.eq.s32.totalorder %s18, 0
    %p108 = por %p106, %p107
    %s109 = ssub.s32 %s12, %s19
    %p110 = scmp.eq.s32.totalorder %s109, 0
    %s112 = sadd.s32 %s111, 1
    %s113 = scalar_select %p110, %s111, %s112
    %p116 = pneg %p110
    %p117 = scmp.eq.s32.totalorder %s12, 1
    %p118 = por %p116, %p117
    %p119 = scmp.ne.s32.totalorder %s111, %s114
    %p120 = scmp.eq.s32.totalorder %s12, 0
    %p121 = por %p119, %p120
    %p122 = scmp.ne.s32.totalorder %s111, %s114
    %p123 = scmp.eq.s32.totalorder %s17, 1
    %p124 = por %p122, %p123
    %p125 = scmp.ne.s32.totalorder %s114, %s115
    %p126 = scmp.eq.s32.totalorder %s17, 0
    %p127 = por %p125, %p126
    %p128 = scmp.ne.s32.totalorder %s114, %s115
    %p129 = scmp.eq.s32.totalorder %s18, 1
    %p130 = por %p128, %p129
    %p132 = scmp.ne.s32.totalorder %s115, %s131
    %p133 = scmp.eq.s32.totalorder %s18, 0
    %p134 = por %p132, %p133
    %s136 = sadd.s32 %s135, 1
    %p139 = scmp.eq.s32.totalorder %s12, 1
    %p140 = scmp.ne.s32.totalorder %s135, %s137
    %p141 = scmp.eq.s32.totalorder %s12, 0
    %p142 = por %p140, %p141
    %p143 = scmp.ne.s32.totalorder %s135, %s137
    %p144 = scmp.eq.s32.totalorder %s17, 1
    %p145 = por %p143, %p144
    %p146 = scmp.ne.s32.totalorder %s137, %s138
    %p147 = scmp.eq.s32.totalorder %s17, 0
    %p148 = por %p146, %p147
    %p149 = scmp.ne.s32.totalorder %s137, %s138
    %p150 = scmp.eq.s32.totalorder %s18, 1
    %p151 = por %p149, %p150
    %p153 = scmp.ne.s32.totalorder %s138, %s152
    %p154 = scmp.eq.s32.totalorder %s18, 0
    %p155 = por %p153, %p154
    %p156 = scmp.le.s32.totalorder 1, %s12
    %p157 = scmp.lt.s32.totalorder %s12, 3
    %p158 = pnand %p156, %p157
    %p159 = pneg %p158
    // Predicated region
    $region9: #{bottleneck_forward.6} parent=5 // pred_check
      _
    $region10: #{bottleneck_forward.6} parent=5 // pred_check_branch
      %161 = sbr.rel (%p158) target = $region12
    $region11: #{bottleneck_forward.6} parent=5 // pred_region
      %s162 = ssub.s32 %s12, 1
      // Predicated region
      $region13: #{bottleneck_forward.6} parent=11 // pred_check
        %p163 = pneg %p59
      $region14: #{bottleneck_forward.6} parent=11 // pred_check_branch
        %165 = sbr.rel (%p163) target = $region16
      $region15: #{bottleneck_forward.6} parent=11 // pred_region
        _
      $region16: #{bottleneck_forward.6} parent=11 // pred_fallthru
        _
      // Predicated region
      $region17: #{bottleneck_forward.6} parent=11 // pred_check
        %p166 = pneg %p80
      $region18: #{bottleneck_forward.6} parent=11 // pred_check_branch
        %168 = sbr.rel (%p166) target = $region20
      $region19: #{bottleneck_forward.6} parent=11 // pred_region
        _
      $region20: #{bottleneck_forward.6} parent=11 // pred_fallthru
        _
      // Predicated region
      $region21: #{bottleneck_forward.6} parent=11 // pred_check
        %p169 = pneg %p101
      $region22: #{bottleneck_forward.6} parent=11 // pred_check_branch
        %171 = sbr.rel (%p169) target = $region24
      $region23: #{bottleneck_forward.6} parent=11 // pred_region
        _
      $region24: #{bottleneck_forward.6} parent=11 // pred_fallthru
        _
    $region12: #{bottleneck_forward.6} parent=5 // pred_fallthru
      _
    %p172 = scmp.lt.s32.totalorder %s12, 2
    // Predicated region
    $region25: #{bottleneck_forward.6} parent=5 // pred_check
      %p173 = pneg %p172
    $region26: #{bottleneck_forward.6} parent=5 // pred_check_branch
      %175 = sbr.rel (%p173) target = $region28
    $region27: #{bottleneck_forward.6} parent=5 // pred_region
      // Predicated region
      $region29: #{bottleneck_forward.6} parent=27 // pred_check
        %p176 = pneg %p32
      $region30: #{bottleneck_forward.6} parent=27 // pred_check_branch
        %178 = sbr.rel (%p176) target = $region32
      $region31: #{bottleneck_forward.6} parent=27 // pred_region
        %p179 = scmp.lt.s32.totalorder %s12, 1
        %s180 = scalar_select %p179, %s12, 1
        %s181 = smul.addr %s180, 32
        %s182 = smul.addr %s181, 8
        %s183 = scalar_lea.vmem %s0, %s182
      $region32: #{bottleneck_forward.6} parent=27 // pred_fallthru
        _
    $region28: #{bottleneck_forward.6} parent=5 // pred_fallthru
      _
    %p184 = scmp.le.s32.totalorder 1, %s12
    %p185 = scmp.lt.s32.totalorder %s12, 3
    %p186 = pnand %p184, %p185
    %p187 = pneg %p186
    // Predicated region
    $region33: #{bottleneck_forward.6} parent=5 // pred_check
      _
    $region34: #{bottleneck_forward.6} parent=5 // pred_check_branch
      %189 = sbr.rel (%p186) target = $region36
    $region35: #{bottleneck_forward.6} parent=5 // pred_region
      %s190 = ssub.s32 %s12, 1
      %p191 = scmp.lt.s32.totalorder %s17, 1
      %s192 = scalar_select %p191, %s17, 1
      %s193 = smul.addr %s192, 32
      %s194 = smul.addr %s193, 8
      %s195 = scalar_lea.vmem %s0, %s194
      %p196 = pneg %p38
      %p197 = pneg %p35
      %p198 = pneg %p59
      %p199 = pneg %p56
      %p200 = pneg %p80
      %p201 = pneg %p77
      %p202 = pneg %p101
      %p203 = pneg %p98
      %p204 = pneg %p127
      %p205 = pneg %p124
      %p206 = scmp.lt.s32.totalorder %s17, 1
      %s207 = scalar_select %p206, %s17, 1
      %s208 = smul.addr %s207, 32
      %s209 = smul.addr %s208, 8
      %s210 = scalar_lea.vmem %s4, %s209
      %p211 = pneg %p148
      %p212 = pneg %p145
      %p213 = scmp.lt.s32.totalorder %s17, 1
      %s214 = scalar_select %p213, %s17, 1
      %s215 = smul.addr %s214, 32
      %s216 = smul.addr %s215, 8
      %s217 = scalar_lea.vmem %s0, %s216
      %p218 = scmp.lt.s32.totalorder %s17, 1
      %s219 = scalar_select %p218, %s17, 1
      %s220 = smul.addr %s219, 32
      %s221 = smul.addr %s220, 8
      %s222 = scalar_lea.vmem %s4, %s221
      %p224 = scmp.eq.s32.totalorder %s17, 0
      // Predicated region
      $region37: #{bottleneck_forward.6} parent=35 // pred_check
        %p225 = pneg %p224
      $region38: #{bottleneck_forward.6} parent=35 // pred_check_branch
        %227 = sbr.rel (%p225) target = $region40
      $region39: #{bottleneck_forward.6} parent=35 // pred_region
        %228 = vst [vmem:[#allocation2] sm:$0xff] 0.0
        %229 = vst [vmem:[#allocation2 + $0x8] sm:$0xff] 0.0
        %230 = vst [vmem:[#allocation2 + $0x10] sm:$0x3] 0.0
        %231 = vst [vmem:[#allocation2 + $0x18] sm:$0xff] 0.0
        %232 = vst [vmem:[#allocation2 + $0x20] sm:$0xff] 0.0
        %233 = vst [vmem:[#allocation2 + $0x28] sm:$0x3] 0.0
        %234 = vst [vmem:[#allocation2 + $0x30] sm:$0xff] 0.0
        %235 = vst [vmem:[#allocation2 + $0x38] sm:$0xff] 0.0
        %236 = vst [vmem:[#allocation2 + $0x40] sm:$0x3] 0.0
        %237 = vst [vmem:[#allocation2 + $0x48] sm:$0xff] 0.0
        %238 = vst [vmem:[#allocation2 + $0x50] sm:$0xff] 0.0
        %239 = vst [vmem:[#allocation2 + $0x58] sm:$0x3] 0.0
        %240 = vst [vmem:[#allocation2 + $0x60] sm:$0xff] 0.0
        %241 = vst [vmem:[#allocation2 + $0x68] sm:$0xff] 0.0
        %242 = vst [vmem:[#allocation2 + $0x70] sm:$0x3] 0.0
        %243 = vst [vmem:[#allocation2 + $0x78] sm:$0xff] 0.0
        %244 = vst [vmem:[#allocation2 + $0x80] sm:$0xff] 0.0
        %245 = vst [vmem:[#allocation2 + $0x88] sm:$0x3] 0.0
        %246 = vst [vmem:[#allocation2 + $0x90] sm:$0xff] 0.0
        %247 = vst [vmem:[#allocation2 + $0x98] sm:$0xff] 0.0
        %248 = vst [vmem:[#allocation2 + $0xa0] sm:$0x3] 0.0
        %249 = vst [vmem:[#allocation2 + $0xa8] sm:$0xff] 0.0
        %250 = vst [vmem:[#allocation2 + $0xb0] sm:$0xff] 0.0
        %251 = vst [vmem:[#allocation2 + $0xb8] sm:$0x3] 0.0
        %252 = vst [vmem:[#allocation2 + $0xc0] sm:$0xff] 0.0
        %253 = vst [vmem:[#allocation2 + $0xc8] sm:$0xff] 0.0
        %254 = vst [vmem:[#allocation2 + $0xd0] sm:$0x3] 0.0
        %255 = vst [vmem:[#allocation2 + $0xd8] sm:$0xff] 0.0
        %256 = vst [vmem:[#allocation2 + $0xe0] sm:$0xff] 0.0
        %257 = vst [vmem:[#allocation2 + $0xe8] sm:$0x3] 0.0
        %258 = vst [vmem:[#allocation2 + $0xf0] sm:$0xff] 0.0
        %259 = vst [vmem:[#allocation2 + $0xf8] sm:$0xff] 0.0
        %260 = vst [vmem:[#allocation2 + $0x100] sm:$0x3] 0.0
        %261 = vst [vmem:[#allocation2 + $0x108] sm:$0xff] 0.0
        %262 = vst [vmem:[#allocation2 + $0x110] sm:$0xff] 0.0
        %263 = vst [vmem:[#allocation2 + $0x118] sm:$0x3] 0.0
        %264 = vst [vmem:[#allocation2 + $0x120] sm:$0xff] 0.0
        %265 = vst [vmem:[#allocation2 + $0x128] sm:$0xff] 0.0
        %266 = vst [vmem:[#allocation2 + $0x130] sm:$0x3] 0.0
        %267 = vst [vmem:[#allocation2 + $0x138] sm:$0xff] 0.0
        %268 = vst [vmem:[#allocation2 + $0x140] sm:$0xff] 0.0
        %269 = vst [vmem:[#allocation2 + $0x148] sm:$0x3] 0.0
        %270 = vst [vmem:[#allocation2 + $0x150] sm:$0xff] 0.0
        %271 = vst [vmem:[#allocation2 + $0x158] sm:$0xff] 0.0
        %272 = vst [vmem:[#allocation2 + $0x160] sm:$0x3] 0.0
        %273 = vst [vmem:[#allocation2 + $0x168] sm:$0xff] 0.0
        %274 = vst [vmem:[#allocation2 + $0x170] sm:$0xff] 0.0
        %275 = vst [vmem:[#allocation2 + $0x178] sm:$0x3] 0.0
        %276 = vst [vmem:[#allocation2 + $0x180] sm:$0xff] 0.0
        %277 = vst [vmem:[#allocation2 + $0x188] sm:$0xff] 0.0
        %278 = vst [vmem:[#allocation2 + $0x190] sm:$0x3] 0.0
        %279 = vst [vmem:[#allocation2 + $0x198] sm:$0xff] 0.0
        %280 = vst [vmem:[#allocation2 + $0x1a0] sm:$0xff] 0.0
        %281 = vst [vmem:[#allocation2 + $0x1a8] sm:$0x3] 0.0
        %282 = vst [vmem:[%s5] sm:$0xff] 0.0
      $region40: #{bottleneck_forward.6} parent=35 // pred_fallthru
        _
      %v283 = vld [vmem:[%s217] sm:$0xff]
      %v284 = vld [vmem:[%s217 + $0x8] sm:$0xff]
      %v285 = vld [vmem:[%s217 + $0x10] sm:$0xff]
      %v286 = vld [vmem:[%s217 + $0x18] sm:$0xff]
      %v287 = vld [vmem:[%s217 + $0x20] sm:$0xff]
      %v288 = vld [vmem:[%s217 + $0x28] sm:$0xff]
      %v289 = vld [vmem:[%s217 + $0x30] sm:$0xff]
      %v290 = vld [vmem:[%s217 + $0x38] sm:$0xff]
      %v291 = vld [vmem:[%s217 + $0x40] sm:$0xff]
      %v292 = vld [vmem:[%s217 + $0x48] sm:$0xff]
      %v293 = vld [vmem:[%s217 + $0x50] sm:$0xff]
      %v294 = vld [vmem:[%s217 + $0x58] sm:$0xff]
      %v295 = vld [vmem:[%s217 + $0x60] sm:$0xff]
      %v296 = vld [vmem:[%s217 + $0x68] sm:$0xff]
      %v297 = vld [vmem:[%s217 + $0x70] sm:$0xff]
      %v298 = vld [vmem:[%s217 + $0x78] sm:$0xff]
      %v299 = vld [vmem:[%s217 + $0x80] sm:$0xff]
      %v300 = vld [vmem:[%s217 + $0x88] sm:$0xff]
      %v301 = vld [vmem:[%s217 + $0x90] sm:$0xff]
      %v302 = vld [vmem:[%s217 + $0x98] sm:$0xff]
      %v303 = vld [vmem:[%s217 + $0xa0] sm:$0xff]
      %v304 = vld [vmem:[%s217 + $0xa8] sm:$0xff]
      %v305 = vld [vmem:[%s217 + $0xb0] sm:$0xff]
      %v306 = vld [vmem:[%s217 + $0xb8] sm:$0xff]
      %v307 = vld [vmem:[%s217 + $0xc0] sm:$0xff]
      %v308 = vld [vmem:[%s217 + $0xc8] sm:$0xff]
      %v309 = vld [vmem:[%s217 + $0xd0] sm:$0xff]
      %v310 = vld [vmem:[%s217 + $0xd8] sm:$0xff]
      %v311 = vld [vmem:[%s217 + $0xe0] sm:$0xff]
      %v312 = vld [vmem:[%s217 + $0xe8] sm:$0xff]
      %v313 = vld [vmem:[%s217 + $0xf0] sm:$0xff]
      %v314 = vld [vmem:[%s217 + $0xf8] sm:$0xff]
      %v315 = vld [vmem:[%s1] sm:$0x1]
      %v317 = vlaneseq
      %v318 = vshrl.u32 %v317, 7
      %v319 = vsub.s32 0, %v318
      %v320 = vrot.slane %v315, %v319
      %v322 = vmul.f32 %v283, %v320
      %v323 = vmul.f32 %v284, %v320
      %v324 = vmul.f32 %v285, %v320
      %v325 = vmul.f32 %v286, %v320
      %v326 = vmul.f32 %v287, %v320
      %v327 = vmul.f32 %v288, %v320
      %v328 = vmul.f32 %v289, %v320
      %v329 = vmul.f32 %v290, %v320
      %v330 = vmul.f32 %v291, %v320
      %v331 = vmul.f32 %v292, %v320
      %v332 = vmul.f32 %v293, %v320
      %v333 = vmul.f32 %v294, %v320
      %v334 = vmul.f32 %v295, %v320
      %v335 = vmul.f32 %v296, %v320
      %v336 = vmul.f32 %v297, %v320
      %v337 = vmul.f32 %v298, %v320
      %v338 = vmul.f32 %v299, %v320
      %v339 = vmul.f32 %v300, %v320
      %v340 = vmul.f32 %v301, %v320
      %v341 = vmul.f32 %v302, %v320
      %v342 = vmul.f32 %v303, %v320
      %v343 = vmul.f32 %v304, %v320
      %v344 = vmul.f32 %v305, %v320
      %v345 = vmul.f32 %v306, %v320
      %v346 = vmul.f32 %v307, %v320
      %v347 = vmul.f32 %v308, %v320
      %v348 = vmul.f32 %v309, %v320
      %v349 = vmul.f32 %v310, %v320
      %v350 = vmul.f32 %v311, %v320
      %v351 = vmul.f32 %v312, %v320
      %v352 = vmul.f32 %v313, %v320
      %v353 = vmul.f32 %v314, %v320
      %v354 = vld [vmem:[%s2] sm:$0x1]
      %v356 = vlaneseq
      %v357 = vshrl.u32 %v356, 7
      %v358 = vsub.s32 0, %v357
      %v359 = vrot.slane %v354, %v358
      %v361 = vadd.f32 %v322, %v359
      %v362 = vadd.f32 %v323, %v359
      %v363 = vadd.f32 %v324, %v359
      %v364 = vadd.f32 %v325, %v359
      %v365 = vadd.f32 %v326, %v359
      %v366 = vadd.f32 %v327, %v359
      %v367 = vadd.f32 %v328, %v359
      %v368 = vadd.f32 %v329, %v359
      %v369 = vadd.f32 %v330, %v359
      %v370 = vadd.f32 %v331, %v359
      %v371 = vadd.f32 %v332, %v359
      %v372 = vadd.f32 %v333, %v359
      %v373 = vadd.f32 %v334, %v359
      %v374 = vadd.f32 %v335, %v359
      %v375 = vadd.f32 %v336, %v359
      %v376 = vadd.f32 %v337, %v359
      %v377 = vadd.f32 %v338, %v359
      %v378 = vadd.f32 %v339, %v359
      %v379 = vadd.f32 %v340, %v359
      %v380 = vadd.f32 %v341, %v359
      %v381 = vadd.f32 %v342, %v359
      %v382 = vadd.f32 %v343, %v359
      %v383 = vadd.f32 %v344, %v359
      %v384 = vadd.f32 %v345, %v359
      %v385 = vadd.f32 %v346, %v359
      %v386 = vadd.f32 %v347, %v359
      %v387 = vadd.f32 %v348, %v359
      %v388 = vadd.f32 %v349, %v359
      %v389 = vadd.f32 %v350, %v359
      %v390 = vadd.f32 %v351, %v359
      %v391 = vadd.f32 %v352, %v359
      %v392 = vadd.f32 %v353, %v359
      %v393 = vmax.f32 %v361, 0.0
      %v394 = vmax.f32 %v362, 0.0
      %v395 = vmax.f32 %v363, 0.0
      %v396 = vmax.f32 %v364, 0.0
      %v397 = vmax.f32 %v365, 0.0
      %v398 = vmax.f32 %v366, 0.0
      %v399 = vmax.f32 %v367, 0.0
      %v400 = vmax.f32 %v368, 0.0
      %v401 = vmax.f32 %v369, 0.0
      %v402 = vmax.f32 %v370, 0.0
      %v403 = vmax.f32 %v371, 0.0
      %v404 = vmax.f32 %v372, 0.0
      %v405 = vmax.f32 %v373, 0.0
      %v406 = vmax.f32 %v374, 0.0
      %v407 = vmax.f32 %v375, 0.0
      %v408 = vmax.f32 %v376, 0.0
      %v409 = vmax.f32 %v377, 0.0
      %v410 = vmax.f32 %v378, 0.0
      %v411 = vmax.f32 %v379, 0.0
      %v412 = vmax.f32 %v380, 0.0
      %v413 = vmax.f32 %v381, 0.0
      %v414 = vmax.f32 %v382, 0.0
      %v415 = vmax.f32 %v383, 0.0
      %v416 = vmax.f32 %v384, 0.0
      %v417 = vmax.f32 %v385, 0.0
      %v418 = vmax.f32 %v386, 0.0
      %v419 = vmax.f32 %v387, 0.0
      %v420 = vmax.f32 %v388, 0.0
      %v421 = vmax.f32 %v389, 0.0
      %v422 = vmax.f32 %v390, 0.0
      %v423 = vmax.f32 %v391, 0.0
      %v424 = vmax.f32 %v392, 0.0
      %s425 = scalar_lea.vmem [#allocation2], 24
      %426 = vst [vmem:[%s425 + $0x1] sm:$0xff] %v393
      %427 = vst [vmem:[%s425 + $0x9] sm:$0xff] %v394
      %428 = vst [vmem:[%s425 + $0x19] sm:$0xff] %v395
      %429 = vst [vmem:[%s425 + $0x21] sm:$0xff] %v396
      %430 = vst [vmem:[%s425 + $0x31] sm:$0xff] %v397
      %431 = vst [vmem:[%s425 + $0x39] sm:$0xff] %v398
      %432 = vst [vmem:[%s425 + $0x49] sm:$0xff] %v399
      %433 = vst [vmem:[%s425 + $0x51] sm:$0xff] %v400
      %434 = vst [vmem:[%s425 + $0x61] sm:$0xff] %v401
      %435 = vst [vmem:[%s425 + $0x69] sm:$0xff] %v402
      %436 = vst [vmem:[%s425 + $0x79] sm:$0xff] %v403
      %437 = vst [vmem:[%s425 + $0x81] sm:$0xff] %v404
      %438 = vst [vmem:[%s425 + $0x91] sm:$0xff] %v405
      %439 = vst [vmem:[%s425 + $0x99] sm:$0xff] %v406
      %440 = vst [vmem:[%s425 + $0xa9] sm:$0xff] %v407
      %441 = vst [vmem:[%s425 + $0xb1] sm:$0xff] %v408
      %442 = vst [vmem:[%s425 + $0xc1] sm:$0xff] %v409
      %443 = vst [vmem:[%s425 + $0xc9] sm:$0xff] %v410
      %444 = vst [vmem:[%s425 + $0xd9] sm:$0xff] %v411
      %445 = vst [vmem:[%s425 + $0xe1] sm:$0xff] %v412
      %446 = vst [vmem:[%s425 + $0xf1] sm:$0xff] %v413
      %447 = vst [vmem:[%s425 + $0xf9] sm:$0xff] %v414
      %448 = vst [vmem:[%s425 + $0x109] sm:$0xff] %v415
      %449 = vst [vmem:[%s425 + $0x111] sm:$0xff] %v416
      %450 = vst [vmem:[%s425 + $0x121] sm:$0xff] %v417
      %451 = vst [vmem:[%s425 + $0x129] sm:$0xff] %v418
      %452 = vst [vmem:[%s425 + $0x139] sm:$0xff] %v419
      %453 = vst [vmem:[%s425 + $0x141] sm:$0xff] %v420
      %454 = vst [vmem:[%s425 + $0x151] sm:$0xff] %v421
      %455 = vst [vmem:[%s425 + $0x159] sm:$0xff] %v422
      %456 = vst [vmem:[%s425 + $0x169] sm:$0xff] %v423
      %457 = vst [vmem:[%s425 + $0x171] sm:$0xff] %v424
      %v458 = vld [vmem:[#allocation2] sm:$0xff]
      %v459 = vld [vmem:[#allocation2 + $0x8] sm:$0xff]
      %v460 = vld [vmem:[#allocation2 + $0x18] sm:$0xff]
      %v461 = vld [vmem:[#allocation2 + $0x20] sm:$0xff]
      %v462 = vld [vmem:[#allocation2 + $0x30] sm:$0xff]
      %v463 = vld [vmem:[#allocation2 + $0x38] sm:$0xff]
      %v464 = vld [vmem:[#allocation2 + $0x48] sm:$0xff]
      %v465 = vld [vmem:[#allocation2 + $0x50] sm:$0xff]
      %v466 = vld [vmem:[#allocation2 + $0x60] sm:$0xff]
      %v467 = vld [vmem:[#allocation2 + $0x68] sm:$0xff]
      %v468 = vld [vmem:[#allocation2 + $0x78] sm:$0xff]
      %v469 = vld [vmem:[#allocation2 + $0x80] sm:$0xff]
      %v470 = vld [vmem:[#allocation2 + $0x90] sm:$0xff]
      %v471 = vld [vmem:[#allocation2 + $0x98] sm:$0xff]
      %v472 = vld [vmem:[#allocation2 + $0xa8] sm:$0xff]
      %v473 = vld [vmem:[#allocation2 + $0xb0] sm:$0xff]
      %v474 = vld [vmem:[#allocation2 + $0xc0] sm:$0xff]
      %v475 = vld [vmem:[#allocation2 + $0xc8] sm:$0xff]
      %v476 = vld [vmem:[#allocation2 + $0xd8] sm:$0xff]
      %v477 = vld [vmem:[#allocation2 + $0xe0] sm:$0xff]
      %v478 = vld [vmem:[#allocation2 + $0xf0] sm:$0xff]
      %v479 = vld [vmem:[#allocation2 + $0xf8] sm:$0xff]
      %v480 = vld [vmem:[#allocation2 + $0x108] sm:$0xff]
      %v481 = vld [vmem:[#allocation2 + $0x110] sm:$0xff]
      %v482 = vld [vmem:[#allocation2 + $0x120] sm:$0xff]
      %v483 = vld [vmem:[#allocation2 + $0x128] sm:$0xff]
      %v484 = vld [vmem:[#allocation2 + $0x138] sm:$0xff]
      %v485 = vld [vmem:[#allocation2 + $0x140] sm:$0xff]
      %v486 = vld [vmem:[#allocation2 + $0x150] sm:$0xff]
      %v487 = vld [vmem:[#allocation2 + $0x158] sm:$0xff]
      %v488 = vld [vmem:[#allocation2 + $0x168] sm:$0xff]
      %v489 = vld [vmem:[#allocation2 + $0x170] sm:$0xff]
      %v490 = vpack.c.bf16 %v459, %v458
      %v491 = vpack.c.bf16 %v461, %v460
      %v492 = vpack.c.bf16 %v463, %v462
      %v493 = vpack.c.bf16 %v465, %v464
      %v494 = vpack.c.bf16 %v467, %v466
      %v495 = vpack.c.bf16 %v469, %v468
      %v496 = vpack.c.bf16 %v471, %v470
      %v497 = vpack.c.bf16 %v473, %v472
      %v498 = vpack.c.bf16 %v475, %v474
      %v499 = vpack.c.bf16 %v477, %v476
      %v500 = vpack.c.bf16 %v479, %v478
      %v501 = vpack.c.bf16 %v481, %v480
      %v502 = vpack.c.bf16 %v483, %v482
      %v503 = vpack.c.bf16 %v485, %v484
      %v504 = vpack.c.bf16 %v487, %v486
      %v505 = vpack.c.bf16 %v489, %v488
      %v506 = vld [vmem:[%s3] sm:$0xf]
      %v507 = vld [vmem:[%s3 + $0x4] sm:$0xf]
      %v508 = vld [vmem:[%s3 + $0x8] sm:$0xf]
      %v509 = vld [vmem:[%s3 + $0xc] sm:$0xf]
      %v510 = vld [vmem:[%s3 + $0x10] sm:$0xf]
      %v511 = vld [vmem:[%s3 + $0x14] sm:$0xf]
      %v512 = vld [vmem:[%s3 + $0x18] sm:$0xf]
      %v513 = vld [vmem:[%s3 + $0x1c] sm:$0xf]
      %v514 = vld [vmem:[%s3 + $0x20] sm:$0xf]
      %v515 = vld [vmem:[%s3 + $0x24] sm:$0xf]
      %v516 = vld [vmem:[%s3 + $0x28] sm:$0xf]
      %v517 = vld [vmem:[%s3 + $0x2c] sm:$0xf]
      %v518 = vld [vmem:[%s3 + $0x30] sm:$0xf]
      %v519 = vld [vmem:[%s3 + $0x34] sm:$0xf]
      %v520 = vld [vmem:[%s3 + $0x38] sm:$0xf]
      %v521 = vld [vmem:[%s3 + $0x3c] sm:$0xf]
      %v522 = vld [vmem:[#allocation2 + $0x1] sm:$0xff]
      %v523 = vld [vmem:[#allocation2 + $0x9] sm:$0xff]
      %v524 = vld [vmem:[#allocation2 + $0x19] sm:$0xff]
      %v525 = vld [vmem:[#allocation2 + $0x21] sm:$0xff]
      %v526 = vld [vmem:[#allocation2 + $0x31] sm:$0xff]
      %v527 = vld [vmem:[#allocation2 + $0x39] sm:$0xff]
      %v528 = vld [vmem:[#allocation2 + $0x49] sm:$0xff]
      %v529 = vld [vmem:[#allocation2 + $0x51] sm:$0xff]
      %v530 = vld [vmem:[#allocation2 + $0x61] sm:$0xff]
      %v531 = vld [vmem:[#allocation2 + $0x69] sm:$0xff]
      %v532 = vld [vmem:[#allocation2 + $0x79] sm:$0xff]
      %v533 = vld [vmem:[#allocation2 + $0x81] sm:$0xff]
      %v534 = vld [vmem:[#allocation2 + $0x91] sm:$0xff]
      %v535 = vld [vmem:[#allocation2 + $0x99] sm:$0xff]
      %v536 = vld [vmem:[#allocation2 + $0xa9] sm:$0xff]
      %v537 = vld [vmem:[#allocation2 + $0xb1] sm:$0xff]
      %v538 = vld [vmem:[#allocation2 + $0xc1] sm:$0xff]
      %v539 = vld [vmem:[#allocation2 + $0xc9] sm:$0xff]
      %v540 = vld [vmem:[#allocation2 + $0xd9] sm:$0xff]
      %v541 = vld [vmem:[#allocation2 + $0xe1] sm:$0xff]
      %v542 = vld [vmem:[#allocation2 + $0xf1] sm:$0xff]
      %v543 = vld [vmem:[#allocation2 + $0xf9] sm:$0xff]
      %v544 = vld [vmem:[#allocation2 + $0x109] sm:$0xff]
      %v545 = vld [vmem:[#allocation2 + $0x111] sm:$0xff]
      %v546 = vld [vmem:[#allocation2 + $0x121] sm:$0xff]
      %v547 = vld [vmem:[#allocation2 + $0x129] sm:$0xff]
      %v548 = vld [vmem:[#allocation2 + $0x139] sm:$0xff]
      %v549 = vld [vmem:[#allocation2 + $0x141] sm:$0xff]
      %v550 = vld [vmem:[#allocation2 + $0x151] sm:$0xff]
      %v551 = vld [vmem:[#allocation2 + $0x159] sm:$0xff]
      %v552 = vld [vmem:[#allocation2 + $0x169] sm:$0xff]
      %v553 = vld [vmem:[#allocation2 + $0x171] sm:$0xff]
      %v554 = vpack.c.bf16 %v523, %v522
      %v555 = vpack.c.bf16 %v525, %v524
      %v556 = vpack.c.bf16 %v527, %v526
      %v557 = vpack.c.bf16 %v529, %v528
      %v558 = vpack.c.bf16 %v531, %v530
      %v559 = vpack.c.bf16 %v533, %v532
      %v560 = vpack.c.bf16 %v535, %v534
      %v561 = vpack.c.bf16 %v537, %v536
      %v562 = vpack.c.bf16 %v539, %v538
      %v563 = vpack.c.bf16 %v541, %v540
      %v564 = vpack.c.bf16 %v543, %v542
      %v565 = vpack.c.bf16 %v545, %v544
      %v566 = vpack.c.bf16 %v547, %v546
      %v567 = vpack.c.bf16 %v549, %v548
      %v568 = vpack.c.bf16 %v551, %v550
      %v569 = vpack.c.bf16 %v553, %v552
      %s570 = scalar_lea.vmem %s3, 64
      %v571 = vld [vmem:[%s570] sm:$0xf]
      %v572 = vld [vmem:[%s570 + $0x4] sm:$0xf]
      %v573 = vld [vmem:[%s570 + $0x8] sm:$0xf]
      %v574 = vld [vmem:[%s570 + $0xc] sm:$0xf]
      %v575 = vld [vmem:[%s570 + $0x10] sm:$0xf]
      %v576 = vld [vmem:[%s570 + $0x14] sm:$0xf]
      %v577 = vld [vmem:[%s570 + $0x18] sm:$0xf]
      %v578 = vld [vmem:[%s570 + $0x1c] sm:$0xf]
      %v579 = vld [vmem:[%s570 + $0x20] sm:$0xf]
      %v580 = vld [vmem:[%s570 + $0x24] sm:$0xf]
      %v581 = vld [vmem:[%s570 + $0x28] sm:$0xf]
      %v582 = vld [vmem:[%s570 + $0x2c] sm:$0xf]
      %v583 = vld [vmem:[%s570 + $0x30] sm:$0xf]
      %v584 = vld [vmem:[%s570 + $0x34] sm:$0xf]
      %v585 = vld [vmem:[%s570 + $0x38] sm:$0xf]
      %v586 = vld [vmem:[%s570 + $0x3c] sm:$0xf]
      %v603 = vunpack.c.l.b16 %v571
      %v604 = vunpack.c.l.b16 %v572
      %v605 = vunpack.c.l.b16 %v573
      %v606 = vunpack.c.l.b16 %v574
      %v607 = vunpack.c.l.b16 %v575
      %v608 = vunpack.c.l.b16 %v576
      %v609 = vunpack.c.l.b16 %v577
      %v610 = vunpack.c.l.b16 %v578
      %v611 = vunpack.c.l.b16 %v579
      %v612 = vunpack.c.l.b16 %v580
      %v613 = vunpack.c.l.b16 %v581
      %v614 = vunpack.c.l.b16 %v582
      %v615 = vunpack.c.l.b16 %v583
      %v616 = vunpack.c.l.b16 %v584
      %v617 = vunpack.c.l.b16 %v585
      %v618 = vunpack.c.l.b16 %v586
      %v619 = vpack.c.b16 %v604, %v603
      %v620 = vpack.c.b16 %v606, %v605
      %v621 = vpack.c.b16 %v608, %v607
      %v622 = vpack.c.b16 %v610, %v609
      %v623 = vpack.c.b16 %v612, %v611
      %v624 = vpack.c.b16 %v614, %v613
      %v625 = vpack.c.b16 %v616, %v615
      %v626 = vpack.c.b16 %v618, %v617
      %635 = vmatprep.subr.bf16.mxu0 0
      %636 = vmatpush1.bf16.msra.mxu0 %v619
      %637 = vmatprep.subr.bf16.mxu0 0
      %638 = vmatpush1.bf16.msra.mxu0 %v620
      %639 = vmatprep.subr.bf16.mxu0 0
      %640 = vmatpush1.bf16.msra.mxu0 %v621
      %641 = vmatprep.subr.bf16.mxu0 0
      %642 = vmatpush1.bf16.msra.mxu0 %v622
      %643 = vmatprep.subr.bf16.mxu0 0
      %644 = vmatpush1.bf16.msra.mxu0 %v623
      %645 = vmatprep.subr.bf16.mxu0 0
      %646 = vmatpush1.bf16.msra.mxu0 %v624
      %647 = vmatprep.subr.bf16.mxu0 0
      %648 = vmatpush1.bf16.msra.mxu0 %v625
      %649 = vmatprep.subr.bf16.mxu0 0
      %650 = vmatpush1.bf16.msra.mxu0 %v626
      %651 = vmatprep.subr.bf16.mxu0 0
      %652 = vmatpush1.bf16.msra.mxu0 0
      %653 = vmatprep.subr.bf16.mxu0 0
      %654 = vmatpush1.bf16.msra.mxu0 0
      %655 = vmatprep.subr.bf16.mxu0 0
      %656 = vmatpush1.bf16.msra.mxu0 0
      %657 = vmatprep.subr.bf16.mxu0 0
      %658 = vmatpush1.bf16.msra.mxu0 0
      %659 = vmatprep.subr.bf16.mxu0 0
      %660 = vmatpush1.bf16.msra.mxu0 0
      %661 = vmatprep.subr.bf16.mxu0 0
      %662 = vmatpush1.bf16.msra.mxu0 0
      %663 = vmatprep.subr.bf16.mxu0 0
      %664 = vmatpush1.bf16.msra.mxu0 0
      %665 = vmatprep.subr.bf16.mxu0 0
      %666 = vmatpush1.bf16.msra.mxu0 0
      %667 = vmatprep.mubr.bf16.mxu0 0
      %668 = vmatmul.mubr.bf16.gmra.mrb[0].mxu0 %v554
      %v669 = vpop.f32.mrb[0].mxu0
      %v670 = vadd.f32 0.0, %v669
      %v671 = vpop.f32.mrb[0].mxu0
      %v672 = vpop.f32.mrb[0].mxu0
      %v673 = vadd.f32 0.0, %v672
      %v674 = vpop.f32.mrb[0].mxu0
      %675 = vmatprep.mubr.bf16.mxu0 0
      %676 = vmatmul.mubr.bf16.gmra.mrb[0].mxu0 %v555
      %v677 = vpop.f32.mrb[0].mxu0
      %v678 = vadd.f32 0.0, %v677
      %v679 = vpop.f32.mrb[0].mxu0
      %v680 = vpop.f32.mrb[0].mxu0
      %v681 = vadd.f32 0.0, %v680
      %v682 = vpop.f32.mrb[0].mxu0
      %683 = vmatprep.mubr.bf16.mxu0 0
      %684 = vmatmul.mubr.bf16.gmra.mrb[0].mxu0 %v556
      %v685 = vpop.f32.mrb[0].mxu0
      %v686 = vadd.f32 0.0, %v685
      %v687 = vpop.f32.mrb[0].mxu0
      %v688 = vpop.f32.mrb[0].mxu0
      %v689 = vadd.f32 0.0, %v688
      %v690 = vpop.f32.mrb[0].mxu0
      %691 = vmatprep.mubr.bf16.mxu0 0
      %692 = vmatmul.mubr.bf16.gmra.mrb[0].mxu0 %v557
      %v693 = vpop.f32.mrb[0].mxu0
      %v694 = vadd.f32 0.0, %v693
      %v695 = vpop.f32.mrb[0].mxu0
      %v696 = vpop.f32.mrb[0].mxu0
      %v697 = vadd.f32 0.0, %v696
      %v698 = vpop.f32.mrb[0].mxu0
      %699 = vmatprep.mubr.bf16.mxu0 0
      %700 = vmatmul.mubr.bf16.gmra.mrb[0].mxu0 %v558
      %v701 = vpop.f32.mrb[0].mxu0
      %v702 = vadd.f32 0.0, %v701
      %v703 = vpop.f32.mrb[0].mxu0
      %v704 = vpop.f32.mrb[0].mxu0
      %v705 = vadd.f32 0.0, %v704
      %v706 = vpop.f32.mrb[0].mxu0
      %707 = vmatprep.mubr.bf16.mxu0 0
      %708 = vmatmul.mubr.bf16.gmra.mrb[0].mxu0 %v559
      %v709 = vpop.f32.mrb[0].mxu0
      %v710 = vadd.f32 0.0, %v709
      %v711 = vpop.f32.mrb[0].mxu0
      %v712 = vpop.f32.mrb[0].mxu0
      %v713 = vadd.f32 0.0, %v712
      %v714 = vpop.f32.mrb[0].mxu0
      %715 = vmatprep.mubr.bf16.mxu0 0
      %716 = vmatmul.mubr.bf16.gmra.mrb[0].mxu0 %v560
      %v717 = vpop.f32.mrb[0].mxu0
      %v718 = vadd.f32 0.0, %v717
      %v719 = vpop.f32.mrb[0].mxu0
      %v720 = vpop.f32.mrb[0].mxu0
      %v721 = vadd.f32 0.0, %v720
      %v722 = vpop.f32.mrb[0].mxu0
      %723 = vmatprep.mubr.bf16.mxu0 0
      %724 = vmatmul.mubr.bf16.gmra.mrb[0].mxu0 %v561
      %v725 = vpop.f32.mrb[0].mxu0
      %v726 = vadd.f32 0.0, %v725
      %v727 = vpop.f32.mrb[0].mxu0
      %v728 = vpop.f32.mrb[0].mxu0
      %v729 = vadd.f32 0.0, %v728
      %v730 = vpop.f32.mrb[0].mxu0
      %731 = vmatprep.mubr.bf16.mxu0 0
      %732 = vmatmul.mubr.bf16.gmra.mrb[0].mxu0 %v562
      %v733 = vpop.f32.mrb[0].mxu0
      %v734 = vadd.f32 0.0, %v733
      %v735 = vpop.f32.mrb[0].mxu0
      %v736 = vpop.f32.mrb[0].mxu0
      %v737 = vadd.f32 0.0, %v736
      %v738 = vpop.f32.mrb[0].mxu0
      %739 = vmatprep.mubr.bf16.mxu0 0
      %740 = vmatmul.mubr.bf16.gmra.mrb[0].mxu0 %v563
      %v741 = vpop.f32.mrb[0].mxu0
      %v742 = vadd.f32 0.0, %v741
      %v743 = vpop.f32.mrb[0].mxu0
      %v744 = vpop.f32.mrb[0].mxu0
      %v745 = vadd.f32 0.0, %v744
      %v746 = vpop.f32.mrb[0].mxu0
      %747 = vmatprep.mubr.bf16.mxu0 0
      %748 = vmatmul.mubr.bf16.gmra.mrb[0].mxu0 %v564
      %v749 = vpop.f32.mrb[0].mxu0
      %v750 = vadd.f32 0.0, %v749
      %v751 = vpop.f32.mrb[0].mxu0
      %v752 = vpop.f32.mrb[0].mxu0
      %v753 = vadd.f32 0.0, %v752
      %v754 = vpop.f32.mrb[0].mxu0
      %755 = vmatprep.mubr.bf16.mxu0 0
      %756 = vmatmul.mubr.bf16.gmra.mrb[0].mxu0 %v565
      %v757 = vpop.f32.mrb[0].mxu0
      %v758 = vadd.f32 0.0, %v757
      %v759 = vpop.f32.mrb[0].mxu0
      %v760 = vpop.f32.mrb[0].mxu0
      %v761 = vadd.f32 0.0, %v760
      %v762 = vpop.f32.mrb[0].mxu0
      %763 = vmatprep.mubr.bf16.mxu0 0
      %764 = vmatmul.mubr.bf16.gmra.mrb[0].mxu0 %v566
      %v765 = vpop.f32.mrb[0].mxu0
      %v766 = vadd.f32 0.0, %v765
      %v767 = vpop.f32.mrb[0].mxu0
      %v768 = vpop.f32.mrb[0].mxu0
      %v769 = vadd.f32 0.0, %v768
      %v770 = vpop.f32.mrb[0].mxu0
      %771 = vmatprep.mubr.bf16.mxu0 0
      %772 = vmatmul.mubr.bf16.gmra.mrb[0].mxu0 %v567
      %v773 = vpop.f32.mrb[0].mxu0
      %v774 = vadd.f32 0.0, %v773
      %v775 = vpop.f32.mrb[0].mxu0
      %v776 = vpop.f32.mrb[0].mxu0
      %v777 = vadd.f32 0.0, %v776
      %v778 = vpop.f32.mrb[0].mxu0
      %779 = vmatprep.mubr.bf16.mxu0 0
      %780 = vmatmul.mubr.bf16.gmra.mrb[0].mxu0 %v568
      %v781 = vpop.f32.mrb[0].mxu0
      %v782 = vadd.f32 0.0, %v781
      %v783 = vpop.f32.mrb[0].mxu0
      %v784 = vpop.f32.mrb[0].mxu0
      %v785 = vadd.f32 0.0, %v784
      %v786 = vpop.f32.mrb[0].mxu0
      %787 = vmatprep.mubr.bf16.mxu0 0
      %788 = vmatmul.mubr.bf16.gmra.mrb[0].mxu0 %v569
      %v789 = vpop.f32.mrb[0].mxu0
      %v790 = vadd.f32 0.0, %v789
      %v791 = vpop.f32.mrb[0].mxu0
      %v792 = vpop.f32.mrb[0].mxu0
      %v793 = vadd.f32 0.0, %v792
      %v794 = vpop.f32.mrb[0].mxu0
      %795 = vdwg.mxu0
      %v812 = vunpack.c.l.b16 %v506
      %v813 = vunpack.c.l.b16 %v507
      %v814 = vunpack.c.l.b16 %v508
      %v815 = vunpack.c.l.b16 %v509
      %v816 = vunpack.c.l.b16 %v510
      %v817 = vunpack.c.l.b16 %v511
      %v818 = vunpack.c.l.b16 %v512
      %v819 = vunpack.c.l.b16 %v513
      %v820 = vunpack.c.l.b16 %v514
      %v821 = vunpack.c.l.b16 %v515
      %v822 = vunpack.c.l.b16 %v516
      %v823 = vunpack.c.l.b16 %v517
      %v824 = vunpack.c.l.b16 %v518
      %v825 = vunpack.c.l.b16 %v519
      %v826 = vunpack.c.l.b16 %v520
      %v827 = vunpack.c.l.b16 %v521
      %v828 = vpack.c.b16 %v813, %v812
      %v829 = vpack.c.b16 %v815, %v814
      %v830 = vpack.c.b16 %v817, %v816
      %v831 = vpack.c.b16 %v819, %v818
      %v832 = vpack.c.b16 %v821, %v820
      %v833 = vpack.c.b16 %v823, %v822
      %v834 = vpack.c.b16 %v825, %v824
      %v835 = vpack.c.b16 %v827, %v826
      %844 = vmatprep.subr.bf16.mxu0 0
      %845 = vmatpush1.bf16.msra.mxu0 %v828
      %846 = vmatprep.subr.bf16.mxu0 0
      %847 = vmatpush1.bf16.msra.mxu0 %v829
      %848 = vmatprep.subr.bf16.mxu0 0
      %849 = vmatpush1.bf16.msra.mxu0 %v830
      %850 = vmatprep.subr.bf16.mxu0 0
      %851 = vmatpush1.bf16.msra.mxu0 %v831
      %852 = vmatprep.subr.bf16.mxu0 0
      %853 = vmatpush1.bf16.msra.mxu0 %v832
      %854 = vmatprep.subr.bf16.mxu0 0
      %855 = vmatpush1.bf16.msra.mxu0 %v833
      %856 = vmatprep.subr.bf16.mxu0 0
      %857 = vmatpush1.bf16.msra.mxu0 %v834
      %858 = vmatprep.subr.bf16.mxu0 0
      %859 = vmatpush1.bf16.msra.mxu0 %v835
      %860 = vmatprep.subr.bf16.mxu0 0
      %861 = vmatpush1.bf16.msra.mxu0 0
      %862 = vmatprep.subr.bf16.mxu0 0
      %863 = vmatpush1.bf16.msra.mxu0 0
      %864 = vmatprep.subr.bf16.mxu0 0
      %865 = vmatpush1.bf16.msra.mxu0 0
      %866 = vmatprep.subr.bf16.mxu0 0
      %867 = vmatpush1.bf16.msra.mxu0 0
      %868 = vmatprep.subr.bf16.mxu0 0
      %869 = vmatpush1.bf16.msra.mxu0 0
      %870 = vmatprep.subr.bf16.mxu0 0
      %871 = vmatpush1.bf16.msra.mxu0 0
      %872 = vmatprep.subr.bf16.mxu0 0
      %873 = vmatpush1.bf16.msra.mxu0 0
      %874 = vmatprep.subr.bf16.mxu0 0
      %875 = vmatpush1.bf16.msra.mxu0 0
      %876 = vmatprep.mubr.bf16.mxu0 0
      %877 = vmatmul.mubr.bf16.gmra.mrb[0].mxu0 %v490
      %v878 = vpop.f32.mrb[0].mxu0
      %v879 = vadd.f32 %v670, %v878
      %v880 = vpop.f32.mrb[0].mxu0
      %v881 = vpop.f32.mrb[0].mxu0
      %v882 = vadd.f32 %v673, %v881
      %v883 = vpop.f32.mrb[0].mxu0
      %884 = vmatprep.mubr.bf16.mxu0 0
      %885 = vmatmul.mubr.bf16.gmra.mrb[0].mxu0 %v491
      %v886 = vpop.f32.mrb[0].mxu0
      %v887 = vadd.f32 %v678, %v886
      %v888 = vpop.f32.mrb[0].mxu0
      %v889 = vpop.f32.mrb[0].mxu0
      %v890 = vadd.f32 %v681, %v889
      %v891 = vpop.f32.mrb[0].mxu0
      %892 = vmatprep.mubr.bf16.mxu0 0
      %893 = vmatmul.mubr.bf16.gmra.mrb[0].mxu0 %v492
      %v894 = vpop.f32.mrb[0].mxu0
      %v895 = vadd.f32 %v686, %v894
      %v896 = vpop.f32.mrb[0].mxu0
      %v897 = vpop.f32.mrb[0].mxu0
      %v898 = vadd.f32 %v689, %v897
      %v899 = vpop.f32.mrb[0].mxu0
      %900 = vmatprep.mubr.bf16.mxu0 0
      %901 = vmatmul.mubr.bf16.gmra.mrb[0].mxu0 %v493
      %v902 = vpop.f32.mrb[0].mxu0
      %v903 = vadd.f32 %v694, %v902
      %v904 = vpop.f32.mrb[0].mxu0
      %v905 = vpop.f32.mrb[0].mxu0
      %v906 = vadd.f32 %v697, %v905
      %v907 = vpop.f32.mrb[0].mxu0
      %908 = vmatprep.mubr.bf16.mxu0 0
      %909 = vmatmul.mubr.bf16.gmra.mrb[0].mxu0 %v494
      %v910 = vpop.f32.mrb[0].mxu0
      %v911 = vadd.f32 %v702, %v910
      %v912 = vpop.f32.mrb[0].mxu0
      %v913 = vpop.f32.mrb[0].mxu0
      %v914 = vadd.f32 %v705, %v913
      %v915 = vpop.f32.mrb[0].mxu0
      %916 = vmatprep.mubr.bf16.mxu0 0
      %917 = vmatmul.mubr.bf16.gmra.mrb[0].mxu0 %v495
      %v918 = vpop.f32.mrb[0].mxu0
      %v919 = vadd.f32 %v710, %v918
      %v920 = vpop.f32.mrb[0].mxu0
      %v921 = vpop.f32.mrb[0].mxu0
      %v922 = vadd.f32 %v713, %v921
      %v923 = vpop.f32.mrb[0].mxu0
      %924 = vmatprep.mubr.bf16.mxu0 0
      %925 = vmatmul.mubr.bf16.gmra.mrb[0].mxu0 %v496
      %v926 = vpop.f32.mrb[0].mxu0
      %v927 = vadd.f32 %v718, %v926
      %v928 = vpop.f32.mrb[0].mxu0
      %v929 = vpop.f32.mrb[0].mxu0
      %v930 = vadd.f32 %v721, %v929
      %v931 = vpop.f32.mrb[0].mxu0
      %932 = vmatprep.mubr.bf16.mxu0 0
      %933 = vmatmul.mubr.bf16.gmra.mrb[0].mxu0 %v497
      %v934 = vpop.f32.mrb[0].mxu0
      %v935 = vadd.f32 %v726, %v934
      %v936 = vpop.f32.mrb[0].mxu0
      %v937 = vpop.f32.mrb[0].mxu0
      %v938 = vadd.f32 %v729, %v937
      %v939 = vpop.f32.mrb[0].mxu0
      %940 = vmatprep.mubr.bf16.mxu0 0
      %941 = vmatmul.mubr.bf16.gmra.mrb[0].mxu0 %v498
      %v942 = vpop.f32.mrb[0].mxu0
      %v943 = vadd.f32 %v734, %v942
      %v944 = vpop.f32.mrb[0].mxu0
      %v945 = vpop.f32.mrb[0].mxu0
      %v946 = vadd.f32 %v737, %v945
      %v947 = vpop.f32.mrb[0].mxu0
      %948 = vmatprep.mubr.bf16.mxu0 0
      %949 = vmatmul.mubr.bf16.gmra.mrb[0].mxu0 %v499
      %v950 = vpop.f32.mrb[0].mxu0
      %v951 = vadd.f32 %v742, %v950
      %v952 = vpop.f32.mrb[0].mxu0
      %v953 = vpop.f32.mrb[0].mxu0
      %v954 = vadd.f32 %v745, %v953
      %v955 = vpop.f32.mrb[0].mxu0
      %956 = vmatprep.mubr.bf16.mxu0 0
      %957 = vmatmul.mubr.bf16.gmra.mrb[0].mxu0 %v500
      %v958 = vpop.f32.mrb[0].mxu0
      %v959 = vadd.f32 %v750, %v958
      %v960 = vpop.f32.mrb[0].mxu0
      %v961 = vpop.f32.mrb[0].mxu0
      %v962 = vadd.f32 %v753, %v961
      %v963 = vpop.f32.mrb[0].mxu0
      %964 = vmatprep.mubr.bf16.mxu0 0
      %965 = vmatmul.mubr.bf16.gmra.mrb[0].mxu0 %v501
      %v966 = vpop.f32.mrb[0].mxu0
      %v967 = vadd.f32 %v758, %v966
      %v968 = vpop.f32.mrb[0].mxu0
      %v969 = vpop.f32.mrb[0].mxu0
      %v970 = vadd.f32 %v761, %v969
      %v971 = vpop.f32.mrb[0].mxu0
      %972 = vmatprep.mubr.bf16.mxu0 0
      %973 = vmatmul.mubr.bf16.gmra.mrb[0].mxu0 %v502
      %v974 = vpop.f32.mrb[0].mxu0
      %v975 = vadd.f32 %v766, %v974
      %v976 = vpop.f32.mrb[0].mxu0
      %v977 = vpop.f32.mrb[0].mxu0
      %v978 = vadd.f32 %v769, %v977
      %v979 = vpop.f32.mrb[0].mxu0
      %980 = vmatprep.mubr.bf16.mxu0 0
      %981 = vmatmul.mubr.bf16.gmra.mrb[0].mxu0 %v503
      %v982 = vpop.f32.mrb[0].mxu0
      %v983 = vadd.f32 %v774, %v982
      %v984 = vpop.f32.mrb[0].mxu0
      %v985 = vpop.f32.mrb[0].mxu0
      %v986 = vadd.f32 %v777, %v985
      %v987 = vpop.f32.mrb[0].mxu0
      %988 = vmatprep.mubr.bf16.mxu0 0
      %989 = vmatmul.mubr.bf16.gmra.mrb[0].mxu0 %v504
      %v990 = vpop.f32.mrb[0].mxu0
      %v991 = vadd.f32 %v782, %v990
      %v992 = vpop.f32.mrb[0].mxu0
      %v993 = vpop.f32.mrb[0].mxu0
      %v994 = vadd.f32 %v785, %v993
      %v995 = vpop.f32.mrb[0].mxu0
      %996 = vmatprep.mubr.bf16.mxu0 0
      %997 = vmatmul.mubr.bf16.gmra.mrb[0].mxu0 %v505
      %v998 = vpop.f32.mrb[0].mxu0
      %v999 = vadd.f32 %v790, %v998
      %v1000 = vpop.f32.mrb[0].mxu0
      %v1001 = vpop.f32.mrb[0].mxu0
      %v1002 = vadd.f32 %v793, %v1001
      %v1003 = vpop.f32.mrb[0].mxu0
      %1004 = vdwg.mxu0
      %v1005 = vld [vmem:[#allocation2 + $0x2] sm:$0xff]
      %v1006 = vld [vmem:[#allocation2 + $0xa] sm:$0xff]
      %v1007 = vld [vmem:[#allocation2 + $0x1a] sm:$0xff]
      %v1008 = vld [vmem:[#allocation2 + $0x22] sm:$0xff]
      %v1009 = vld [vmem:[#allocation2 + $0x32] sm:$0xff]
      %v1010 = vld [vmem:[#allocation2 + $0x3a] sm:$0xff]
      %v1011 = vld [vmem:[#allocation2 + $0x4a] sm:$0xff]
      %v1012 = vld [vmem:[#allocation2 + $0x52] sm:$0xff]
      %v1013 = vld [vmem:[#allocation2 + $0x62] sm:$0xff]
      %v1014 = vld [vmem:[#allocation2 + $0x6a] sm:$0xff]
      %v1015 = vld [vmem:[#allocation2 + $0x7a] sm:$0xff]
      %v1016 = vld [vmem:[#allocation2 + $0x82] sm:$0xff]
      %v1017 = vld [vmem:[#allocation2 + $0x92] sm:$0xff]
      %v1018 = vld [vmem:[#allocation2 + $0x9a] sm:$0xff]
      %v1019 = vld [vmem:[#allocation2 + $0xaa] sm:$0xff]
      %v1020 = vld [vmem:[#allocation2 + $0xb2] sm:$0xff]
      %v1021 = vld [vmem:[#allocation2 + $0xc2] sm:$0xff]
      %v1022 = vld [vmem:[#allocation2 + $0xca] sm:$0xff]
      %v1023 = vld [vmem:[#allocation2 + $0xda] sm:$0xff]
      %v1024 = vld [vmem:[#allocation2 + $0xe2] sm:$0xff]
      %v1025 = vld [vmem:[#allocation2 + $0xf2] sm:$0xff]
      %v1026 = vld [vmem:[#allocation2 + $0xfa] sm:$0xff]
      %v1027 = vld [vmem:[#allocation2 + $0x10a] sm:$0xff]
      %v1028 = vld [vmem:[#allocation2 + $0x112] sm:$0xff]
      %v1029 = vld [vmem:[#allocation2 + $0x122] sm:$0xff]
      %v1030 = vld [vmem:[#allocation2 + $0x12a] sm:$0xff]
      %v1031 = vld [vmem:[#allocation2 + $0x13a] sm:$0xff]
      %v1032 = vld [vmem:[#allocation2 + $0x142] sm:$0xff]
      %v1033 = vld [vmem:[#allocation2 + $0x152] sm:$0xff]
      %v1034 = vld [vmem:[#allocation2 + $0x15a] sm:$0xff]
      %v1035 = vld [vmem:[#allocation2 + $0x16a] sm:$0xff]
      %v1036 = vld [vmem:[#allocation2 + $0x172] sm:$0xff]
      %v1037 = vpack.c.bf16 %v1006, %v1005
      %v1038 = vpack.c.bf16 %v1008, %v1007
      %v1039 = vpack.c.bf16 %v1010, %v1009
      %v1040 = vpack.c.bf16 %v1012, %v1011
      %v1041 = vpack.c.bf16 %v1014, %v1013
      %v1042 = vpack.c.bf16 %v1016, %v1015
      %v1043 = vpack.c.bf16 %v1018, %v1017
      %v1044 = vpack.c.bf16 %v1020, %v1019
      %v1045 = vpack.c.bf16 %v1022, %v1021
      %v1046 = vpack.c.bf16 %v1024, %v1023
      %v1047 = vpack.c.bf16 %v1026, %v1025
      %v1048 = vpack.c.bf16 %v1028, %v1027
      %v1049 = vpack.c.bf16 %v1030, %v1029
      %v1050 = vpack.c.bf16 %v1032, %v1031
      %v1051 = vpack.c.bf16 %v1034, %v1033
      %v1052 = vpack.c.bf16 %v1036, %v1035
      %s1053 = scalar_lea.vmem %s3, 128
      %v1054 = vld [vmem:[%s1053] sm:$0xf]
      %v1055 = vld [vmem:[%s1053 + $0x4] sm:$0xf]
      %v1056 = vld [vmem:[%s1053 + $0x8] sm:$0xf]
      %v1057 = vld [vmem:[%s1053 + $0xc] sm:$0xf]
      %v1058 = vld [vmem:[%s1053 + $0x10] sm:$0xf]
      %v1059 = vld [vmem:[%s1053 + $0x14] sm:$0xf]
      %v1060 = vld [vmem:[%s1053 + $0x18] sm:$0xf]
      %v1061 = vld [vmem:[%s1053 + $0x1c] sm:$0xf]
      %v1062 = vld [vmem:[%s1053 + $0x20] sm:$0xf]
      %v1063 = vld [vmem:[%s1053 + $0x24] sm:$0xf]
      %v1064 = vld [vmem:[%s1053 + $0x28] sm:$0xf]
      %v1065 = vld [vmem:[%s1053 + $0x2c] sm:$0xf]
      %v1066 = vld [vmem:[%s1053 + $0x30] sm:$0xf]
      %v1067 = vld [vmem:[%s1053 + $0x34] sm:$0xf]
      %v1068 = vld [vmem:[%s1053 + $0x38] sm:$0xf]
      %v1069 = vld [vmem:[%s1053 + $0x3c] sm:$0xf]
      %v1086 = vunpack.c.l.b16 %v1054
      %v1087 = vunpack.c.l.b16 %v1055
      %v1088 = vunpack.c.l.b16 %v1056
      %v1089 = vunpack.c.l.b16 %v1057
      %v1090 = vunpack.c.l.b16 %v1058
      %v1091 = vunpack.c.l.b16 %v1059
      %v1092 = vunpack.c.l.b16 %v1060
      %v1093 = vunpack.c.l.b16 %v1061
      %v1094 = vunpack.c.l.b16 %v1062
      %v1095 = vunpack.c.l.b16 %v1063
      %v1096 = vunpack.c.l.b16 %v1064
      %v1097 = vunpack.c.l.b16 %v1065
      %v1098 = vunpack.c.l.b16 %v1066
      %v1099 = vunpack.c.l.b16 %v1067
      %v1100 = vunpack.c.l.b16 %v1068
      %v1101 = vunpack.c.l.b16 %v1069
      %v1102 = vpack.c.b16 %v1087, %v1086
      %v1103 = vpack.c.b16 %v1089, %v1088
      %v1104 = vpack.c.b16 %v1091, %v1090
      %v1105 = vpack.c.b16 %v1093, %v1092
      %v1106 = vpack.c.b16 %v1095, %v1094
      %v1107 = vpack.c.b16 %v1097, %v1096
      %v1108 = vpack.c.b16 %v1099, %v1098
      %v1109 = vpack.c.b16 %v1101, %v1100
      %1118 = vmatprep.subr.bf16.mxu0 0
      %1119 = vmatpush1.bf16.msra.mxu0 %v1102
      %1120 = vmatprep.subr.bf16.mxu0 0
      %1121 = vmatpush1.bf16.msra.mxu0 %v1103
      %1122 = vmatprep.subr.bf16.mxu0 0
      %1123 = vmatpush1.bf16.msra.mxu0 %v1104
      %1124 = vmatprep.subr.bf16.mxu0 0
      %1125 = vmatpush1.bf16.msra.mxu0 %v1105
      %1126 = vmatprep.subr.bf16.mxu0 0
      %1127 = vmatpush1.bf16.msra.mxu0 %v1106
      %1128 = vmatprep.subr.bf16.mxu0 0
      %1129 = vmatpush1.bf16.msra.mxu0 %v1107
      %1130 = vmatprep.subr.bf16.mxu0 0
      %1131 = vmatpush1.bf16.msra.mxu0 %v1108
      %1132 = vmatprep.subr.bf16.mxu0 0
      %1133 = vmatpush1.bf16.msra.mxu0 %v1109
      %1134 = vmatprep.subr.bf16.mxu0 0
      %1135 = vmatpush1.bf16.msra.mxu0 0
      %1136 = vmatprep.subr.bf16.mxu0 0
      %1137 = vmatpush1.bf16.msra.mxu0 0
      %1138 = vmatprep.subr.bf16.mxu0 0
      %1139 = vmatpush1.bf16.msra.mxu0 0
      %1140 = vmatprep.subr.bf16.mxu0 0
      %1141 = vmatpush1.bf16.msra.mxu0 0
      %1142 = vmatprep.subr.bf16.mxu0 0
      %1143 = vmatpush1.bf16.msra.mxu0 0
      %1144 = vmatprep.subr.bf16.mxu0 0
      %1145 = vmatpush1.bf16.msra.mxu0 0
      %1146 = vmatprep.subr.bf16.mxu0 0
      %1147 = vmatpush1.bf16.msra.mxu0 0
      %1148 = vmatprep.subr.bf16.mxu0 0
      %1149 = vmatpush1.bf16.msra.mxu0 0
      %1150 = vmatprep.mubr.bf16.mxu0 0
      %1151 = vmatmul.mubr.bf16.gmra.mrb[0].mxu0 %v1037
      %v1152 = vpop.f32.mrb[0].mxu0
      %v1153 = vadd.f32 0.0, %v1152
      %v1154 = vpop.f32.mrb[0].mxu0
      %v1155 = vpop.f32.mrb[0].mxu0
      %v1156 = vadd.f32 0.0, %v1155
      %v1157 = vpop.f32.mrb[0].mxu0
      %1158 = vmatprep.mubr.bf16.mxu0 0
      %1159 = vmatmul.mubr.bf16.gmra.mrb[0].mxu0 %v1038
      %v1160 = vpop.f32.mrb[0].mxu0
      %v1161 = vadd.f32 0.0, %v1160
      %v1162 = vpop.f32.mrb[0].mxu0
      %v1163 = vpop.f32.mrb[0].mxu0
      %v1164 = vadd.f32 0.0, %v1163
      %v1165 = vpop.f32.mrb[0].mxu0
      %1166 = vmatprep.mubr.bf16.mxu0 0
      %1167 = vmatmul.mubr.bf16.gmra.mrb[0].mxu0 %v1039
      %v1168 = vpop.f32.mrb[0].mxu0
      %v1169 = vadd.f32 0.0, %v1168
      %v1170 = vpop.f32.mrb[0].mxu0
      %v1171 = vpop.f32.mrb[0].mxu0
      %v1172 = vadd.f32 0.0, %v1171
      %v1173 = vpop.f32.mrb[0].mxu0
      %1174 = vmatprep.mubr.bf16.mxu0 0
      %1175 = vmatmul.mubr.bf16.gmra.mrb[0].mxu0 %v1040
      %v1176 = vpop.f32.mrb[0].mxu0
      %v1177 = vadd.f32 0.0, %v1176
      %v1178 = vpop.f32.mrb[0].mxu0
      %v1179 = vpop.f32.mrb[0].mxu0
      %v1180 = vadd.f32 0.0, %v1179
      %v1181 = vpop.f32.mrb[0].mxu0
      %1182 = vmatprep.mubr.bf16.mxu0 0
      %1183 = vmatmul.mubr.bf16.gmra.mrb[0].mxu0 %v1041
      %v1184 = vpop.f32.mrb[0].mxu0
      %v1185 = vadd.f32 0.0, %v1184
      %v1186 = vpop.f32.mrb[0].mxu0
      %v1187 = vpop.f32.mrb[0].mxu0
      %v1188 = vadd.f32 0.0, %v1187
      %v1189 = vpop.f32.mrb[0].mxu0
      %1190 = vmatprep.mubr.bf16.mxu0 0
      %1191 = vmatmul.mubr.bf16.gmra.mrb[0].mxu0 %v1042
      %v1192 = vpop.f32.mrb[0].mxu0
      %v1193 = vadd.f32 0.0, %v1192
      %v1194 = vpop.f32.mrb[0].mxu0
      %v1195 = vpop.f32.mrb[0].mxu0
      %v1196 = vadd.f32 0.0, %v1195
      %v1197 = vpop.f32.mrb[0].mxu0
      %1198 = vmatprep.mubr.bf16.mxu0 0
      %1199 = vmatmul.mubr.bf16.gmra.mrb[0].mxu0 %v1043
      %v1200 = vpop.f32.mrb[0].mxu0
      %v1201 = vadd.f32 0.0, %v1200
      %v1202 = vpop.f32.mrb[0].mxu0
      %v1203 = vpop.f32.mrb[0].mxu0
      %v1204 = vadd.f32 0.0, %v1203
      %v1205 = vpop.f32.mrb[0].mxu0
      %1206 = vmatprep.mubr.bf16.mxu0 0
      %1207 = vmatmul.mubr.bf16.gmra.mrb[0].mxu0 %v1044
      %v1208 = vpop.f32.mrb[0].mxu0
      %v1209 = vadd.f32 0.0, %v1208
      %v1210 = vpop.f32.mrb[0].mxu0
      %v1211 = vpop.f32.mrb[0].mxu0
      %v1212 = vadd.f32 0.0, %v1211
      %v1213 = vpop.f32.mrb[0].mxu0
      %1214 = vmatprep.mubr.bf16.mxu0 0
      %1215 = vmatmul.mubr.bf16.gmra.mrb[0].mxu0 %v1045
      %v1216 = vpop.f32.mrb[0].mxu0
      %v1217 = vadd.f32 0.0, %v1216
      %v1218 = vpop.f32.mrb[0].mxu0
      %v1219 = vpop.f32.mrb[0].mxu0
      %v1220 = vadd.f32 0.0, %v1219
      %v1221 = vpop.f32.mrb[0].mxu0
      %1222 = vmatprep.mubr.bf16.mxu0 0
      %1223 = vmatmul.mubr.bf16.gmra.mrb[0].mxu0 %v1046
      %v1224 = vpop.f32.mrb[0].mxu0
      %v1225 = vadd.f32 0.0, %v1224
      %v1226 = vpop.f32.mrb[0].mxu0
      %v1227 = vpop.f32.mrb[0].mxu0
      %v1228 = vadd.f32 0.0, %v1227
      %v1229 = vpop.f32.mrb[0].mxu0
      %1230 = vmatprep.mubr.bf16.mxu0 0
      %1231 = vmatmul.mubr.bf16.gmra.mrb[0].mxu0 %v1047
      %v1232 = vpop.f32.mrb[0].mxu0
      %v1233 = vadd.f32 0.0, %v1232
      %v1234 = vpop.f32.mrb[0].mxu0
      %v1235 = vpop.f32.mrb[0].mxu0
      %v1236 = vadd.f32 0.0, %v1235
      %v1237 = vpop.f32.mrb[0].mxu0
      %1238 = vmatprep.mubr.bf16.mxu0 0
      %1239 = vmatmul.mubr.bf16.gmra.mrb[0].mxu0 %v1048
      %v1240 = vpop.f32.mrb[0].mxu0
      %v1241 = vadd.f32 0.0, %v1240
      %v1242 = vpop.f32.mrb[0].mxu0
      %v1243 = vpop.f32.mrb[0].mxu0
      %v1244 = vadd.f32 0.0, %v1243
      %v1245 = vpop.f32.mrb[0].mxu0
      %1246 = vmatprep.mubr.bf16.mxu0 0
      %1247 = vmatmul.mubr.bf16.gmra.mrb[0].mxu0 %v1049
      %v1248 = vpop.f32.mrb[0].mxu0
      %v1249 = vadd.f32 0.0, %v1248
      %v1250 = vpop.f32.mrb[0].mxu0
      %v1251 = vpop.f32.mrb[0].mxu0
      %v1252 = vadd.f32 0.0, %v1251
      %v1253 = vpop.f32.mrb[0].mxu0
      %1254 = vmatprep.mubr.bf16.mxu0 0
      %1255 = vmatmul.mubr.bf16.gmra.mrb[0].mxu0 %v1050
      %v1256 = vpop.f32.mrb[0].mxu0
      %v1257 = vadd.f32 0.0, %v1256
      %v1258 = vpop.f32.mrb[0].mxu0
      %v1259 = vpop.f32.mrb[0].mxu0
      %v1260 = vadd.f32 0.0, %v1259
      %v1261 = vpop.f32.mrb[0].mxu0
      %1262 = vmatprep.mubr.bf16.mxu0 0
      %1263 = vmatmul.mubr.bf16.gmra.mrb[0].mxu0 %v1051
      %v1264 = vpop.f32.mrb[0].mxu0
      %v1265 = vadd.f32 0.0, %v1264
      %v1266 = vpop.f32.mrb[0].mxu0
      %v1267 = vpop.f32.mrb[0].mxu0
      %v1268 = vadd.f32 0.0, %v1267
      %v1269 = vpop.f32.mrb[0].mxu0
      %1270 = vmatprep.mubr.bf16.mxu0 0
      %1271 = vmatmul.mubr.bf16.gmra.mrb[0].mxu0 %v1052
      %v1272 = vpop.f32.mrb[0].mxu0
      %v1273 = vadd.f32 0.0, %v1272
      %v1274 = vpop.f32.mrb[0].mxu0
      %v1275 = vpop.f32.mrb[0].mxu0
      %v1276 = vadd.f32 0.0, %v1275
      %v1277 = vpop.f32.mrb[0].mxu0
      %1278 = vdwg.mxu0
      %v1279 = vadd.f32 %v879, %v1153
      %v1280 = vadd.f32 %v882, %v1156
      %v1281 = vadd.f32 %v887, %v1161
      %v1282 = vadd.f32 %v890, %v1164
      %v1283 = vadd.f32 %v895, %v1169
      %v1284 = vadd.f32 %v898, %v1172
      %v1285 = vadd.f32 %v903, %v1177
      %v1286 = vadd.f32 %v906, %v1180
      %v1287 = vadd.f32 %v911, %v1185
      %v1288 = vadd.f32 %v914, %v1188
      %v1289 = vadd.f32 %v919, %v1193
      %v1290 = vadd.f32 %v922, %v1196
      %v1291 = vadd.f32 %v927, %v1201
      %v1292 = vadd.f32 %v930, %v1204
      %v1293 = vadd.f32 %v935, %v1209
      %v1294 = vadd.f32 %v938, %v1212
      %v1295 = vadd.f32 %v943, %v1217
      %v1296 = vadd.f32 %v946, %v1220
      %v1297 = vadd.f32 %v951, %v1225
      %v1298 = vadd.f32 %v954, %v1228
      %v1299 = vadd.f32 %v959, %v1233
      %v1300 = vadd.f32 %v962, %v1236
      %v1301 = vadd.f32 %v967, %v1241
      %v1302 = vadd.f32 %v970, %v1244
      %v1303 = vadd.f32 %v975, %v1249
      %v1304 = vadd.f32 %v978, %v1252
      %v1305 = vadd.f32 %v983, %v1257
      %v1306 = vadd.f32 %v986, %v1260
      %v1307 = vadd.f32 %v991, %v1265
      %v1308 = vadd.f32 %v994, %v1268
      %v1309 = vadd.f32 %v999, %v1273
      %v1310 = vadd.f32 %v1002, %v1276
      %v1311 = vld [vmem:[%s425] sm:$0xff]
      %v1312 = vld [vmem:[%s425 + $0x8] sm:$0xff]
      %v1313 = vld [vmem:[%s425 + $0x18] sm:$0xff]
      %v1314 = vld [vmem:[%s425 + $0x20] sm:$0xff]
      %v1315 = vld [vmem:[%s425 + $0x30] sm:$0xff]
      %v1316 = vld [vmem:[%s425 + $0x38] sm:$0xff]
      %v1317 = vld [vmem:[%s425 + $0x48] sm:$0xff]
      %v1318 = vld [vmem:[%s425 + $0x50] sm:$0xff]
      %v1319 = vld [vmem:[%s425 + $0x60] sm:$0xff]
      %v1320 = vld [vmem:[%s425 + $0x68] sm:$0xff]
      %v1321 = vld [vmem:[%s425 + $0x78] sm:$0xff]
      %v1322 = vld [vmem:[%s425 + $0x80] sm:$0xff]
      %v1323 = vld [vmem:[%s425 + $0x90] sm:$0xff]
      %v1324 = vld [vmem:[%s425 + $0x98] sm:$0xff]
      %v1325 = vld [vmem:[%s425 + $0xa8] sm:$0xff]
      %v1326 = vld [vmem:[%s425 + $0xb0] sm:$0xff]
      %v1327 = vld [vmem:[%s425 + $0xc0] sm:$0xff]
      %v1328 = vld [vmem:[%s425 + $0xc8] sm:$0xff]
      %v1329 = vld [vmem:[%s425 + $0xd8] sm:$0xff]
      %v1330 = vld [vmem:[%s425 + $0xe0] sm:$0xff]
      %v1331 = vld [vmem:[%s425 + $0xf0] sm:$0xff]
      %v1332 = vld [vmem:[%s425 + $0xf8] sm:$0xff]
      %v1333 = vld [vmem:[%s425 + $0x108] sm:$0xff]
      %v1334 = vld [vmem:[%s425 + $0x110] sm:$0xff]
      %v1335 = vld [vmem:[%s425 + $0x120] sm:$0xff]
      %v1336 = vld [vmem:[%s425 + $0x128] sm:$0xff]
      %v1337 = vld [vmem:[%s425 + $0x138] sm:$0xff]
      %v1338 = vld [vmem:[%s425 + $0x140] sm:$0xff]
      %v1339 = vld [vmem:[%s425 + $0x150] sm:$0xff]
      %v1340 = vld [vmem:[%s425 + $0x158] sm:$0xff]
      %v1341 = vld [vmem:[%s425 + $0x168] sm:$0xff]
      %v1342 = vld [vmem:[%s425 + $0x170] sm:$0xff]
      %v1343 = vpack.c.bf16 %v1312, %v1311
      %v1344 = vpack.c.bf16 %v1314, %v1313
      %v1345 = vpack.c.bf16 %v1316, %v1315
      %v1346 = vpack.c.bf16 %v1318, %v1317
      %v1347 = vpack.c.bf16 %v1320, %v1319
      %v1348 = vpack.c.bf16 %v1322, %v1321
      %v1349 = vpack.c.bf16 %v1324, %v1323
      %v1350 = vpack.c.bf16 %v1326, %v1325
      %v1351 = vpack.c.bf16 %v1328, %v1327
      %v1352 = vpack.c.bf16 %v1330, %v1329
      %v1353 = vpack.c.bf16 %v1332, %v1331
      %v1354 = vpack.c.bf16 %v1334, %v1333
      %v1355 = vpack.c.bf16 %v1336, %v1335
      %v1356 = vpack.c.bf16 %v1338, %v1337
      %v1357 = vpack.c.bf16 %v1340, %v1339
      %v1358 = vpack.c.bf16 %v1342, %v1341
      %s1359 = scalar_lea.vmem %s3, 192
      %v1360 = vld [vmem:[%s1359] sm:$0xf]
      %v1361 = vld [vmem:[%s1359 + $0x4] sm:$0xf]
      %v1362 = vld [vmem:[%s1359 + $0x8] sm:$0xf]
      %v1363 = vld [vmem:[%s1359 + $0xc] sm:$0xf]
      %v1364 = vld [vmem:[%s1359 + $0x10] sm:$0xf]
      %v1365 = vld [vmem:[%s1359 + $0x14] sm:$0xf]
      %v1366 = vld [vmem:[%s1359 + $0x18] sm:$0xf]
      %v1367 = vld [vmem:[%s1359 + $0x1c] sm:$0xf]
      %v1368 = vld [vmem:[%s1359 + $0x20] sm:$0xf]
      %v1369 = vld [vmem:[%s1359 + $0x24] sm:$0xf]
      %v1370 = vld [vmem:[%s1359 + $0x28] sm:$0xf]
      %v1371 = vld [vmem:[%s1359 + $0x2c] sm:$0xf]
      %v1372 = vld [vmem:[%s1359 + $0x30] sm:$0xf]
      %v1373 = vld [vmem:[%s1359 + $0x34] sm:$0xf]
      %v1374 = vld [vmem:[%s1359 + $0x38] sm:$0xf]
      %v1375 = vld [vmem:[%s1359 + $0x3c] sm:$0xf]
      %v1392 = vunpack.c.l.b16 %v1360
      %v1393 = vunpack.c.l.b16 %v1361
      %v1394 = vunpack.c.l.b16 %v1362
      %v1395 = vunpack.c.l.b16 %v1363
      %v1396 = vunpack.c.l.b16 %v1364
      %v1397 = vunpack.c.l.b16 %v1365
      %v1398 = vunpack.c.l.b16 %v1366
      %v1399 = vunpack.c.l.b16 %v1367
      %v1400 = vunpack.c.l.b16 %v1368
      %v1401 = vunpack.c.l.b16 %v1369
      %v1402 = vunpack.c.l.b16 %v1370
      %v1403 = vunpack.c.l.b16 %v1371
      %v1404 = vunpack.c.l.b16 %v1372
      %v1405 = vunpack.c.l.b16 %v1373
      %v1406 = vunpack.c.l.b16 %v1374
      %v1407 = vunpack.c.l.b16 %v1375
      %v1408 = vpack.c.b16 %v1393, %v1392
      %v1409 = vpack.c.b16 %v1395, %v1394
      %v1410 = vpack.c.b16 %v1397, %v1396
      %v1411 = vpack.c.b16 %v1399, %v1398
      %v1412 = vpack.c.b16 %v1401, %v1400
      %v1413 = vpack.c.b16 %v1403, %v1402
      %v1414 = vpack.c.b16 %v1405, %v1404
      %v1415 = vpack.c.b16 %v1407, %v1406
      %1424 = vmatprep.subr.bf16.mxu0 0
      %1425 = vmatpush1.bf16.msra.mxu0 %v1408
      %1426 = vmatprep.subr.bf16.mxu0 0
      %1427 = vmatpush1.bf16.msra.mxu0 %v1409
      %1428 = vmatprep.subr.bf16.mxu0 0
      %1429 = vmatpush1.bf16.msra.mxu0 %v1410
      %1430 = vmatprep.subr.bf16.mxu0 0
      %1431 = vmatpush1.bf16.msra.mxu0 %v1411
      %1432 = vmatprep.subr.bf16.mxu0 0
      %1433 = vmatpush1.bf16.msra.mxu0 %v1412
      %1434 = vmatprep.subr.bf16.mxu0 0
      %1435 = vmatpush1.bf16.msra.mxu0 %v1413
      %1436 = vmatprep.subr.bf16.mxu0 0
      %1437 = vmatpush1.bf16.msra.mxu0 %v1414
      %1438 = vmatprep.subr.bf16.mxu0 0
      %1439 = vmatpush1.bf16.msra.mxu0 %v1415
      %1440 = vmatprep.subr.bf16.mxu0 0
      %1441 = vmatpush1.bf16.msra.mxu0 0
      %1442 = vmatprep.subr.bf16.mxu0 0
      %1443 = vmatpush1.bf16.msra.mxu0 0
      %1444 = vmatprep.subr.bf16.mxu0 0
      %1445 = vmatpush1.bf16.msra.mxu0 0
      %1446 = vmatprep.subr.bf16.mxu0 0
      %1447 = vmatpush1.bf16.msra.mxu0 0
      %1448 = vmatprep.subr.bf16.mxu0 0
      %1449 = vmatpush1.bf16.msra.mxu0 0
      %1450 = vmatprep.subr.bf16.mxu0 0
      %1451 = vmatpush1.bf16.msra.mxu0 0
      %1452 = vmatprep.subr.bf16.mxu0 0
      %1453 = vmatpush1.bf16.msra.mxu0 0
      %1454 = vmatprep.subr.bf16.mxu0 0
      %1455 = vmatpush1.bf16.msra.mxu0 0
      %1456 = vmatprep.mubr.bf16.mxu0 0
      %1457 = vmatmul.mubr.bf16.gmra.mrb[0].mxu0 %v1343
      %v1458 = vpop.f32.mrb[0].mxu0
      %v1459 = vadd.f32 0.0, %v1458
      %v1460 = vpop.f32.mrb[0].mxu0
      %v1461 = vpop.f32.mrb[0].mxu0
      %v1462 = vadd.f32 0.0, %v1461
      %v1463 = vpop.f32.mrb[0].mxu0
      %1464 = vmatprep.mubr.bf16.mxu0 0
      %1465 = vmatmul.mubr.bf16.gmra.mrb[0].mxu0 %v1344
      %v1466 = vpop.f32.mrb[0].mxu0
      %v1467 = vadd.f32 0.0, %v1466
      %v1468 = vpop.f32.mrb[0].mxu0
      %v1469 = vpop.f32.mrb[0].mxu0
      %v1470 = vadd.f32 0.0, %v1469
      %v1471 = vpop.f32.mrb[0].mxu0
      %1472 = vmatprep.mubr.bf16.mxu0 0
      %1473 = vmatmul.mubr.bf16.gmra.mrb[0].mxu0 %v1345
      %v1474 = vpop.f32.mrb[0].mxu0
      %v1475 = vadd.f32 0.0, %v1474
      %v1476 = vpop.f32.mrb[0].mxu0
      %v1477 = vpop.f32.mrb[0].mxu0
      %v1478 = vadd.f32 0.0, %v1477
      %v1479 = vpop.f32.mrb[0].mxu0
      %1480 = vmatprep.mubr.bf16.mxu0 0
      %1481 = vmatmul.mubr.bf16.gmra.mrb[0].mxu0 %v1346
      %v1482 = vpop.f32.mrb[0].mxu0
      %v1483 = vadd.f32 0.0, %v1482
      %v1484 = vpop.f32.mrb[0].mxu0
      %v1485 = vpop.f32.mrb[0].mxu0
      %v1486 = vadd.f32 0.0, %v1485
      %v1487 = vpop.f32.mrb[0].mxu0
      %1488 = vmatprep.mubr.bf16.mxu0 0
      %1489 = vmatmul.mubr.bf16.gmra.mrb[0].mxu0 %v1347
      %v1490 = vpop.f32.mrb[0].mxu0
      %v1491 = vadd.f32 0.0, %v1490
      %v1492 = vpop.f32.mrb[0].mxu0
      %v1493 = vpop.f32.mrb[0].mxu0
      %v1494 = vadd.f32 0.0, %v1493
      %v1495 = vpop.f32.mrb[0].mxu0
      %1496 = vmatprep.mubr.bf16.mxu0 0
      %1497 = vmatmul.mubr.bf16.gmra.mrb[0].mxu0 %v1348
      %v1498 = vpop.f32.mrb[0].mxu0
      %v1499 = vadd.f32 0.0, %v1498
      %v1500 = vpop.f32.mrb[0].mxu0
      %v1501 = vpop.f32.mrb[0].mxu0
      %v1502 = vadd.f32 0.0, %v1501
      %v1503 = vpop.f32.mrb[0].mxu0
      %1504 = vmatprep.mubr.bf16.mxu0 0
      %1505 = vmatmul.mubr.bf16.gmra.mrb[0].mxu0 %v1349
      %v1506 = vpop.f32.mrb[0].mxu0
      %v1507 = vadd.f32 0.0, %v1506
      %v1508 = vpop.f32.mrb[0].mxu0
      %v1509 = vpop.f32.mrb[0].mxu0
      %v1510 = vadd.f32 0.0, %v1509
      %v1511 = vpop.f32.mrb[0].mxu0
      %1512 = vmatprep.mubr.bf16.mxu0 0
      %1513 = vmatmul.mubr.bf16.gmra.mrb[0].mxu0 %v1350
      %v1514 = vpop.f32.mrb[0].mxu0
      %v1515 = vadd.f32 0.0, %v1514
      %v1516 = vpop.f32.mrb[0].mxu0
      %v1517 = vpop.f32.mrb[0].mxu0
      %v1518 = vadd.f32 0.0, %v1517
      %v1519 = vpop.f32.mrb[0].mxu0
      %1520 = vmatprep.mubr.bf16.mxu0 0
      %1521 = vmatmul.mubr.bf16.gmra.mrb[0].mxu0 %v1351
      %v1522 = vpop.f32.mrb[0].mxu0
      %v1523 = vadd.f32 0.0, %v1522
      %v1524 = vpop.f32.mrb[0].mxu0
      %v1525 = vpop.f32.mrb[0].mxu0
      %v1526 = vadd.f32 0.0, %v1525
      %v1527 = vpop.f32.mrb[0].mxu0
      %1528 = vmatprep.mubr.bf16.mxu0 0
      %1529 = vmatmul.mubr.bf16.gmra.mrb[0].mxu0 %v1352
      %v1530 = vpop.f32.mrb[0].mxu0
      %v1531 = vadd.f32 0.0, %v1530
      %v1532 = vpop.f32.mrb[0].mxu0
      %v1533 = vpop.f32.mrb[0].mxu0
      %v1534 = vadd.f32 0.0, %v1533
      %v1535 = vpop.f32.mrb[0].mxu0
      %1536 = vmatprep.mubr.bf16.mxu0 0
      %1537 = vmatmul.mubr.bf16.gmra.mrb[0].mxu0 %v1353
      %v1538 = vpop.f32.mrb[0].mxu0
      %v1539 = vadd.f32 0.0, %v1538
      %v1540 = vpop.f32.mrb[0].mxu0
      %v1541 = vpop.f32.mrb[0].mxu0
      %v1542 = vadd.f32 0.0, %v1541
      %v1543 = vpop.f32.mrb[0].mxu0
      %1544 = vmatprep.mubr.bf16.mxu0 0
      %1545 = vmatmul.mubr.bf16.gmra.mrb[0].mxu0 %v1354
      %v1546 = vpop.f32.mrb[0].mxu0
      %v1547 = vadd.f32 0.0, %v1546
      %v1548 = vpop.f32.mrb[0].mxu0
      %v1549 = vpop.f32.mrb[0].mxu0
      %v1550 = vadd.f32 0.0, %v1549
      %v1551 = vpop.f32.mrb[0].mxu0
      %1552 = vmatprep.mubr.bf16.mxu0 0
      %1553 = vmatmul.mubr.bf16.gmra.mrb[0].mxu0 %v1355
      %v1554 = vpop.f32.mrb[0].mxu0
      %v1555 = vadd.f32 0.0, %v1554
      %v1556 = vpop.f32.mrb[0].mxu0
      %v1557 = vpop.f32.mrb[0].mxu0
      %v1558 = vadd.f32 0.0, %v1557
      %v1559 = vpop.f32.mrb[0].mxu0
      %1560 = vmatprep.mubr.bf16.mxu0 0
      %1561 = vmatmul.mubr.bf16.gmra.mrb[0].mxu0 %v1356
      %v1562 = vpop.f32.mrb[0].mxu0
      %v1563 = vadd.f32 0.0, %v1562
      %v1564 = vpop.f32.mrb[0].mxu0
      %v1565 = vpop.f32.mrb[0].mxu0
      %v1566 = vadd.f32 0.0, %v1565
      %v1567 = vpop.f32.mrb[0].mxu0
      %1568 = vmatprep.mubr.bf16.mxu0 0
      %1569 = vmatmul.mubr.bf16.gmra.mrb[0].mxu0 %v1357
      %v1570 = vpop.f32.mrb[0].mxu0
      %v1571 = vadd.f32 0.0, %v1570
      %v1572 = vpop.f32.mrb[0].mxu0
      %v1573 = vpop.f32.mrb[0].mxu0
      %v1574 = vadd.f32 0.0, %v1573
      %v1575 = vpop.f32.mrb[0].mxu0
      %1576 = vmatprep.mubr.bf16.mxu0 0
      %1577 = vmatmul.mubr.bf16.gmra.mrb[0].mxu0 %v1358
      %v1578 = vpop.f32.mrb[0].mxu0
      %v1579 = vadd.f32 0.0, %v1578
      %v1580 = vpop.f32.mrb[0].mxu0
      %v1581 = vpop.f32.mrb[0].mxu0
      %v1582 = vadd.f32 0.0, %v1581
      %v1583 = vpop.f32.mrb[0].mxu0
      %1584 = vdwg.mxu0
      %v1585 = vadd.f32 %v1279, %v1459
      %v1586 = vadd.f32 %v1280, %v1462
      %v1587 = vadd.f32 %v1281, %v1467
      %v1588 = vadd.f32 %v1282, %v1470
      %v1589 = vadd.f32 %v1283, %v1475
      %v1590 = vadd.f32 %v1284, %v1478
      %v1591 = vadd.f32 %v1285, %v1483
      %v1592 = vadd.f32 %v1286, %v1486
      %v1593 = vadd.f32 %v1287, %v1491
      %v1594 = vadd.f32 %v1288, %v1494
      %v1595 = vadd.f32 %v1289, %v1499
      %v1596 = vadd.f32 %v1290, %v1502
      %v1597 = vadd.f32 %v1291, %v1507
      %v1598 = vadd.f32 %v1292, %v1510
      %v1599 = vadd.f32 %v1293, %v1515
      %v1600 = vadd.f32 %v1294, %v1518
      %v1601 = vadd.f32 %v1295, %v1523
      %v1602 = vadd.f32 %v1296, %v1526
      %v1603 = vadd.f32 %v1297, %v1531
      %v1604 = vadd.f32 %v1298, %v1534
      %v1605 = vadd.f32 %v1299, %v1539
      %v1606 = vadd.f32 %v1300, %v1542
      %v1607 = vadd.f32 %v1301, %v1547
      %v1608 = vadd.f32 %v1302, %v1550
      %v1609 = vadd.f32 %v1303, %v1555
      %v1610 = vadd.f32 %v1304, %v1558
      %v1611 = vadd.f32 %v1305, %v1563
      %v1612 = vadd.f32 %v1306, %v1566
      %v1613 = vadd.f32 %v1307, %v1571
      %v1614 = vadd.f32 %v1308, %v1574
      %v1615 = vadd.f32 %v1309, %v1579
      %v1616 = vadd.f32 %v1310, %v1582
      %v1617 = vld [vmem:[%s425 + $0x1] sm:$0xff]
      %v1618 = vld [vmem:[%s425 + $0x9] sm:$0xff]
      %v1619 = vld [vmem:[%s425 + $0x19] sm:$0xff]
      %v1620 = vld [vmem:[%s425 + $0x21] sm:$0xff]
      %v1621 = vld [vmem:[%s425 + $0x31] sm:$0xff]
      %v1622 = vld [vmem:[%s425 + $0x39] sm:$0xff]
      %v1623 = vld [vmem:[%s425 + $0x49] sm:$0xff]
      %v1624 = vld [vmem:[%s425 + $0x51] sm:$0xff]
      %v1625 = vld [vmem:[%s425 + $0x61] sm:$0xff]
      %v1626 = vld [vmem:[%s425 + $0x69] sm:$0xff]
      %v1627 = vld [vmem:[%s425 + $0x79] sm:$0xff]
      %v1628 = vld [vmem:[%s425 + $0x81] sm:$0xff]
      %v1629 = vld [vmem:[%s425 + $0x91] sm:$0xff]
      %v1630 = vld [vmem:[%s425 + $0x99] sm:$0xff]
      %v1631 = vld [vmem:[%s425 + $0xa9] sm:$0xff]
      %v1632 = vld [vmem:[%s425 + $0xb1] sm:$0xff]
      %v1633 = vld [vmem:[%s425 + $0xc1] sm:$0xff]
      %v1634 = vld [vmem:[%s425 + $0xc9] sm:$0xff]
      %v1635 = vld [vmem:[%s425 + $0xd9] sm:$0xff]
      %v1636 = vld [vmem:[%s425 + $0xe1] sm:$0xff]
      %v1637 = vld [vmem:[%s425 + $0xf1] sm:$0xff]
      %v1638 = vld [vmem:[%s425 + $0xf9] sm:$0xff]
      %v1639 = vld [vmem:[%s425 + $0x109] sm:$0xff]
      %v1640 = vld [vmem:[%s425 + $0x111] sm:$0xff]
      %v1641 = vld [vmem:[%s425 + $0x121] sm:$0xff]
      %v1642 = vld [vmem:[%s425 + $0x129] sm:$0xff]
      %v1643 = vld [vmem:[%s425 + $0x139] sm:$0xff]
      %v1644 = vld [vmem:[%s425 + $0x141] sm:$0xff]
      %v1645 = vld [vmem:[%s425 + $0x151] sm:$0xff]
      %v1646 = vld [vmem:[%s425 + $0x159] sm:$0xff]
      %v1647 = vld [vmem:[%s425 + $0x169] sm:$0xff]
      %v1648 = vld [vmem:[%s425 + $0x171] sm:$0xff]
      %v1649 = vpack.c.bf16 %v1618, %v1617
      %v1650 = vpack.c.bf16 %v1620, %v1619
      %v1651 = vpack.c.bf16 %v1622, %v1621
      %v1652 = vpack.c.bf16 %v1624, %v1623
      %v1653 = vpack.c.bf16 %v1626, %v1625
      %v1654 = vpack.c.bf16 %v1628, %v1627
      %v1655 = vpack.c.bf16 %v1630, %v1629
      %v1656 = vpack.c.bf16 %v1632, %v1631
      %v1657 = vpack.c.bf16 %v1634, %v1633
      %v1658 = vpack.c.bf16 %v1636, %v1635
      %v1659 = vpack.c.bf16 %v1638, %v1637
      %v1660 = vpack.c.bf16 %v1640, %v1639
      %v1661 = vpack.c.bf16 %v1642, %v1641
      %v1662 = vpack.c.bf16 %v1644, %v1643
      %v1663 = vpack.c.bf16 %v1646, %v1645
      %v1664 = vpack.c.bf16 %v1648, %v1647
      %s1665 = scalar_lea.vmem %s3, 256
      %v1666 = vld [vmem:[%s1665] sm:$0xf]
      %v1667 = vld [vmem:[%s1665 + $0x4] sm:$0xf]
      %v1668 = vld [vmem:[%s1665 + $0x8] sm:$0xf]
      %v1669 = vld [vmem:[%s1665 + $0xc] sm:$0xf]
      %v1670 = vld [vmem:[%s1665 + $0x10] sm:$0xf]
      %v1671 = vld [vmem:[%s1665 + $0x14] sm:$0xf]
      %v1672 = vld [vmem:[%s1665 + $0x18] sm:$0xf]
      %v1673 = vld [vmem:[%s1665 + $0x1c] sm:$0xf]
      %v1674 = vld [vmem:[%s1665 + $0x20] sm:$0xf]
      %v1675 = vld [vmem:[%s1665 + $0x24] sm:$0xf]
      %v1676 = vld [vmem:[%s1665 + $0x28] sm:$0xf]
      %v1677 = vld [vmem:[%s1665 + $0x2c] sm:$0xf]
      %v1678 = vld [vmem:[%s1665 + $0x30] sm:$0xf]
      %v1679 = vld [vmem:[%s1665 + $0x34] sm:$0xf]
      %v1680 = vld [vmem:[%s1665 + $0x38] sm:$0xf]
      %v1681 = vld [vmem:[%s1665 + $0x3c] sm:$0xf]
      %v1698 = vunpack.c.l.b16 %v1666
      %v1699 = vunpack.c.l.b16 %v1667
      %v1700 = vunpack.c.l.b16 %v1668
      %v1701 = vunpack.c.l.b16 %v1669
      %v1702 = vunpack.c.l.b16 %v1670
      %v1703 = vunpack.c.l.b16 %v1671
      %v1704 = vunpack.c.l.b16 %v1672
      %v1705 = vunpack.c.l.b16 %v1673
      %v1706 = vunpack.c.l.b16 %v1674
      %v1707 = vunpack.c.l.b16 %v1675
      %v1708 = vunpack.c.l.b16 %v1676
      %v1709 = vunpack.c.l.b16 %v1677
      %v1710 = vunpack.c.l.b16 %v1678
      %v1711 = vunpack.c.l.b16 %v1679
      %v1712 = vunpack.c.l.b16 %v1680
      %v1713 = vunpack.c.l.b16 %v1681
      %v1714 = vpack.c.b16 %v1699, %v1698
      %v1715 = vpack.c.b16 %v1701, %v1700
      %v1716 = vpack.c.b16 %v1703, %v1702
      %v1717 = vpack.c.b16 %v1705, %v1704
      %v1718 = vpack.c.b16 %v1707, %v1706
      %v1719 = vpack.c.b16 %v1709, %v1708
      %v1720 = vpack.c.b16 %v1711, %v1710
      %v1721 = vpack.c.b16 %v1713, %v1712
      %1730 = vmatprep.subr.bf16.mxu0 0
      %1731 = vmatpush1.bf16.msra.mxu0 %v1714
      %1732 = vmatprep.subr.bf16.mxu0 0
      %1733 = vmatpush1.bf16.msra.mxu0 %v1715
      %1734 = vmatprep.subr.bf16.mxu0 0
      %1735 = vmatpush1.bf16.msra.mxu0 %v1716
      %1736 = vmatprep.subr.bf16.mxu0 0
      %1737 = vmatpush1.bf16.msra.mxu0 %v1717
      %1738 = vmatprep.subr.bf16.mxu0 0
      %1739 = vmatpush1.bf16.msra.mxu0 %v1718
      %1740 = vmatprep.subr.bf16.mxu0 0
      %1741 = vmatpush1.bf16.msra.mxu0 %v1719
      %1742 = vmatprep.subr.bf16.mxu0 0
      %1743 = vmatpush1.bf16.msra.mxu0 %v1720
      %1744 = vmatprep.subr.bf16.mxu0 0
      %1745 = vmatpush1.bf16.msra.mxu0 %v1721
      %1746 = vmatprep.subr.bf16.mxu0 0
      %1747 = vmatpush1.bf16.msra.mxu0 0
      %1748 = vmatprep.subr.bf16.mxu0 0
      %1749 = vmatpush1.bf16.msra.mxu0 0
      %1750 = vmatprep.subr.bf16.mxu0 0
      %1751 = vmatpush1.bf16.msra.mxu0 0
      %1752 = vmatprep.subr.bf16.mxu0 0
      %1753 = vmatpush1.bf16.msra.mxu0 0
      %1754 = vmatprep.subr.bf16.mxu0 0
      %1755 = vmatpush1.bf16.msra.mxu0 0
      %1756 = vmatprep.subr.bf16.mxu0 0
      %1757 = vmatpush1.bf16.msra.mxu0 0
      %1758 = vmatprep.subr.bf16.mxu0 0
      %1759 = vmatpush1.bf16.msra.mxu0 0
      %1760 = vmatprep.subr.bf16.mxu0 0
      %1761 = vmatpush1.bf16.msra.mxu0 0
      %1762 = vmatprep.mubr.bf16.mxu0 0
      %1763 = vmatmul.mubr.bf16.gmra.mrb[0].mxu0 %v1649
      %v1764 = vpop.f32.mrb[0].mxu0
      %v1765 = vadd.f32 0.0, %v1764
      %v1766 = vpop.f32.mrb[0].mxu0
      %v1767 = vpop.f32.mrb[0].mxu0
      %v1768 = vadd.f32 0.0, %v1767
      %v1769 = vpop.f32.mrb[0].mxu0
      %1770 = vmatprep.mubr.bf16.mxu0 0
      %1771 = vmatmul.mubr.bf16.gmra.mrb[0].mxu0 %v1650
      %v1772 = vpop.f32.mrb[0].mxu0
      %v1773 = vadd.f32 0.0, %v1772
      %v1774 = vpop.f32.mrb[0].mxu0
      %v1775 = vpop.f32.mrb[0].mxu0
      %v1776 = vadd.f32 0.0, %v1775
      %v1777 = vpop.f32.mrb[0].mxu0
      %1778 = vmatprep.mubr.bf16.mxu0 0
      %1779 = vmatmul.mubr.bf16.gmra.mrb[0].mxu0 %v1651
      %v1780 = vpop.f32.mrb[0].mxu0
      %v1781 = vadd.f32 0.0, %v1780
      %v1782 = vpop.f32.mrb[0].mxu0
      %v1783 = vpop.f32.mrb[0].mxu0
      %v1784 = vadd.f32 0.0, %v1783
      %v1785 = vpop.f32.mrb[0].mxu0
      %1786 = vmatprep.mubr.bf16.mxu0 0
      %1787 = vmatmul.mubr.bf16.gmra.mrb[0].mxu0 %v1652
      %v1788 = vpop.f32.mrb[0].mxu0
      %v1789 = vadd.f32 0.0, %v1788
      %v1790 = vpop.f32.mrb[0].mxu0
      %v1791 = vpop.f32.mrb[0].mxu0
      %v1792 = vadd.f32 0.0, %v1791
      %v1793 = vpop.f32.mrb[0].mxu0
      %1794 = vmatprep.mubr.bf16.mxu0 0
      %1795 = vmatmul.mubr.bf16.gmra.mrb[0].mxu0 %v1653
      %v1796 = vpop.f32.mrb[0].mxu0
      %v1797 = vadd.f32 0.0, %v1796
      %v1798 = vpop.f32.mrb[0].mxu0
      %v1799 = vpop.f32.mrb[0].mxu0
      %v1800 = vadd.f32 0.0, %v1799
      %v1801 = vpop.f32.mrb[0].mxu0
      %1802 = vmatprep.mubr.bf16.mxu0 0
      %1803 = vmatmul.mubr.bf16.gmra.mrb[0].mxu0 %v1654
      %v1804 = vpop.f32.mrb[0].mxu0
      %v1805 = vadd.f32 0.0, %v1804
      %v1806 = vpop.f32.mrb[0].mxu0
      %v1807 = vpop.f32.mrb[0].mxu0
      %v1808 = vadd.f32 0.0, %v1807
      %v1809 = vpop.f32.mrb[0].mxu0
      %1810 = vmatprep.mubr.bf16.mxu0 0
      %1811 = vmatmul.mubr.bf16.gmra.mrb[0].mxu0 %v1655
      %v1812 = vpop.f32.mrb[0].mxu0
      %v1813 = vadd.f32 0.0, %v1812
      %v1814 = vpop.f32.mrb[0].mxu0
      %v1815 = vpop.f32.mrb[0].mxu0
      %v1816 = vadd.f32 0.0, %v1815
      %v1817 = vpop.f32.mrb[0].mxu0
      %1818 = vmatprep.mubr.bf16.mxu0 0
      %1819 = vmatmul.mubr.bf16.gmra.mrb[0].mxu0 %v1656
      %v1820 = vpop.f32.mrb[0].mxu0
      %v1821 = vadd.f32 0.0, %v1820
      %v1822 = vpop.f32.mrb[0].mxu0
      %v1823 = vpop.f32.mrb[0].mxu0
      %v1824 = vadd.f32 0.0, %v1823
      %v1825 = vpop.f32.mrb[0].mxu0
      %1826 = vmatprep.mubr.bf16.mxu0 0
      %1827 = vmatmul.mubr.bf16.gmra.mrb[0].mxu0 %v1657
      %v1828 = vpop.f32.mrb[0].mxu0
      %v1829 = vadd.f32 0.0, %v1828
      %v1830 = vpop.f32.mrb[0].mxu0
      %v1831 = vpop.f32.mrb[0].mxu0
      %v1832 = vadd.f32 0.0, %v1831
      %v1833 = vpop.f32.mrb[0].mxu0
      %1834 = vmatprep.mubr.bf16.mxu0 0
      %1835 = vmatmul.mubr.bf16.gmra.mrb[0].mxu0 %v1658
      %v1836 = vpop.f32.mrb[0].mxu0
      %v1837 = vadd.f32 0.0, %v1836
      %v1838 = vpop.f32.mrb[0].mxu0
      %v1839 = vpop.f32.mrb[0].mxu0
      %v1840 = vadd.f32 0.0, %v1839
      %v1841 = vpop.f32.mrb[0].mxu0
      %1842 = vmatprep.mubr.bf16.mxu0 0
      %1843 = vmatmul.mubr.bf16.gmra.mrb[0].mxu0 %v1659
      %v1844 = vpop.f32.mrb[0].mxu0
      %v1845 = vadd.f32 0.0, %v1844
      %v1846 = vpop.f32.mrb[0].mxu0
      %v1847 = vpop.f32.mrb[0].mxu0
      %v1848 = vadd.f32 0.0, %v1847
      %v1849 = vpop.f32.mrb[0].mxu0
      %1850 = vmatprep.mubr.bf16.mxu0 0
      %1851 = vmatmul.mubr.bf16.gmra.mrb[0].mxu0 %v1660
      %v1852 = vpop.f32.mrb[0].mxu0
      %v1853 = vadd.f32 0.0, %v1852
      %v1854 = vpop.f32.mrb[0].mxu0
      %v1855 = vpop.f32.mrb[0].mxu0
      %v1856 = vadd.f32 0.0, %v1855
      %v1857 = vpop.f32.mrb[0].mxu0
      %1858 = vmatprep.mubr.bf16.mxu0 0
      %1859 = vmatmul.mubr.bf16.gmra.mrb[0].mxu0 %v1661
      %v1860 = vpop.f32.mrb[0].mxu0
      %v1861 = vadd.f32 0.0, %v1860
      %v1862 = vpop.f32.mrb[0].mxu0
      %v1863 = vpop.f32.mrb[0].mxu0
      %v1864 = vadd.f32 0.0, %v1863
      %v1865 = vpop.f32.mrb[0].mxu0
      %1866 = vmatprep.mubr.bf16.mxu0 0
      %1867 = vmatmul.mubr.bf16.gmra.mrb[0].mxu0 %v1662
      %v1868 = vpop.f32.mrb[0].mxu0
      %v1869 = vadd.f32 0.0, %v1868
      %v1870 = vpop.f32.mrb[0].mxu0
      %v1871 = vpop.f32.mrb[0].mxu0
      %v1872 = vadd.f32 0.0, %v1871
      %v1873 = vpop.f32.mrb[0].mxu0
      %1874 = vmatprep.mubr.bf16.mxu0 0
      %1875 = vmatmul.mubr.bf16.gmra.mrb[0].mxu0 %v1663
      %v1876 = vpop.f32.mrb[0].mxu0
      %v1877 = vadd.f32 0.0, %v1876
      %v1878 = vpop.f32.mrb[0].mxu0
      %v1879 = vpop.f32.mrb[0].mxu0
      %v1880 = vadd.f32 0.0, %v1879
      %v1881 = vpop.f32.mrb[0].mxu0
      %1882 = vmatprep.mubr.bf16.mxu0 0
      %1883 = vmatmul.mubr.bf16.gmra.mrb[0].mxu0 %v1664
      %v1884 = vpop.f32.mrb[0].mxu0
      %v1885 = vadd.f32 0.0, %v1884
      %v1886 = vpop.f32.mrb[0].mxu0
      %v1887 = vpop.f32.mrb[0].mxu0
      %v1888 = vadd.f32 0.0, %v1887
      %v1889 = vpop.f32.mrb[0].mxu0
      %1890 = vdwg.mxu0
      %v1891 = vadd.f32 %v1585, %v1765
      %v1892 = vadd.f32 %v1586, %v1768
      %v1893 = vadd.f32 %v1587, %v1773
      %v1894 = vadd.f32 %v1588, %v1776
      %v1895 = vadd.f32 %v1589, %v1781
      %v1896 = vadd.f32 %v1590, %v1784
      %v1897 = vadd.f32 %v1591, %v1789
      %v1898 = vadd.f32 %v1592, %v1792
      %v1899 = vadd.f32 %v1593, %v1797
      %v1900 = vadd.f32 %v1594, %v1800
      %v1901 = vadd.f32 %v1595, %v1805
      %v1902 = vadd.f32 %v1596, %v1808
      %v1903 = vadd.f32 %v1597, %v1813
      %v1904 = vadd.f32 %v1598, %v1816
      %v1905 = vadd.f32 %v1599, %v1821
      %v1906 = vadd.f32 %v1600, %v1824
      %v1907 = vadd.f32 %v1601, %v1829
      %v1908 = vadd.f32 %v1602, %v1832
      %v1909 = vadd.f32 %v1603, %v1837
      %v1910 = vadd.f32 %v1604, %v1840
      %v1911 = vadd.f32 %v1605, %v1845
      %v1912 = vadd.f32 %v1606, %v1848
      %v1913 = vadd.f32 %v1607, %v1853
      %v1914 = vadd.f32 %v1608, %v1856
      %v1915 = vadd.f32 %v1609, %v1861
      %v1916 = vadd.f32 %v1610, %v1864
      %v1917 = vadd.f32 %v1611, %v1869
      %v1918 = vadd.f32 %v1612, %v1872
      %v1919 = vadd.f32 %v1613, %v1877
      %v1920 = vadd.f32 %v1614, %v1880
      %v1921 = vadd.f32 %v1615, %v1885
      %v1922 = vadd.f32 %v1616, %v1888
      %v1923 = vld [vmem:[%s425 + $0x2] sm:$0xff]
      %v1924 = vld [vmem:[%s425 + $0xa] sm:$0xff]
      %v1925 = vld [vmem:[%s425 + $0x1a] sm:$0xff]
      %v1926 = vld [vmem:[%s425 + $0x22] sm:$0xff]
      %v1927 = vld [vmem:[%s425 + $0x32] sm:$0xff]
      %v1928 = vld [vmem:[%s425 + $0x3a] sm:$0xff]
      %v1929 = vld [vmem:[%s425 + $0x4a] sm:$0xff]
      %v1930 = vld [vmem:[%s425 + $0x52] sm:$0xff]
      %v1931 = vld [vmem:[%s425 + $0x62] sm:$0xff]
      %v1932 = vld [vmem:[%s425 + $0x6a] sm:$0xff]
      %v1933 = vld [vmem:[%s425 + $0x7a] sm:$0xff]
      %v1934 = vld [vmem:[%s425 + $0x82] sm:$0xff]
      %v1935 = vld [vmem:[%s425 + $0x92] sm:$0xff]
      %v1936 = vld [vmem:[%s425 + $0x9a] sm:$0xff]
      %v1937 = vld [vmem:[%s425 + $0xaa] sm:$0xff]
      %v1938 = vld [vmem:[%s425 + $0xb2] sm:$0xff]
      %v1939 = vld [vmem:[%s425 + $0xc2] sm:$0xff]
      %v1940 = vld [vmem:[%s425 + $0xca] sm:$0xff]
      %v1941 = vld [vmem:[%s425 + $0xda] sm:$0xff]
      %v1942 = vld [vmem:[%s425 + $0xe2] sm:$0xff]
      %v1943 = vld [vmem:[%s425 + $0xf2] sm:$0xff]
      %v1944 = vld [vmem:[%s425 + $0xfa] sm:$0xff]
      %v1945 = vld [vmem:[%s425 + $0x10a] sm:$0xff]
      %v1946 = vld [vmem:[%s425 + $0x112] sm:$0xff]
      %v1947 = vld [vmem:[%s425 + $0x122] sm:$0xff]
      %v1948 = vld [vmem:[%s425 + $0x12a] sm:$0xff]
      %v1949 = vld [vmem:[%s425 + $0x13a] sm:$0xff]
      %v1950 = vld [vmem:[%s425 + $0x142] sm:$0xff]
      %v1951 = vld [vmem:[%s425 + $0x152] sm:$0xff]
      %v1952 = vld [vmem:[%s425 + $0x15a] sm:$0xff]
      %v1953 = vld [vmem:[%s425 + $0x16a] sm:$0xff]
      %v1954 = vld [vmem:[%s425 + $0x172] sm:$0xff]
      %v1955 = vpack.c.bf16 %v1924, %v1923
      %v1956 = vpack.c.bf16 %v1926, %v1925
      %v1957 = vpack.c.bf16 %v1928, %v1927
      %v1958 = vpack.c.bf16 %v1930, %v1929
      %v1959 = vpack.c.bf16 %v1932, %v1931
      %v1960 = vpack.c.bf16 %v1934, %v1933
      %v1961 = vpack.c.bf16 %v1936, %v1935
      %v1962 = vpack.c.bf16 %v1938, %v1937
      %v1963 = vpack.c.bf16 %v1940, %v1939
      %v1964 = vpack.c.bf16 %v1942, %v1941
      %v1965 = vpack.c.bf16 %v1944, %v1943
      %v1966 = vpack.c.bf16 %v1946, %v1945
      %v1967 = vpack.c.bf16 %v1948, %v1947
      %v1968 = vpack.c.bf16 %v1950, %v1949
      %v1969 = vpack.c.bf16 %v1952, %v1951
      %v1970 = vpack.c.bf16 %v1954, %v1953
      %s1971 = scalar_lea.vmem %s3, 320
      %v1972 = vld [vmem:[%s1971] sm:$0xf]
      %v1973 = vld [vmem:[%s1971 + $0x4] sm:$0xf]
      %v1974 = vld [vmem:[%s1971 + $0x8] sm:$0xf]
      %v1975 = vld [vmem:[%s1971 + $0xc] sm:$0xf]
      %v1976 = vld [vmem:[%s1971 + $0x10] sm:$0xf]
      %v1977 = vld [vmem:[%s1971 + $0x14] sm:$0xf]
      %v1978 = vld [vmem:[%s1971 + $0x18] sm:$0xf]
      %v1979 = vld [vmem:[%s1971 + $0x1c] sm:$0xf]
      %v1980 = vld [vmem:[%s1971 + $0x20] sm:$0xf]
      %v1981 = vld [vmem:[%s1971 + $0x24] sm:$0xf]
      %v1982 = vld [vmem:[%s1971 + $0x28] sm:$0xf]
      %v1983 = vld [vmem:[%s1971 + $0x2c] sm:$0xf]
      %v1984 = vld [vmem:[%s1971 + $0x30] sm:$0xf]
      %v1985 = vld [vmem:[%s1971 + $0x34] sm:$0xf]
      %v1986 = vld [vmem:[%s1971 + $0x38] sm:$0xf]
      %v1987 = vld [vmem:[%s1971 + $0x3c] sm:$0xf]
      %v2004 = vunpack.c.l.b16 %v1972
      %v2005 = vunpack.c.l.b16 %v1973
      %v2006 = vunpack.c.l.b16 %v1974
      %v2007 = vunpack.c.l.b16 %v1975
      %v2008 = vunpack.c.l.b16 %v1976
      %v2009 = vunpack.c.l.b16 %v1977
      %v2010 = vunpack.c.l.b16 %v1978
      %v2011 = vunpack.c.l.b16 %v1979
      %v2012 = vunpack.c.l.b16 %v1980
      %v2013 = vunpack.c.l.b16 %v1981
      %v2014 = vunpack.c.l.b16 %v1982
      %v2015 = vunpack.c.l.b16 %v1983
      %v2016 = vunpack.c.l.b16 %v1984
      %v2017 = vunpack.c.l.b16 %v1985
      %v2018 = vunpack.c.l.b16 %v1986
      %v2019 = vunpack.c.l.b16 %v1987
      %v2020 = vpack.c.b16 %v2005, %v2004
      %v2021 = vpack.c.b16 %v2007, %v2006
      %v2022 = vpack.c.b16 %v2009, %v2008
      %v2023 = vpack.c.b16 %v2011, %v2010
      %v2024 = vpack.c.b16 %v2013, %v2012
      %v2025 = vpack.c.b16 %v2015, %v2014
      %v2026 = vpack.c.b16 %v2017, %v2016
      %v2027 = vpack.c.b16 %v2019, %v2018
      %2036 = vmatprep.subr.bf16.mxu0 0
      %2037 = vmatpush1.bf16.msra.mxu0 %v2020
      %2038 = vmatprep.subr.bf16.mxu0 0
      %2039 = vmatpush1.bf16.msra.mxu0 %v2021
      %2040 = vmatprep.subr.bf16.mxu0 0
      %2041 = vmatpush1.bf16.msra.mxu0 %v2022
      %2042 = vmatprep.subr.bf16.mxu0 0
      %2043 = vmatpush1.bf16.msra.mxu0 %v2023
      %2044 = vmatprep.subr.bf16.mxu0 0
      %2045 = vmatpush1.bf16.msra.mxu0 %v2024
      %2046 = vmatprep.subr.bf16.mxu0 0
      %2047 = vmatpush1.bf16.msra.mxu0 %v2025
      %2048 = vmatprep.subr.bf16.mxu0 0
      %2049 = vmatpush1.bf16.msra.mxu0 %v2026
      %2050 = vmatprep.subr.bf16.mxu0 0
      %2051 = vmatpush1.bf16.msra.mxu0 %v2027
      %2052 = vmatprep.subr.bf16.mxu0 0
      %2053 = vmatpush1.bf16.msra.mxu0 0
      %2054 = vmatprep.subr.bf16.mxu0 0
      %2055 = vmatpush1.bf16.msra.mxu0 0
      %2056 = vmatprep.subr.bf16.mxu0 0
      %2057 = vmatpush1.bf16.msra.mxu0 0
      %2058 = vmatprep.subr.bf16.mxu0 0
      %2059 = vmatpush1.bf16.msra.mxu0 0
      %2060 = vmatprep.subr.bf16.mxu0 0
      %2061 = vmatpush1.bf16.msra.mxu0 0
      %2062 = vmatprep.subr.bf16.mxu0 0
      %2063 = vmatpush1.bf16.msra.mxu0 0
      %2064 = vmatprep.subr.bf16.mxu0 0
      %2065 = vmatpush1.bf16.msra.mxu0 0
      %2066 = vmatprep.subr.bf16.mxu0 0
      %2067 = vmatpush1.bf16.msra.mxu0 0
      %2068 = vmatprep.mubr.bf16.mxu0 0
      %2069 = vmatmul.mubr.bf16.gmra.mrb[0].mxu0 %v1955
      %v2070 = vpop.f32.mrb[0].mxu0
      %v2071 = vadd.f32 0.0, %v2070
      %v2072 = vpop.f32.mrb[0].mxu0
      %v2073 = vpop.f32.mrb[0].mxu0
      %v2074 = vadd.f32 0.0, %v2073
      %v2075 = vpop.f32.mrb[0].mxu0
      %2076 = vmatprep.mubr.bf16.mxu0 0
      %2077 = vmatmul.mubr.bf16.gmra.mrb[0].mxu0 %v1956
      %v2078 = vpop.f32.mrb[0].mxu0
      %v2079 = vadd.f32 0.0, %v2078
      %v2080 = vpop.f32.mrb[0].mxu0
      %v2081 = vpop.f32.mrb[0].mxu0
      %v2082 = vadd.f32 0.0, %v2081
      %v2083 = vpop.f32.mrb[0].mxu0
      %2084 = vmatprep.mubr.bf16.mxu0 0
      %2085 = vmatmul.mubr.bf16.gmra.mrb[0].mxu0 %v1957
      %v2086 = vpop.f32.mrb[0].mxu0
      %v2087 = vadd.f32 0.0, %v2086
      %v2088 = vpop.f32.mrb[0].mxu0
      %v2089 = vpop.f32.mrb[0].mxu0
      %v2090 = vadd.f32 0.0, %v2089
      %v2091 = vpop.f32.mrb[0].mxu0
      %2092 = vmatprep.mubr.bf16.mxu0 0
      %2093 = vmatmul.mubr.bf16.gmra.mrb[0].mxu0 %v1958
      %v2094 = vpop.f32.mrb[0].mxu0
      %v2095 = vadd.f32 0.0, %v2094
      %v2096 = vpop.f32.mrb[0].mxu0
      %v2097 = vpop.f32.mrb[0].mxu0
      %v2098 = vadd.f32 0.0, %v2097
      %v2099 = vpop.f32.mrb[0].mxu0
      %2100 = vmatprep.mubr.bf16.mxu0 0
      %2101 = vmatmul.mubr.bf16.gmra.mrb[0].mxu0 %v1959
      %v2102 = vpop.f32.mrb[0].mxu0
      %v2103 = vadd.f32 0.0, %v2102
      %v2104 = vpop.f32.mrb[0].mxu0
      %v2105 = vpop.f32.mrb[0].mxu0
      %v2106 = vadd.f32 0.0, %v2105
      %v2107 = vpop.f32.mrb[0].mxu0
      %2108 = vmatprep.mubr.bf16.mxu0 0
      %2109 = vmatmul.mubr.bf16.gmra.mrb[0].mxu0 %v1960
      %v2110 = vpop.f32.mrb[0].mxu0
      %v2111 = vadd.f32 0.0, %v2110
      %v2112 = vpop.f32.mrb[0].mxu0
      %v2113 = vpop.f32.mrb[0].mxu0
      %v2114 = vadd.f32 0.0, %v2113
      %v2115 = vpop.f32.mrb[0].mxu0
      %2116 = vmatprep.mubr.bf16.mxu0 0
      %2117 = vmatmul.mubr.bf16.gmra.mrb[0].mxu0 %v1961
      %v2118 = vpop.f32.mrb[0].mxu0
      %v2119 = vadd.f32 0.0, %v2118
      %v2120 = vpop.f32.mrb[0].mxu0
      %v2121 = vpop.f32.mrb[0].mxu0
      %v2122 = vadd.f32 0.0, %v2121
      %v2123 = vpop.f32.mrb[0].mxu0
      %2124 = vmatprep.mubr.bf16.mxu0 0
      %2125 = vmatmul.mubr.bf16.gmra.mrb[0].mxu0 %v1962
      %v2126 = vpop.f32.mrb[0].mxu0
      %v2127 = vadd.f32 0.0, %v2126
      %v2128 = vpop.f32.mrb[0].mxu0
      %v2129 = vpop.f32.mrb[0].mxu0
      %v2130 = vadd.f32 0.0, %v2129
      %v2131 = vpop.f32.mrb[0].mxu0
      %2132 = vmatprep.mubr.bf16.mxu0 0
      %2133 = vmatmul.mubr.bf16.gmra.mrb[0].mxu0 %v1963
      %v2134 = vpop.f32.mrb[0].mxu0
      %v2135 = vadd.f32 0.0, %v2134
      %v2136 = vpop.f32.mrb[0].mxu0
      %v2137 = vpop.f32.mrb[0].mxu0
      %v2138 = vadd.f32 0.0, %v2137
      %v2139 = vpop.f32.mrb[0].mxu0
      %2140 = vmatprep.mubr.bf16.mxu0 0
      %2141 = vmatmul.mubr.bf16.gmra.mrb[0].mxu0 %v1964
      %v2142 = vpop.f32.mrb[0].mxu0
      %v2143 = vadd.f32 0.0, %v2142
      %v2144 = vpop.f32.mrb[0].mxu0
      %v2145 = vpop.f32.mrb[0].mxu0
      %v2146 = vadd.f32 0.0, %v2145
      %v2147 = vpop.f32.mrb[0].mxu0
      %2148 = vmatprep.mubr.bf16.mxu0 0
      %2149 = vmatmul.mubr.bf16.gmra.mrb[0].mxu0 %v1965
      %v2150 = vpop.f32.mrb[0].mxu0
      %v2151 = vadd.f32 0.0, %v2150
      %v2152 = vpop.f32.mrb[0].mxu0
      %v2153 = vpop.f32.mrb[0].mxu0
      %v2154 = vadd.f32 0.0, %v2153
      %v2155 = vpop.f32.mrb[0].mxu0
      %2156 = vmatprep.mubr.bf16.mxu0 0
      %2157 = vmatmul.mubr.bf16.gmra.mrb[0].mxu0 %v1966
      %v2158 = vpop.f32.mrb[0].mxu0
      %v2159 = vadd.f32 0.0, %v2158
      %v2160 = vpop.f32.mrb[0].mxu0
      %v2161 = vpop.f32.mrb[0].mxu0
      %v2162 = vadd.f32 0.0, %v2161
      %v2163 = vpop.f32.mrb[0].mxu0
      %2164 = vmatprep.mubr.bf16.mxu0 0
      %2165 = vmatmul.mubr.bf16.gmra.mrb[0].mxu0 %v1967
      %v2166 = vpop.f32.mrb[0].mxu0
      %v2167 = vadd.f32 0.0, %v2166
      %v2168 = vpop.f32.mrb[0].mxu0
      %v2169 = vpop.f32.mrb[0].mxu0
      %v2170 = vadd.f32 0.0, %v2169
      %v2171 = vpop.f32.mrb[0].mxu0
      %2172 = vmatprep.mubr.bf16.mxu0 0
      %2173 = vmatmul.mubr.bf16.gmra.mrb[0].mxu0 %v1968
      %v2174 = vpop.f32.mrb[0].mxu0
      %v2175 = vadd.f32 0.0, %v2174
      %v2176 = vpop.f32.mrb[0].mxu0
      %v2177 = vpop.f32.mrb[0].mxu0
      %v2178 = vadd.f32 0.0, %v2177
      %v2179 = vpop.f32.mrb[0].mxu0
      %2180 = vmatprep.mubr.bf16.mxu0 0
      %2181 = vmatmul.mubr.bf16.gmra.mrb[0].mxu0 %v1969
      %v2182 = vpop.f32.mrb[0].mxu0
      %v2183 = vadd.f32 0.0, %v2182
      %v2184 = vpop.f32.mrb[0].mxu0
      %v2185 = vpop.f32.mrb[0].mxu0
      %v2186 = vadd.f32 0.0, %v2185
      %v2187 = vpop.f32.mrb[0].mxu0
      %2188 = vmatprep.mubr.bf16.mxu0 0
      %2189 = vmatmul.mubr.bf16.gmra.mrb[0].mxu0 %v1970
      %v2190 = vpop.f32.mrb[0].mxu0
      %v2191 = vadd.f32 0.0, %v2190
      %v2192 = vpop.f32.mrb[0].mxu0
      %v2193 = vpop.f32.mrb[0].mxu0
      %v2194 = vadd.f32 0.0, %v2193
      %v2195 = vpop.f32.mrb[0].mxu0
      %2196 = vdwg.mxu0
      %v2197 = vadd.f32 %v1891, %v2071
      %v2198 = vadd.f32 %v1892, %v2074
      %v2199 = vadd.f32 %v1893, %v2079
      %v2200 = vadd.f32 %v1894, %v2082
      %v2201 = vadd.f32 %v1895, %v2087
      %v2202 = vadd.f32 %v1896, %v2090
      %v2203 = vadd.f32 %v1897, %v2095
      %v2204 = vadd.f32 %v1898, %v2098
      %v2205 = vadd.f32 %v1899, %v2103
      %v2206 = vadd.f32 %v1900, %v2106
      %v2207 = vadd.f32 %v1901, %v2111
      %v2208 = vadd.f32 %v1902, %v2114
      %v2209 = vadd.f32 %v1903, %v2119
      %v2210 = vadd.f32 %v1904, %v2122
      %v2211 = vadd.f32 %v1905, %v2127
      %v2212 = vadd.f32 %v1906, %v2130
      %v2213 = vadd.f32 %v1907, %v2135
      %v2214 = vadd.f32 %v1908, %v2138
      %v2215 = vadd.f32 %v1909, %v2143
      %v2216 = vadd.f32 %v1910, %v2146
      %v2217 = vadd.f32 %v1911, %v2151
      %v2218 = vadd.f32 %v1912, %v2154
      %v2219 = vadd.f32 %v1913, %v2159
      %v2220 = vadd.f32 %v1914, %v2162
      %v2221 = vadd.f32 %v1915, %v2167
      %v2222 = vadd.f32 %v1916, %v2170
      %v2223 = vadd.f32 %v1917, %v2175
      %v2224 = vadd.f32 %v1918, %v2178
      %v2225 = vadd.f32 %v1919, %v2183
      %v2226 = vadd.f32 %v1920, %v2186
      %v2227 = vadd.f32 %v1921, %v2191
      %v2228 = vadd.f32 %v1922, %v2194
      %s2229 = scalar_lea.vmem [#allocation2], 48
      %v2230 = vld [vmem:[%s2229] sm:$0xff]
      %v2231 = vld [vmem:[%s2229 + $0x8] sm:$0xff]
      %v2232 = vld [vmem:[%s2229 + $0x18] sm:$0xff]
      %v2233 = vld [vmem:[%s2229 + $0x20] sm:$0xff]
      %v2234 = vld [vmem:[%s2229 + $0x30] sm:$0xff]
      %v2235 = vld [vmem:[%s2229 + $0x38] sm:$0xff]
      %v2236 = vld [vmem:[%s2229 + $0x48] sm:$0xff]
      %v2237 = vld [vmem:[%s2229 + $0x50] sm:$0xff]
      %v2238 = vld [vmem:[%s2229 + $0x60] sm:$0xff]
      %v2239 = vld [vmem:[%s2229 + $0x68] sm:$0xff]
      %v2240 = vld [vmem:[%s2229 + $0x78] sm:$0xff]
      %v2241 = vld [vmem:[%s2229 + $0x80] sm:$0xff]
      %v2242 = vld [vmem:[%s2229 + $0x90] sm:$0xff]
      %v2243 = vld [vmem:[%s2229 + $0x98] sm:$0xff]
      %v2244 = vld [vmem:[%s2229 + $0xa8] sm:$0xff]
      %v2245 = vld [vmem:[%s2229 + $0xb0] sm:$0xff]
      %v2246 = vld [vmem:[%s2229 + $0xc0] sm:$0xff]
      %v2247 = vld [vmem:[%s2229 + $0xc8] sm:$0xff]
      %v2248 = vld [vmem:[%s2229 + $0xd8] sm:$0xff]
      %v2249 = vld [vmem:[%s2229 + $0xe0] sm:$0xff]
      %v2250 = vld [vmem:[%s2229 + $0xf0] sm:$0xff]
      %v2251 = vld [vmem:[%s2229 + $0xf8] sm:$0xff]
      %v2252 = vld [vmem:[%s2229 + $0x108] sm:$0xff]
      %v2253 = vld [vmem:[%s2229 + $0x110] sm:$0xff]
      %v2254 = vld [vmem:[%s2229 + $0x120] sm:$0xff]
      %v2255 = vld [vmem:[%s2229 + $0x128] sm:$0xff]
      %v2256 = vld [vmem:[%s2229 + $0x138] sm:$0xff]
      %v2257 = vld [vmem:[%s2229 + $0x140] sm:$0xff]
      %v2258 = vld [vmem:[%s2229 + $0x150] sm:$0xff]
      %v2259 = vld [vmem:[%s2229 + $0x158] sm:$0xff]
      %v2260 = vld [vmem:[%s2229 + $0x168] sm:$0xff]
      %v2261 = vld [vmem:[%s2229 + $0x170] sm:$0xff]
      %v2262 = vpack.c.bf16 %v2231, %v2230
      %v2263 = vpack.c.bf16 %v2233, %v2232
      %v2264 = vpack.c.bf16 %v2235, %v2234
      %v2265 = vpack.c.bf16 %v2237, %v2236
      %v2266 = vpack.c.bf16 %v2239, %v2238
      %v2267 = vpack.c.bf16 %v2241, %v2240
      %v2268 = vpack.c.bf16 %v2243, %v2242
      %v2269 = vpack.c.bf16 %v2245, %v2244
      %v2270 = vpack.c.bf16 %v2247, %v2246
      %v2271 = vpack.c.bf16 %v2249, %v2248
      %v2272 = vpack.c.bf16 %v2251, %v2250
      %v2273 = vpack.c.bf16 %v2253, %v2252
      %v2274 = vpack.c.bf16 %v2255, %v2254
      %v2275 = vpack.c.bf16 %v2257, %v2256
      %v2276 = vpack.c.bf16 %v2259, %v2258
      %v2277 = vpack.c.bf16 %v2261, %v2260
      %s2278 = scalar_lea.vmem %s3, 384
      %v2279 = vld [vmem:[%s2278] sm:$0xf]
      %v2280 = vld [vmem:[%s2278 + $0x4] sm:$0xf]
      %v2281 = vld [vmem:[%s2278 + $0x8] sm:$0xf]
      %v2282 = vld [vmem:[%s2278 + $0xc] sm:$0xf]
      %v2283 = vld [vmem:[%s2278 + $0x10] sm:$0xf]
      %v2284 = vld [vmem:[%s2278 + $0x14] sm:$0xf]
      %v2285 = vld [vmem:[%s2278 + $0x18] sm:$0xf]
      %v2286 = vld [vmem:[%s2278 + $0x1c] sm:$0xf]
      %v2287 = vld [vmem:[%s2278 + $0x20] sm:$0xf]
      %v2288 = vld [vmem:[%s2278 + $0x24] sm:$0xf]
      %v2289 = vld [vmem:[%s2278 + $0x28] sm:$0xf]
      %v2290 = vld [vmem:[%s2278 + $0x2c] sm:$0xf]
      %v2291 = vld [vmem:[%s2278 + $0x30] sm:$0xf]
      %v2292 = vld [vmem:[%s2278 + $0x34] sm:$0xf]
      %v2293 = vld [vmem:[%s2278 + $0x38] sm:$0xf]
      %v2294 = vld [vmem:[%s2278 + $0x3c] sm:$0xf]
      %v2311 = vunpack.c.l.b16 %v2279
      %v2312 = vunpack.c.l.b16 %v2280
      %v2313 = vunpack.c.l.b16 %v2281
      %v2314 = vunpack.c.l.b16 %v2282
      %v2315 = vunpack.c.l.b16 %v2283
      %v2316 = vunpack.c.l.b16 %v2284
      %v2317 = vunpack.c.l.b16 %v2285
      %v2318 = vunpack.c.l.b16 %v2286
      %v2319 = vunpack.c.l.b16 %v2287
      %v2320 = vunpack.c.l.b16 %v2288
      %v2321 = vunpack.c.l.b16 %v2289
      %v2322 = vunpack.c.l.b16 %v2290
      %v2323 = vunpack.c.l.b16 %v2291
      %v2324 = vunpack.c.l.b16 %v2292
      %v2325 = vunpack.c.l.b16 %v2293
      %v2326 = vunpack.c.l.b16 %v2294
      %v2327 = vpack.c.b16 %v2312, %v2311
      %v2328 = vpack.c.b16 %v2314, %v2313
      %v2329 = vpack.c.b16 %v2316, %v2315
      %v2330 = vpack.c.b16 %v2318, %v2317
      %v2331 = vpack.c.b16 %v2320, %v2319
      %v2332 = vpack.c.b16 %v2322, %v2321
      %v2333 = vpack.c.b16 %v2324, %v2323
      %v2334 = vpack.c.b16 %v2326, %v2325
      %2343 = vmatprep.subr.bf16.mxu0 0
      %2344 = vmatpush1.bf16.msra.mxu0 %v2327
      %2345 = vmatprep.subr.bf16.mxu0 0
      %2346 = vmatpush1.bf16.msra.mxu0 %v2328
      %2347 = vmatprep.subr.bf16.mxu0 0
      %2348 = vmatpush1.bf16.msra.mxu0 %v2329
      %2349 = vmatprep.subr.bf16.mxu0 0
      %2350 = vmatpush1.bf16.msra.mxu0 %v2330
      %2351 = vmatprep.subr.bf16.mxu0 0
      %2352 = vmatpush1.bf16.msra.mxu0 %v2331
      %2353 = vmatprep.subr.bf16.mxu0 0
      %2354 = vmatpush1.bf16.msra.mxu0 %v2332
      %2355 = vmatprep.subr.bf16.mxu0 0
      %2356 = vmatpush1.bf16.msra.mxu0 %v2333
      %2357 = vmatprep.subr.bf16.mxu0 0
      %2358 = vmatpush1.bf16.msra.mxu0 %v2334
      %2359 = vmatprep.subr.bf16.mxu0 0
      %2360 = vmatpush1.bf16.msra.mxu0 0
      %2361 = vmatprep.subr.bf16.mxu0 0
      %2362 = vmatpush1.bf16.msra.mxu0 0
      %2363 = vmatprep.subr.bf16.mxu0 0
      %2364 = vmatpush1.bf16.msra.mxu0 0
      %2365 = vmatprep.subr.bf16.mxu0 0
      %2366 = vmatpush1.bf16.msra.mxu0 0
      %2367 = vmatprep.subr.bf16.mxu0 0
      %2368 = vmatpush1.bf16.msra.mxu0 0
      %2369 = vmatprep.subr.bf16.mxu0 0
      %2370 = vmatpush1.bf16.msra.mxu0 0
      %2371 = vmatprep.subr.bf16.mxu0 0
      %2372 = vmatpush1.bf16.msra.mxu0 0
      %2373 = vmatprep.subr.bf16.mxu0 0
      %2374 = vmatpush1.bf16.msra.mxu0 0
      %2375 = vmatprep.mubr.bf16.mxu0 0
      %2376 = vmatmul.mubr.bf16.gmra.mrb[0].mxu0 %v2262
      %v2377 = vpop.f32.mrb[0].mxu0
      %v2378 = vadd.f32 0.0, %v2377
      %v2379 = vpop.f32.mrb[0].mxu0
      %v2380 = vpop.f32.mrb[0].mxu0
      %v2381 = vadd.f32 0.0, %v2380
      %v2382 = vpop.f32.mrb[0].mxu0
      %2383 = vmatprep.mubr.bf16.mxu0 0
      %2384 = vmatmul.mubr.bf16.gmra.mrb[0].mxu0 %v2263
      %v2385 = vpop.f32.mrb[0].mxu0
      %v2386 = vadd.f32 0.0, %v2385
      %v2387 = vpop.f32.mrb[0].mxu0
      %v2388 = vpop.f32.mrb[0].mxu0
      %v2389 = vadd.f32 0.0, %v2388
      %v2390 = vpop.f32.mrb[0].mxu0
      %2391 = vmatprep.mubr.bf16.mxu0 0
      %2392 = vmatmul.mubr.bf16.gmra.mrb[0].mxu0 %v2264
      %v2393 = vpop.f32.mrb[0].mxu0
      %v2394 = vadd.f32 0.0, %v2393
      %v2395 = vpop.f32.mrb[0].mxu0
      %v2396 = vpop.f32.mrb[0].mxu0
      %v2397 = vadd.f32 0.0, %v2396
      %v2398 = vpop.f32.mrb[0].mxu0
      %2399 = vmatprep.mubr.bf16.mxu0 0
      %2400 = vmatmul.mubr.bf16.gmra.mrb[0].mxu0 %v2265
      %v2401 = vpop.f32.mrb[0].mxu0
      %v2402 = vadd.f32 0.0, %v2401
      %v2403 = vpop.f32.mrb[0].mxu0
      %v2404 = vpop.f32.mrb[0].mxu0
      %v2405 = vadd.f32 0.0, %v2404
      %v2406 = vpop.f32.mrb[0].mxu0
      %2407 = vmatprep.mubr.bf16.mxu0 0
      %2408 = vmatmul.mubr.bf16.gmra.mrb[0].mxu0 %v2266
      %v2409 = vpop.f32.mrb[0].mxu0
      %v2410 = vadd.f32 0.0, %v2409
      %v2411 = vpop.f32.mrb[0].mxu0
      %v2412 = vpop.f32.mrb[0].mxu0
      %v2413 = vadd.f32 0.0, %v2412
      %v2414 = vpop.f32.mrb[0].mxu0
      %2415 = vmatprep.mubr.bf16.mxu0 0
      %2416 = vmatmul.mubr.bf16.gmra.mrb[0].mxu0 %v2267
      %v2417 = vpop.f32.mrb[0].mxu0
      %v2418 = vadd.f32 0.0, %v2417
      %v2419 = vpop.f32.mrb[0].mxu0
      %v2420 = vpop.f32.mrb[0].mxu0
      %v2421 = vadd.f32 0.0, %v2420
      %v2422 = vpop.f32.mrb[0].mxu0
      %2423 = vmatprep.mubr.bf16.mxu0 0
      %2424 = vmatmul.mubr.bf16.gmra.mrb[0].mxu0 %v2268
      %v2425 = vpop.f32.mrb[0].mxu0
      %v2426 = vadd.f32 0.0, %v2425
      %v2427 = vpop.f32.mrb[0].mxu0
      %v2428 = vpop.f32.mrb[0].mxu0
      %v2429 = vadd.f32 0.0, %v2428
      %v2430 = vpop.f32.mrb[0].mxu0
      %2431 = vmatprep.mubr.bf16.mxu0 0
      %2432 = vmatmul.mubr.bf16.gmra.mrb[0].mxu0 %v2269
      %v2433 = vpop.f32.mrb[0].mxu0
      %v2434 = vadd.f32 0.0, %v2433
      %v2435 = vpop.f32.mrb[0].mxu0
      %v2436 = vpop.f32.mrb[0].mxu0
      %v2437 = vadd.f32 0.0, %v2436
      %v2438 = vpop.f32.mrb[0].mxu0
      %2439 = vmatprep.mubr.bf16.mxu0 0
      %2440 = vmatmul.mubr.bf16.gmra.mrb[0].mxu0 %v2270
      %v2441 = vpop.f32.mrb[0].mxu0
      %v2442 = vadd.f32 0.0, %v2441
      %v2443 = vpop.f32.mrb[0].mxu0
      %v2444 = vpop.f32.mrb[0].mxu0
      %v2445 = vadd.f32 0.0, %v2444
      %v2446 = vpop.f32.mrb[0].mxu0
      %2447 = vmatprep.mubr.bf16.mxu0 0
      %2448 = vmatmul.mubr.bf16.gmra.mrb[0].mxu0 %v2271
      %v2449 = vpop.f32.mrb[0].mxu0
      %v2450 = vadd.f32 0.0, %v2449
      %v2451 = vpop.f32.mrb[0].mxu0
      %v2452 = vpop.f32.mrb[0].mxu0
      %v2453 = vadd.f32 0.0, %v2452
      %v2454 = vpop.f32.mrb[0].mxu0
      %2455 = vmatprep.mubr.bf16.mxu0 0
      %2456 = vmatmul.mubr.bf16.gmra.mrb[0].mxu0 %v2272
      %v2457 = vpop.f32.mrb[0].mxu0
      %v2458 = vadd.f32 0.0, %v2457
      %v2459 = vpop.f32.mrb[0].mxu0
      %v2460 = vpop.f32.mrb[0].mxu0
      %v2461 = vadd.f32 0.0, %v2460
      %v2462 = vpop.f32.mrb[0].mxu0
      %2463 = vmatprep.mubr.bf16.mxu0 0
      %2464 = vmatmul.mubr.bf16.gmra.mrb[0].mxu0 %v2273
      %v2465 = vpop.f32.mrb[0].mxu0
      %v2466 = vadd.f32 0.0, %v2465
      %v2467 = vpop.f32.mrb[0].mxu0
      %v2468 = vpop.f32.mrb[0].mxu0
      %v2469 = vadd.f32 0.0, %v2468
      %v2470 = vpop.f32.mrb[0].mxu0
      %2471 = vmatprep.mubr.bf16.mxu0 0
      %2472 = vmatmul.mubr.bf16.gmra.mrb[0].mxu0 %v2274
      %v2473 = vpop.f32.mrb[0].mxu0
      %v2474 = vadd.f32 0.0, %v2473
      %v2475 = vpop.f32.mrb[0].mxu0
      %v2476 = vpop.f32.mrb[0].mxu0
      %v2477 = vadd.f32 0.0, %v2476
      %v2478 = vpop.f32.mrb[0].mxu0
      %2479 = vmatprep.mubr.bf16.mxu0 0
      %2480 = vmatmul.mubr.bf16.gmra.mrb[0].mxu0 %v2275
      %v2481 = vpop.f32.mrb[0].mxu0
      %v2482 = vadd.f32 0.0, %v2481
      %v2483 = vpop.f32.mrb[0].mxu0
      %v2484 = vpop.f32.mrb[0].mxu0
      %v2485 = vadd.f32 0.0, %v2484
      %v2486 = vpop.f32.mrb[0].mxu0
      %2487 = vmatprep.mubr.bf16.mxu0 0
      %2488 = vmatmul.mubr.bf16.gmra.mrb[0].mxu0 %v2276
      %v2489 = vpop.f32.mrb[0].mxu0
      %v2490 = vadd.f32 0.0, %v2489
      %v2491 = vpop.f32.mrb[0].mxu0
      %v2492 = vpop.f32.mrb[0].mxu0
      %v2493 = vadd.f32 0.0, %v2492
      %v2494 = vpop.f32.mrb[0].mxu0
      %2495 = vmatprep.mubr.bf16.mxu0 0
      %2496 = vmatmul.mubr.bf16.gmra.mrb[0].mxu0 %v2277
      %v2497 = vpop.f32.mrb[0].mxu0
      %v2498 = vadd.f32 0.0, %v2497
      %v2499 = vpop.f32.mrb[0].mxu0
      %v2500 = vpop.f32.mrb[0].mxu0
      %v2501 = vadd.f32 0.0, %v2500
      %v2502 = vpop.f32.mrb[0].mxu0
      %2503 = vdwg.mxu0
      %v2504 = vadd.f32 %v2197, %v2378
      %v2505 = vadd.f32 %v2198, %v2381
      %v2506 = vadd.f32 %v2199, %v2386
      %v2507 = vadd.f32 %v2200, %v2389
      %v2508 = vadd.f32 %v2201, %v2394
      %v2509 = vadd.f32 %v2202, %v2397
      %v2510 = vadd.f32 %v2203, %v2402
      %v2511 = vadd.f32 %v2204, %v2405
      %v2512 = vadd.f32 %v2205, %v2410
      %v2513 = vadd.f32 %v2206, %v2413
      %v2514 = vadd.f32 %v2207, %v2418
      %v2515 = vadd.f32 %v2208, %v2421
      %v2516 = vadd.f32 %v2209, %v2426
      %v2517 = vadd.f32 %v2210, %v2429
      %v2518 = vadd.f32 %v2211, %v2434
      %v2519 = vadd.f32 %v2212, %v2437
      %v2520 = vadd.f32 %v2213, %v2442
      %v2521 = vadd.f32 %v2214, %v2445
      %v2522 = vadd.f32 %v2215, %v2450
      %v2523 = vadd.f32 %v2216, %v2453
      %v2524 = vadd.f32 %v2217, %v2458
      %v2525 = vadd.f32 %v2218, %v2461
      %v2526 = vadd.f32 %v2219, %v2466
      %v2527 = vadd.f32 %v2220, %v2469
      %v2528 = vadd.f32 %v2221, %v2474
      %v2529 = vadd.f32 %v2222, %v2477
      %v2530 = vadd.f32 %v2223, %v2482
      %v2531 = vadd.f32 %v2224, %v2485
      %v2532 = vadd.f32 %v2225, %v2490
      %v2533 = vadd.f32 %v2226, %v2493
      %v2534 = vadd.f32 %v2227, %v2498
      %v2535 = vadd.f32 %v2228, %v2501
      %v2536 = vld [vmem:[%s2229 + $0x1] sm:$0xff]
      %v2537 = vld [vmem:[%s2229 + $0x9] sm:$0xff]
      %v2538 = vld [vmem:[%s2229 + $0x19] sm:$0xff]
      %v2539 = vld [vmem:[%s2229 + $0x21] sm:$0xff]
      %v2540 = vld [vmem:[%s2229 + $0x31] sm:$0xff]
      %v2541 = vld [vmem:[%s2229 + $0x39] sm:$0xff]
      %v2542 = vld [vmem:[%s2229 + $0x49] sm:$0xff]
      %v2543 = vld [vmem:[%s2229 + $0x51] sm:$0xff]
      %v2544 = vld [vmem:[%s2229 + $0x61] sm:$0xff]
      %v2545 = vld [vmem:[%s2229 + $0x69] sm:$0xff]
      %v2546 = vld [vmem:[%s2229 + $0x79] sm:$0xff]
      %v2547 = vld [vmem:[%s2229 + $0x81] sm:$0xff]
      %v2548 = vld [vmem:[%s2229 + $0x91] sm:$0xff]
      %v2549 = vld [vmem:[%s2229 + $0x99] sm:$0xff]
      %v2550 = vld [vmem:[%s2229 + $0xa9] sm:$0xff]
      %v2551 = vld [vmem:[%s2229 + $0xb1] sm:$0xff]
      %v2552 = vld [vmem:[%s2229 + $0xc1] sm:$0xff]
      %v2553 = vld [vmem:[%s2229 + $0xc9] sm:$0xff]
      %v2554 = vld [vmem:[%s2229 + $0xd9] sm:$0xff]
      %v2555 = vld [vmem:[%s2229 + $0xe1] sm:$0xff]
      %v2556 = vld [vmem:[%s2229 + $0xf1] sm:$0xff]
      %v2557 = vld [vmem:[%s2229 + $0xf9] sm:$0xff]
      %v2558 = vld [vmem:[%s2229 + $0x109] sm:$0xff]
      %v2559 = vld [vmem:[%s2229 + $0x111] sm:$0xff]
      %v2560 = vld [vmem:[%s2229 + $0x121] sm:$0xff]
      %v2561 = vld [vmem:[%s2229 + $0x129] sm:$0xff]
      %v2562 = vld [vmem:[%s2229 + $0x139] sm:$0xff]
      %v2563 = vld [vmem:[%s2229 + $0x141] sm:$0xff]
      %v2564 = vld [vmem:[%s2229 + $0x151] sm:$0xff]
      %v2565 = vld [vmem:[%s2229 + $0x159] sm:$0xff]
      %v2566 = vld [vmem:[%s2229 + $0x169] sm:$0xff]
      %v2567 = vld [vmem:[%s2229 + $0x171] sm:$0xff]
      %v2568 = vpack.c.bf16 %v2537, %v2536
      %v2569 = vpack.c.bf16 %v2539, %v2538
      %v2570 = vpack.c.bf16 %v2541, %v2540
      %v2571 = vpack.c.bf16 %v2543, %v2542
      %v2572 = vpack.c.bf16 %v2545, %v2544
      %v2573 = vpack.c.bf16 %v2547, %v2546
      %v2574 = vpack.c.bf16 %v2549, %v2548
      %v2575 = vpack.c.bf16 %v2551, %v2550
      %v2576 = vpack.c.bf16 %v2553, %v2552
      %v2577 = vpack.c.bf16 %v2555, %v2554
      %v2578 = vpack.c.bf16 %v2557, %v2556
      %v2579 = vpack.c.bf16 %v2559, %v2558
      %v2580 = vpack.c.bf16 %v2561, %v2560
      %v2581 = vpack.c.bf16 %v2563, %v2562
      %v2582 = vpack.c.bf16 %v2565, %v2564
      %v2583 = vpack.c.bf16 %v2567, %v2566
      %s2584 = scalar_lea.vmem %s3, 448
      %v2585 = vld [vmem:[%s2584] sm:$0xf]
      %v2586 = vld [vmem:[%s2584 + $0x4] sm:$0xf]
      %v2587 = vld [vmem:[%s2584 + $0x8] sm:$0xf]
      %v2588 = vld [vmem:[%s2584 + $0xc] sm:$0xf]
      %v2589 = vld [vmem:[%s2584 + $0x10] sm:$0xf]
      %v2590 = vld [vmem:[%s2584 + $0x14] sm:$0xf]
      %v2591 = vld [vmem:[%s2584 + $0x18] sm:$0xf]
      %v2592 = vld [vmem:[%s2584 + $0x1c] sm:$0xf]
      %v2593 = vld [vmem:[%s2584 + $0x20] sm:$0xf]
      %v2594 = vld [vmem:[%s2584 + $0x24] sm:$0xf]
      %v2595 = vld [vmem:[%s2584 + $0x28] sm:$0xf]
      %v2596 = vld [vmem:[%s2584 + $0x2c] sm:$0xf]
      %v2597 = vld [vmem:[%s2584 + $0x30] sm:$0xf]
      %v2598 = vld [vmem:[%s2584 + $0x34] sm:$0xf]
      %v2599 = vld [vmem:[%s2584 + $0x38] sm:$0xf]
      %v2600 = vld [vmem:[%s2584 + $0x3c] sm:$0xf]
      %v2617 = vunpack.c.l.b16 %v2585
      %v2618 = vunpack.c.l.b16 %v2586
      %v2619 = vunpack.c.l.b16 %v2587
      %v2620 = vunpack.c.l.b16 %v2588
      %v2621 = vunpack.c.l.b16 %v2589
      %v2622 = vunpack.c.l.b16 %v2590
      %v2623 = vunpack.c.l.b16 %v2591
      %v2624 = vunpack.c.l.b16 %v2592
      %v2625 = vunpack.c.l.b16 %v2593
      %v2626 = vunpack.c.l.b16 %v2594
      %v2627 = vunpack.c.l.b16 %v2595
      %v2628 = vunpack.c.l.b16 %v2596
      %v2629 = vunpack.c.l.b16 %v2597
      %v2630 = vunpack.c.l.b16 %v2598
      %v2631 = vunpack.c.l.b16 %v2599
      %v2632 = vunpack.c.l.b16 %v2600
      %v2633 = vpack.c.b16 %v2618, %v2617
      %v2634 = vpack.c.b16 %v2620, %v2619
      %v2635 = vpack.c.b16 %v2622, %v2621
      %v2636 = vpack.c.b16 %v2624, %v2623
      %v2637 = vpack.c.b16 %v2626, %v2625
      %v2638 = vpack.c.b16 %v2628, %v2627
      %v2639 = vpack.c.b16 %v2630, %v2629
      %v2640 = vpack.c.b16 %v2632, %v2631
      %2649 = vmatprep.subr.bf16.mxu0 0
      %2650 = vmatpush1.bf16.msra.mxu0 %v2633
      %2651 = vmatprep.subr.bf16.mxu0 0
      %2652 = vmatpush1.bf16.msra.mxu0 %v2634
      %2653 = vmatprep.subr.bf16.mxu0 0
      %2654 = vmatpush1.bf16.msra.mxu0 %v2635
      %2655 = vmatprep.subr.bf16.mxu0 0
      %2656 = vmatpush1.bf16.msra.mxu0 %v2636
      %2657 = vmatprep.subr.bf16.mxu0 0
      %2658 = vmatpush1.bf16.msra.mxu0 %v2637
      %2659 = vmatprep.subr.bf16.mxu0 0
      %2660 = vmatpush1.bf16.msra.mxu0 %v2638
      %2661 = vmatprep.subr.bf16.mxu0 0
      %2662 = vmatpush1.bf16.msra.mxu0 %v2639
      %2663 = vmatprep.subr.bf16.mxu0 0
      %2664 = vmatpush1.bf16.msra.mxu0 %v2640
      %2665 = vmatprep.subr.bf16.mxu0 0
      %2666 = vmatpush1.bf16.msra.mxu0 0
      %2667 = vmatprep.subr.bf16.mxu0 0
      %2668 = vmatpush1.bf16.msra.mxu0 0
      %2669 = vmatprep.subr.bf16.mxu0 0
      %2670 = vmatpush1.bf16.msra.mxu0 0
      %2671 = vmatprep.subr.bf16.mxu0 0
      %2672 = vmatpush1.bf16.msra.mxu0 0
      %2673 = vmatprep.subr.bf16.mxu0 0
      %2674 = vmatpush1.bf16.msra.mxu0 0
      %2675 = vmatprep.subr.bf16.mxu0 0
      %2676 = vmatpush1.bf16.msra.mxu0 0
      %2677 = vmatprep.subr.bf16.mxu0 0
      %2678 = vmatpush1.bf16.msra.mxu0 0
      %2679 = vmatprep.subr.bf16.mxu0 0
      %2680 = vmatpush1.bf16.msra.mxu0 0
      %2681 = vmatprep.mubr.bf16.mxu0 0
      %2682 = vmatmul.mubr.bf16.gmra.mrb[0].mxu0 %v2568
      %v2683 = vpop.f32.mrb[0].mxu0
      %v2684 = vadd.f32 0.0, %v2683
      %v2685 = vpop.f32.mrb[0].mxu0
      %v2686 = vpop.f32.mrb[0].mxu0
      %v2687 = vadd.f32 0.0, %v2686
      %v2688 = vpop.f32.mrb[0].mxu0
      %2689 = vmatprep.mubr.bf16.mxu0 0
      %2690 = vmatmul.mubr.bf16.gmra.mrb[0].mxu0 %v2569
      %v2691 = vpop.f32.mrb[0].mxu0
      %v2692 = vadd.f32 0.0, %v2691
      %v2693 = vpop.f32.mrb[0].mxu0
      %v2694 = vpop.f32.mrb[0].mxu0
      %v2695 = vadd.f32 0.0, %v2694
      %v2696 = vpop.f32.mrb[0].mxu0
      %2697 = vmatprep.mubr.bf16.mxu0 0
      %2698 = vmatmul.mubr.bf16.gmra.mrb[0].mxu0 %v2570
      %v2699 = vpop.f32.mrb[0].mxu0
      %v2700 = vadd.f32 0.0, %v2699
      %v2701 = vpop.f32.mrb[0].mxu0
      %v2702 = vpop.f32.mrb[0].mxu0
      %v2703 = vadd.f32 0.0, %v2702
      %v2704 = vpop.f32.mrb[0].mxu0
      %2705 = vmatprep.mubr.bf16.mxu0 0
      %2706 = vmatmul.mubr.bf16.gmra.mrb[0].mxu0 %v2571
      %v2707 = vpop.f32.mrb[0].mxu0
      %v2708 = vadd.f32 0.0, %v2707
      %v2709 = vpop.f32.mrb[0].mxu0
      %v2710 = vpop.f32.mrb[0].mxu0
      %v2711 = vadd.f32 0.0, %v2710
      %v2712 = vpop.f32.mrb[0].mxu0
      %2713 = vmatprep.mubr.bf16.mxu0 0
      %2714 = vmatmul.mubr.bf16.gmra.mrb[0].mxu0 %v2572
      %v2715 = vpop.f32.mrb[0].mxu0
      %v2716 = vadd.f32 0.0, %v2715
      %v2717 = vpop.f32.mrb[0].mxu0
      %v2718 = vpop.f32.mrb[0].mxu0
      %v2719 = vadd.f32 0.0, %v2718
      %v2720 = vpop.f32.mrb[0].mxu0
      %2721 = vmatprep.mubr.bf16.mxu0 0
      %2722 = vmatmul.mubr.bf16.gmra.mrb[0].mxu0 %v2573
      %v2723 = vpop.f32.mrb[0].mxu0
      %v2724 = vadd.f32 0.0, %v2723
      %v2725 = vpop.f32.mrb[0].mxu0
      %v2726 = vpop.f32.mrb[0].mxu0
      %v2727 = vadd.f32 0.0, %v2726
      %v2728 = vpop.f32.mrb[0].mxu0
      %2729 = vmatprep.mubr.bf16.mxu0 0
      %2730 = vmatmul.mubr.bf16.gmra.mrb[0].mxu0 %v2574
      %v2731 = vpop.f32.mrb[0].mxu0
      %v2732 = vadd.f32 0.0, %v2731
      %v2733 = vpop.f32.mrb[0].mxu0
      %v2734 = vpop.f32.mrb[0].mxu0
      %v2735 = vadd.f32 0.0, %v2734
      %v2736 = vpop.f32.mrb[0].mxu0
      %2737 = vmatprep.mubr.bf16.mxu0 0
      %2738 = vmatmul.mubr.bf16.gmra.mrb[0].mxu0 %v2575
      %v2739 = vpop.f32.mrb[0].mxu0
      %v2740 = vadd.f32 0.0, %v2739
      %v2741 = vpop.f32.mrb[0].mxu0
      %v2742 = vpop.f32.mrb[0].mxu0
      %v2743 = vadd.f32 0.0, %v2742
      %v2744 = vpop.f32.mrb[0].mxu0
      %2745 = vmatprep.mubr.bf16.mxu0 0
      %2746 = vmatmul.mubr.bf16.gmra.mrb[0].mxu0 %v2576
      %v2747 = vpop.f32.mrb[0].mxu0
      %v2748 = vadd.f32 0.0, %v2747
      %v2749 = vpop.f32.mrb[0].mxu0
      %v2750 = vpop.f32.mrb[0].mxu0
      %v2751 = vadd.f32 0.0, %v2750
      %v2752 = vpop.f32.mrb[0].mxu0
      %2753 = vmatprep.mubr.bf16.mxu0 0
      %2754 = vmatmul.mubr.bf16.gmra.mrb[0].mxu0 %v2577
      %v2755 = vpop.f32.mrb[0].mxu0
      %v2756 = vadd.f32 0.0, %v2755
      %v2757 = vpop.f32.mrb[0].mxu0
      %v2758 = vpop.f32.mrb[0].mxu0
      %v2759 = vadd.f32 0.0, %v2758
      %v2760 = vpop.f32.mrb[0].mxu0
      %2761 = vmatprep.mubr.bf16.mxu0 0
      %2762 = vmatmul.mubr.bf16.gmra.mrb[0].mxu0 %v2578
      %v2763 = vpop.f32.mrb[0].mxu0
      %v2764 = vadd.f32 0.0, %v2763
      %v2765 = vpop.f32.mrb[0].mxu0
      %v2766 = vpop.f32.mrb[0].mxu0
      %v2767 = vadd.f32 0.0, %v2766
      %v2768 = vpop.f32.mrb[0].mxu0
      %2769 = vmatprep.mubr.bf16.mxu0 0
      %2770 = vmatmul.mubr.bf16.gmra.mrb[0].mxu0 %v2579
      %v2771 = vpop.f32.mrb[0].mxu0
      %v2772 = vadd.f32 0.0, %v2771
      %v2773 = vpop.f32.mrb[0].mxu0
      %v2774 = vpop.f32.mrb[0].mxu0
      %v2775 = vadd.f32 0.0, %v2774
      %v2776 = vpop.f32.mrb[0].mxu0
      %2777 = vmatprep.mubr.bf16.mxu0 0
      %2778 = vmatmul.mubr.bf16.gmra.mrb[0].mxu0 %v2580
      %v2779 = vpop.f32.mrb[0].mxu0
      %v2780 = vadd.f32 0.0, %v2779
      %v2781 = vpop.f32.mrb[0].mxu0
      %v2782 = vpop.f32.mrb[0].mxu0
      %v2783 = vadd.f32 0.0, %v2782
      %v2784 = vpop.f32.mrb[0].mxu0
      %2785 = vmatprep.mubr.bf16.mxu0 0
      %2786 = vmatmul.mubr.bf16.gmra.mrb[0].mxu0 %v2581
      %v2787 = vpop.f32.mrb[0].mxu0
      %v2788 = vadd.f32 0.0, %v2787
      %v2789 = vpop.f32.mrb[0].mxu0
      %v2790 = vpop.f32.mrb[0].mxu0
      %v2791 = vadd.f32 0.0, %v2790
      %v2792 = vpop.f32.mrb[0].mxu0
      %2793 = vmatprep.mubr.bf16.mxu0 0
      %2794 = vmatmul.mubr.bf16.gmra.mrb[0].mxu0 %v2582
      %v2795 = vpop.f32.mrb[0].mxu0
      %v2796 = vadd.f32 0.0, %v2795
      %v2797 = vpop.f32.mrb[0].mxu0
      %v2798 = vpop.f32.mrb[0].mxu0
      %v2799 = vadd.f32 0.0, %v2798
      %v2800 = vpop.f32.mrb[0].mxu0
      %2801 = vmatprep.mubr.bf16.mxu0 0
      %2802 = vmatmul.mubr.bf16.gmra.mrb[0].mxu0 %v2583
      %v2803 = vpop.f32.mrb[0].mxu0
      %v2804 = vadd.f32 0.0, %v2803
      %v2805 = vpop.f32.mrb[0].mxu0
      %v2806 = vpop.f32.mrb[0].mxu0
      %v2807 = vadd.f32 0.0, %v2806
      %v2808 = vpop.f32.mrb[0].mxu0
      %2809 = vdwg.mxu0
      %v2810 = vadd.f32 %v2504, %v2684
      %v2811 = vadd.f32 %v2505, %v2687
      %v2812 = vadd.f32 %v2506, %v2692
      %v2813 = vadd.f32 %v2507, %v2695
      %v2814 = vadd.f32 %v2508, %v2700
      %v2815 = vadd.f32 %v2509, %v2703
      %v2816 = vadd.f32 %v2510, %v2708
      %v2817 = vadd.f32 %v2511, %v2711
      %v2818 = vadd.f32 %v2512, %v2716
      %v2819 = vadd.f32 %v2513, %v2719
      %v2820 = vadd.f32 %v2514, %v2724
      %v2821 = vadd.f32 %v2515, %v2727
      %v2822 = vadd.f32 %v2516, %v2732
      %v2823 = vadd.f32 %v2517, %v2735
      %v2824 = vadd.f32 %v2518, %v2740
      %v2825 = vadd.f32 %v2519, %v2743
      %v2826 = vadd.f32 %v2520, %v2748
      %v2827 = vadd.f32 %v2521, %v2751
      %v2828 = vadd.f32 %v2522, %v2756
      %v2829 = vadd.f32 %v2523, %v2759
      %v2830 = vadd.f32 %v2524, %v2764
      %v2831 = vadd.f32 %v2525, %v2767
      %v2832 = vadd.f32 %v2526, %v2772
      %v2833 = vadd.f32 %v2527, %v2775
      %v2834 = vadd.f32 %v2528, %v2780
      %v2835 = vadd.f32 %v2529, %v2783
      %v2836 = vadd.f32 %v2530, %v2788
      %v2837 = vadd.f32 %v2531, %v2791
      %v2838 = vadd.f32 %v2532, %v2796
      %v2839 = vadd.f32 %v2533, %v2799
      %v2840 = vadd.f32 %v2534, %v2804
      %v2841 = vadd.f32 %v2535, %v2807
      %v2842 = vld [vmem:[%s2229 + $0x2] sm:$0xff]
      %v2843 = vld [vmem:[%s2229 + $0xa] sm:$0xff]
      %v2844 = vld [vmem:[%s2229 + $0x1a] sm:$0xff]
      %v2845 = vld [vmem:[%s2229 + $0x22] sm:$0xff]
      %v2846 = vld [vmem:[%s2229 + $0x32] sm:$0xff]
      %v2847 = vld [vmem:[%s2229 + $0x3a] sm:$0xff]
      %v2848 = vld [vmem:[%s2229 + $0x4a] sm:$0xff]
      %v2849 = vld [vmem:[%s2229 + $0x52] sm:$0xff]
      %v2850 = vld [vmem:[%s2229 + $0x62] sm:$0xff]
      %v2851 = vld [vmem:[%s2229 + $0x6a] sm:$0xff]
      %v2852 = vld [vmem:[%s2229 + $0x7a] sm:$0xff]
      %v2853 = vld [vmem:[%s2229 + $0x82] sm:$0xff]
      %v2854 = vld [vmem:[%s2229 + $0x92] sm:$0xff]
      %v2855 = vld [vmem:[%s2229 + $0x9a] sm:$0xff]
      %v2856 = vld [vmem:[%s2229 + $0xaa] sm:$0xff]
      %v2857 = vld [vmem:[%s2229 + $0xb2] sm:$0xff]
      %v2858 = vld [vmem:[%s2229 + $0xc2] sm:$0xff]
      %v2859 = vld [vmem:[%s2229 + $0xca] sm:$0xff]
      %v2860 = vld [vmem:[%s2229 + $0xda] sm:$0xff]
      %v2861 = vld [vmem:[%s2229 + $0xe2] sm:$0xff]
      %v2862 = vld [vmem:[%s2229 + $0xf2] sm:$0xff]
      %v2863 = vld [vmem:[%s2229 + $0xfa] sm:$0xff]
      %v2864 = vld [vmem:[%s2229 + $0x10a] sm:$0xff]
      %v2865 = vld [vmem:[%s2229 + $0x112] sm:$0xff]
      %v2866 = vld [vmem:[%s2229 + $0x122] sm:$0xff]
      %v2867 = vld [vmem:[%s2229 + $0x12a] sm:$0xff]
      %v2868 = vld [vmem:[%s2229 + $0x13a] sm:$0xff]
      %v2869 = vld [vmem:[%s2229 + $0x142] sm:$0xff]
      %v2870 = vld [vmem:[%s2229 + $0x152] sm:$0xff]
      %v2871 = vld [vmem:[%s2229 + $0x15a] sm:$0xff]
      %v2872 = vld [vmem:[%s2229 + $0x16a] sm:$0xff]
      %v2873 = vld [vmem:[%s2229 + $0x172] sm:$0xff]
      %v2874 = vpack.c.bf16 %v2843, %v2842
      %v2875 = vpack.c.bf16 %v2845, %v2844
      %v2876 = vpack.c.bf16 %v2847, %v2846
      %v2877 = vpack.c.bf16 %v2849, %v2848
      %v2878 = vpack.c.bf16 %v2851, %v2850
      %v2879 = vpack.c.bf16 %v2853, %v2852
      %v2880 = vpack.c.bf16 %v2855, %v2854
      %v2881 = vpack.c.bf16 %v2857, %v2856
      %v2882 = vpack.c.bf16 %v2859, %v2858
      %v2883 = vpack.c.bf16 %v2861, %v2860
      %v2884 = vpack.c.bf16 %v2863, %v2862
      %v2885 = vpack.c.bf16 %v2865, %v2864
      %v2886 = vpack.c.bf16 %v2867, %v2866
      %v2887 = vpack.c.bf16 %v2869, %v2868
      %v2888 = vpack.c.bf16 %v2871, %v2870
      %v2889 = vpack.c.bf16 %v2873, %v2872
      %s2890 = scalar_lea.vmem %s3, 512
      %v2891 = vld [vmem:[%s2890] sm:$0xf]
      %v2892 = vld [vmem:[%s2890 + $0x4] sm:$0xf]
      %v2893 = vld [vmem:[%s2890 + $0x8] sm:$0xf]
      %v2894 = vld [vmem:[%s2890 + $0xc] sm:$0xf]
      %v2895 = vld [vmem:[%s2890 + $0x10] sm:$0xf]
      %v2896 = vld [vmem:[%s2890 + $0x14] sm:$0xf]
      %v2897 = vld [vmem:[%s2890 + $0x18] sm:$0xf]
      %v2898 = vld [vmem:[%s2890 + $0x1c] sm:$0xf]
      %v2899 = vld [vmem:[%s2890 + $0x20] sm:$0xf]
      %v2900 = vld [vmem:[%s2890 + $0x24] sm:$0xf]
      %v2901 = vld [vmem:[%s2890 + $0x28] sm:$0xf]
      %v2902 = vld [vmem:[%s2890 + $0x2c] sm:$0xf]
      %v2903 = vld [vmem:[%s2890 + $0x30] sm:$0xf]
      %v2904 = vld [vmem:[%s2890 + $0x34] sm:$0xf]
      %v2905 = vld [vmem:[%s2890 + $0x38] sm:$0xf]
      %v2906 = vld [vmem:[%s2890 + $0x3c] sm:$0xf]
      %v2923 = vunpack.c.l.b16 %v2891
      %v2924 = vunpack.c.l.b16 %v2892
      %v2925 = vunpack.c.l.b16 %v2893
      %v2926 = vunpack.c.l.b16 %v2894
      %v2927 = vunpack.c.l.b16 %v2895
      %v2928 = vunpack.c.l.b16 %v2896
      %v2929 = vunpack.c.l.b16 %v2897
      %v2930 = vunpack.c.l.b16 %v2898
      %v2931 = vunpack.c.l.b16 %v2899
      %v2932 = vunpack.c.l.b16 %v2900
      %v2933 = vunpack.c.l.b16 %v2901
      %v2934 = vunpack.c.l.b16 %v2902
      %v2935 = vunpack.c.l.b16 %v2903
      %v2936 = vunpack.c.l.b16 %v2904
      %v2937 = vunpack.c.l.b16 %v2905
      %v2938 = vunpack.c.l.b16 %v2906
      %v2939 = vpack.c.b16 %v2924, %v2923
      %v2940 = vpack.c.b16 %v2926, %v2925
      %v2941 = vpack.c.b16 %v2928, %v2927
      %v2942 = vpack.c.b16 %v2930, %v2929
      %v2943 = vpack.c.b16 %v2932, %v2931
      %v2944 = vpack.c.b16 %v2934, %v2933
      %v2945 = vpack.c.b16 %v2936, %v2935
      %v2946 = vpack.c.b16 %v2938, %v2937
      %2955 = vmatprep.subr.bf16.mxu0 0
      %2956 = vmatpush1.bf16.msra.mxu0 %v2939
      %2957 = vmatprep.subr.bf16.mxu0 0
      %2958 = vmatpush1.bf16.msra.mxu0 %v2940
      %2959 = vmatprep.subr.bf16.mxu0 0
      %2960 = vmatpush1.bf16.msra.mxu0 %v2941
      %2961 = vmatprep.subr.bf16.mxu0 0
      %2962 = vmatpush1.bf16.msra.mxu0 %v2942
      %2963 = vmatprep.subr.bf16.mxu0 0
      %2964 = vmatpush1.bf16.msra.mxu0 %v2943
      %2965 = vmatprep.subr.bf16.mxu0 0
      %2966 = vmatpush1.bf16.msra.mxu0 %v2944
      %2967 = vmatprep.subr.bf16.mxu0 0
      %2968 = vmatpush1.bf16.msra.mxu0 %v2945
      %2969 = vmatprep.subr.bf16.mxu0 0
      %2970 = vmatpush1.bf16.msra.mxu0 %v2946
      %2971 = vmatprep.subr.bf16.mxu0 0
      %2972 = vmatpush1.bf16.msra.mxu0 0
      %2973 = vmatprep.subr.bf16.mxu0 0
      %2974 = vmatpush1.bf16.msra.mxu0 0
      %2975 = vmatprep.subr.bf16.mxu0 0
      %2976 = vmatpush1.bf16.msra.mxu0 0
      %2977 = vmatprep.subr.bf16.mxu0 0
      %2978 = vmatpush1.bf16.msra.mxu0 0
      %2979 = vmatprep.subr.bf16.mxu0 0
      %2980 = vmatpush1.bf16.msra.mxu0 0
      %2981 = vmatprep.subr.bf16.mxu0 0
      %2982 = vmatpush1.bf16.msra.mxu0 0
      %2983 = vmatprep.subr.bf16.mxu0 0
      %2984 = vmatpush1.bf16.msra.mxu0 0
      %2985 = vmatprep.subr.bf16.mxu0 0
      %2986 = vmatpush1.bf16.msra.mxu0 0
      %2987 = vmatprep.mubr.bf16.mxu0 0
      %2988 = vmatmul.mubr.bf16.gmra.mrb[0].mxu0 %v2874
      %v2989 = vpop.f32.mrb[0].mxu0
      %v2990 = vadd.f32 0.0, %v2989
      %v2991 = vpop.f32.mrb[0].mxu0
      %v2992 = vpop.f32.mrb[0].mxu0
      %v2993 = vadd.f32 0.0, %v2992
      %v2994 = vpop.f32.mrb[0].mxu0
      %2995 = vmatprep.mubr.bf16.mxu0 0
      %2996 = vmatmul.mubr.bf16.gmra.mrb[0].mxu0 %v2875
      %v2997 = vpop.f32.mrb[0].mxu0
      %v2998 = vadd.f32 0.0, %v2997
      %v2999 = vpop.f32.mrb[0].mxu0
      %v3000 = vpop.f32.mrb[0].mxu0
      %v3001 = vadd.f32 0.0, %v3000
      %v3002 = vpop.f32.mrb[0].mxu0
      %3003 = vmatprep.mubr.bf16.mxu0 0
      %3004 = vmatmul.mubr.bf16.gmra.mrb[0].mxu0 %v2876
      %v3005 = vpop.f32.mrb[0].mxu0
      %v3006 = vadd.f32 0.0, %v3005
      %v3007 = vpop.f32.mrb[0].mxu0
      %v3008 = vpop.f32.mrb[0].mxu0
      %v3009 = vadd.f32 0.0, %v3008
      %v3010 = vpop.f32.mrb[0].mxu0
      %3011 = vmatprep.mubr.bf16.mxu0 0
      %3012 = vmatmul.mubr.bf16.gmra.mrb[0].mxu0 %v2877
      %v3013 = vpop.f32.mrb[0].mxu0
      %v3014 = vadd.f32 0.0, %v3013
      %v3015 = vpop.f32.mrb[0].mxu0
      %v3016 = vpop.f32.mrb[0].mxu0
      %v3017 = vadd.f32 0.0, %v3016
      %v3018 = vpop.f32.mrb[0].mxu0
      %3019 = vmatprep.mubr.bf16.mxu0 0
      %3020 = vmatmul.mubr.bf16.gmra.mrb[0].mxu0 %v2878
      %v3021 = vpop.f32.mrb[0].mxu0
      %v3022 = vadd.f32 0.0, %v3021
      %v3023 = vpop.f32.mrb[0].mxu0
      %v3024 = vpop.f32.mrb[0].mxu0
      %v3025 = vadd.f32 0.0, %v3024
      %v3026 = vpop.f32.mrb[0].mxu0
      %3027 = vmatprep.mubr.bf16.mxu0 0
      %3028 = vmatmul.mubr.bf16.gmra.mrb[0].mxu0 %v2879
      %v3029 = vpop.f32.mrb[0].mxu0
      %v3030 = vadd.f32 0.0, %v3029
      %v3031 = vpop.f32.mrb[0].mxu0
      %v3032 = vpop.f32.mrb[0].mxu0
      %v3033 = vadd.f32 0.0, %v3032
      %v3034 = vpop.f32.mrb[0].mxu0
      %3035 = vmatprep.mubr.bf16.mxu0 0
      %3036 = vmatmul.mubr.bf16.gmra.mrb[0].mxu0 %v2880
      %v3037 = vpop.f32.mrb[0].mxu0
      %v3038 = vadd.f32 0.0, %v3037
      %v3039 = vpop.f32.mrb[0].mxu0
      %v3040 = vpop.f32.mrb[0].mxu0
      %v3041 = vadd.f32 0.0, %v3040
      %v3042 = vpop.f32.mrb[0].mxu0
      %3043 = vmatprep.mubr.bf16.mxu0 0
      %3044 = vmatmul.mubr.bf16.gmra.mrb[0].mxu0 %v2881
      %v3045 = vpop.f32.mrb[0].mxu0
      %v3046 = vadd.f32 0.0, %v3045
      %v3047 = vpop.f32.mrb[0].mxu0
      %v3048 = vpop.f32.mrb[0].mxu0
      %v3049 = vadd.f32 0.0, %v3048
      %v3050 = vpop.f32.mrb[0].mxu0
      %3051 = vmatprep.mubr.bf16.mxu0 0
      %3052 = vmatmul.mubr.bf16.gmra.mrb[0].mxu0 %v2882
      %v3053 = vpop.f32.mrb[0].mxu0
      %v3054 = vadd.f32 0.0, %v3053
      %v3055 = vpop.f32.mrb[0].mxu0
      %v3056 = vpop.f32.mrb[0].mxu0
      %v3057 = vadd.f32 0.0, %v3056
      %v3058 = vpop.f32.mrb[0].mxu0
      %3059 = vmatprep.mubr.bf16.mxu0 0
      %3060 = vmatmul.mubr.bf16.gmra.mrb[0].mxu0 %v2883
      %v3061 = vpop.f32.mrb[0].mxu0
      %v3062 = vadd.f32 0.0, %v3061
      %v3063 = vpop.f32.mrb[0].mxu0
      %v3064 = vpop.f32.mrb[0].mxu0
      %v3065 = vadd.f32 0.0, %v3064
      %v3066 = vpop.f32.mrb[0].mxu0
      %3067 = vmatprep.mubr.bf16.mxu0 0
      %3068 = vmatmul.mubr.bf16.gmra.mrb[0].mxu0 %v2884
      %v3069 = vpop.f32.mrb[0].mxu0
      %v3070 = vadd.f32 0.0, %v3069
      %v3071 = vpop.f32.mrb[0].mxu0
      %v3072 = vpop.f32.mrb[0].mxu0
      %v3073 = vadd.f32 0.0, %v3072
      %v3074 = vpop.f32.mrb[0].mxu0
      %3075 = vmatprep.mubr.bf16.mxu0 0
      %3076 = vmatmul.mubr.bf16.gmra.mrb[0].mxu0 %v2885
      %v3077 = vpop.f32.mrb[0].mxu0
      %v3078 = vadd.f32 0.0, %v3077
      %v3079 = vpop.f32.mrb[0].mxu0
      %v3080 = vpop.f32.mrb[0].mxu0
      %v3081 = vadd.f32 0.0, %v3080
      %v3082 = vpop.f32.mrb[0].mxu0
      %3083 = vmatprep.mubr.bf16.mxu0 0
      %3084 = vmatmul.mubr.bf16.gmra.mrb[0].mxu0 %v2886
      %v3085 = vpop.f32.mrb[0].mxu0
      %v3086 = vadd.f32 0.0, %v3085
      %v3087 = vpop.f32.mrb[0].mxu0
      %v3088 = vpop.f32.mrb[0].mxu0
      %v3089 = vadd.f32 0.0, %v3088
      %v3090 = vpop.f32.mrb[0].mxu0
      %3091 = vmatprep.mubr.bf16.mxu0 0
      %3092 = vmatmul.mubr.bf16.gmra.mrb[0].mxu0 %v2887
      %v3093 = vpop.f32.mrb[0].mxu0
      %v3094 = vadd.f32 0.0, %v3093
      %v3095 = vpop.f32.mrb[0].mxu0
      %v3096 = vpop.f32.mrb[0].mxu0
      %v3097 = vadd.f32 0.0, %v3096
      %v3098 = vpop.f32.mrb[0].mxu0
      %3099 = vmatprep.mubr.bf16.mxu0 0
      %3100 = vmatmul.mubr.bf16.gmra.mrb[0].mxu0 %v2888
      %v3101 = vpop.f32.mrb[0].mxu0
      %v3102 = vadd.f32 0.0, %v3101
      %v3103 = vpop.f32.mrb[0].mxu0
      %v3104 = vpop.f32.mrb[0].mxu0
      %v3105 = vadd.f32 0.0, %v3104
      %v3106 = vpop.f32.mrb[0].mxu0
      %3107 = vmatprep.mubr.bf16.mxu0 0
      %3108 = vmatmul.mubr.bf16.gmra.mrb[0].mxu0 %v2889
      %v3109 = vpop.f32.mrb[0].mxu0
      %v3110 = vadd.f32 0.0, %v3109
      %v3111 = vpop.f32.mrb[0].mxu0
      %v3112 = vpop.f32.mrb[0].mxu0
      %v3113 = vadd.f32 0.0, %v3112
      %v3114 = vpop.f32.mrb[0].mxu0
      %3115 = vdwg.mxu0
      %v3116 = vadd.f32 %v2810, %v2990
      %v3117 = vadd.f32 %v2811, %v2993
      %v3118 = vadd.f32 %v2812, %v2998
      %v3119 = vadd.f32 %v2813, %v3001
      %v3120 = vadd.f32 %v2814, %v3006
      %v3121 = vadd.f32 %v2815, %v3009
      %v3122 = vadd.f32 %v2816, %v3014
      %v3123 = vadd.f32 %v2817, %v3017
      %v3124 = vadd.f32 %v2818, %v3022
      %v3125 = vadd.f32 %v2819, %v3025
      %v3126 = vadd.f32 %v2820, %v3030
      %v3127 = vadd.f32 %v2821, %v3033
      %v3128 = vadd.f32 %v2822, %v3038
      %v3129 = vadd.f32 %v2823, %v3041
      %v3130 = vadd.f32 %v2824, %v3046
      %v3131 = vadd.f32 %v2825, %v3049
      %v3132 = vadd.f32 %v2826, %v3054
      %v3133 = vadd.f32 %v2827, %v3057
      %v3134 = vadd.f32 %v2828, %v3062
      %v3135 = vadd.f32 %v2829, %v3065
      %v3136 = vadd.f32 %v2830, %v3070
      %v3137 = vadd.f32 %v2831, %v3073
      %v3138 = vadd.f32 %v2832, %v3078
      %v3139 = vadd.f32 %v2833, %v3081
      %v3140 = vadd.f32 %v2834, %v3086
      %v3141 = vadd.f32 %v2835, %v3089
      %v3142 = vadd.f32 %v2836, %v3094
      %v3143 = vadd.f32 %v2837, %v3097
      %v3144 = vadd.f32 %v2838, %v3102
      %v3145 = vadd.f32 %v2839, %v3105
      %v3146 = vadd.f32 %v2840, %v3110
      %v3147 = vadd.f32 %v2841, %v3113
      %3148 = vst [vmem:[%s222] sm:$0xff] %v3116
      %3149 = vst [vmem:[%s222 + $0x8] sm:$0xff] %v3117
      %3150 = vst [vmem:[%s222 + $0x10] sm:$0xff] %v3118
      %3151 = vst [vmem:[%s222 + $0x18] sm:$0xff] %v3119
      %3152 = vst [vmem:[%s222 + $0x20] sm:$0xff] %v3120
      %3153 = vst [vmem:[%s222 + $0x28] sm:$0xff] %v3121
      %3154 = vst [vmem:[%s222 + $0x30] sm:$0xff] %v3122
      %3155 = vst [vmem:[%s222 + $0x38] sm:$0xff] %v3123
      %3156 = vst [vmem:[%s222 + $0x40] sm:$0xff] %v3124
      %3157 = vst [vmem:[%s222 + $0x48] sm:$0xff] %v3125
      %3158 = vst [vmem:[%s222 + $0x50] sm:$0xff] %v3126
      %3159 = vst [vmem:[%s222 + $0x58] sm:$0xff] %v3127
      %3160 = vst [vmem:[%s222 + $0x60] sm:$0xff] %v3128
      %3161 = vst [vmem:[%s222 + $0x68] sm:$0xff] %v3129
      %3162 = vst [vmem:[%s222 + $0x70] sm:$0xff] %v3130
      %3163 = vst [vmem:[%s222 + $0x78] sm:$0xff] %v3131
      %3164 = vst [vmem:[%s222 + $0x80] sm:$0xff] %v3132
      %3165 = vst [vmem:[%s222 + $0x88] sm:$0xff] %v3133
      %3166 = vst [vmem:[%s222 + $0x90] sm:$0xff] %v3134
      %3167 = vst [vmem:[%s222 + $0x98] sm:$0xff] %v3135
      %3168 = vst [vmem:[%s222 + $0xa0] sm:$0xff] %v3136
      %3169 = vst [vmem:[%s222 + $0xa8] sm:$0xff] %v3137
      %3170 = vst [vmem:[%s222 + $0xb0] sm:$0xff] %v3138
      %3171 = vst [vmem:[%s222 + $0xb8] sm:$0xff] %v3139
      %3172 = vst [vmem:[%s222 + $0xc0] sm:$0xff] %v3140
      %3173 = vst [vmem:[%s222 + $0xc8] sm:$0xff] %v3141
      %3174 = vst [vmem:[%s222 + $0xd0] sm:$0xff] %v3142
      %3175 = vst [vmem:[%s222 + $0xd8] sm:$0xff] %v3143
      %3176 = vst [vmem:[%s222 + $0xe0] sm:$0xff] %v3144
      %3177 = vst [vmem:[%s222 + $0xe8] sm:$0xff] %v3145
      %3178 = vst [vmem:[%s222 + $0xf0] sm:$0xff] %v3146
      %3179 = vst [vmem:[%s222 + $0xf8] sm:$0xff] %v3147
      %v3180 = vld [vmem:[%s5] sm:$0x1]
      %v3181 = vadd.f32 %v3116, %v3117
      %v3182 = vadd.f32 %v3181, %v3118
      %v3183 = vadd.f32 %v3182, %v3119
      %v3184 = vadd.f32 %v3183, %v3120
      %v3185 = vadd.f32 %v3184, %v3121
      %v3186 = vadd.f32 %v3185, %v3122
      %v3187 = vadd.f32 %v3186, %v3123
      %v3188 = vadd.f32 %v3187, %v3124
      %v3189 = vadd.f32 %v3188, %v3125
      %v3190 = vadd.f32 %v3189, %v3126
      %v3191 = vadd.f32 %v3190, %v3127
      %v3192 = vadd.f32 %v3191, %v3128
      %v3193 = vadd.f32 %v3192, %v3129
      %v3194 = vadd.f32 %v3193, %v3130
      %v3195 = vadd.f32 %v3194, %v3131
      %v3196 = vadd.f32 %v3195, %v3132
      %v3197 = vadd.f32 %v3196, %v3133
      %v3198 = vadd.f32 %v3197, %v3134
      %v3199 = vadd.f32 %v3198, %v3135
      %v3200 = vadd.f32 %v3199, %v3136
      %v3201 = vadd.f32 %v3200, %v3137
      %v3202 = vadd.f32 %v3201, %v3138
      %v3203 = vadd.f32 %v3202, %v3139
      %v3204 = vadd.f32 %v3203, %v3140
      %v3205 = vadd.f32 %v3204, %v3141
      %v3206 = vadd.f32 %v3205, %v3142
      %v3207 = vadd.f32 %v3206, %v3143
      %v3208 = vadd.f32 %v3207, %v3144
      %v3209 = vadd.f32 %v3208, %v3145
      %v3210 = vadd.f32 %v3209, %v3146
      %v3211 = vadd.f32 %v3210, %v3147
      %v3212 = vrot.slane %v3211, 4
      %v3213 = vadd.f32 %v3211, %v3212
      %v3214 = vrot.slane %v3213, 2
      %v3215 = vadd.f32 %v3213, %v3214
      %v3216 = vrot.slane %v3215, 1
      %v3217 = vadd.f32 %v3215, %v3216
      %v3218 = vadd.f32 %v3180, %v3217
      %3219 = vst [vmem:[%s5] sm:$0x1] %v3218
      %v3220 = vld [vmem:[%s5 + $0x1] sm:$0x1]
      %v3221 = vmul.f32 %v3116, %v3116
      %v3222 = vmul.f32 %v3117, %v3117
      %v3223 = vmul.f32 %v3118, %v3118
      %v3224 = vmul.f32 %v3119, %v3119
      %v3225 = vmul.f32 %v3120, %v3120
      %v3226 = vmul.f32 %v3121, %v3121
      %v3227 = vmul.f32 %v3122, %v3122
      %v3228 = vmul.f32 %v3123, %v3123
      %v3229 = vmul.f32 %v3124, %v3124
      %v3230 = vmul.f32 %v3125, %v3125
      %v3231 = vmul.f32 %v3126, %v3126
      %v3232 = vmul.f32 %v3127, %v3127
      %v3233 = vmul.f32 %v3128, %v3128
      %v3234 = vmul.f32 %v3129, %v3129
      %v3235 = vmul.f32 %v3130, %v3130
      %v3236 = vmul.f32 %v3131, %v3131
      %v3237 = vmul.f32 %v3132, %v3132
      %v3238 = vmul.f32 %v3133, %v3133
      %v3239 = vmul.f32 %v3134, %v3134
      %v3240 = vmul.f32 %v3135, %v3135
      %v3241 = vmul.f32 %v3136, %v3136
      %v3242 = vmul.f32 %v3137, %v3137
      %v3243 = vmul.f32 %v3138, %v3138
      %v3244 = vmul.f32 %v3139, %v3139
      %v3245 = vmul.f32 %v3140, %v3140
      %v3246 = vmul.f32 %v3141, %v3141
      %v3247 = vmul.f32 %v3142, %v3142
      %v3248 = vmul.f32 %v3143, %v3143
      %v3249 = vmul.f32 %v3144, %v3144
      %v3250 = vmul.f32 %v3145, %v3145
      %v3251 = vmul.f32 %v3146, %v3146
      %v3252 = vmul.f32 %v3147, %v3147
      %v3253 = vadd.f32 %v3221, %v3222
      %v3254 = vadd.f32 %v3253, %v3223
      %v3255 = vadd.f32 %v3254, %v3224
      %v3256 = vadd.f32 %v3255, %v3225
      %v3257 = vadd.f32 %v3256, %v3226
      %v3258 = vadd.f32 %v3257, %v3227
      %v3259 = vadd.f32 %v3258, %v3228
      %v3260 = vadd.f32 %v3259, %v3229
      %v3261 = vadd.f32 %v3260, %v3230
      %v3262 = vadd.f32 %v3261, %v3231
      %v3263 = vadd.f32 %v3262, %v3232
      %v3264 = vadd.f32 %v3263, %v3233
      %v3265 = vadd.f32 %v3264, %v3234
      %v3266 = vadd.f32 %v3265, %v3235
      %v3267 = vadd.f32 %v3266, %v3236
      %v3268 = vadd.f32 %v3267, %v3237
      %v3269 = vadd.f32 %v3268, %v3238
      %v3270 = vadd.f32 %v3269, %v3239
      %v3271 = vadd.f32 %v3270, %v3240
      %v3272 = vadd.f32 %v3271, %v3241
      %v3273 = vadd.f32 %v3272, %v3242
      %v3274 = vadd.f32 %v3273, %v3243
      %v3275 = vadd.f32 %v3274, %v3244
      %v3276 = vadd.f32 %v3275, %v3245
      %v3277 = vadd.f32 %v3276, %v3246
      %v3278 = vadd.f32 %v3277, %v3247
      %v3279 = vadd.f32 %v3278, %v3248
      %v3280 = vadd.f32 %v3279, %v3249
      %v3281 = vadd.f32 %v3280, %v3250
      %v3282 = vadd.f32 %v3281, %v3251
      %v3283 = vadd.f32 %v3282, %v3252
      %v3284 = vrot.slane %v3283, 4
      %v3285 = vadd.f32 %v3283, %v3284
      %v3286 = vrot.slane %v3285, 2
      %v3287 = vadd.f32 %v3285, %v3286
      %v3288 = vrot.slane %v3287, 1
      %v3289 = vadd.f32 %v3287, %v3288
      %v3290 = vadd.f32 %v3220, %v3289
      %3291 = vst [vmem:[%s5 + $0x1] sm:$0x1] %v3290
      %p3292 = scmp.lt.s32.totalorder %s17, 1
      %s3293 = scalar_select %p3292, %s17, 1
      %s3294 = smul.addr %s3293, 32
      %s3295 = smul.addr %s3294, 8
      %s3296 = scalar_lea.vmem %s4, %s3295
      // Predicated region
      $region41: #{bottleneck_forward.6} parent=35 // pred_check
        %p3297 = pneg %p124
      $region42: #{bottleneck_forward.6} parent=35 // pred_check_branch
        %3299 = sbr.rel (%p3297) target = $region44
      $region43: #{bottleneck_forward.6} parent=35 // pred_region
        _
      $region44: #{bottleneck_forward.6} parent=35 // pred_fallthru
        _
      // Predicated region
      $region45: #{bottleneck_forward.6} parent=35 // pred_check
        %p3300 = pneg %p145
      $region46: #{bottleneck_forward.6} parent=35 // pred_check_branch
        %3302 = sbr.rel (%p3300) target = $region48
      $region47: #{bottleneck_forward.6} parent=35 // pred_region
        _
      $region48: #{bottleneck_forward.6} parent=35 // pred_fallthru
        _
      // Predicated region
      $region49: #{bottleneck_forward.6} parent=35 // pred_check
        %p3303 = pneg %p145
      $region50: #{bottleneck_forward.6} parent=35 // pred_check_branch
        %3305 = sbr.rel (%p3303) target = $region52
      $region51: #{bottleneck_forward.6} parent=35 // pred_region
        _
      $region52: #{bottleneck_forward.6} parent=35 // pred_fallthru
        _
    $region36: #{bottleneck_forward.6} parent=5 // pred_fallthru
      _
    %p3306 = scmp.le.s32.totalorder 2, %s12
    // Predicated region
    $region53: #{bottleneck_forward.6} parent=5 // pred_check
      %p3307 = pneg %p3306
    $region54: #{bottleneck_forward.6} parent=5 // pred_check_branch
      %3309 = sbr.rel (%p3307) target = $region56
    $region55: #{bottleneck_forward.6} parent=5 // pred_region
      %s3310 = ssub.s32 %s12, 2
      // Predicated region
      $region57: #{bottleneck_forward.6} parent=55 // pred_check
        %p3311 = pneg %p130
      $region58: #{bottleneck_forward.6} parent=55 // pred_check_branch
        %3313 = sbr.rel (%p3311) target = $region60
      $region59: #{bottleneck_forward.6} parent=55 // pred_region
        %p3314 = scmp.lt.s32.totalorder %s18, 1
        %s3315 = scalar_select %p3314, %s18, 1
        %s3316 = smul.addr %s3315, 32
        %s3317 = smul.addr %s3316, 8
        %s3318 = scalar_lea.vmem %s4, %s3317
      $region60: #{bottleneck_forward.6} parent=55 // pred_fallthru
        _
    $region56: #{bottleneck_forward.6} parent=5 // pred_fallthru
      _
  $region6: #{bottleneck_forward.6} parent=0 // loop_footer
    %s16 = sadd.s32 1, %s12
  $region7: #{bottleneck_forward.6} parent=0 // loop_footer_branch
    %11 = sbr.rel target = $region3
  $region8: #{bottleneck_forward.6} parent=0 // loop_exit
    _

</llo_original>
